<compile_context>
chip_gen: v7x
topology: tpu7x:2x2x1
jax: 0.10.0
libtpu: 0.0.40
codegen_flags: <defaults>
</compile_context>

<pallas_src>
import numpy as np

import jax
import jax.numpy as jnp
from jax.experimental import pallas as pl
from jax.experimental.pallas import tpu as pltpu


BN_EPS = 1e-5
LANE = 128
SUBLANE = 8

# (in_features, out_features, apply_relu) for the 11 layers of Net.
LAYER_DIMS = [
    (3072, 1024, True),
    (1024, 512, True),
    (512, 512, True),
    (512, 512, True),
    (512, 256, True),
    (256, 256, True),
    (256, 256, True),
    (256, 128, True),
    (128, 128, True),
    (128, 128, True),
    (128, 10, False),   # fc11: BN but no ReLU, no dropout
]
NUM_LAYERS = len(LAYER_DIMS)
OUT_FEATURES = LAYER_DIMS[-1][1]   # 10
OUT_PAD = LANE                     # lane-dense padded output width (10 -> 128)


def _round_up(x, m):
    return (x + m - 1) // m * m


# Static packed-slab offsets. Every offset is a multiple of 128, so all in-kernel
# slices of the bf16 weight slab / f32 bias slab are (16,128)/(8,128)-tile aligned.
_W_ROW_OFFSETS = []
_B_COL_OFFSETS = []
_r = 0
_c = 0
for _k, _n, _ in LAYER_DIMS:
    _W_ROW_OFFSETS.append(_r)
    _B_COL_OFFSETS.append(_c)
    _npad = _round_up(_n, LANE)
    _r += _k * (_npad // LANE)
    _c += _npad
TOTAL_W_ROWS = _r      # 35456 rows of 128 bf16 lanes  (~8.66 MiB)
TOTAL_B_COLS = _c      # 3840 f32 lanes                 (~15 KiB)


def _net_kernel(x_ref, b_ref, w_hbm, out_ref, w_vmem, sem):
    """Fused 11-layer forward.

      x_ref   (B_pad, 3072)          f32   VMEM
      b_ref   (1, TOTAL_B_COLS)      f32   VMEM   (all folded biases, packed)
      w_hbm   (TOTAL_W_ROWS, 128)    bf16  HBM    (all weights, column-tile-major)
      out_ref (B_pad, 128)           f32   VMEM   (lane-dense padded logits)
      w_vmem  (TOTAL_W_ROWS, 128)    bf16  VMEM scratch
      sem     DMA semaphore, shape (1,)
    """
    # ONE bandwidth-saturating DMA for every layer's weights.
    cp = pltpu.make_async_copy(w_hbm, w_vmem, sem.at[0])
    cp.start()
    cp.wait()

    h = x_ref[...]                                   # (B_pad, 3072) f32
    for i, (k, _, relu) in enumerate(LAYER_DIMS):
        row_off = _W_ROW_OFFSETS[i]
        col_off = _B_COL_OFFSETS[i]
        n_pad = _round_up(LAYER_DIMS[i][1], LANE)
        n_tiles = n_pad // LANE

        hb = h.astype(jnp.bfloat16)
        tiles = []
        for j in range(n_tiles):
            # Tile-aligned static slice of the packed slab: W'_i[:, j*128:(j+1)*128]
            w_tile = w_vmem[row_off + j * k: row_off + (j + 1) * k, :]   # (k, 128)
            tiles.append(jnp.dot(hb, w_tile, preferred_element_type=jnp.float32))
        y = tiles[0] if n_tiles == 1 else jnp.concatenate(tiles, axis=-1)
        y = y + b_ref[:, col_off:col_off + n_pad]    # folded bias + BN (eval)
        if relu:
            y = jnp.maximum(y, 0.0)
        h = y

    out_ref[...] = h.astype(out_ref.dtype)           # lane-dense (B_pad, 128)


def _fused_net(x_pad, w_packed, b_packed):
    b_pad = x_pad.shape[0]
    vmem = pl.BlockSpec(memory_space=pltpu.MemorySpace.VMEM)
    hbm = pl.BlockSpec(memory_space=pl.ANY)

    flops = sum(2 * b_pad * k * _round_up(n, LANE) for k, n, _ in LAYER_DIMS)
    bytes_accessed = (x_pad.size * 4 + b_pad * OUT_PAD * 4
                      + w_packed.size * 2          # bf16 weights
                      + b_packed.size * 4)         # f32 biases

    return pl.pallas_call(
        _net_kernel,
        out_shape=jax.ShapeDtypeStruct((b_pad, OUT_PAD), jnp.float32),
        in_specs=[vmem, vmem, hbm],
        out_specs=vmem,
        scratch_shapes=(
            pltpu.VMEM((TOTAL_W_ROWS, LANE), jnp.bfloat16),
            pltpu.SemaphoreType.DMA((1,)),
        ),
        compiler_params=pltpu.CompilerParams(
            vmem_limit_bytes=32 * 1024 * 1024),
        cost_estimate=pl.CostEstimate(
            flops=flops, transcendentals=0, bytes_accessed=bytes_accessed),
    )(x_pad, b_packed, w_packed)


def init_params(key):
    """Deterministic PyTorch-style init for all 11 Linear + BatchNorm1d layers."""
    params = []
    for (fan_in, fan_out, _) in LAYER_DIMS:
        key, kw, kb = jax.random.split(key, 3)
        bound = 1.0 / float(np.sqrt(fan_in))
        # Stored as (in, out) == transpose of PyTorch's (out, in) weight.
        w = jax.random.uniform(kw, (fan_in, fan_out), jnp.float32,
                               minval=-bound, maxval=bound)
        b = jax.random.uniform(kb, (fan_out,), jnp.float32,
                               minval=-bound, maxval=bound)
        gamma = jnp.ones((fan_out,), jnp.float32)    # BN weight
        beta = jnp.zeros((fan_out,), jnp.float32)    # BN bias
        mean = jnp.zeros((fan_out,), jnp.float32)    # running_mean
        var = jnp.ones((fan_out,), jnp.float32)      # running_var
        params.append((w, b, gamma, beta, mean, var))
    return params


def prepare_params(params):
    """Fold BN (eval) + bias into (W', b'), pad N to 128, pack everything.

    Returns:
      w_packed: (TOTAL_W_ROWS, 128) bf16 — column-tile-major concatenation of all
                11 folded weight matrices (layer-major, then column-tile-major).
      b_packed: (1, TOTAL_B_COLS) f32 — concatenation of all padded folded biases.
    """
    w_blocks, b_blocks = [], []
    for (fan_in, fan_out, _), (w, b, gamma, beta, mean, var) in zip(LAYER_DIMS, params):
        scale = gamma * jax.lax.rsqrt(var + BN_EPS)        # (N,)
        w_f = w * scale[None, :]                           # (K, N)
        b_f = (b - mean) * scale + beta                    # (N,)
        n_pad = _round_up(fan_out, LANE)
        if n_pad != fan_out:
            w_f = jnp.pad(w_f, ((0, 0), (0, n_pad - fan_out)))
            b_f = jnp.pad(b_f, (0, n_pad - fan_out))
        w_bf = w_f.astype(jnp.bfloat16)
        for j in range(n_pad // LANE):
            w_blocks.append(w_bf[:, j * LANE:(j + 1) * LANE])   # (K, 128)
        b_blocks.append(b_f.astype(jnp.float32))
    w_packed = jnp.concatenate(w_blocks, axis=0)           # (TOTAL_W_ROWS, 128)
    b_packed = jnp.concatenate(b_blocks)[None, :]          # (1, TOTAL_B_COLS)
    assert w_packed.shape == (TOTAL_W_ROWS, LANE)
    assert b_packed.shape == (1, TOTAL_B_COLS)
    return w_packed, b_packed


@jax.jit
def net_forward(x_nchw, w_packed, b_packed):
    batch = x_nchw.shape[0]
    x = x_nchw.reshape(batch, -1).astype(jnp.float32)      # x.view(-1, 3072)
    b_pad = max(_round_up(batch, SUBLANE), SUBLANE)        # fill the sublane tile
    x = jnp.pad(x, ((0, b_pad - batch), (0, 0)))
    out = _fused_net(x, w_packed, b_packed)
    return out[:batch, :OUT_FEATURES]                      # (B, 10)


def _reference_forward(x_nchw, w_packed, b_packed):
    """Pure-JAX reference with identical numerics (bf16 matmul inputs, f32 acc)."""
    batch = x_nchw.shape[0]
    h = x_nchw.reshape(batch, -1).astype(jnp.float32)
    for i, (k, n, relu) in enumerate(LAYER_DIMS):
        row_off = _W_ROW_OFFSETS[i]
        col_off = _B_COL_OFFSETS[i]
        n_pad = _round_up(n, LANE)
        n_tiles = n_pad // LANE
        w = jnp.concatenate(
            [w_packed[row_off + j * k: row_off + (j + 1) * k, :]
             for j in range(n_tiles)], axis=1)             # (k, n_pad) bf16
        y = jnp.dot(h.astype(jnp.bfloat16), w, preferred_element_type=jnp.float32)
        y = y + b_packed[:, col_off:col_off + n_pad]
        if relu:
            y = jnp.maximum(y, 0.0)
        h = y
    return h[:, :OUT_FEATURES]


if __name__ == "__main__":
    key = jax.random.PRNGKey(0)
    key, kx = jax.random.split(key)
    # CIFAR-like input: batch=2, NCHW [2, 3, 32, 32] -> 3072 features.
    x = jax.random.normal(kx, (2, 3, 32, 32), jnp.float32)
    params = init_params(key)
    w_packed, b_packed = prepare_params(params)

    out = jax.block_until_ready(net_forward(x, w_packed, b_packed))
    assert out.shape == (2, 10) and out.dtype == jnp.float32

    ref = jax.block_until_ready(_reference_forward(x, w_packed, b_packed))
    np.testing.assert_allclose(np.asarray(out), np.asarray(ref),
                               rtol=2e-2, atol=2e-2)
    print("KERNEL_OK")
</pallas_src>

<mosaic_0001>
module attributes {stable_mosaic.version = 11 : i64} {
  func.func @_net_kernel(%arg0: memref<8x3072xf32, #tpu.memory_space<vmem>>, %arg1: memref<1x3840xf32, #tpu.memory_space<vmem>>, %arg2: memref<35456x128xbf16, #tpu.memory_space<any>>, %arg3: memref<8x128xf32, #tpu.memory_space<vmem>>, %arg4: memref<35456x128xbf16, #tpu.memory_space<vmem>>, %arg5: memref<1x!tpu.dma_semaphore, #tpu.memory_space<semaphore_mem>>) attributes {dimension_semantics = [], scalar_prefetch = 0 : i64, scratch_operands = 2 : i64, tpu.core_type = #tpu.core_type<tc>} {
    %c0_i32 = arith.constant 0 : i32
    %0 = tpu.memref_slice %arg5[%c0_i32] : memref<1x!tpu.dma_semaphore, #tpu.memory_space<semaphore_mem>> -> memref<1x!tpu.dma_semaphore, #tpu.memory_space<semaphore_mem>>
    %1 = tpu.memref_squeeze %0 : memref<1x!tpu.dma_semaphore, #tpu.memory_space<semaphore_mem>> -> memref<!tpu.dma_semaphore, #tpu.memory_space<semaphore_mem>>
    tpu.enqueue_dma source(%arg2 : memref<35456x128xbf16, #tpu.memory_space<any>>) target(%arg4 : memref<35456x128xbf16, #tpu.memory_space<vmem>>) target_semaphore(%1 : memref<!tpu.dma_semaphore, #tpu.memory_space<semaphore_mem>>)
    %c0_i32_0 = arith.constant 0 : i32
    %2 = tpu.memref_slice %arg5[%c0_i32_0] : memref<1x!tpu.dma_semaphore, #tpu.memory_space<semaphore_mem>> -> memref<1x!tpu.dma_semaphore, #tpu.memory_space<semaphore_mem>>
    %3 = tpu.memref_squeeze %2 : memref<1x!tpu.dma_semaphore, #tpu.memory_space<semaphore_mem>> -> memref<!tpu.dma_semaphore, #tpu.memory_space<semaphore_mem>>
    tpu.wait_dma2 semaphore(%3 : memref<!tpu.dma_semaphore, #tpu.memory_space<semaphore_mem>>) src(%arg2 : memref<35456x128xbf16, #tpu.memory_space<any>>) dst(%arg4 : memref<35456x128xbf16, #tpu.memory_space<vmem>>)
    %c0 = arith.constant 0 : index
    %c0_1 = arith.constant 0 : index
    %4 = vector.load %arg0[%c0, %c0_1] : memref<8x3072xf32, #tpu.memory_space<vmem>>, vector<8x3072xf32>
    %5 = arith.truncf %4 : vector<8x3072xf32> to vector<8x3072xbf16>
    %c0_2 = arith.constant 0 : index
    %c0_3 = arith.constant 0 : index
    %6 = vector.load %arg4[%c0_2, %c0_3] : memref<35456x128xbf16, #tpu.memory_space<vmem>>, vector<3072x128xbf16>
    %cst = arith.constant dense<0.000000e+00> : vector<8x128xf32>
    %7 = tpu.matmul %5, %6, %cst {dimension_numbers = #tpu.dot_dimension_numbers<[1], [0], [0], [1], [0, 0, 1, 1], [], []>} : vector<8x3072xbf16>, vector<3072x128xbf16>, vector<8x128xf32> -> vector<8x128xf32>
    %c3072 = arith.constant 3072 : index
    %c0_4 = arith.constant 0 : index
    %8 = vector.load %arg4[%c3072, %c0_4] : memref<35456x128xbf16, #tpu.memory_space<vmem>>, vector<3072x128xbf16>
    %cst_5 = arith.constant dense<0.000000e+00> : vector<8x128xf32>
    %9 = tpu.matmul %5, %8, %cst_5 {dimension_numbers = #tpu.dot_dimension_numbers<[1], [0], [0], [1], [0, 0, 1, 1], [], []>} : vector<8x3072xbf16>, vector<3072x128xbf16>, vector<8x128xf32> -> vector<8x128xf32>
    %c6144 = arith.constant 6144 : index
    %c0_6 = arith.constant 0 : index
    %10 = vector.load %arg4[%c6144, %c0_6] : memref<35456x128xbf16, #tpu.memory_space<vmem>>, vector<3072x128xbf16>
    %cst_7 = arith.constant dense<0.000000e+00> : vector<8x128xf32>
    %11 = tpu.matmul %5, %10, %cst_7 {dimension_numbers = #tpu.dot_dimension_numbers<[1], [0], [0], [1], [0, 0, 1, 1], [], []>} : vector<8x3072xbf16>, vector<3072x128xbf16>, vector<8x128xf32> -> vector<8x128xf32>
    %c9216 = arith.constant 9216 : index
    %c0_8 = arith.constant 0 : index
    %12 = vector.load %arg4[%c9216, %c0_8] : memref<35456x128xbf16, #tpu.memory_space<vmem>>, vector<3072x128xbf16>
    %cst_9 = arith.constant dense<0.000000e+00> : vector<8x128xf32>
    %13 = tpu.matmul %5, %12, %cst_9 {dimension_numbers = #tpu.dot_dimension_numbers<[1], [0], [0], [1], [0, 0, 1, 1], [], []>} : vector<8x3072xbf16>, vector<3072x128xbf16>, vector<8x128xf32> -> vector<8x128xf32>
    %c12288 = arith.constant 12288 : index
    %c0_10 = arith.constant 0 : index
    %14 = vector.load %arg4[%c12288, %c0_10] : memref<35456x128xbf16, #tpu.memory_space<vmem>>, vector<3072x128xbf16>
    %cst_11 = arith.constant dense<0.000000e+00> : vector<8x128xf32>
    %15 = tpu.matmul %5, %14, %cst_11 {dimension_numbers = #tpu.dot_dimension_numbers<[1], [0], [0], [1], [0, 0, 1, 1], [], []>} : vector<8x3072xbf16>, vector<3072x128xbf16>, vector<8x128xf32> -> vector<8x128xf32>
    %c15360 = arith.constant 15360 : index
    %c0_12 = arith.constant 0 : index
    %16 = vector.load %arg4[%c15360, %c0_12] : memref<35456x128xbf16, #tpu.memory_space<vmem>>, vector<3072x128xbf16>
    %cst_13 = arith.constant dense<0.000000e+00> : vector<8x128xf32>
    %17 = tpu.matmul %5, %16, %cst_13 {dimension_numbers = #tpu.dot_dimension_numbers<[1], [0], [0], [1], [0, 0, 1, 1], [], []>} : vector<8x3072xbf16>, vector<3072x128xbf16>, vector<8x128xf32> -> vector<8x128xf32>
    %c18432 = arith.constant 18432 : index
    %c0_14 = arith.constant 0 : index
    %18 = vector.load %arg4[%c18432, %c0_14] : memref<35456x128xbf16, #tpu.memory_space<vmem>>, vector<3072x128xbf16>
    %cst_15 = arith.constant dense<0.000000e+00> : vector<8x128xf32>
    %19 = tpu.matmul %5, %18, %cst_15 {dimension_numbers = #tpu.dot_dimension_numbers<[1], [0], [0], [1], [0, 0, 1, 1], [], []>} : vector<8x3072xbf16>, vector<3072x128xbf16>, vector<8x128xf32> -> vector<8x128xf32>
    %c21504 = arith.constant 21504 : index
    %c0_16 = arith.constant 0 : index
    %20 = vector.load %arg4[%c21504, %c0_16] : memref<35456x128xbf16, #tpu.memory_space<vmem>>, vector<3072x128xbf16>
    %cst_17 = arith.constant dense<0.000000e+00> : vector<8x128xf32>
    %21 = tpu.matmul %5, %20, %cst_17 {dimension_numbers = #tpu.dot_dimension_numbers<[1], [0], [0], [1], [0, 0, 1, 1], [], []>} : vector<8x3072xbf16>, vector<3072x128xbf16>, vector<8x128xf32> -> vector<8x128xf32>
    %22 = tpu.concatenate %7, %9, %11, %13, %15, %17, %19, %21 in 1 : vector<8x128xf32>, vector<8x128xf32>, vector<8x128xf32>, vector<8x128xf32>, vector<8x128xf32>, vector<8x128xf32>, vector<8x128xf32>, vector<8x128xf32> -> vector<8x1024xf32>
    %c0_18 = arith.constant 0 : index
    %c0_19 = arith.constant 0 : index
    %23 = vector.load %arg1[%c0_18, %c0_19] : memref<1x3840xf32, #tpu.memory_space<vmem>>, vector<1x1024xf32>
    %24 = vector.broadcast %23 : vector<1x1024xf32> to vector<8x1024xf32>
    %25 = arith.addf %22, %24 : vector<8x1024xf32>
    %cst_20 = arith.constant 0.000000e+00 : f32
    %26 = vector.broadcast %cst_20 : f32 to vector<8x1024xf32>
    %27 = arith.maximumf %25, %26 : vector<8x1024xf32>
    %28 = arith.truncf %27 : vector<8x1024xf32> to vector<8x1024xbf16>
    %c24576 = arith.constant 24576 : index
    %c0_21 = arith.constant 0 : index
    %29 = vector.load %arg4[%c24576, %c0_21] : memref<35456x128xbf16, #tpu.memory_space<vmem>>, vector<1024x128xbf16>
    %cst_22 = arith.constant dense<0.000000e+00> : vector<8x128xf32>
    %30 = tpu.matmul %28, %29, %cst_22 {dimension_numbers = #tpu.dot_dimension_numbers<[1], [0], [0], [1], [0, 0, 1, 1], [], []>} : vector<8x1024xbf16>, vector<1024x128xbf16>, vector<8x128xf32> -> vector<8x128xf32>
    %c25600 = arith.constant 25600 : index
    %c0_23 = arith.constant 0 : index
    %31 = vector.load %arg4[%c25600, %c0_23] : memref<35456x128xbf16, #tpu.memory_space<vmem>>, vector<1024x128xbf16>
    %cst_24 = arith.constant dense<0.000000e+00> : vector<8x128xf32>
    %32 = tpu.matmul %28, %31, %cst_24 {dimension_numbers = #tpu.dot_dimension_numbers<[1], [0], [0], [1], [0, 0, 1, 1], [], []>} : vector<8x1024xbf16>, vector<1024x128xbf16>, vector<8x128xf32> -> vector<8x128xf32>
    %c26624 = arith.constant 26624 : index
    %c0_25 = arith.constant 0 : index
    %33 = vector.load %arg4[%c26624, %c0_25] : memref<35456x128xbf16, #tpu.memory_space<vmem>>, vector<1024x128xbf16>
    %cst_26 = arith.constant dense<0.000000e+00> : vector<8x128xf32>
    %34 = tpu.matmul %28, %33, %cst_26 {dimension_numbers = #tpu.dot_dimension_numbers<[1], [0], [0], [1], [0, 0, 1, 1], [], []>} : vector<8x1024xbf16>, vector<1024x128xbf16>, vector<8x128xf32> -> vector<8x128xf32>
    %c27648 = arith.constant 27648 : index
    %c0_27 = arith.constant 0 : index
    %35 = vector.load %arg4[%c27648, %c0_27] : memref<35456x128xbf16, #tpu.memory_space<vmem>>, vector<1024x128xbf16>
    %cst_28 = arith.constant dense<0.000000e+00> : vector<8x128xf32>
    %36 = tpu.matmul %28, %35, %cst_28 {dimension_numbers = #tpu.dot_dimension_numbers<[1], [0], [0], [1], [0, 0, 1, 1], [], []>} : vector<8x1024xbf16>, vector<1024x128xbf16>, vector<8x128xf32> -> vector<8x128xf32>
    %37 = tpu.concatenate %30, %32, %34, %36 in 1 : vector<8x128xf32>, vector<8x128xf32>, vector<8x128xf32>, vector<8x128xf32> -> vector<8x512xf32>
    %c0_29 = arith.constant 0 : index
    %c1024 = arith.constant 1024 : index
    %38 = vector.load %arg1[%c0_29, %c1024] : memref<1x3840xf32, #tpu.memory_space<vmem>>, vector<1x512xf32>
    %39 = vector.broadcast %38 : vector<1x512xf32> to vector<8x512xf32>
    %40 = arith.addf %37, %39 : vector<8x512xf32>
    %cst_30 = arith.constant 0.000000e+00 : f32
    %41 = vector.broadcast %cst_30 : f32 to vector<8x512xf32>
    %42 = arith.maximumf %40, %41 : vector<8x512xf32>
    %43 = arith.truncf %42 : vector<8x512xf32> to vector<8x512xbf16>
    %c28672 = arith.constant 28672 : index
    %c0_31 = arith.constant 0 : index
    %44 = vector.load %arg4[%c28672, %c0_31] : memref<35456x128xbf16, #tpu.memory_space<vmem>>, vector<512x128xbf16>
    %cst_32 = arith.constant dense<0.000000e+00> : vector<8x128xf32>
    %45 = tpu.matmul %43, %44, %cst_32 {dimension_numbers = #tpu.dot_dimension_numbers<[1], [0], [0], [1], [0, 0, 1, 1], [], []>} : vector<8x512xbf16>, vector<512x128xbf16>, vector<8x128xf32> -> vector<8x128xf32>
    %c29184 = arith.constant 29184 : index
    %c0_33 = arith.constant 0 : index
    %46 = vector.load %arg4[%c29184, %c0_33] : memref<35456x128xbf16, #tpu.memory_space<vmem>>, vector<512x128xbf16>
    %cst_34 = arith.constant dense<0.000000e+00> : vector<8x128xf32>
    %47 = tpu.matmul %43, %46, %cst_34 {dimension_numbers = #tpu.dot_dimension_numbers<[1], [0], [0], [1], [0, 0, 1, 1], [], []>} : vector<8x512xbf16>, vector<512x128xbf16>, vector<8x128xf32> -> vector<8x128xf32>
    %c29696 = arith.constant 29696 : index
    %c0_35 = arith.constant 0 : index
    %48 = vector.load %arg4[%c29696, %c0_35] : memref<35456x128xbf16, #tpu.memory_space<vmem>>, vector<512x128xbf16>
    %cst_36 = arith.constant dense<0.000000e+00> : vector<8x128xf32>
    %49 = tpu.matmul %43, %48, %cst_36 {dimension_numbers = #tpu.dot_dimension_numbers<[1], [0], [0], [1], [0, 0, 1, 1], [], []>} : vector<8x512xbf16>, vector<512x128xbf16>, vector<8x128xf32> -> vector<8x128xf32>
    %c30208 = arith.constant 30208 : index
    %c0_37 = arith.constant 0 : index
    %50 = vector.load %arg4[%c30208, %c0_37] : memref<35456x128xbf16, #tpu.memory_space<vmem>>, vector<512x128xbf16>
    %cst_38 = arith.constant dense<0.000000e+00> : vector<8x128xf32>
    %51 = tpu.matmul %43, %50, %cst_38 {dimension_numbers = #tpu.dot_dimension_numbers<[1], [0], [0], [1], [0, 0, 1, 1], [], []>} : vector<8x512xbf16>, vector<512x128xbf16>, vector<8x128xf32> -> vector<8x128xf32>
    %52 = tpu.concatenate %45, %47, %49, %51 in 1 : vector<8x128xf32>, vector<8x128xf32>, vector<8x128xf32>, vector<8x128xf32> -> vector<8x512xf32>
    %c0_39 = arith.constant 0 : index
    %c1536 = arith.constant 1536 : index
    %53 = vector.load %arg1[%c0_39, %c1536] : memref<1x3840xf32, #tpu.memory_space<vmem>>, vector<1x512xf32>
    %54 = vector.broadcast %53 : vector<1x512xf32> to vector<8x512xf32>
    %55 = arith.addf %52, %54 : vector<8x512xf32>
    %cst_40 = arith.constant 0.000000e+00 : f32
    %56 = vector.broadcast %cst_40 : f32 to vector<8x512xf32>
    %57 = arith.maximumf %55, %56 : vector<8x512xf32>
    %58 = arith.truncf %57 : vector<8x512xf32> to vector<8x512xbf16>
    %c30720 = arith.constant 30720 : index
    %c0_41 = arith.constant 0 : index
    %59 = vector.load %arg4[%c30720, %c0_41] : memref<35456x128xbf16, #tpu.memory_space<vmem>>, vector<512x128xbf16>
    %cst_42 = arith.constant dense<0.000000e+00> : vector<8x128xf32>
    %60 = tpu.matmul %58, %59, %cst_42 {dimension_numbers = #tpu.dot_dimension_numbers<[1], [0], [0], [1], [0, 0, 1, 1], [], []>} : vector<8x512xbf16>, vector<512x128xbf16>, vector<8x128xf32> -> vector<8x128xf32>
    %c31232 = arith.constant 31232 : index
    %c0_43 = arith.constant 0 : index
    %61 = vector.load %arg4[%c31232, %c0_43] : memref<35456x128xbf16, #tpu.memory_space<vmem>>, vector<512x128xbf16>
    %cst_44 = arith.constant dense<0.000000e+00> : vector<8x128xf32>
    %62 = tpu.matmul %58, %61, %cst_44 {dimension_numbers = #tpu.dot_dimension_numbers<[1], [0], [0], [1], [0, 0, 1, 1], [], []>} : vector<8x512xbf16>, vector<512x128xbf16>, vector<8x128xf32> -> vector<8x128xf32>
    %c31744 = arith.constant 31744 : index
    %c0_45 = arith.constant 0 : index
    %63 = vector.load %arg4[%c31744, %c0_45] : memref<35456x128xbf16, #tpu.memory_space<vmem>>, vector<512x128xbf16>
    %cst_46 = arith.constant dense<0.000000e+00> : vector<8x128xf32>
    %64 = tpu.matmul %58, %63, %cst_46 {dimension_numbers = #tpu.dot_dimension_numbers<[1], [0], [0], [1], [0, 0, 1, 1], [], []>} : vector<8x512xbf16>, vector<512x128xbf16>, vector<8x128xf32> -> vector<8x128xf32>
    %c32256 = arith.constant 32256 : index
    %c0_47 = arith.constant 0 : index
    %65 = vector.load %arg4[%c32256, %c0_47] : memref<35456x128xbf16, #tpu.memory_space<vmem>>, vector<512x128xbf16>
    %cst_48 = arith.constant dense<0.000000e+00> : vector<8x128xf32>
    %66 = tpu.matmul %58, %65, %cst_48 {dimension_numbers = #tpu.dot_dimension_numbers<[1], [0], [0], [1], [0, 0, 1, 1], [], []>} : vector<8x512xbf16>, vector<512x128xbf16>, vector<8x128xf32> -> vector<8x128xf32>
    %67 = tpu.concatenate %60, %62, %64, %66 in 1 : vector<8x128xf32>, vector<8x128xf32>, vector<8x128xf32>, vector<8x128xf32> -> vector<8x512xf32>
    %c0_49 = arith.constant 0 : index
    %c2048 = arith.constant 2048 : index
    %68 = vector.load %arg1[%c0_49, %c2048] : memref<1x3840xf32, #tpu.memory_space<vmem>>, vector<1x512xf32>
    %69 = vector.broadcast %68 : vector<1x512xf32> to vector<8x512xf32>
    %70 = arith.addf %67, %69 : vector<8x512xf32>
    %cst_50 = arith.constant 0.000000e+00 : f32
    %71 = vector.broadcast %cst_50 : f32 to vector<8x512xf32>
    %72 = arith.maximumf %70, %71 : vector<8x512xf32>
    %73 = arith.truncf %72 : vector<8x512xf32> to vector<8x512xbf16>
    %c32768 = arith.constant 32768 : index
    %c0_51 = arith.constant 0 : index
    %74 = vector.load %arg4[%c32768, %c0_51] : memref<35456x128xbf16, #tpu.memory_space<vmem>>, vector<512x128xbf16>
    %cst_52 = arith.constant dense<0.000000e+00> : vector<8x128xf32>
    %75 = tpu.matmul %73, %74, %cst_52 {dimension_numbers = #tpu.dot_dimension_numbers<[1], [0], [0], [1], [0, 0, 1, 1], [], []>} : vector<8x512xbf16>, vector<512x128xbf16>, vector<8x128xf32> -> vector<8x128xf32>
    %c33280 = arith.constant 33280 : index
    %c0_53 = arith.constant 0 : index
    %76 = vector.load %arg4[%c33280, %c0_53] : memref<35456x128xbf16, #tpu.memory_space<vmem>>, vector<512x128xbf16>
    %cst_54 = arith.constant dense<0.000000e+00> : vector<8x128xf32>
    %77 = tpu.matmul %73, %76, %cst_54 {dimension_numbers = #tpu.dot_dimension_numbers<[1], [0], [0], [1], [0, 0, 1, 1], [], []>} : vector<8x512xbf16>, vector<512x128xbf16>, vector<8x128xf32> -> vector<8x128xf32>
    %78 = tpu.concatenate %75, %77 in 1 : vector<8x128xf32>, vector<8x128xf32> -> vector<8x256xf32>
    %c0_55 = arith.constant 0 : index
    %c2560 = arith.constant 2560 : index
    %79 = vector.load %arg1[%c0_55, %c2560] : memref<1x3840xf32, #tpu.memory_space<vmem>>, vector<1x256xf32>
    %80 = vector.broadcast %79 : vector<1x256xf32> to vector<8x256xf32>
    %81 = arith.addf %78, %80 : vector<8x256xf32>
    %cst_56 = arith.constant 0.000000e+00 : f32
    %82 = vector.broadcast %cst_56 : f32 to vector<8x256xf32>
    %83 = arith.maximumf %81, %82 : vector<8x256xf32>
    %84 = arith.truncf %83 : vector<8x256xf32> to vector<8x256xbf16>
    %c33792 = arith.constant 33792 : index
    %c0_57 = arith.constant 0 : index
    %85 = vector.load %arg4[%c33792, %c0_57] : memref<35456x128xbf16, #tpu.memory_space<vmem>>, vector<256x128xbf16>
    %cst_58 = arith.constant dense<0.000000e+00> : vector<8x128xf32>
    %86 = tpu.matmul %84, %85, %cst_58 {dimension_numbers = #tpu.dot_dimension_numbers<[1], [0], [0], [1], [0, 0, 1, 1], [], []>} : vector<8x256xbf16>, vector<256x128xbf16>, vector<8x128xf32> -> vector<8x128xf32>
    %c34048 = arith.constant 34048 : index
    %c0_59 = arith.constant 0 : index
    %87 = vector.load %arg4[%c34048, %c0_59] : memref<35456x128xbf16, #tpu.memory_space<vmem>>, vector<256x128xbf16>
    %cst_60 = arith.constant dense<0.000000e+00> : vector<8x128xf32>
    %88 = tpu.matmul %84, %87, %cst_60 {dimension_numbers = #tpu.dot_dimension_numbers<[1], [0], [0], [1], [0, 0, 1, 1], [], []>} : vector<8x256xbf16>, vector<256x128xbf16>, vector<8x128xf32> -> vector<8x128xf32>
    %89 = tpu.concatenate %86, %88 in 1 : vector<8x128xf32>, vector<8x128xf32> -> vector<8x256xf32>
    %c0_61 = arith.constant 0 : index
    %c2816 = arith.constant 2816 : index
    %90 = vector.load %arg1[%c0_61, %c2816] : memref<1x3840xf32, #tpu.memory_space<vmem>>, vector<1x256xf32>
    %91 = vector.broadcast %90 : vector<1x256xf32> to vector<8x256xf32>
    %92 = arith.addf %89, %91 : vector<8x256xf32>
    %cst_62 = arith.constant 0.000000e+00 : f32
    %93 = vector.broadcast %cst_62 : f32 to vector<8x256xf32>
    %94 = arith.maximumf %92, %93 : vector<8x256xf32>
    %95 = arith.truncf %94 : vector<8x256xf32> to vector<8x256xbf16>
    %c34304 = arith.constant 34304 : index
    %c0_63 = arith.constant 0 : index
    %96 = vector.load %arg4[%c34304, %c0_63] : memref<35456x128xbf16, #tpu.memory_space<vmem>>, vector<256x128xbf16>
    %cst_64 = arith.constant dense<0.000000e+00> : vector<8x128xf32>
    %97 = tpu.matmul %95, %96, %cst_64 {dimension_numbers = #tpu.dot_dimension_numbers<[1], [0], [0], [1], [0, 0, 1, 1], [], []>} : vector<8x256xbf16>, vector<256x128xbf16>, vector<8x128xf32> -> vector<8x128xf32>
    %c34560 = arith.constant 34560 : index
    %c0_65 = arith.constant 0 : index
    %98 = vector.load %arg4[%c34560, %c0_65] : memref<35456x128xbf16, #tpu.memory_space<vmem>>, vector<256x128xbf16>
    %cst_66 = arith.constant dense<0.000000e+00> : vector<8x128xf32>
    %99 = tpu.matmul %95, %98, %cst_66 {dimension_numbers = #tpu.dot_dimension_numbers<[1], [0], [0], [1], [0, 0, 1, 1], [], []>} : vector<8x256xbf16>, vector<256x128xbf16>, vector<8x128xf32> -> vector<8x128xf32>
    %100 = tpu.concatenate %97, %99 in 1 : vector<8x128xf32>, vector<8x128xf32> -> vector<8x256xf32>
    %c0_67 = arith.constant 0 : index
    %c3072_68 = arith.constant 3072 : index
    %101 = vector.load %arg1[%c0_67, %c3072_68] : memref<1x3840xf32, #tpu.memory_space<vmem>>, vector<1x256xf32>
    %102 = vector.broadcast %101 : vector<1x256xf32> to vector<8x256xf32>
    %103 = arith.addf %100, %102 : vector<8x256xf32>
    %cst_69 = arith.constant 0.000000e+00 : f32
    %104 = vector.broadcast %cst_69 : f32 to vector<8x256xf32>
    %105 = arith.maximumf %103, %104 : vector<8x256xf32>
    %106 = arith.truncf %105 : vector<8x256xf32> to vector<8x256xbf16>
    %c34816 = arith.constant 34816 : index
    %c0_70 = arith.constant 0 : index
    %107 = vector.load %arg4[%c34816, %c0_70] : memref<35456x128xbf16, #tpu.memory_space<vmem>>, vector<256x128xbf16>
    %cst_71 = arith.constant dense<0.000000e+00> : vector<8x128xf32>
    %108 = tpu.matmul %106, %107, %cst_71 {dimension_numbers = #tpu.dot_dimension_numbers<[1], [0], [0], [1], [0, 0, 1, 1], [], []>} : vector<8x256xbf16>, vector<256x128xbf16>, vector<8x128xf32> -> vector<8x128xf32>
    %c0_72 = arith.constant 0 : index
    %c3328 = arith.constant 3328 : index
    %109 = vector.load %arg1[%c0_72, %c3328] : memref<1x3840xf32, #tpu.memory_space<vmem>>, vector<1x128xf32>
    %110 = vector.broadcast %109 : vector<1x128xf32> to vector<8x128xf32>
    %111 = arith.addf %108, %110 : vector<8x128xf32>
    %cst_73 = arith.constant 0.000000e+00 : f32
    %112 = vector.broadcast %cst_73 : f32 to vector<8x128xf32>
    %113 = arith.maximumf %111, %112 : vector<8x128xf32>
    %114 = arith.truncf %113 : vector<8x128xf32> to vector<8x128xbf16>
    %c35072 = arith.constant 35072 : index
    %c0_74 = arith.constant 0 : index
    %115 = vector.load %arg4[%c35072, %c0_74] : memref<35456x128xbf16, #tpu.memory_space<vmem>>, vector<128x128xbf16>
    %cst_75 = arith.constant dense<0.000000e+00> : vector<8x128xf32>
    %116 = tpu.matmul %114, %115, %cst_75 {dimension_numbers = #tpu.dot_dimension_numbers<[1], [0], [0], [1], [0, 0, 1, 1], [], []>} : vector<8x128xbf16>, vector<128x128xbf16>, vector<8x128xf32> -> vector<8x128xf32>
    %c0_76 = arith.constant 0 : index
    %c3456 = arith.constant 3456 : index
    %117 = vector.load %arg1[%c0_76, %c3456] : memref<1x3840xf32, #tpu.memory_space<vmem>>, vector<1x128xf32>
    %118 = vector.broadcast %117 : vector<1x128xf32> to vector<8x128xf32>
    %119 = arith.addf %116, %118 : vector<8x128xf32>
    %cst_77 = arith.constant 0.000000e+00 : f32
    %120 = vector.broadcast %cst_77 : f32 to vector<8x128xf32>
    %121 = arith.maximumf %119, %120 : vector<8x128xf32>
    %122 = arith.truncf %121 : vector<8x128xf32> to vector<8x128xbf16>
    %c35200 = arith.constant 35200 : index
    %c0_78 = arith.constant 0 : index
    %123 = vector.load %arg4[%c35200, %c0_78] : memref<35456x128xbf16, #tpu.memory_space<vmem>>, vector<128x128xbf16>
    %cst_79 = arith.constant dense<0.000000e+00> : vector<8x128xf32>
    %124 = tpu.matmul %122, %123, %cst_79 {dimension_numbers = #tpu.dot_dimension_numbers<[1], [0], [0], [1], [0, 0, 1, 1], [], []>} : vector<8x128xbf16>, vector<128x128xbf16>, vector<8x128xf32> -> vector<8x128xf32>
    %c0_80 = arith.constant 0 : index
    %c3584 = arith.constant 3584 : index
    %125 = vector.load %arg1[%c0_80, %c3584] : memref<1x3840xf32, #tpu.memory_space<vmem>>, vector<1x128xf32>
    %126 = vector.broadcast %125 : vector<1x128xf32> to vector<8x128xf32>
    %127 = arith.addf %124, %126 : vector<8x128xf32>
    %cst_81 = arith.constant 0.000000e+00 : f32
    %128 = vector.broadcast %cst_81 : f32 to vector<8x128xf32>
    %129 = arith.maximumf %127, %128 : vector<8x128xf32>
    %130 = arith.truncf %129 : vector<8x128xf32> to vector<8x128xbf16>
    %c35328 = arith.constant 35328 : index
    %c0_82 = arith.constant 0 : index
    %131 = vector.load %arg4[%c35328, %c0_82] : memref<35456x128xbf16, #tpu.memory_space<vmem>>, vector<128x128xbf16>
    %cst_83 = arith.constant dense<0.000000e+00> : vector<8x128xf32>
    %132 = tpu.matmul %130, %131, %cst_83 {dimension_numbers = #tpu.dot_dimension_numbers<[1], [0], [0], [1], [0, 0, 1, 1], [], []>} : vector<8x128xbf16>, vector<128x128xbf16>, vector<8x128xf32> -> vector<8x128xf32>
    %c0_84 = arith.constant 0 : index
    %c3712 = arith.constant 3712 : index
    %133 = vector.load %arg1[%c0_84, %c3712] : memref<1x3840xf32, #tpu.memory_space<vmem>>, vector<1x128xf32>
    %134 = vector.broadcast %133 : vector<1x128xf32> to vector<8x128xf32>
    %135 = arith.addf %132, %134 : vector<8x128xf32>
    %c0_85 = arith.constant 0 : index
    %c0_86 = arith.constant 0 : index
    %136 = vector.load %arg3[%c0_85, %c0_86] : memref<8x128xf32, #tpu.memory_space<vmem>>, vector<8x128xf32>
    tpu.vector_store %arg3[%c0_85, %c0_86], %135 {strides = array<i32>} : memref<8x128xf32, #tpu.memory_space<vmem>>, vector<8x128xf32>,
    return
  }
}

</mosaic_0001>

<llo_original>
// kernel: net_forward.1
$region0: #{net_forward.1}
  #allocation0 [shape = 'u32[]', space=smem, size = 0x4, offset = 0x4, fixed_abs, tag = 'smem constant byte address 0x4 - core index']
  #allocation1 [shape = 'u32[144,128]{1,0:T(1,128)}', space=vmem, size = 0x12000, scoped, tag = 'internal scratch']
  #allocation2 [shape = 'bf16[35456,128]{1,0:T(16,128)(2,1)}', space=vmem, size = 0x8a8000, scoped, tag = 'scratch operand']
  #allocation3 [shape = 's32[1]{0}', space=sflag, size = 0x4, scoped, tag = 'scratch operand']
  #allocation6 [shape = 's32[]', space=sflag, size = 0x4, offset = 0, fixed_abs, tag = 'sflag constant byte address 0x0 - dummy sync flag']
  #allocation7 [shape = 's32[]', space=sflag, size = 0x4, offset = 0, fixed_abs, tag = 'sflag constant byte address 0x0 - dummy sync flag']
  #allocation8 [shape = 'u32[]', space=smem, size = 0x4, offset = 0x44, fixed_abs, tag = 'smem constant byte address 0x44 - assertion arg 0']
  #allocation9 [shape = 'u32[]', space=smem, size = 0x4, offset = 0x48, fixed_abs, tag = 'smem constant byte address 0x48 - assertion arg 1']
  %s0 = inlined_call_operand.vmem [shape: f32[8,3072], index: 0, kind: input, shape index: {}]
  %s1 = inlined_call_operand.hbm [shape: f32[1,3840], index: 1, kind: input, shape index: {}]
  %s2 = inlined_call_operand.hbm [shape: bf16[35456,128], index: 2, kind: input, shape index: {}]
  %s3 = inlined_call_operand.vmem [shape: f32[8,128], index: 3, kind: output, shape index: {}]
  %s4 = sld [smem:[#allocation0]]
  $region26: #{net_forward.1} parent=0
    _
  %s6 = ssub.s32 1, %s4
  %s7 = scalar_select 0, %s6, %s4
  $region1: #{net_forward.1} parent=0
    #allocation4 [shape = 'u8[15360]{0}', space=vmem, size = 0x3c00, scoped, tag = 'input window, operand 1, single buffered']
    #allocation5 [shape = 's32[1]{0}', space=sflag, size = 0x4, scoped, tag = 'scoped memory for net_forward.1']
    %8 = vsyncpa [#allocation5], 0
    // Predicated region
    $region2: #{net_forward.1} parent=1 // pred_check
      _
    $region3: #{net_forward.1} parent=1 // pred_check_branch
      %10 = sbr.rel (0) target = $region5
    $region4: #{net_forward.1} parent=1 // pred_region
      _
    $region5: #{net_forward.1} parent=1 // pred_fallthru
      _
    // Predicated region
    $region6: #{net_forward.1} parent=1 // pred_check
      _
    $region7: #{net_forward.1} parent=1 // pred_check_branch
      %12 = sbr.rel (0) target = $region9
    $region8: #{net_forward.1} parent=1 // pred_region
      %s14 = ssub.s32 480, 480
      %15 = vsyncadd [#allocation5], %s14
      %s17 = sshll.u32 [#allocation4], 4
      %s18 = int_to_ptr.vmem [resolvable:$true] %s17
      %20 = dma.hbm_to_vmem [thread:$0]  %s1, 480, %s18, [#allocation5]
    $region9: #{net_forward.1} parent=1 // pred_fallthru
      _
    // Predicated region
    $region10: #{net_forward.1} parent=1 // pred_check
      _
    $region11: #{net_forward.1} parent=1 // pred_check_branch
      %22 = sbr.rel (0) target = $region13
    $region12: #{net_forward.1} parent=1 // pred_region
      %23 = dma.done [#allocation5], 480
    $region13: #{net_forward.1} parent=1 // pred_fallthru
      _
    // Predicated region
    $region14: #{net_forward.1} parent=1 // pred_check
      _
    $region15: #{net_forward.1} parent=1 // pred_check_branch
      %26 = sbr.rel target = $region17
    $region16: #{net_forward.1} parent=1 // pred_region
      %27 = sst [smem:[#allocation8]] [#allocation7]
      %28 = sst [smem:[#allocation9]] [#allocation6]
    $region17: #{net_forward.1} parent=1 // pred_fallthru
      _
    %30 = shalt.err (0)
    %s32 = sshll.u32 [#allocation2], 4
    %s33 = int_to_ptr.vmem [resolvable:$true] %s32
    %35 = dma.hbm_to_vmem [thread:$0]  %s2, 283648, %s33, [#allocation3]
    %s36 = smul.u32 4, 4432
    %s37 = smul.u32 %s36, 1
    %s38 = sshll.u32 %s37, 4
    %39 = dma.done [#allocation3], %s38
    %v40 = vld [vmem:[%s0] sm:$0xff]
    %v41 = vld [vmem:[%s0 + $0x8] sm:$0xff]
    %v42 = vld [vmem:[%s0 + $0x10] sm:$0xff]
    %v43 = vld [vmem:[%s0 + $0x18] sm:$0xff]
    %v44 = vld [vmem:[%s0 + $0x20] sm:$0xff]
    %v45 = vld [vmem:[%s0 + $0x28] sm:$0xff]
    %v46 = vld [vmem:[%s0 + $0x30] sm:$0xff]
    %v47 = vld [vmem:[%s0 + $0x38] sm:$0xff]
    %v48 = vld [vmem:[%s0 + $0x40] sm:$0xff]
    %v49 = vld [vmem:[%s0 + $0x48] sm:$0xff]
    %v50 = vld [vmem:[%s0 + $0x50] sm:$0xff]
    %v51 = vld [vmem:[%s0 + $0x58] sm:$0xff]
    %v52 = vld [vmem:[%s0 + $0x60] sm:$0xff]
    %v53 = vld [vmem:[%s0 + $0x68] sm:$0xff]
    %v54 = vld [vmem:[%s0 + $0x70] sm:$0xff]
    %v55 = vld [vmem:[%s0 + $0x78] sm:$0xff]
    %v56 = vld [vmem:[%s0 + $0x80] sm:$0xff]
    %v57 = vld [vmem:[%s0 + $0x88] sm:$0xff]
    %v58 = vld [vmem:[%s0 + $0x90] sm:$0xff]
    %v59 = vld [vmem:[%s0 + $0x98] sm:$0xff]
    %v60 = vld [vmem:[%s0 + $0xa0] sm:$0xff]
    %v61 = vld [vmem:[%s0 + $0xa8] sm:$0xff]
    %v62 = vld [vmem:[%s0 + $0xb0] sm:$0xff]
    %v63 = vld [vmem:[%s0 + $0xb8] sm:$0xff]
    %v64 = vpack.c.bf16 %v40, %v40
    %v65 = vpack.c.bf16 %v41, %v41
    %v66 = vpack.c.bf16 %v42, %v42
    %v67 = vpack.c.bf16 %v43, %v43
    %v68 = vpack.c.bf16 %v44, %v44
    %v69 = vpack.c.bf16 %v45, %v45
    %v70 = vpack.c.bf16 %v46, %v46
    %v71 = vpack.c.bf16 %v47, %v47
    %v72 = vpack.c.bf16 %v48, %v48
    %v73 = vpack.c.bf16 %v49, %v49
    %v74 = vpack.c.bf16 %v50, %v50
    %v75 = vpack.c.bf16 %v51, %v51
    %v76 = vpack.c.bf16 %v52, %v52
    %v77 = vpack.c.bf16 %v53, %v53
    %v78 = vpack.c.bf16 %v54, %v54
    %v79 = vpack.c.bf16 %v55, %v55
    %v80 = vpack.c.bf16 %v56, %v56
    %v81 = vpack.c.bf16 %v57, %v57
    %v82 = vpack.c.bf16 %v58, %v58
    %v83 = vpack.c.bf16 %v59, %v59
    %v84 = vpack.c.bf16 %v60, %v60
    %v85 = vpack.c.bf16 %v61, %v61
    %v86 = vpack.c.bf16 %v62, %v62
    %v87 = vpack.c.bf16 %v63, %v63
    %v88 = vld [vmem:[#allocation2] sm:$0xff]
    %v89 = vld [vmem:[#allocation2 + $0x8] sm:$0xff]
    %v90 = vld [vmem:[#allocation2 + $0x10] sm:$0xff]
    %v91 = vld [vmem:[#allocation2 + $0x18] sm:$0xff]
    %v92 = vld [vmem:[#allocation2 + $0x20] sm:$0xff]
    %v93 = vld [vmem:[#allocation2 + $0x28] sm:$0xff]
    %v94 = vld [vmem:[#allocation2 + $0x30] sm:$0xff]
    %v95 = vld [vmem:[#allocation2 + $0x38] sm:$0xff]
    %v96 = vld [vmem:[#allocation2 + $0x40] sm:$0xff]
    %v97 = vld [vmem:[#allocation2 + $0x48] sm:$0xff]
    %v98 = vld [vmem:[#allocation2 + $0x50] sm:$0xff]
    %v99 = vld [vmem:[#allocation2 + $0x58] sm:$0xff]
    %v100 = vld [vmem:[#allocation2 + $0x60] sm:$0xff]
    %v101 = vld [vmem:[#allocation2 + $0x68] sm:$0xff]
    %v102 = vld [vmem:[#allocation2 + $0x70] sm:$0xff]
    %v103 = vld [vmem:[#allocation2 + $0x78] sm:$0xff]
    %v104 = vld [vmem:[#allocation2 + $0x80] sm:$0xff]
    %v105 = vld [vmem:[#allocation2 + $0x88] sm:$0xff]
    %v106 = vld [vmem:[#allocation2 + $0x90] sm:$0xff]
    %v107 = vld [vmem:[#allocation2 + $0x98] sm:$0xff]
    %v108 = vld [vmem:[#allocation2 + $0xa0] sm:$0xff]
    %v109 = vld [vmem:[#allocation2 + $0xa8] sm:$0xff]
    %v110 = vld [vmem:[#allocation2 + $0xb0] sm:$0xff]
    %v111 = vld [vmem:[#allocation2 + $0xb8] sm:$0xff]
    %v112 = vld [vmem:[#allocation2 + $0xc0] sm:$0xff]
    %v113 = vld [vmem:[#allocation2 + $0xc8] sm:$0xff]
    %v114 = vld [vmem:[#allocation2 + $0xd0] sm:$0xff]
    %v115 = vld [vmem:[#allocation2 + $0xd8] sm:$0xff]
    %v116 = vld [vmem:[#allocation2 + $0xe0] sm:$0xff]
    %v117 = vld [vmem:[#allocation2 + $0xe8] sm:$0xff]
    %v118 = vld [vmem:[#allocation2 + $0xf0] sm:$0xff]
    %v119 = vld [vmem:[#allocation2 + $0xf8] sm:$0xff]
    %v120 = vld [vmem:[#allocation2 + $0x100] sm:$0xff]
    %v121 = vld [vmem:[#allocation2 + $0x108] sm:$0xff]
    %v122 = vld [vmem:[#allocation2 + $0x110] sm:$0xff]
    %v123 = vld [vmem:[#allocation2 + $0x118] sm:$0xff]
    %v124 = vld [vmem:[#allocation2 + $0x120] sm:$0xff]
    %v125 = vld [vmem:[#allocation2 + $0x128] sm:$0xff]
    %v126 = vld [vmem:[#allocation2 + $0x130] sm:$0xff]
    %v127 = vld [vmem:[#allocation2 + $0x138] sm:$0xff]
    %v128 = vld [vmem:[#allocation2 + $0x140] sm:$0xff]
    %v129 = vld [vmem:[#allocation2 + $0x148] sm:$0xff]
    %v130 = vld [vmem:[#allocation2 + $0x150] sm:$0xff]
    %v131 = vld [vmem:[#allocation2 + $0x158] sm:$0xff]
    %v132 = vld [vmem:[#allocation2 + $0x160] sm:$0xff]
    %v133 = vld [vmem:[#allocation2 + $0x168] sm:$0xff]
    %v134 = vld [vmem:[#allocation2 + $0x170] sm:$0xff]
    %v135 = vld [vmem:[#allocation2 + $0x178] sm:$0xff]
    %v136 = vld [vmem:[#allocation2 + $0x180] sm:$0xff]
    %v137 = vld [vmem:[#allocation2 + $0x188] sm:$0xff]
    %v138 = vld [vmem:[#allocation2 + $0x190] sm:$0xff]
    %v139 = vld [vmem:[#allocation2 + $0x198] sm:$0xff]
    %v140 = vld [vmem:[#allocation2 + $0x1a0] sm:$0xff]
    %v141 = vld [vmem:[#allocation2 + $0x1a8] sm:$0xff]
    %v142 = vld [vmem:[#allocation2 + $0x1b0] sm:$0xff]
    %v143 = vld [vmem:[#allocation2 + $0x1b8] sm:$0xff]
    %v144 = vld [vmem:[#allocation2 + $0x1c0] sm:$0xff]
    %v145 = vld [vmem:[#allocation2 + $0x1c8] sm:$0xff]
    %v146 = vld [vmem:[#allocation2 + $0x1d0] sm:$0xff]
    %v147 = vld [vmem:[#allocation2 + $0x1d8] sm:$0xff]
    %v148 = vld [vmem:[#allocation2 + $0x1e0] sm:$0xff]
    %v149 = vld [vmem:[#allocation2 + $0x1e8] sm:$0xff]
    %v150 = vld [vmem:[#allocation2 + $0x1f0] sm:$0xff]
    %v151 = vld [vmem:[#allocation2 + $0x1f8] sm:$0xff]
    %v152 = vld [vmem:[#allocation2 + $0x200] sm:$0xff]
    %v153 = vld [vmem:[#allocation2 + $0x208] sm:$0xff]
    %v154 = vld [vmem:[#allocation2 + $0x210] sm:$0xff]
    %v155 = vld [vmem:[#allocation2 + $0x218] sm:$0xff]
    %v156 = vld [vmem:[#allocation2 + $0x220] sm:$0xff]
    %v157 = vld [vmem:[#allocation2 + $0x228] sm:$0xff]
    %v158 = vld [vmem:[#allocation2 + $0x230] sm:$0xff]
    %v159 = vld [vmem:[#allocation2 + $0x238] sm:$0xff]
    %v160 = vld [vmem:[#allocation2 + $0x240] sm:$0xff]
    %v161 = vld [vmem:[#allocation2 + $0x248] sm:$0xff]
    %v162 = vld [vmem:[#allocation2 + $0x250] sm:$0xff]
    %v163 = vld [vmem:[#allocation2 + $0x258] sm:$0xff]
    %v164 = vld [vmem:[#allocation2 + $0x260] sm:$0xff]
    %v165 = vld [vmem:[#allocation2 + $0x268] sm:$0xff]
    %v166 = vld [vmem:[#allocation2 + $0x270] sm:$0xff]
    %v167 = vld [vmem:[#allocation2 + $0x278] sm:$0xff]
    %v168 = vld [vmem:[#allocation2 + $0x280] sm:$0xff]
    %v169 = vld [vmem:[#allocation2 + $0x288] sm:$0xff]
    %v170 = vld [vmem:[#allocation2 + $0x290] sm:$0xff]
    %v171 = vld [vmem:[#allocation2 + $0x298] sm:$0xff]
    %v172 = vld [vmem:[#allocation2 + $0x2a0] sm:$0xff]
    %v173 = vld [vmem:[#allocation2 + $0x2a8] sm:$0xff]
    %v174 = vld [vmem:[#allocation2 + $0x2b0] sm:$0xff]
    %v175 = vld [vmem:[#allocation2 + $0x2b8] sm:$0xff]
    %v176 = vld [vmem:[#allocation2 + $0x2c0] sm:$0xff]
    %v177 = vld [vmem:[#allocation2 + $0x2c8] sm:$0xff]
    %v178 = vld [vmem:[#allocation2 + $0x2d0] sm:$0xff]
    %v179 = vld [vmem:[#allocation2 + $0x2d8] sm:$0xff]
    %v180 = vld [vmem:[#allocation2 + $0x2e0] sm:$0xff]
    %v181 = vld [vmem:[#allocation2 + $0x2e8] sm:$0xff]
    %v182 = vld [vmem:[#allocation2 + $0x2f0] sm:$0xff]
    %v183 = vld [vmem:[#allocation2 + $0x2f8] sm:$0xff]
    %v184 = vld [vmem:[#allocation2 + $0x300] sm:$0xff]
    %v185 = vld [vmem:[#allocation2 + $0x308] sm:$0xff]
    %v186 = vld [vmem:[#allocation2 + $0x310] sm:$0xff]
    %v187 = vld [vmem:[#allocation2 + $0x318] sm:$0xff]
    %v188 = vld [vmem:[#allocation2 + $0x320] sm:$0xff]
    %v189 = vld [vmem:[#allocation2 + $0x328] sm:$0xff]
    %v190 = vld [vmem:[#allocation2 + $0x330] sm:$0xff]
    %v191 = vld [vmem:[#allocation2 + $0x338] sm:$0xff]
    %v192 = vld [vmem:[#allocation2 + $0x340] sm:$0xff]
    %v193 = vld [vmem:[#allocation2 + $0x348] sm:$0xff]
    %v194 = vld [vmem:[#allocation2 + $0x350] sm:$0xff]
    %v195 = vld [vmem:[#allocation2 + $0x358] sm:$0xff]
    %v196 = vld [vmem:[#allocation2 + $0x360] sm:$0xff]
    %v197 = vld [vmem:[#allocation2 + $0x368] sm:$0xff]
    %v198 = vld [vmem:[#allocation2 + $0x370] sm:$0xff]
    %v199 = vld [vmem:[#allocation2 + $0x378] sm:$0xff]
    %v200 = vld [vmem:[#allocation2 + $0x380] sm:$0xff]
    %v201 = vld [vmem:[#allocation2 + $0x388] sm:$0xff]
    %v202 = vld [vmem:[#allocation2 + $0x390] sm:$0xff]
    %v203 = vld [vmem:[#allocation2 + $0x398] sm:$0xff]
    %v204 = vld [vmem:[#allocation2 + $0x3a0] sm:$0xff]
    %v205 = vld [vmem:[#allocation2 + $0x3a8] sm:$0xff]
    %v206 = vld [vmem:[#allocation2 + $0x3b0] sm:$0xff]
    %v207 = vld [vmem:[#allocation2 + $0x3b8] sm:$0xff]
    %v208 = vld [vmem:[#allocation2 + $0x3c0] sm:$0xff]
    %v209 = vld [vmem:[#allocation2 + $0x3c8] sm:$0xff]
    %v210 = vld [vmem:[#allocation2 + $0x3d0] sm:$0xff]
    %v211 = vld [vmem:[#allocation2 + $0x3d8] sm:$0xff]
    %v212 = vld [vmem:[#allocation2 + $0x3e0] sm:$0xff]
    %v213 = vld [vmem:[#allocation2 + $0x3e8] sm:$0xff]
    %v214 = vld [vmem:[#allocation2 + $0x3f0] sm:$0xff]
    %v215 = vld [vmem:[#allocation2 + $0x3f8] sm:$0xff]
    %v216 = vld [vmem:[#allocation2 + $0x400] sm:$0xff]
    %v217 = vld [vmem:[#allocation2 + $0x408] sm:$0xff]
    %v218 = vld [vmem:[#allocation2 + $0x410] sm:$0xff]
    %v219 = vld [vmem:[#allocation2 + $0x418] sm:$0xff]
    %v220 = vld [vmem:[#allocation2 + $0x420] sm:$0xff]
    %v221 = vld [vmem:[#allocation2 + $0x428] sm:$0xff]
    %v222 = vld [vmem:[#allocation2 + $0x430] sm:$0xff]
    %v223 = vld [vmem:[#allocation2 + $0x438] sm:$0xff]
    %v224 = vld [vmem:[#allocation2 + $0x440] sm:$0xff]
    %v225 = vld [vmem:[#allocation2 + $0x448] sm:$0xff]
    %v226 = vld [vmem:[#allocation2 + $0x450] sm:$0xff]
    %v227 = vld [vmem:[#allocation2 + $0x458] sm:$0xff]
    %v228 = vld [vmem:[#allocation2 + $0x460] sm:$0xff]
    %v229 = vld [vmem:[#allocation2 + $0x468] sm:$0xff]
    %v230 = vld [vmem:[#allocation2 + $0x470] sm:$0xff]
    %v231 = vld [vmem:[#allocation2 + $0x478] sm:$0xff]
    %v232 = vld [vmem:[#allocation2 + $0x480] sm:$0xff]
    %v233 = vld [vmem:[#allocation2 + $0x488] sm:$0xff]
    %v234 = vld [vmem:[#allocation2 + $0x490] sm:$0xff]
    %v235 = vld [vmem:[#allocation2 + $0x498] sm:$0xff]
    %v236 = vld [vmem:[#allocation2 + $0x4a0] sm:$0xff]
    %v237 = vld [vmem:[#allocation2 + $0x4a8] sm:$0xff]
    %v238 = vld [vmem:[#allocation2 + $0x4b0] sm:$0xff]
    %v239 = vld [vmem:[#allocation2 + $0x4b8] sm:$0xff]
    %v240 = vld [vmem:[#allocation2 + $0x4c0] sm:$0xff]
    %v241 = vld [vmem:[#allocation2 + $0x4c8] sm:$0xff]
    %v242 = vld [vmem:[#allocation2 + $0x4d0] sm:$0xff]
    %v243 = vld [vmem:[#allocation2 + $0x4d8] sm:$0xff]
    %v244 = vld [vmem:[#allocation2 + $0x4e0] sm:$0xff]
    %v245 = vld [vmem:[#allocation2 + $0x4e8] sm:$0xff]
    %v246 = vld [vmem:[#allocation2 + $0x4f0] sm:$0xff]
    %v247 = vld [vmem:[#allocation2 + $0x4f8] sm:$0xff]
    %v248 = vld [vmem:[#allocation2 + $0x500] sm:$0xff]
    %v249 = vld [vmem:[#allocation2 + $0x508] sm:$0xff]
    %v250 = vld [vmem:[#allocation2 + $0x510] sm:$0xff]
    %v251 = vld [vmem:[#allocation2 + $0x518] sm:$0xff]
    %v252 = vld [vmem:[#allocation2 + $0x520] sm:$0xff]
    %v253 = vld [vmem:[#allocation2 + $0x528] sm:$0xff]
    %v254 = vld [vmem:[#allocation2 + $0x530] sm:$0xff]
    %v255 = vld [vmem:[#allocation2 + $0x538] sm:$0xff]
    %v256 = vld [vmem:[#allocation2 + $0x540] sm:$0xff]
    %v257 = vld [vmem:[#allocation2 + $0x548] sm:$0xff]
    %v258 = vld [vmem:[#allocation2 + $0x550] sm:$0xff]
    %v259 = vld [vmem:[#allocation2 + $0x558] sm:$0xff]
    %v260 = vld [vmem:[#allocation2 + $0x560] sm:$0xff]
    %v261 = vld [vmem:[#allocation2 + $0x568] sm:$0xff]
    %v262 = vld [vmem:[#allocation2 + $0x570] sm:$0xff]
    %v263 = vld [vmem:[#allocation2 + $0x578] sm:$0xff]
    %v264 = vld [vmem:[#allocation2 + $0x580] sm:$0xff]
    %v265 = vld [vmem:[#allocation2 + $0x588] sm:$0xff]
    %v266 = vld [vmem:[#allocation2 + $0x590] sm:$0xff]
    %v267 = vld [vmem:[#allocation2 + $0x598] sm:$0xff]
    %v268 = vld [vmem:[#allocation2 + $0x5a0] sm:$0xff]
    %v269 = vld [vmem:[#allocation2 + $0x5a8] sm:$0xff]
    %v270 = vld [vmem:[#allocation2 + $0x5b0] sm:$0xff]
    %v271 = vld [vmem:[#allocation2 + $0x5b8] sm:$0xff]
    %v272 = vld [vmem:[#allocation2 + $0x5c0] sm:$0xff]
    %v273 = vld [vmem:[#allocation2 + $0x5c8] sm:$0xff]
    %v274 = vld [vmem:[#allocation2 + $0x5d0] sm:$0xff]
    %v275 = vld [vmem:[#allocation2 + $0x5d8] sm:$0xff]
    %v276 = vld [vmem:[#allocation2 + $0x5e0] sm:$0xff]
    %v277 = vld [vmem:[#allocation2 + $0x5e8] sm:$0xff]
    %v278 = vld [vmem:[#allocation2 + $0x5f0] sm:$0xff]
    %v279 = vld [vmem:[#allocation2 + $0x5f8] sm:$0xff]
    %280 = vmatprep.subr.bf16.mxu0 0
    %281 = vmatpush1.bf16.msra.mxu0 %v88
    %282 = vmatprep.subr.bf16.mxu0 0
    %283 = vmatpush1.bf16.msra.mxu0 %v89
    %284 = vmatprep.subr.bf16.mxu0 0
    %285 = vmatpush1.bf16.msra.mxu0 %v90
    %286 = vmatprep.subr.bf16.mxu0 0
    %287 = vmatpush1.bf16.msra.mxu0 %v91
    %288 = vmatprep.subr.bf16.mxu0 0
    %289 = vmatpush1.bf16.msra.mxu0 %v92
    %290 = vmatprep.subr.bf16.mxu0 0
    %291 = vmatpush1.bf16.msra.mxu0 %v93
    %292 = vmatprep.subr.bf16.mxu0 0
    %293 = vmatpush1.bf16.msra.mxu0 %v94
    %294 = vmatprep.subr.bf16.mxu0 0
    %295 = vmatpush1.bf16.msra.mxu0 %v95
    %296 = vmatprep.subr.bf16.mxu0 0
    %297 = vmatpush1.bf16.msra.mxu0 %v96
    %298 = vmatprep.subr.bf16.mxu0 0
    %299 = vmatpush1.bf16.msra.mxu0 %v97
    %300 = vmatprep.subr.bf16.mxu0 0
    %301 = vmatpush1.bf16.msra.mxu0 %v98
    %302 = vmatprep.subr.bf16.mxu0 0
    %303 = vmatpush1.bf16.msra.mxu0 %v99
    %304 = vmatprep.subr.bf16.mxu0 0
    %305 = vmatpush1.bf16.msra.mxu0 %v100
    %306 = vmatprep.subr.bf16.mxu0 0
    %307 = vmatpush1.bf16.msra.mxu0 %v101
    %308 = vmatprep.subr.bf16.mxu0 0
    %309 = vmatpush1.bf16.msra.mxu0 %v102
    %310 = vmatprep.subr.bf16.mxu0 0
    %311 = vmatpush1.bf16.msra.mxu0 %v103
    %312 = vmatprep.mubr.bf16.mxu0 %v65
    %313 = vmatmul.mubr.bf16.gmra.mrb[0].mxu0 %v64
    %v314 = vpop.f32.mrb[0].mxu0
    %v315 = vadd.f32 0.0, %v314
    %v316 = vpop.f32.mrb[0].mxu0
    %v317 = vpop.f32.mrb[0].mxu0
    %v318 = vpop.f32.mrb[0].mxu0
    %319 = vdwg.mxu0
    %320 = vmatprep.subr.bf16.mxu0 0
    %321 = vmatpush1.bf16.msra.mxu0 %v104
    %322 = vmatprep.subr.bf16.mxu0 0
    %323 = vmatpush1.bf16.msra.mxu0 %v105
    %324 = vmatprep.subr.bf16.mxu0 0
    %325 = vmatpush1.bf16.msra.mxu0 %v106
    %326 = vmatprep.subr.bf16.mxu0 0
    %327 = vmatpush1.bf16.msra.mxu0 %v107
    %328 = vmatprep.subr.bf16.mxu0 0
    %329 = vmatpush1.bf16.msra.mxu0 %v108
    %330 = vmatprep.subr.bf16.mxu0 0
    %331 = vmatpush1.bf16.msra.mxu0 %v109
    %332 = vmatprep.subr.bf16.mxu0 0
    %333 = vmatpush1.bf16.msra.mxu0 %v110
    %334 = vmatprep.subr.bf16.mxu0 0
    %335 = vmatpush1.bf16.msra.mxu0 %v111
    %336 = vmatprep.subr.bf16.mxu0 0
    %337 = vmatpush1.bf16.msra.mxu0 %v112
    %338 = vmatprep.subr.bf16.mxu0 0
    %339 = vmatpush1.bf16.msra.mxu0 %v113
    %340 = vmatprep.subr.bf16.mxu0 0
    %341 = vmatpush1.bf16.msra.mxu0 %v114
    %342 = vmatprep.subr.bf16.mxu0 0
    %343 = vmatpush1.bf16.msra.mxu0 %v115
    %344 = vmatprep.subr.bf16.mxu0 0
    %345 = vmatpush1.bf16.msra.mxu0 %v116
    %346 = vmatprep.subr.bf16.mxu0 0
    %347 = vmatpush1.bf16.msra.mxu0 %v117
    %348 = vmatprep.subr.bf16.mxu0 0
    %349 = vmatpush1.bf16.msra.mxu0 %v118
    %350 = vmatprep.subr.bf16.mxu0 0
    %351 = vmatpush1.bf16.msra.mxu0 %v119
    %352 = vmatprep.mubr.bf16.mxu0 %v67
    %353 = vmatmul.mubr.bf16.gmra.mrb[0].mxu0 %v66
    %v354 = vpop.f32.mrb[0].mxu0
    %v355 = vadd.f32 %v315, %v354
    %v356 = vpop.f32.mrb[0].mxu0
    %v357 = vpop.f32.mrb[0].mxu0
    %v358 = vpop.f32.mrb[0].mxu0
    %359 = vdwg.mxu0
    %360 = vmatprep.subr.bf16.mxu0 0
    %361 = vmatpush1.bf16.msra.mxu0 %v120
    %362 = vmatprep.subr.bf16.mxu0 0
    %363 = vmatpush1.bf16.msra.mxu0 %v121
    %364 = vmatprep.subr.bf16.mxu0 0
    %365 = vmatpush1.bf16.msra.mxu0 %v122
    %366 = vmatprep.subr.bf16.mxu0 0
    %367 = vmatpush1.bf16.msra.mxu0 %v123
    %368 = vmatprep.subr.bf16.mxu0 0
    %369 = vmatpush1.bf16.msra.mxu0 %v124
    %370 = vmatprep.subr.bf16.mxu0 0
    %371 = vmatpush1.bf16.msra.mxu0 %v125
    %372 = vmatprep.subr.bf16.mxu0 0
    %373 = vmatpush1.bf16.msra.mxu0 %v126
    %374 = vmatprep.subr.bf16.mxu0 0
    %375 = vmatpush1.bf16.msra.mxu0 %v127
    %376 = vmatprep.subr.bf16.mxu0 0
    %377 = vmatpush1.bf16.msra.mxu0 %v128
    %378 = vmatprep.subr.bf16.mxu0 0
    %379 = vmatpush1.bf16.msra.mxu0 %v129
    %380 = vmatprep.subr.bf16.mxu0 0
    %381 = vmatpush1.bf16.msra.mxu0 %v130
    %382 = vmatprep.subr.bf16.mxu0 0
    %383 = vmatpush1.bf16.msra.mxu0 %v131
    %384 = vmatprep.subr.bf16.mxu0 0
    %385 = vmatpush1.bf16.msra.mxu0 %v132
    %386 = vmatprep.subr.bf16.mxu0 0
    %387 = vmatpush1.bf16.msra.mxu0 %v133
    %388 = vmatprep.subr.bf16.mxu0 0
    %389 = vmatpush1.bf16.msra.mxu0 %v134
    %390 = vmatprep.subr.bf16.mxu0 0
    %391 = vmatpush1.bf16.msra.mxu0 %v135
    %392 = vmatprep.mubr.bf16.mxu0 %v69
    %393 = vmatmul.mubr.bf16.gmra.mrb[0].mxu0 %v68
    %v394 = vpop.f32.mrb[0].mxu0
    %v395 = vadd.f32 %v355, %v394
    %v396 = vpop.f32.mrb[0].mxu0
    %v397 = vpop.f32.mrb[0].mxu0
    %v398 = vpop.f32.mrb[0].mxu0
    %399 = vdwg.mxu0
    %400 = vmatprep.subr.bf16.mxu0 0
    %401 = vmatpush1.bf16.msra.mxu0 %v136
    %402 = vmatprep.subr.bf16.mxu0 0
    %403 = vmatpush1.bf16.msra.mxu0 %v137
    %404 = vmatprep.subr.bf16.mxu0 0
    %405 = vmatpush1.bf16.msra.mxu0 %v138
    %406 = vmatprep.subr.bf16.mxu0 0
    %407 = vmatpush1.bf16.msra.mxu0 %v139
    %408 = vmatprep.subr.bf16.mxu0 0
    %409 = vmatpush1.bf16.msra.mxu0 %v140
    %410 = vmatprep.subr.bf16.mxu0 0
    %411 = vmatpush1.bf16.msra.mxu0 %v141
    %412 = vmatprep.subr.bf16.mxu0 0
    %413 = vmatpush1.bf16.msra.mxu0 %v142
    %414 = vmatprep.subr.bf16.mxu0 0
    %415 = vmatpush1.bf16.msra.mxu0 %v143
    %416 = vmatprep.subr.bf16.mxu0 0
    %417 = vmatpush1.bf16.msra.mxu0 %v144
    %418 = vmatprep.subr.bf16.mxu0 0
    %419 = vmatpush1.bf16.msra.mxu0 %v145
    %420 = vmatprep.subr.bf16.mxu0 0
    %421 = vmatpush1.bf16.msra.mxu0 %v146
    %422 = vmatprep.subr.bf16.mxu0 0
    %423 = vmatpush1.bf16.msra.mxu0 %v147
    %424 = vmatprep.subr.bf16.mxu0 0
    %425 = vmatpush1.bf16.msra.mxu0 %v148
    %426 = vmatprep.subr.bf16.mxu0 0
    %427 = vmatpush1.bf16.msra.mxu0 %v149
    %428 = vmatprep.subr.bf16.mxu0 0
    %429 = vmatpush1.bf16.msra.mxu0 %v150
    %430 = vmatprep.subr.bf16.mxu0 0
    %431 = vmatpush1.bf16.msra.mxu0 %v151
    %432 = vmatprep.mubr.bf16.mxu0 %v71
    %433 = vmatmul.mubr.bf16.gmra.mrb[0].mxu0 %v70
    %v434 = vpop.f32.mrb[0].mxu0
    %v435 = vadd.f32 %v395, %v434
    %v436 = vpop.f32.mrb[0].mxu0
    %v437 = vpop.f32.mrb[0].mxu0
    %v438 = vpop.f32.mrb[0].mxu0
    %439 = vdwg.mxu0
    %440 = vmatprep.subr.bf16.mxu0 0
    %441 = vmatpush1.bf16.msra.mxu0 %v152
    %442 = vmatprep.subr.bf16.mxu0 0
    %443 = vmatpush1.bf16.msra.mxu0 %v153
    %444 = vmatprep.subr.bf16.mxu0 0
    %445 = vmatpush1.bf16.msra.mxu0 %v154
    %446 = vmatprep.subr.bf16.mxu0 0
    %447 = vmatpush1.bf16.msra.mxu0 %v155
    %448 = vmatprep.subr.bf16.mxu0 0
    %449 = vmatpush1.bf16.msra.mxu0 %v156
    %450 = vmatprep.subr.bf16.mxu0 0
    %451 = vmatpush1.bf16.msra.mxu0 %v157
    %452 = vmatprep.subr.bf16.mxu0 0
    %453 = vmatpush1.bf16.msra.mxu0 %v158
    %454 = vmatprep.subr.bf16.mxu0 0
    %455 = vmatpush1.bf16.msra.mxu0 %v159
    %456 = vmatprep.subr.bf16.mxu0 0
    %457 = vmatpush1.bf16.msra.mxu0 %v160
    %458 = vmatprep.subr.bf16.mxu0 0
    %459 = vmatpush1.bf16.msra.mxu0 %v161
    %460 = vmatprep.subr.bf16.mxu0 0
    %461 = vmatpush1.bf16.msra.mxu0 %v162
    %462 = vmatprep.subr.bf16.mxu0 0
    %463 = vmatpush1.bf16.msra.mxu0 %v163
    %464 = vmatprep.subr.bf16.mxu0 0
    %465 = vmatpush1.bf16.msra.mxu0 %v164
    %466 = vmatprep.subr.bf16.mxu0 0
    %467 = vmatpush1.bf16.msra.mxu0 %v165
    %468 = vmatprep.subr.bf16.mxu0 0
    %469 = vmatpush1.bf16.msra.mxu0 %v166
    %470 = vmatprep.subr.bf16.mxu0 0
    %471 = vmatpush1.bf16.msra.mxu0 %v167
    %472 = vmatprep.mubr.bf16.mxu0 %v73
    %473 = vmatmul.mubr.bf16.gmra.mrb[0].mxu0 %v72
    %v474 = vpop.f32.mrb[0].mxu0
    %v475 = vadd.f32 %v435, %v474
    %v476 = vpop.f32.mrb[0].mxu0
    %v477 = vpop.f32.mrb[0].mxu0
    %v478 = vpop.f32.mrb[0].mxu0
    %479 = vdwg.mxu0
    %480 = vmatprep.subr.bf16.mxu0 0
    %481 = vmatpush1.bf16.msra.mxu0 %v168
    %482 = vmatprep.subr.bf16.mxu0 0
    %483 = vmatpush1.bf16.msra.mxu0 %v169
    %484 = vmatprep.subr.bf16.mxu0 0
    %485 = vmatpush1.bf16.msra.mxu0 %v170
    %486 = vmatprep.subr.bf16.mxu0 0
    %487 = vmatpush1.bf16.msra.mxu0 %v171
    %488 = vmatprep.subr.bf16.mxu0 0
    %489 = vmatpush1.bf16.msra.mxu0 %v172
    %490 = vmatprep.subr.bf16.mxu0 0
    %491 = vmatpush1.bf16.msra.mxu0 %v173
    %492 = vmatprep.subr.bf16.mxu0 0
    %493 = vmatpush1.bf16.msra.mxu0 %v174
    %494 = vmatprep.subr.bf16.mxu0 0
    %495 = vmatpush1.bf16.msra.mxu0 %v175
    %496 = vmatprep.subr.bf16.mxu0 0
    %497 = vmatpush1.bf16.msra.mxu0 %v176
    %498 = vmatprep.subr.bf16.mxu0 0
    %499 = vmatpush1.bf16.msra.mxu0 %v177
    %500 = vmatprep.subr.bf16.mxu0 0
    %501 = vmatpush1.bf16.msra.mxu0 %v178
    %502 = vmatprep.subr.bf16.mxu0 0
    %503 = vmatpush1.bf16.msra.mxu0 %v179
    %504 = vmatprep.subr.bf16.mxu0 0
    %505 = vmatpush1.bf16.msra.mxu0 %v180
    %506 = vmatprep.subr.bf16.mxu0 0
    %507 = vmatpush1.bf16.msra.mxu0 %v181
    %508 = vmatprep.subr.bf16.mxu0 0
    %509 = vmatpush1.bf16.msra.mxu0 %v182
    %510 = vmatprep.subr.bf16.mxu0 0
    %511 = vmatpush1.bf16.msra.mxu0 %v183
    %512 = vmatprep.mubr.bf16.mxu0 %v75
    %513 = vmatmul.mubr.bf16.gmra.mrb[0].mxu0 %v74
    %v514 = vpop.f32.mrb[0].mxu0
    %v515 = vadd.f32 %v475, %v514
    %v516 = vpop.f32.mrb[0].mxu0
    %v517 = vpop.f32.mrb[0].mxu0
    %v518 = vpop.f32.mrb[0].mxu0
    %519 = vdwg.mxu0
    %520 = vmatprep.subr.bf16.mxu0 0
    %521 = vmatpush1.bf16.msra.mxu0 %v184
    %522 = vmatprep.subr.bf16.mxu0 0
    %523 = vmatpush1.bf16.msra.mxu0 %v185
    %524 = vmatprep.subr.bf16.mxu0 0
    %525 = vmatpush1.bf16.msra.mxu0 %v186
    %526 = vmatprep.subr.bf16.mxu0 0
    %527 = vmatpush1.bf16.msra.mxu0 %v187
    %528 = vmatprep.subr.bf16.mxu0 0
    %529 = vmatpush1.bf16.msra.mxu0 %v188
    %530 = vmatprep.subr.bf16.mxu0 0
    %531 = vmatpush1.bf16.msra.mxu0 %v189
    %532 = vmatprep.subr.bf16.mxu0 0
    %533 = vmatpush1.bf16.msra.mxu0 %v190
    %534 = vmatprep.subr.bf16.mxu0 0
    %535 = vmatpush1.bf16.msra.mxu0 %v191
    %536 = vmatprep.subr.bf16.mxu0 0
    %537 = vmatpush1.bf16.msra.mxu0 %v192
    %538 = vmatprep.subr.bf16.mxu0 0
    %539 = vmatpush1.bf16.msra.mxu0 %v193
    %540 = vmatprep.subr.bf16.mxu0 0
    %541 = vmatpush1.bf16.msra.mxu0 %v194
    %542 = vmatprep.subr.bf16.mxu0 0
    %543 = vmatpush1.bf16.msra.mxu0 %v195
    %544 = vmatprep.subr.bf16.mxu0 0
    %545 = vmatpush1.bf16.msra.mxu0 %v196
    %546 = vmatprep.subr.bf16.mxu0 0
    %547 = vmatpush1.bf16.msra.mxu0 %v197
    %548 = vmatprep.subr.bf16.mxu0 0
    %549 = vmatpush1.bf16.msra.mxu0 %v198
    %550 = vmatprep.subr.bf16.mxu0 0
    %551 = vmatpush1.bf16.msra.mxu0 %v199
    %552 = vmatprep.mubr.bf16.mxu0 %v77
    %553 = vmatmul.mubr.bf16.gmra.mrb[0].mxu0 %v76
    %v554 = vpop.f32.mrb[0].mxu0
    %v555 = vadd.f32 %v515, %v554
    %v556 = vpop.f32.mrb[0].mxu0
    %v557 = vpop.f32.mrb[0].mxu0
    %v558 = vpop.f32.mrb[0].mxu0
    %559 = vdwg.mxu0
    %560 = vmatprep.subr.bf16.mxu0 0
    %561 = vmatpush1.bf16.msra.mxu0 %v200
    %562 = vmatprep.subr.bf16.mxu0 0
    %563 = vmatpush1.bf16.msra.mxu0 %v201
    %564 = vmatprep.subr.bf16.mxu0 0
    %565 = vmatpush1.bf16.msra.mxu0 %v202
    %566 = vmatprep.subr.bf16.mxu0 0
    %567 = vmatpush1.bf16.msra.mxu0 %v203
    %568 = vmatprep.subr.bf16.mxu0 0
    %569 = vmatpush1.bf16.msra.mxu0 %v204
    %570 = vmatprep.subr.bf16.mxu0 0
    %571 = vmatpush1.bf16.msra.mxu0 %v205
    %572 = vmatprep.subr.bf16.mxu0 0
    %573 = vmatpush1.bf16.msra.mxu0 %v206
    %574 = vmatprep.subr.bf16.mxu0 0
    %575 = vmatpush1.bf16.msra.mxu0 %v207
    %576 = vmatprep.subr.bf16.mxu0 0
    %577 = vmatpush1.bf16.msra.mxu0 %v208
    %578 = vmatprep.subr.bf16.mxu0 0
    %579 = vmatpush1.bf16.msra.mxu0 %v209
    %580 = vmatprep.subr.bf16.mxu0 0
    %581 = vmatpush1.bf16.msra.mxu0 %v210
    %582 = vmatprep.subr.bf16.mxu0 0
    %583 = vmatpush1.bf16.msra.mxu0 %v211
    %584 = vmatprep.subr.bf16.mxu0 0
    %585 = vmatpush1.bf16.msra.mxu0 %v212
    %586 = vmatprep.subr.bf16.mxu0 0
    %587 = vmatpush1.bf16.msra.mxu0 %v213
    %588 = vmatprep.subr.bf16.mxu0 0
    %589 = vmatpush1.bf16.msra.mxu0 %v214
    %590 = vmatprep.subr.bf16.mxu0 0
    %591 = vmatpush1.bf16.msra.mxu0 %v215
    %592 = vmatprep.mubr.bf16.mxu0 %v79
    %593 = vmatmul.mubr.bf16.gmra.mrb[0].mxu0 %v78
    %v594 = vpop.f32.mrb[0].mxu0
    %v595 = vadd.f32 %v555, %v594
    %v596 = vpop.f32.mrb[0].mxu0
    %v597 = vpop.f32.mrb[0].mxu0
    %v598 = vpop.f32.mrb[0].mxu0
    %599 = vdwg.mxu0
    %600 = vmatprep.subr.bf16.mxu0 0
    %601 = vmatpush1.bf16.msra.mxu0 %v216
    %602 = vmatprep.subr.bf16.mxu0 0
    %603 = vmatpush1.bf16.msra.mxu0 %v217
    %604 = vmatprep.subr.bf16.mxu0 0
    %605 = vmatpush1.bf16.msra.mxu0 %v218
    %606 = vmatprep.subr.bf16.mxu0 0
    %607 = vmatpush1.bf16.msra.mxu0 %v219
    %608 = vmatprep.subr.bf16.mxu0 0
    %609 = vmatpush1.bf16.msra.mxu0 %v220
    %610 = vmatprep.subr.bf16.mxu0 0
    %611 = vmatpush1.bf16.msra.mxu0 %v221
    %612 = vmatprep.subr.bf16.mxu0 0
    %613 = vmatpush1.bf16.msra.mxu0 %v222
    %614 = vmatprep.subr.bf16.mxu0 0
    %615 = vmatpush1.bf16.msra.mxu0 %v223
    %616 = vmatprep.subr.bf16.mxu0 0
    %617 = vmatpush1.bf16.msra.mxu0 %v224
    %618 = vmatprep.subr.bf16.mxu0 0
    %619 = vmatpush1.bf16.msra.mxu0 %v225
    %620 = vmatprep.subr.bf16.mxu0 0
    %621 = vmatpush1.bf16.msra.mxu0 %v226
    %622 = vmatprep.subr.bf16.mxu0 0
    %623 = vmatpush1.bf16.msra.mxu0 %v227
    %624 = vmatprep.subr.bf16.mxu0 0
    %625 = vmatpush1.bf16.msra.mxu0 %v228
    %626 = vmatprep.subr.bf16.mxu0 0
    %627 = vmatpush1.bf16.msra.mxu0 %v229
    %628 = vmatprep.subr.bf16.mxu0 0
    %629 = vmatpush1.bf16.msra.mxu0 %v230
    %630 = vmatprep.subr.bf16.mxu0 0
    %631 = vmatpush1.bf16.msra.mxu0 %v231
    %632 = vmatprep.mubr.bf16.mxu0 %v81
    %633 = vmatmul.mubr.bf16.gmra.mrb[0].mxu0 %v80
    %v634 = vpop.f32.mrb[0].mxu0
    %v635 = vadd.f32 %v595, %v634
    %v636 = vpop.f32.mrb[0].mxu0
    %v637 = vpop.f32.mrb[0].mxu0
    %v638 = vpop.f32.mrb[0].mxu0
    %639 = vdwg.mxu0
    %640 = vmatprep.subr.bf16.mxu0 0
    %641 = vmatpush1.bf16.msra.mxu0 %v232
    %642 = vmatprep.subr.bf16.mxu0 0
    %643 = vmatpush1.bf16.msra.mxu0 %v233
    %644 = vmatprep.subr.bf16.mxu0 0
    %645 = vmatpush1.bf16.msra.mxu0 %v234
    %646 = vmatprep.subr.bf16.mxu0 0
    %647 = vmatpush1.bf16.msra.mxu0 %v235
    %648 = vmatprep.subr.bf16.mxu0 0
    %649 = vmatpush1.bf16.msra.mxu0 %v236
    %650 = vmatprep.subr.bf16.mxu0 0
    %651 = vmatpush1.bf16.msra.mxu0 %v237
    %652 = vmatprep.subr.bf16.mxu0 0
    %653 = vmatpush1.bf16.msra.mxu0 %v238
    %654 = vmatprep.subr.bf16.mxu0 0
    %655 = vmatpush1.bf16.msra.mxu0 %v239
    %656 = vmatprep.subr.bf16.mxu0 0
    %657 = vmatpush1.bf16.msra.mxu0 %v240
    %658 = vmatprep.subr.bf16.mxu0 0
    %659 = vmatpush1.bf16.msra.mxu0 %v241
    %660 = vmatprep.subr.bf16.mxu0 0
    %661 = vmatpush1.bf16.msra.mxu0 %v242
    %662 = vmatprep.subr.bf16.mxu0 0
    %663 = vmatpush1.bf16.msra.mxu0 %v243
    %664 = vmatprep.subr.bf16.mxu0 0
    %665 = vmatpush1.bf16.msra.mxu0 %v244
    %666 = vmatprep.subr.bf16.mxu0 0
    %667 = vmatpush1.bf16.msra.mxu0 %v245
    %668 = vmatprep.subr.bf16.mxu0 0
    %669 = vmatpush1.bf16.msra.mxu0 %v246
    %670 = vmatprep.subr.bf16.mxu0 0
    %671 = vmatpush1.bf16.msra.mxu0 %v247
    %672 = vmatprep.mubr.bf16.mxu0 %v83
    %673 = vmatmul.mubr.bf16.gmra.mrb[0].mxu0 %v82
    %v674 = vpop.f32.mrb[0].mxu0
    %v675 = vadd.f32 %v635, %v674
    %v676 = vpop.f32.mrb[0].mxu0
    %v677 = vpop.f32.mrb[0].mxu0
    %v678 = vpop.f32.mrb[0].mxu0
    %679 = vdwg.mxu0
    %680 = vmatprep.subr.bf16.mxu0 0
    %681 = vmatpush1.bf16.msra.mxu0 %v248
    %682 = vmatprep.subr.bf16.mxu0 0
    %683 = vmatpush1.bf16.msra.mxu0 %v249
    %684 = vmatprep.subr.bf16.mxu0 0
    %685 = vmatpush1.bf16.msra.mxu0 %v250
    %686 = vmatprep.subr.bf16.mxu0 0
    %687 = vmatpush1.bf16.msra.mxu0 %v251
    %688 = vmatprep.subr.bf16.mxu0 0
    %689 = vmatpush1.bf16.msra.mxu0 %v252
    %690 = vmatprep.subr.bf16.mxu0 0
    %691 = vmatpush1.bf16.msra.mxu0 %v253
    %692 = vmatprep.subr.bf16.mxu0 0
    %693 = vmatpush1.bf16.msra.mxu0 %v254
    %694 = vmatprep.subr.bf16.mxu0 0
    %695 = vmatpush1.bf16.msra.mxu0 %v255
    %696 = vmatprep.subr.bf16.mxu0 0
    %697 = vmatpush1.bf16.msra.mxu0 %v256
    %698 = vmatprep.subr.bf16.mxu0 0
    %699 = vmatpush1.bf16.msra.mxu0 %v257
    %700 = vmatprep.subr.bf16.mxu0 0
    %701 = vmatpush1.bf16.msra.mxu0 %v258
    %702 = vmatprep.subr.bf16.mxu0 0
    %703 = vmatpush1.bf16.msra.mxu0 %v259
    %704 = vmatprep.subr.bf16.mxu0 0
    %705 = vmatpush1.bf16.msra.mxu0 %v260
    %706 = vmatprep.subr.bf16.mxu0 0
    %707 = vmatpush1.bf16.msra.mxu0 %v261
    %708 = vmatprep.subr.bf16.mxu0 0
    %709 = vmatpush1.bf16.msra.mxu0 %v262
    %710 = vmatprep.subr.bf16.mxu0 0
    %711 = vmatpush1.bf16.msra.mxu0 %v263
    %712 = vmatprep.mubr.bf16.mxu0 %v85
    %713 = vmatmul.mubr.bf16.gmra.mrb[0].mxu0 %v84
    %v714 = vpop.f32.mrb[0].mxu0
    %v715 = vadd.f32 %v675, %v714
    %v716 = vpop.f32.mrb[0].mxu0
    %v717 = vpop.f32.mrb[0].mxu0
    %v718 = vpop.f32.mrb[0].mxu0
    %719 = vdwg.mxu0
    %720 = vmatprep.subr.bf16.mxu0 0
    %721 = vmatpush1.bf16.msra.mxu0 %v264
    %722 = vmatprep.subr.bf16.mxu0 0
    %723 = vmatpush1.bf16.msra.mxu0 %v265
    %724 = vmatprep.subr.bf16.mxu0 0
    %725 = vmatpush1.bf16.msra.mxu0 %v266
    %726 = vmatprep.subr.bf16.mxu0 0
    %727 = vmatpush1.bf16.msra.mxu0 %v267
    %728 = vmatprep.subr.bf16.mxu0 0
    %729 = vmatpush1.bf16.msra.mxu0 %v268
    %730 = vmatprep.subr.bf16.mxu0 0
    %731 = vmatpush1.bf16.msra.mxu0 %v269
    %732 = vmatprep.subr.bf16.mxu0 0
    %733 = vmatpush1.bf16.msra.mxu0 %v270
    %734 = vmatprep.subr.bf16.mxu0 0
    %735 = vmatpush1.bf16.msra.mxu0 %v271
    %736 = vmatprep.subr.bf16.mxu0 0
    %737 = vmatpush1.bf16.msra.mxu0 %v272
    %738 = vmatprep.subr.bf16.mxu0 0
    %739 = vmatpush1.bf16.msra.mxu0 %v273
    %740 = vmatprep.subr.bf16.mxu0 0
    %741 = vmatpush1.bf16.msra.mxu0 %v274
    %742 = vmatprep.subr.bf16.mxu0 0
    %743 = vmatpush1.bf16.msra.mxu0 %v275
    %744 = vmatprep.subr.bf16.mxu0 0
    %745 = vmatpush1.bf16.msra.mxu0 %v276
    %746 = vmatprep.subr.bf16.mxu0 0
    %747 = vmatpush1.bf16.msra.mxu0 %v277
    %748 = vmatprep.subr.bf16.mxu0 0
    %749 = vmatpush1.bf16.msra.mxu0 %v278
    %750 = vmatprep.subr.bf16.mxu0 0
    %751 = vmatpush1.bf16.msra.mxu0 %v279
    %752 = vmatprep.mubr.bf16.mxu0 %v87
    %753 = vmatmul.mubr.bf16.gmra.mrb[0].mxu0 %v86
    %v754 = vpop.f32.mrb[0].mxu0
    %v755 = vadd.f32 %v715, %v754
    %v756 = vpop.f32.mrb[0].mxu0
    %v757 = vpop.f32.mrb[0].mxu0
    %v758 = vpop.f32.mrb[0].mxu0
    %759 = vdwg.mxu0
    %v760 = vld [vmem:[#allocation2 + $0x600] sm:$0xff]
    %v761 = vld [vmem:[#allocation2 + $0x608] sm:$0xff]
    %v762 = vld [vmem:[#allocation2 + $0x610] sm:$0xff]
    %v763 = vld [vmem:[#allocation2 + $0x618] sm:$0xff]
    %v764 = vld [vmem:[#allocation2 + $0x620] sm:$0xff]
    %v765 = vld [vmem:[#allocation2 + $0x628] sm:$0xff]
    %v766 = vld [vmem:[#allocation2 + $0x630] sm:$0xff]
    %v767 = vld [vmem:[#allocation2 + $0x638] sm:$0xff]
    %v768 = vld [vmem:[#allocation2 + $0x640] sm:$0xff]
    %v769 = vld [vmem:[#allocation2 + $0x648] sm:$0xff]
    %v770 = vld [vmem:[#allocation2 + $0x650] sm:$0xff]
    %v771 = vld [vmem:[#allocation2 + $0x658] sm:$0xff]
    %v772 = vld [vmem:[#allocation2 + $0x660] sm:$0xff]
    %v773 = vld [vmem:[#allocation2 + $0x668] sm:$0xff]
    %v774 = vld [vmem:[#allocation2 + $0x670] sm:$0xff]
    %v775 = vld [vmem:[#allocation2 + $0x678] sm:$0xff]
    %v776 = vld [vmem:[#allocation2 + $0x680] sm:$0xff]
    %v777 = vld [vmem:[#allocation2 + $0x688] sm:$0xff]
    %v778 = vld [vmem:[#allocation2 + $0x690] sm:$0xff]
    %v779 = vld [vmem:[#allocation2 + $0x698] sm:$0xff]
    %v780 = vld [vmem:[#allocation2 + $0x6a0] sm:$0xff]
    %v781 = vld [vmem:[#allocation2 + $0x6a8] sm:$0xff]
    %v782 = vld [vmem:[#allocation2 + $0x6b0] sm:$0xff]
    %v783 = vld [vmem:[#allocation2 + $0x6b8] sm:$0xff]
    %v784 = vld [vmem:[#allocation2 + $0x6c0] sm:$0xff]
    %v785 = vld [vmem:[#allocation2 + $0x6c8] sm:$0xff]
    %v786 = vld [vmem:[#allocation2 + $0x6d0] sm:$0xff]
    %v787 = vld [vmem:[#allocation2 + $0x6d8] sm:$0xff]
    %v788 = vld [vmem:[#allocation2 + $0x6e0] sm:$0xff]
    %v789 = vld [vmem:[#allocation2 + $0x6e8] sm:$0xff]
    %v790 = vld [vmem:[#allocation2 + $0x6f0] sm:$0xff]
    %v791 = vld [vmem:[#allocation2 + $0x6f8] sm:$0xff]
    %v792 = vld [vmem:[#allocation2 + $0x700] sm:$0xff]
    %v793 = vld [vmem:[#allocation2 + $0x708] sm:$0xff]
    %v794 = vld [vmem:[#allocation2 + $0x710] sm:$0xff]
    %v795 = vld [vmem:[#allocation2 + $0x718] sm:$0xff]
    %v796 = vld [vmem:[#allocation2 + $0x720] sm:$0xff]
    %v797 = vld [vmem:[#allocation2 + $0x728] sm:$0xff]
    %v798 = vld [vmem:[#allocation2 + $0x730] sm:$0xff]
    %v799 = vld [vmem:[#allocation2 + $0x738] sm:$0xff]
    %v800 = vld [vmem:[#allocation2 + $0x740] sm:$0xff]
    %v801 = vld [vmem:[#allocation2 + $0x748] sm:$0xff]
    %v802 = vld [vmem:[#allocation2 + $0x750] sm:$0xff]
    %v803 = vld [vmem:[#allocation2 + $0x758] sm:$0xff]
    %v804 = vld [vmem:[#allocation2 + $0x760] sm:$0xff]
    %v805 = vld [vmem:[#allocation2 + $0x768] sm:$0xff]
    %v806 = vld [vmem:[#allocation2 + $0x770] sm:$0xff]
    %v807 = vld [vmem:[#allocation2 + $0x778] sm:$0xff]
    %v808 = vld [vmem:[#allocation2 + $0x780] sm:$0xff]
    %v809 = vld [vmem:[#allocation2 + $0x788] sm:$0xff]
    %v810 = vld [vmem:[#allocation2 + $0x790] sm:$0xff]
    %v811 = vld [vmem:[#allocation2 + $0x798] sm:$0xff]
    %v812 = vld [vmem:[#allocation2 + $0x7a0] sm:$0xff]
    %v813 = vld [vmem:[#allocation2 + $0x7a8] sm:$0xff]
    %v814 = vld [vmem:[#allocation2 + $0x7b0] sm:$0xff]
    %v815 = vld [vmem:[#allocation2 + $0x7b8] sm:$0xff]
    %v816 = vld [vmem:[#allocation2 + $0x7c0] sm:$0xff]
    %v817 = vld [vmem:[#allocation2 + $0x7c8] sm:$0xff]
    %v818 = vld [vmem:[#allocation2 + $0x7d0] sm:$0xff]
    %v819 = vld [vmem:[#allocation2 + $0x7d8] sm:$0xff]
    %v820 = vld [vmem:[#allocation2 + $0x7e0] sm:$0xff]
    %v821 = vld [vmem:[#allocation2 + $0x7e8] sm:$0xff]
    %v822 = vld [vmem:[#allocation2 + $0x7f0] sm:$0xff]
    %v823 = vld [vmem:[#allocation2 + $0x7f8] sm:$0xff]
    %v824 = vld [vmem:[#allocation2 + $0x800] sm:$0xff]
    %v825 = vld [vmem:[#allocation2 + $0x808] sm:$0xff]
    %v826 = vld [vmem:[#allocation2 + $0x810] sm:$0xff]
    %v827 = vld [vmem:[#allocation2 + $0x818] sm:$0xff]
    %v828 = vld [vmem:[#allocation2 + $0x820] sm:$0xff]
    %v829 = vld [vmem:[#allocation2 + $0x828] sm:$0xff]
    %v830 = vld [vmem:[#allocation2 + $0x830] sm:$0xff]
    %v831 = vld [vmem:[#allocation2 + $0x838] sm:$0xff]
    %v832 = vld [vmem:[#allocation2 + $0x840] sm:$0xff]
    %v833 = vld [vmem:[#allocation2 + $0x848] sm:$0xff]
    %v834 = vld [vmem:[#allocation2 + $0x850] sm:$0xff]
    %v835 = vld [vmem:[#allocation2 + $0x858] sm:$0xff]
    %v836 = vld [vmem:[#allocation2 + $0x860] sm:$0xff]
    %v837 = vld [vmem:[#allocation2 + $0x868] sm:$0xff]
    %v838 = vld [vmem:[#allocation2 + $0x870] sm:$0xff]
    %v839 = vld [vmem:[#allocation2 + $0x878] sm:$0xff]
    %v840 = vld [vmem:[#allocation2 + $0x880] sm:$0xff]
    %v841 = vld [vmem:[#allocation2 + $0x888] sm:$0xff]
    %v842 = vld [vmem:[#allocation2 + $0x890] sm:$0xff]
    %v843 = vld [vmem:[#allocation2 + $0x898] sm:$0xff]
    %v844 = vld [vmem:[#allocation2 + $0x8a0] sm:$0xff]
    %v845 = vld [vmem:[#allocation2 + $0x8a8] sm:$0xff]
    %v846 = vld [vmem:[#allocation2 + $0x8b0] sm:$0xff]
    %v847 = vld [vmem:[#allocation2 + $0x8b8] sm:$0xff]
    %v848 = vld [vmem:[#allocation2 + $0x8c0] sm:$0xff]
    %v849 = vld [vmem:[#allocation2 + $0x8c8] sm:$0xff]
    %v850 = vld [vmem:[#allocation2 + $0x8d0] sm:$0xff]
    %v851 = vld [vmem:[#allocation2 + $0x8d8] sm:$0xff]
    %v852 = vld [vmem:[#allocation2 + $0x8e0] sm:$0xff]
    %v853 = vld [vmem:[#allocation2 + $0x8e8] sm:$0xff]
    %v854 = vld [vmem:[#allocation2 + $0x8f0] sm:$0xff]
    %v855 = vld [vmem:[#allocation2 + $0x8f8] sm:$0xff]
    %v856 = vld [vmem:[#allocation2 + $0x900] sm:$0xff]
    %v857 = vld [vmem:[#allocation2 + $0x908] sm:$0xff]
    %v858 = vld [vmem:[#allocation2 + $0x910] sm:$0xff]
    %v859 = vld [vmem:[#allocation2 + $0x918] sm:$0xff]
    %v860 = vld [vmem:[#allocation2 + $0x920] sm:$0xff]
    %v861 = vld [vmem:[#allocation2 + $0x928] sm:$0xff]
    %v862 = vld [vmem:[#allocation2 + $0x930] sm:$0xff]
    %v863 = vld [vmem:[#allocation2 + $0x938] sm:$0xff]
    %v864 = vld [vmem:[#allocation2 + $0x940] sm:$0xff]
    %v865 = vld [vmem:[#allocation2 + $0x948] sm:$0xff]
    %v866 = vld [vmem:[#allocation2 + $0x950] sm:$0xff]
    %v867 = vld [vmem:[#allocation2 + $0x958] sm:$0xff]
    %v868 = vld [vmem:[#allocation2 + $0x960] sm:$0xff]
    %v869 = vld [vmem:[#allocation2 + $0x968] sm:$0xff]
    %v870 = vld [vmem:[#allocation2 + $0x970] sm:$0xff]
    %v871 = vld [vmem:[#allocation2 + $0x978] sm:$0xff]
    %v872 = vld [vmem:[#allocation2 + $0x980] sm:$0xff]
    %v873 = vld [vmem:[#allocation2 + $0x988] sm:$0xff]
    %v874 = vld [vmem:[#allocation2 + $0x990] sm:$0xff]
    %v875 = vld [vmem:[#allocation2 + $0x998] sm:$0xff]
    %v876 = vld [vmem:[#allocation2 + $0x9a0] sm:$0xff]
    %v877 = vld [vmem:[#allocation2 + $0x9a8] sm:$0xff]
    %v878 = vld [vmem:[#allocation2 + $0x9b0] sm:$0xff]
    %v879 = vld [vmem:[#allocation2 + $0x9b8] sm:$0xff]
    %v880 = vld [vmem:[#allocation2 + $0x9c0] sm:$0xff]
    %v881 = vld [vmem:[#allocation2 + $0x9c8] sm:$0xff]
    %v882 = vld [vmem:[#allocation2 + $0x9d0] sm:$0xff]
    %v883 = vld [vmem:[#allocation2 + $0x9d8] sm:$0xff]
    %v884 = vld [vmem:[#allocation2 + $0x9e0] sm:$0xff]
    %v885 = vld [vmem:[#allocation2 + $0x9e8] sm:$0xff]
    %v886 = vld [vmem:[#allocation2 + $0x9f0] sm:$0xff]
    %v887 = vld [vmem:[#allocation2 + $0x9f8] sm:$0xff]
    %v888 = vld [vmem:[#allocation2 + $0xa00] sm:$0xff]
    %v889 = vld [vmem:[#allocation2 + $0xa08] sm:$0xff]
    %v890 = vld [vmem:[#allocation2 + $0xa10] sm:$0xff]
    %v891 = vld [vmem:[#allocation2 + $0xa18] sm:$0xff]
    %v892 = vld [vmem:[#allocation2 + $0xa20] sm:$0xff]
    %v893 = vld [vmem:[#allocation2 + $0xa28] sm:$0xff]
    %v894 = vld [vmem:[#allocation2 + $0xa30] sm:$0xff]
    %v895 = vld [vmem:[#allocation2 + $0xa38] sm:$0xff]
    %v896 = vld [vmem:[#allocation2 + $0xa40] sm:$0xff]
    %v897 = vld [vmem:[#allocation2 + $0xa48] sm:$0xff]
    %v898 = vld [vmem:[#allocation2 + $0xa50] sm:$0xff]
    %v899 = vld [vmem:[#allocation2 + $0xa58] sm:$0xff]
    %v900 = vld [vmem:[#allocation2 + $0xa60] sm:$0xff]
    %v901 = vld [vmem:[#allocation2 + $0xa68] sm:$0xff]
    %v902 = vld [vmem:[#allocation2 + $0xa70] sm:$0xff]
    %v903 = vld [vmem:[#allocation2 + $0xa78] sm:$0xff]
    %v904 = vld [vmem:[#allocation2 + $0xa80] sm:$0xff]
    %v905 = vld [vmem:[#allocation2 + $0xa88] sm:$0xff]
    %v906 = vld [vmem:[#allocation2 + $0xa90] sm:$0xff]
    %v907 = vld [vmem:[#allocation2 + $0xa98] sm:$0xff]
    %v908 = vld [vmem:[#allocation2 + $0xaa0] sm:$0xff]
    %v909 = vld [vmem:[#allocation2 + $0xaa8] sm:$0xff]
    %v910 = vld [vmem:[#allocation2 + $0xab0] sm:$0xff]
    %v911 = vld [vmem:[#allocation2 + $0xab8] sm:$0xff]
    %v912 = vld [vmem:[#allocation2 + $0xac0] sm:$0xff]
    %v913 = vld [vmem:[#allocation2 + $0xac8] sm:$0xff]
    %v914 = vld [vmem:[#allocation2 + $0xad0] sm:$0xff]
    %v915 = vld [vmem:[#allocation2 + $0xad8] sm:$0xff]
    %v916 = vld [vmem:[#allocation2 + $0xae0] sm:$0xff]
    %v917 = vld [vmem:[#allocation2 + $0xae8] sm:$0xff]
    %v918 = vld [vmem:[#allocation2 + $0xaf0] sm:$0xff]
    %v919 = vld [vmem:[#allocation2 + $0xaf8] sm:$0xff]
    %v920 = vld [vmem:[#allocation2 + $0xb00] sm:$0xff]
    %v921 = vld [vmem:[#allocation2 + $0xb08] sm:$0xff]
    %v922 = vld [vmem:[#allocation2 + $0xb10] sm:$0xff]
    %v923 = vld [vmem:[#allocation2 + $0xb18] sm:$0xff]
    %v924 = vld [vmem:[#allocation2 + $0xb20] sm:$0xff]
    %v925 = vld [vmem:[#allocation2 + $0xb28] sm:$0xff]
    %v926 = vld [vmem:[#allocation2 + $0xb30] sm:$0xff]
    %v927 = vld [vmem:[#allocation2 + $0xb38] sm:$0xff]
    %v928 = vld [vmem:[#allocation2 + $0xb40] sm:$0xff]
    %v929 = vld [vmem:[#allocation2 + $0xb48] sm:$0xff]
    %v930 = vld [vmem:[#allocation2 + $0xb50] sm:$0xff]
    %v931 = vld [vmem:[#allocation2 + $0xb58] sm:$0xff]
    %v932 = vld [vmem:[#allocation2 + $0xb60] sm:$0xff]
    %v933 = vld [vmem:[#allocation2 + $0xb68] sm:$0xff]
    %v934 = vld [vmem:[#allocation2 + $0xb70] sm:$0xff]
    %v935 = vld [vmem:[#allocation2 + $0xb78] sm:$0xff]
    %v936 = vld [vmem:[#allocation2 + $0xb80] sm:$0xff]
    %v937 = vld [vmem:[#allocation2 + $0xb88] sm:$0xff]
    %v938 = vld [vmem:[#allocation2 + $0xb90] sm:$0xff]
    %v939 = vld [vmem:[#allocation2 + $0xb98] sm:$0xff]
    %v940 = vld [vmem:[#allocation2 + $0xba0] sm:$0xff]
    %v941 = vld [vmem:[#allocation2 + $0xba8] sm:$0xff]
    %v942 = vld [vmem:[#allocation2 + $0xbb0] sm:$0xff]
    %v943 = vld [vmem:[#allocation2 + $0xbb8] sm:$0xff]
    %v944 = vld [vmem:[#allocation2 + $0xbc0] sm:$0xff]
    %v945 = vld [vmem:[#allocation2 + $0xbc8] sm:$0xff]
    %v946 = vld [vmem:[#allocation2 + $0xbd0] sm:$0xff]
    %v947 = vld [vmem:[#allocation2 + $0xbd8] sm:$0xff]
    %v948 = vld [vmem:[#allocation2 + $0xbe0] sm:$0xff]
    %v949 = vld [vmem:[#allocation2 + $0xbe8] sm:$0xff]
    %v950 = vld [vmem:[#allocation2 + $0xbf0] sm:$0xff]
    %v951 = vld [vmem:[#allocation2 + $0xbf8] sm:$0xff]
    %952 = vmatprep.subr.bf16.mxu0 0
    %953 = vmatpush1.bf16.msra.mxu0 %v760
    %954 = vmatprep.subr.bf16.mxu0 0
    %955 = vmatpush1.bf16.msra.mxu0 %v761
    %956 = vmatprep.subr.bf16.mxu0 0
    %957 = vmatpush1.bf16.msra.mxu0 %v762
    %958 = vmatprep.subr.bf16.mxu0 0
    %959 = vmatpush1.bf16.msra.mxu0 %v763
    %960 = vmatprep.subr.bf16.mxu0 0
    %961 = vmatpush1.bf16.msra.mxu0 %v764
    %962 = vmatprep.subr.bf16.mxu0 0
    %963 = vmatpush1.bf16.msra.mxu0 %v765
    %964 = vmatprep.subr.bf16.mxu0 0
    %965 = vmatpush1.bf16.msra.mxu0 %v766
    %966 = vmatprep.subr.bf16.mxu0 0
    %967 = vmatpush1.bf16.msra.mxu0 %v767
    %968 = vmatprep.subr.bf16.mxu0 0
    %969 = vmatpush1.bf16.msra.mxu0 %v768
    %970 = vmatprep.subr.bf16.mxu0 0
    %971 = vmatpush1.bf16.msra.mxu0 %v769
    %972 = vmatprep.subr.bf16.mxu0 0
    %973 = vmatpush1.bf16.msra.mxu0 %v770
    %974 = vmatprep.subr.bf16.mxu0 0
    %975 = vmatpush1.bf16.msra.mxu0 %v771
    %976 = vmatprep.subr.bf16.mxu0 0
    %977 = vmatpush1.bf16.msra.mxu0 %v772
    %978 = vmatprep.subr.bf16.mxu0 0
    %979 = vmatpush1.bf16.msra.mxu0 %v773
    %980 = vmatprep.subr.bf16.mxu0 0
    %981 = vmatpush1.bf16.msra.mxu0 %v774
    %982 = vmatprep.subr.bf16.mxu0 0
    %983 = vmatpush1.bf16.msra.mxu0 %v775
    %984 = vmatprep.mubr.bf16.mxu0 %v65
    %985 = vmatmul.mubr.bf16.gmra.mrb[0].mxu0 %v64
    %v986 = vpop.f32.mrb[0].mxu0
    %v987 = vadd.f32 0.0, %v986
    %v988 = vpop.f32.mrb[0].mxu0
    %v989 = vpop.f32.mrb[0].mxu0
    %v990 = vpop.f32.mrb[0].mxu0
    %991 = vdwg.mxu0
    %992 = vmatprep.subr.bf16.mxu0 0
    %993 = vmatpush1.bf16.msra.mxu0 %v776
    %994 = vmatprep.subr.bf16.mxu0 0
    %995 = vmatpush1.bf16.msra.mxu0 %v777
    %996 = vmatprep.subr.bf16.mxu0 0
    %997 = vmatpush1.bf16.msra.mxu0 %v778
    %998 = vmatprep.subr.bf16.mxu0 0
    %999 = vmatpush1.bf16.msra.mxu0 %v779
    %1000 = vmatprep.subr.bf16.mxu0 0
    %1001 = vmatpush1.bf16.msra.mxu0 %v780
    %1002 = vmatprep.subr.bf16.mxu0 0
    %1003 = vmatpush1.bf16.msra.mxu0 %v781
    %1004 = vmatprep.subr.bf16.mxu0 0
    %1005 = vmatpush1.bf16.msra.mxu0 %v782
    %1006 = vmatprep.subr.bf16.mxu0 0
    %1007 = vmatpush1.bf16.msra.mxu0 %v783
    %1008 = vmatprep.subr.bf16.mxu0 0
    %1009 = vmatpush1.bf16.msra.mxu0 %v784
    %1010 = vmatprep.subr.bf16.mxu0 0
    %1011 = vmatpush1.bf16.msra.mxu0 %v785
    %1012 = vmatprep.subr.bf16.mxu0 0
    %1013 = vmatpush1.bf16.msra.mxu0 %v786
    %1014 = vmatprep.subr.bf16.mxu0 0
    %1015 = vmatpush1.bf16.msra.mxu0 %v787
    %1016 = vmatprep.subr.bf16.mxu0 0
    %1017 = vmatpush1.bf16.msra.mxu0 %v788
    %1018 = vmatprep.subr.bf16.mxu0 0
    %1019 = vmatpush1.bf16.msra.mxu0 %v789
    %1020 = vmatprep.subr.bf16.mxu0 0
    %1021 = vmatpush1.bf16.msra.mxu0 %v790
    %1022 = vmatprep.subr.bf16.mxu0 0
    %1023 = vmatpush1.bf16.msra.mxu0 %v791
    %1024 = vmatprep.mubr.bf16.mxu0 %v67
    %1025 = vmatmul.mubr.bf16.gmra.mrb[0].mxu0 %v66
    %v1026 = vpop.f32.mrb[0].mxu0
    %v1027 = vadd.f32 %v987, %v1026
    %v1028 = vpop.f32.mrb[0].mxu0
    %v1029 = vpop.f32.mrb[0].mxu0
    %v1030 = vpop.f32.mrb[0].mxu0
    %1031 = vdwg.mxu0
    %1032 = vmatprep.subr.bf16.mxu0 0
    %1033 = vmatpush1.bf16.msra.mxu0 %v792
    %1034 = vmatprep.subr.bf16.mxu0 0
    %1035 = vmatpush1.bf16.msra.mxu0 %v793
    %1036 = vmatprep.subr.bf16.mxu0 0
    %1037 = vmatpush1.bf16.msra.mxu0 %v794
    %1038 = vmatprep.subr.bf16.mxu0 0
    %1039 = vmatpush1.bf16.msra.mxu0 %v795
    %1040 = vmatprep.subr.bf16.mxu0 0
    %1041 = vmatpush1.bf16.msra.mxu0 %v796
    %1042 = vmatprep.subr.bf16.mxu0 0
    %1043 = vmatpush1.bf16.msra.mxu0 %v797
    %1044 = vmatprep.subr.bf16.mxu0 0
    %1045 = vmatpush1.bf16.msra.mxu0 %v798
    %1046 = vmatprep.subr.bf16.mxu0 0
    %1047 = vmatpush1.bf16.msra.mxu0 %v799
    %1048 = vmatprep.subr.bf16.mxu0 0
    %1049 = vmatpush1.bf16.msra.mxu0 %v800
    %1050 = vmatprep.subr.bf16.mxu0 0
    %1051 = vmatpush1.bf16.msra.mxu0 %v801
    %1052 = vmatprep.subr.bf16.mxu0 0
    %1053 = vmatpush1.bf16.msra.mxu0 %v802
    %1054 = vmatprep.subr.bf16.mxu0 0
    %1055 = vmatpush1.bf16.msra.mxu0 %v803
    %1056 = vmatprep.subr.bf16.mxu0 0
    %1057 = vmatpush1.bf16.msra.mxu0 %v804
    %1058 = vmatprep.subr.bf16.mxu0 0
    %1059 = vmatpush1.bf16.msra.mxu0 %v805
    %1060 = vmatprep.subr.bf16.mxu0 0
    %1061 = vmatpush1.bf16.msra.mxu0 %v806
    %1062 = vmatprep.subr.bf16.mxu0 0
    %1063 = vmatpush1.bf16.msra.mxu0 %v807
    %1064 = vmatprep.mubr.bf16.mxu0 %v69
    %1065 = vmatmul.mubr.bf16.gmra.mrb[0].mxu0 %v68
    %v1066 = vpop.f32.mrb[0].mxu0
    %v1067 = vadd.f32 %v1027, %v1066
    %v1068 = vpop.f32.mrb[0].mxu0
    %v1069 = vpop.f32.mrb[0].mxu0
    %v1070 = vpop.f32.mrb[0].mxu0
    %1071 = vdwg.mxu0
    %1072 = vmatprep.subr.bf16.mxu0 0
    %1073 = vmatpush1.bf16.msra.mxu0 %v808
    %1074 = vmatprep.subr.bf16.mxu0 0
    %1075 = vmatpush1.bf16.msra.mxu0 %v809
    %1076 = vmatprep.subr.bf16.mxu0 0
    %1077 = vmatpush1.bf16.msra.mxu0 %v810
    %1078 = vmatprep.subr.bf16.mxu0 0
    %1079 = vmatpush1.bf16.msra.mxu0 %v811
    %1080 = vmatprep.subr.bf16.mxu0 0
    %1081 = vmatpush1.bf16.msra.mxu0 %v812
    %1082 = vmatprep.subr.bf16.mxu0 0
    %1083 = vmatpush1.bf16.msra.mxu0 %v813
    %1084 = vmatprep.subr.bf16.mxu0 0
    %1085 = vmatpush1.bf16.msra.mxu0 %v814
    %1086 = vmatprep.subr.bf16.mxu0 0
    %1087 = vmatpush1.bf16.msra.mxu0 %v815
    %1088 = vmatprep.subr.bf16.mxu0 0
    %1089 = vmatpush1.bf16.msra.mxu0 %v816
    %1090 = vmatprep.subr.bf16.mxu0 0
    %1091 = vmatpush1.bf16.msra.mxu0 %v817
    %1092 = vmatprep.subr.bf16.mxu0 0
    %1093 = vmatpush1.bf16.msra.mxu0 %v818
    %1094 = vmatprep.subr.bf16.mxu0 0
    %1095 = vmatpush1.bf16.msra.mxu0 %v819
    %1096 = vmatprep.subr.bf16.mxu0 0
    %1097 = vmatpush1.bf16.msra.mxu0 %v820
    %1098 = vmatprep.subr.bf16.mxu0 0
    %1099 = vmatpush1.bf16.msra.mxu0 %v821
    %1100 = vmatprep.subr.bf16.mxu0 0
    %1101 = vmatpush1.bf16.msra.mxu0 %v822
    %1102 = vmatprep.subr.bf16.mxu0 0
    %1103 = vmatpush1.bf16.msra.mxu0 %v823
    %1104 = vmatprep.mubr.bf16.mxu0 %v71
    %1105 = vmatmul.mubr.bf16.gmra.mrb[0].mxu0 %v70
    %v1106 = vpop.f32.mrb[0].mxu0
    %v1107 = vadd.f32 %v1067, %v1106
    %v1108 = vpop.f32.mrb[0].mxu0
    %v1109 = vpop.f32.mrb[0].mxu0
    %v1110 = vpop.f32.mrb[0].mxu0
    %1111 = vdwg.mxu0
    %1112 = vmatprep.subr.bf16.mxu0 0
    %1113 = vmatpush1.bf16.msra.mxu0 %v824
    %1114 = vmatprep.subr.bf16.mxu0 0
    %1115 = vmatpush1.bf16.msra.mxu0 %v825
    %1116 = vmatprep.subr.bf16.mxu0 0
    %1117 = vmatpush1.bf16.msra.mxu0 %v826
    %1118 = vmatprep.subr.bf16.mxu0 0
    %1119 = vmatpush1.bf16.msra.mxu0 %v827
    %1120 = vmatprep.subr.bf16.mxu0 0
    %1121 = vmatpush1.bf16.msra.mxu0 %v828
    %1122 = vmatprep.subr.bf16.mxu0 0
    %1123 = vmatpush1.bf16.msra.mxu0 %v829
    %1124 = vmatprep.subr.bf16.mxu0 0
    %1125 = vmatpush1.bf16.msra.mxu0 %v830
    %1126 = vmatprep.subr.bf16.mxu0 0
    %1127 = vmatpush1.bf16.msra.mxu0 %v831
    %1128 = vmatprep.subr.bf16.mxu0 0
    %1129 = vmatpush1.bf16.msra.mxu0 %v832
    %1130 = vmatprep.subr.bf16.mxu0 0
    %1131 = vmatpush1.bf16.msra.mxu0 %v833
    %1132 = vmatprep.subr.bf16.mxu0 0
    %1133 = vmatpush1.bf16.msra.mxu0 %v834
    %1134 = vmatprep.subr.bf16.mxu0 0
    %1135 = vmatpush1.bf16.msra.mxu0 %v835
    %1136 = vmatprep.subr.bf16.mxu0 0
    %1137 = vmatpush1.bf16.msra.mxu0 %v836
    %1138 = vmatprep.subr.bf16.mxu0 0
    %1139 = vmatpush1.bf16.msra.mxu0 %v837
    %1140 = vmatprep.subr.bf16.mxu0 0
    %1141 = vmatpush1.bf16.msra.mxu0 %v838
    %1142 = vmatprep.subr.bf16.mxu0 0
    %1143 = vmatpush1.bf16.msra.mxu0 %v839
    %1144 = vmatprep.mubr.bf16.mxu0 %v73
    %1145 = vmatmul.mubr.bf16.gmra.mrb[0].mxu0 %v72
    %v1146 = vpop.f32.mrb[0].mxu0
    %v1147 = vadd.f32 %v1107, %v1146
    %v1148 = vpop.f32.mrb[0].mxu0
    %v1149 = vpop.f32.mrb[0].mxu0
    %v1150 = vpop.f32.mrb[0].mxu0
    %1151 = vdwg.mxu0
    %1152 = vmatprep.subr.bf16.mxu0 0
    %1153 = vmatpush1.bf16.msra.mxu0 %v840
    %1154 = vmatprep.subr.bf16.mxu0 0
    %1155 = vmatpush1.bf16.msra.mxu0 %v841
    %1156 = vmatprep.subr.bf16.mxu0 0
    %1157 = vmatpush1.bf16.msra.mxu0 %v842
    %1158 = vmatprep.subr.bf16.mxu0 0
    %1159 = vmatpush1.bf16.msra.mxu0 %v843
    %1160 = vmatprep.subr.bf16.mxu0 0
    %1161 = vmatpush1.bf16.msra.mxu0 %v844
    %1162 = vmatprep.subr.bf16.mxu0 0
    %1163 = vmatpush1.bf16.msra.mxu0 %v845
    %1164 = vmatprep.subr.bf16.mxu0 0
    %1165 = vmatpush1.bf16.msra.mxu0 %v846
    %1166 = vmatprep.subr.bf16.mxu0 0
    %1167 = vmatpush1.bf16.msra.mxu0 %v847
    %1168 = vmatprep.subr.bf16.mxu0 0
    %1169 = vmatpush1.bf16.msra.mxu0 %v848
    %1170 = vmatprep.subr.bf16.mxu0 0
    %1171 = vmatpush1.bf16.msra.mxu0 %v849
    %1172 = vmatprep.subr.bf16.mxu0 0
    %1173 = vmatpush1.bf16.msra.mxu0 %v850
    %1174 = vmatprep.subr.bf16.mxu0 0
    %1175 = vmatpush1.bf16.msra.mxu0 %v851
    %1176 = vmatprep.subr.bf16.mxu0 0
    %1177 = vmatpush1.bf16.msra.mxu0 %v852
    %1178 = vmatprep.subr.bf16.mxu0 0
    %1179 = vmatpush1.bf16.msra.mxu0 %v853
    %1180 = vmatprep.subr.bf16.mxu0 0
    %1181 = vmatpush1.bf16.msra.mxu0 %v854
    %1182 = vmatprep.subr.bf16.mxu0 0
    %1183 = vmatpush1.bf16.msra.mxu0 %v855
    %1184 = vmatprep.mubr.bf16.mxu0 %v75
    %1185 = vmatmul.mubr.bf16.gmra.mrb[0].mxu0 %v74
    %v1186 = vpop.f32.mrb[0].mxu0
    %v1187 = vadd.f32 %v1147, %v1186
    %v1188 = vpop.f32.mrb[0].mxu0
    %v1189 = vpop.f32.mrb[0].mxu0
    %v1190 = vpop.f32.mrb[0].mxu0
    %1191 = vdwg.mxu0
    %1192 = vmatprep.subr.bf16.mxu0 0
    %1193 = vmatpush1.bf16.msra.mxu0 %v856
    %1194 = vmatprep.subr.bf16.mxu0 0
    %1195 = vmatpush1.bf16.msra.mxu0 %v857
    %1196 = vmatprep.subr.bf16.mxu0 0
    %1197 = vmatpush1.bf16.msra.mxu0 %v858
    %1198 = vmatprep.subr.bf16.mxu0 0
    %1199 = vmatpush1.bf16.msra.mxu0 %v859
    %1200 = vmatprep.subr.bf16.mxu0 0
    %1201 = vmatpush1.bf16.msra.mxu0 %v860
    %1202 = vmatprep.subr.bf16.mxu0 0
    %1203 = vmatpush1.bf16.msra.mxu0 %v861
    %1204 = vmatprep.subr.bf16.mxu0 0
    %1205 = vmatpush1.bf16.msra.mxu0 %v862
    %1206 = vmatprep.subr.bf16.mxu0 0
    %1207 = vmatpush1.bf16.msra.mxu0 %v863
    %1208 = vmatprep.subr.bf16.mxu0 0
    %1209 = vmatpush1.bf16.msra.mxu0 %v864
    %1210 = vmatprep.subr.bf16.mxu0 0
    %1211 = vmatpush1.bf16.msra.mxu0 %v865
    %1212 = vmatprep.subr.bf16.mxu0 0
    %1213 = vmatpush1.bf16.msra.mxu0 %v866
    %1214 = vmatprep.subr.bf16.mxu0 0
    %1215 = vmatpush1.bf16.msra.mxu0 %v867
    %1216 = vmatprep.subr.bf16.mxu0 0
    %1217 = vmatpush1.bf16.msra.mxu0 %v868
    %1218 = vmatprep.subr.bf16.mxu0 0
    %1219 = vmatpush1.bf16.msra.mxu0 %v869
    %1220 = vmatprep.subr.bf16.mxu0 0
    %1221 = vmatpush1.bf16.msra.mxu0 %v870
    %1222 = vmatprep.subr.bf16.mxu0 0
    %1223 = vmatpush1.bf16.msra.mxu0 %v871
    %1224 = vmatprep.mubr.bf16.mxu0 %v77
    %1225 = vmatmul.mubr.bf16.gmra.mrb[0].mxu0 %v76
    %v1226 = vpop.f32.mrb[0].mxu0
    %v1227 = vadd.f32 %v1187, %v1226
    %v1228 = vpop.f32.mrb[0].mxu0
    %v1229 = vpop.f32.mrb[0].mxu0
    %v1230 = vpop.f32.mrb[0].mxu0
    %1231 = vdwg.mxu0
    %1232 = vmatprep.subr.bf16.mxu0 0
    %1233 = vmatpush1.bf16.msra.mxu0 %v872
    %1234 = vmatprep.subr.bf16.mxu0 0
    %1235 = vmatpush1.bf16.msra.mxu0 %v873
    %1236 = vmatprep.subr.bf16.mxu0 0
    %1237 = vmatpush1.bf16.msra.mxu0 %v874
    %1238 = vmatprep.subr.bf16.mxu0 0
    %1239 = vmatpush1.bf16.msra.mxu0 %v875
    %1240 = vmatprep.subr.bf16.mxu0 0
    %1241 = vmatpush1.bf16.msra.mxu0 %v876
    %1242 = vmatprep.subr.bf16.mxu0 0
    %1243 = vmatpush1.bf16.msra.mxu0 %v877
    %1244 = vmatprep.subr.bf16.mxu0 0
    %1245 = vmatpush1.bf16.msra.mxu0 %v878
    %1246 = vmatprep.subr.bf16.mxu0 0
    %1247 = vmatpush1.bf16.msra.mxu0 %v879
    %1248 = vmatprep.subr.bf16.mxu0 0
    %1249 = vmatpush1.bf16.msra.mxu0 %v880
    %1250 = vmatprep.subr.bf16.mxu0 0
    %1251 = vmatpush1.bf16.msra.mxu0 %v881
    %1252 = vmatprep.subr.bf16.mxu0 0
    %1253 = vmatpush1.bf16.msra.mxu0 %v882
    %1254 = vmatprep.subr.bf16.mxu0 0
    %1255 = vmatpush1.bf16.msra.mxu0 %v883
    %1256 = vmatprep.subr.bf16.mxu0 0
    %1257 = vmatpush1.bf16.msra.mxu0 %v884
    %1258 = vmatprep.subr.bf16.mxu0 0
    %1259 = vmatpush1.bf16.msra.mxu0 %v885
    %1260 = vmatprep.subr.bf16.mxu0 0
    %1261 = vmatpush1.bf16.msra.mxu0 %v886
    %1262 = vmatprep.subr.bf16.mxu0 0
    %1263 = vmatpush1.bf16.msra.mxu0 %v887
    %1264 = vmatprep.mubr.bf16.mxu0 %v79
    %1265 = vmatmul.mubr.bf16.gmra.mrb[0].mxu0 %v78
    %v1266 = vpop.f32.mrb[0].mxu0
    %v1267 = vadd.f32 %v1227, %v1266
    %v1268 = vpop.f32.mrb[0].mxu0
    %v1269 = vpop.f32.mrb[0].mxu0
    %v1270 = vpop.f32.mrb[0].mxu0
    %1271 = vdwg.mxu0
    %1272 = vmatprep.subr.bf16.mxu0 0
    %1273 = vmatpush1.bf16.msra.mxu0 %v888
    %1274 = vmatprep.subr.bf16.mxu0 0
    %1275 = vmatpush1.bf16.msra.mxu0 %v889
    %1276 = vmatprep.subr.bf16.mxu0 0
    %1277 = vmatpush1.bf16.msra.mxu0 %v890
    %1278 = vmatprep.subr.bf16.mxu0 0
    %1279 = vmatpush1.bf16.msra.mxu0 %v891
    %1280 = vmatprep.subr.bf16.mxu0 0
    %1281 = vmatpush1.bf16.msra.mxu0 %v892
    %1282 = vmatprep.subr.bf16.mxu0 0
    %1283 = vmatpush1.bf16.msra.mxu0 %v893
    %1284 = vmatprep.subr.bf16.mxu0 0
    %1285 = vmatpush1.bf16.msra.mxu0 %v894
    %1286 = vmatprep.subr.bf16.mxu0 0
    %1287 = vmatpush1.bf16.msra.mxu0 %v895
    %1288 = vmatprep.subr.bf16.mxu0 0
    %1289 = vmatpush1.bf16.msra.mxu0 %v896
    %1290 = vmatprep.subr.bf16.mxu0 0
    %1291 = vmatpush1.bf16.msra.mxu0 %v897
    %1292 = vmatprep.subr.bf16.mxu0 0
    %1293 = vmatpush1.bf16.msra.mxu0 %v898
    %1294 = vmatprep.subr.bf16.mxu0 0
    %1295 = vmatpush1.bf16.msra.mxu0 %v899
    %1296 = vmatprep.subr.bf16.mxu0 0
    %1297 = vmatpush1.bf16.msra.mxu0 %v900
    %1298 = vmatprep.subr.bf16.mxu0 0
    %1299 = vmatpush1.bf16.msra.mxu0 %v901
    %1300 = vmatprep.subr.bf16.mxu0 0
    %1301 = vmatpush1.bf16.msra.mxu0 %v902
    %1302 = vmatprep.subr.bf16.mxu0 0
    %1303 = vmatpush1.bf16.msra.mxu0 %v903
    %1304 = vmatprep.mubr.bf16.mxu0 %v81
    %1305 = vmatmul.mubr.bf16.gmra.mrb[0].mxu0 %v80
    %v1306 = vpop.f32.mrb[0].mxu0
    %v1307 = vadd.f32 %v1267, %v1306
    %v1308 = vpop.f32.mrb[0].mxu0
    %v1309 = vpop.f32.mrb[0].mxu0
    %v1310 = vpop.f32.mrb[0].mxu0
    %1311 = vdwg.mxu0
    %1312 = vmatprep.subr.bf16.mxu0 0
    %1313 = vmatpush1.bf16.msra.mxu0 %v904
    %1314 = vmatprep.subr.bf16.mxu0 0
    %1315 = vmatpush1.bf16.msra.mxu0 %v905
    %1316 = vmatprep.subr.bf16.mxu0 0
    %1317 = vmatpush1.bf16.msra.mxu0 %v906
    %1318 = vmatprep.subr.bf16.mxu0 0
    %1319 = vmatpush1.bf16.msra.mxu0 %v907
    %1320 = vmatprep.subr.bf16.mxu0 0
    %1321 = vmatpush1.bf16.msra.mxu0 %v908
    %1322 = vmatprep.subr.bf16.mxu0 0
    %1323 = vmatpush1.bf16.msra.mxu0 %v909
    %1324 = vmatprep.subr.bf16.mxu0 0
    %1325 = vmatpush1.bf16.msra.mxu0 %v910
    %1326 = vmatprep.subr.bf16.mxu0 0
    %1327 = vmatpush1.bf16.msra.mxu0 %v911
    %1328 = vmatprep.subr.bf16.mxu0 0
    %1329 = vmatpush1.bf16.msra.mxu0 %v912
    %1330 = vmatprep.subr.bf16.mxu0 0
    %1331 = vmatpush1.bf16.msra.mxu0 %v913
    %1332 = vmatprep.subr.bf16.mxu0 0
    %1333 = vmatpush1.bf16.msra.mxu0 %v914
    %1334 = vmatprep.subr.bf16.mxu0 0
    %1335 = vmatpush1.bf16.msra.mxu0 %v915
    %1336 = vmatprep.subr.bf16.mxu0 0
    %1337 = vmatpush1.bf16.msra.mxu0 %v916
    %1338 = vmatprep.subr.bf16.mxu0 0
    %1339 = vmatpush1.bf16.msra.mxu0 %v917
    %1340 = vmatprep.subr.bf16.mxu0 0
    %1341 = vmatpush1.bf16.msra.mxu0 %v918
    %1342 = vmatprep.subr.bf16.mxu0 0
    %1343 = vmatpush1.bf16.msra.mxu0 %v919
    %1344 = vmatprep.mubr.bf16.mxu0 %v83
    %1345 = vmatmul.mubr.bf16.gmra.mrb[0].mxu0 %v82
    %v1346 = vpop.f32.mrb[0].mxu0
    %v1347 = vadd.f32 %v1307, %v1346
    %v1348 = vpop.f32.mrb[0].mxu0
    %v1349 = vpop.f32.mrb[0].mxu0
    %v1350 = vpop.f32.mrb[0].mxu0
    %1351 = vdwg.mxu0
    %1352 = vmatprep.subr.bf16.mxu0 0
    %1353 = vmatpush1.bf16.msra.mxu0 %v920
    %1354 = vmatprep.subr.bf16.mxu0 0
    %1355 = vmatpush1.bf16.msra.mxu0 %v921
    %1356 = vmatprep.subr.bf16.mxu0 0
    %1357 = vmatpush1.bf16.msra.mxu0 %v922
    %1358 = vmatprep.subr.bf16.mxu0 0
    %1359 = vmatpush1.bf16.msra.mxu0 %v923
    %1360 = vmatprep.subr.bf16.mxu0 0
    %1361 = vmatpush1.bf16.msra.mxu0 %v924
    %1362 = vmatprep.subr.bf16.mxu0 0
    %1363 = vmatpush1.bf16.msra.mxu0 %v925
    %1364 = vmatprep.subr.bf16.mxu0 0
    %1365 = vmatpush1.bf16.msra.mxu0 %v926
    %1366 = vmatprep.subr.bf16.mxu0 0
    %1367 = vmatpush1.bf16.msra.mxu0 %v927
    %1368 = vmatprep.subr.bf16.mxu0 0
    %1369 = vmatpush1.bf16.msra.mxu0 %v928
    %1370 = vmatprep.subr.bf16.mxu0 0
    %1371 = vmatpush1.bf16.msra.mxu0 %v929
    %1372 = vmatprep.subr.bf16.mxu0 0
    %1373 = vmatpush1.bf16.msra.mxu0 %v930
    %1374 = vmatprep.subr.bf16.mxu0 0
    %1375 = vmatpush1.bf16.msra.mxu0 %v931
    %1376 = vmatprep.subr.bf16.mxu0 0
    %1377 = vmatpush1.bf16.msra.mxu0 %v932
    %1378 = vmatprep.subr.bf16.mxu0 0
    %1379 = vmatpush1.bf16.msra.mxu0 %v933
    %1380 = vmatprep.subr.bf16.mxu0 0
    %1381 = vmatpush1.bf16.msra.mxu0 %v934
    %1382 = vmatprep.subr.bf16.mxu0 0
    %1383 = vmatpush1.bf16.msra.mxu0 %v935
    %1384 = vmatprep.mubr.bf16.mxu0 %v85
    %1385 = vmatmul.mubr.bf16.gmra.mrb[0].mxu0 %v84
    %v1386 = vpop.f32.mrb[0].mxu0
    %v1387 = vadd.f32 %v1347, %v1386
    %v1388 = vpop.f32.mrb[0].mxu0
    %v1389 = vpop.f32.mrb[0].mxu0
    %v1390 = vpop.f32.mrb[0].mxu0
    %1391 = vdwg.mxu0
    %1392 = vmatprep.subr.bf16.mxu0 0
    %1393 = vmatpush1.bf16.msra.mxu0 %v936
    %1394 = vmatprep.subr.bf16.mxu0 0
    %1395 = vmatpush1.bf16.msra.mxu0 %v937
    %1396 = vmatprep.subr.bf16.mxu0 0
    %1397 = vmatpush1.bf16.msra.mxu0 %v938
    %1398 = vmatprep.subr.bf16.mxu0 0
    %1399 = vmatpush1.bf16.msra.mxu0 %v939
    %1400 = vmatprep.subr.bf16.mxu0 0
    %1401 = vmatpush1.bf16.msra.mxu0 %v940
    %1402 = vmatprep.subr.bf16.mxu0 0
    %1403 = vmatpush1.bf16.msra.mxu0 %v941
    %1404 = vmatprep.subr.bf16.mxu0 0
    %1405 = vmatpush1.bf16.msra.mxu0 %v942
    %1406 = vmatprep.subr.bf16.mxu0 0
    %1407 = vmatpush1.bf16.msra.mxu0 %v943
    %1408 = vmatprep.subr.bf16.mxu0 0
    %1409 = vmatpush1.bf16.msra.mxu0 %v944
    %1410 = vmatprep.subr.bf16.mxu0 0
    %1411 = vmatpush1.bf16.msra.mxu0 %v945
    %1412 = vmatprep.subr.bf16.mxu0 0
    %1413 = vmatpush1.bf16.msra.mxu0 %v946
    %1414 = vmatprep.subr.bf16.mxu0 0
    %1415 = vmatpush1.bf16.msra.mxu0 %v947
    %1416 = vmatprep.subr.bf16.mxu0 0
    %1417 = vmatpush1.bf16.msra.mxu0 %v948
    %1418 = vmatprep.subr.bf16.mxu0 0
    %1419 = vmatpush1.bf16.msra.mxu0 %v949
    %1420 = vmatprep.subr.bf16.mxu0 0
    %1421 = vmatpush1.bf16.msra.mxu0 %v950
    %1422 = vmatprep.subr.bf16.mxu0 0
    %1423 = vmatpush1.bf16.msra.mxu0 %v951
    %1424 = vmatprep.mubr.bf16.mxu0 %v87
    %1425 = vmatmul.mubr.bf16.gmra.mrb[0].mxu0 %v86
    %v1426 = vpop.f32.mrb[0].mxu0
    %v1427 = vadd.f32 %v1387, %v1426
    %v1428 = vpop.f32.mrb[0].mxu0
    %v1429 = vpop.f32.mrb[0].mxu0
    %v1430 = vpop.f32.mrb[0].mxu0
    %1431 = vdwg.mxu0
    %v1432 = vld [vmem:[#allocation2 + $0xc00] sm:$0xff]
    %v1433 = vld [vmem:[#allocation2 + $0xc08] sm:$0xff]
    %v1434 = vld [vmem:[#allocation2 + $0xc10] sm:$0xff]
    %v1435 = vld [vmem:[#allocation2 + $0xc18] sm:$0xff]
    %v1436 = vld [vmem:[#allocation2 + $0xc20] sm:$0xff]
    %v1437 = vld [vmem:[#allocation2 + $0xc28] sm:$0xff]
    %v1438 = vld [vmem:[#allocation2 + $0xc30] sm:$0xff]
    %v1439 = vld [vmem:[#allocation2 + $0xc38] sm:$0xff]
    %v1440 = vld [vmem:[#allocation2 + $0xc40] sm:$0xff]
    %v1441 = vld [vmem:[#allocation2 + $0xc48] sm:$0xff]
    %v1442 = vld [vmem:[#allocation2 + $0xc50] sm:$0xff]
    %v1443 = vld [vmem:[#allocation2 + $0xc58] sm:$0xff]
    %v1444 = vld [vmem:[#allocation2 + $0xc60] sm:$0xff]
    %v1445 = vld [vmem:[#allocation2 + $0xc68] sm:$0xff]
    %v1446 = vld [vmem:[#allocation2 + $0xc70] sm:$0xff]
    %v1447 = vld [vmem:[#allocation2 + $0xc78] sm:$0xff]
    %v1448 = vld [vmem:[#allocation2 + $0xc80] sm:$0xff]
    %v1449 = vld [vmem:[#allocation2 + $0xc88] sm:$0xff]
    %v1450 = vld [vmem:[#allocation2 + $0xc90] sm:$0xff]
    %v1451 = vld [vmem:[#allocation2 + $0xc98] sm:$0xff]
    %v1452 = vld [vmem:[#allocation2 + $0xca0] sm:$0xff]
    %v1453 = vld [vmem:[#allocation2 + $0xca8] sm:$0xff]
    %v1454 = vld [vmem:[#allocation2 + $0xcb0] sm:$0xff]
    %v1455 = vld [vmem:[#allocation2 + $0xcb8] sm:$0xff]
    %v1456 = vld [vmem:[#allocation2 + $0xcc0] sm:$0xff]
    %v1457 = vld [vmem:[#allocation2 + $0xcc8] sm:$0xff]
    %v1458 = vld [vmem:[#allocation2 + $0xcd0] sm:$0xff]
    %v1459 = vld [vmem:[#allocation2 + $0xcd8] sm:$0xff]
    %v1460 = vld [vmem:[#allocation2 + $0xce0] sm:$0xff]
    %v1461 = vld [vmem:[#allocation2 + $0xce8] sm:$0xff]
    %v1462 = vld [vmem:[#allocation2 + $0xcf0] sm:$0xff]
    %v1463 = vld [vmem:[#allocation2 + $0xcf8] sm:$0xff]
    %v1464 = vld [vmem:[#allocation2 + $0xd00] sm:$0xff]
    %v1465 = vld [vmem:[#allocation2 + $0xd08] sm:$0xff]
    %v1466 = vld [vmem:[#allocation2 + $0xd10] sm:$0xff]
    %v1467 = vld [vmem:[#allocation2 + $0xd18] sm:$0xff]
    %v1468 = vld [vmem:[#allocation2 + $0xd20] sm:$0xff]
    %v1469 = vld [vmem:[#allocation2 + $0xd28] sm:$0xff]
    %v1470 = vld [vmem:[#allocation2 + $0xd30] sm:$0xff]
    %v1471 = vld [vmem:[#allocation2 + $0xd38] sm:$0xff]
    %v1472 = vld [vmem:[#allocation2 + $0xd40] sm:$0xff]
    %v1473 = vld [vmem:[#allocation2 + $0xd48] sm:$0xff]
    %v1474 = vld [vmem:[#allocation2 + $0xd50] sm:$0xff]
    %v1475 = vld [vmem:[#allocation2 + $0xd58] sm:$0xff]
    %v1476 = vld [vmem:[#allocation2 + $0xd60] sm:$0xff]
    %v1477 = vld [vmem:[#allocation2 + $0xd68] sm:$0xff]
    %v1478 = vld [vmem:[#allocation2 + $0xd70] sm:$0xff]
    %v1479 = vld [vmem:[#allocation2 + $0xd78] sm:$0xff]
    %v1480 = vld [vmem:[#allocation2 + $0xd80] sm:$0xff]
    %v1481 = vld [vmem:[#allocation2 + $0xd88] sm:$0xff]
    %v1482 = vld [vmem:[#allocation2 + $0xd90] sm:$0xff]
    %v1483 = vld [vmem:[#allocation2 + $0xd98] sm:$0xff]
    %v1484 = vld [vmem:[#allocation2 + $0xda0] sm:$0xff]
    %v1485 = vld [vmem:[#allocation2 + $0xda8] sm:$0xff]
    %v1486 = vld [vmem:[#allocation2 + $0xdb0] sm:$0xff]
    %v1487 = vld [vmem:[#allocation2 + $0xdb8] sm:$0xff]
    %v1488 = vld [vmem:[#allocation2 + $0xdc0] sm:$0xff]
    %v1489 = vld [vmem:[#allocation2 + $0xdc8] sm:$0xff]
    %v1490 = vld [vmem:[#allocation2 + $0xdd0] sm:$0xff]
    %v1491 = vld [vmem:[#allocation2 + $0xdd8] sm:$0xff]
    %v1492 = vld [vmem:[#allocation2 + $0xde0] sm:$0xff]
    %v1493 = vld [vmem:[#allocation2 + $0xde8] sm:$0xff]
    %v1494 = vld [vmem:[#allocation2 + $0xdf0] sm:$0xff]
    %v1495 = vld [vmem:[#allocation2 + $0xdf8] sm:$0xff]
    %v1496 = vld [vmem:[#allocation2 + $0xe00] sm:$0xff]
    %v1497 = vld [vmem:[#allocation2 + $0xe08] sm:$0xff]
    %v1498 = vld [vmem:[#allocation2 + $0xe10] sm:$0xff]
    %v1499 = vld [vmem:[#allocation2 + $0xe18] sm:$0xff]
    %v1500 = vld [vmem:[#allocation2 + $0xe20] sm:$0xff]
    %v1501 = vld [vmem:[#allocation2 + $0xe28] sm:$0xff]
    %v1502 = vld [vmem:[#allocation2 + $0xe30] sm:$0xff]
    %v1503 = vld [vmem:[#allocation2 + $0xe38] sm:$0xff]
    %v1504 = vld [vmem:[#allocation2 + $0xe40] sm:$0xff]
    %v1505 = vld [vmem:[#allocation2 + $0xe48] sm:$0xff]
    %v1506 = vld [vmem:[#allocation2 + $0xe50] sm:$0xff]
    %v1507 = vld [vmem:[#allocation2 + $0xe58] sm:$0xff]
    %v1508 = vld [vmem:[#allocation2 + $0xe60] sm:$0xff]
    %v1509 = vld [vmem:[#allocation2 + $0xe68] sm:$0xff]
    %v1510 = vld [vmem:[#allocation2 + $0xe70] sm:$0xff]
    %v1511 = vld [vmem:[#allocation2 + $0xe78] sm:$0xff]
    %v1512 = vld [vmem:[#allocation2 + $0xe80] sm:$0xff]
    %v1513 = vld [vmem:[#allocation2 + $0xe88] sm:$0xff]
    %v1514 = vld [vmem:[#allocation2 + $0xe90] sm:$0xff]
    %v1515 = vld [vmem:[#allocation2 + $0xe98] sm:$0xff]
    %v1516 = vld [vmem:[#allocation2 + $0xea0] sm:$0xff]
    %v1517 = vld [vmem:[#allocation2 + $0xea8] sm:$0xff]
    %v1518 = vld [vmem:[#allocation2 + $0xeb0] sm:$0xff]
    %v1519 = vld [vmem:[#allocation2 + $0xeb8] sm:$0xff]
    %v1520 = vld [vmem:[#allocation2 + $0xec0] sm:$0xff]
    %v1521 = vld [vmem:[#allocation2 + $0xec8] sm:$0xff]
    %v1522 = vld [vmem:[#allocation2 + $0xed0] sm:$0xff]
    %v1523 = vld [vmem:[#allocation2 + $0xed8] sm:$0xff]
    %v1524 = vld [vmem:[#allocation2 + $0xee0] sm:$0xff]
    %v1525 = vld [vmem:[#allocation2 + $0xee8] sm:$0xff]
    %v1526 = vld [vmem:[#allocation2 + $0xef0] sm:$0xff]
    %v1527 = vld [vmem:[#allocation2 + $0xef8] sm:$0xff]
    %v1528 = vld [vmem:[#allocation2 + $0xf00] sm:$0xff]
    %v1529 = vld [vmem:[#allocation2 + $0xf08] sm:$0xff]
    %v1530 = vld [vmem:[#allocation2 + $0xf10] sm:$0xff]
    %v1531 = vld [vmem:[#allocation2 + $0xf18] sm:$0xff]
    %v1532 = vld [vmem:[#allocation2 + $0xf20] sm:$0xff]
    %v1533 = vld [vmem:[#allocation2 + $0xf28] sm:$0xff]
    %v1534 = vld [vmem:[#allocation2 + $0xf30] sm:$0xff]
    %v1535 = vld [vmem:[#allocation2 + $0xf38] sm:$0xff]
    %v1536 = vld [vmem:[#allocation2 + $0xf40] sm:$0xff]
    %v1537 = vld [vmem:[#allocation2 + $0xf48] sm:$0xff]
    %v1538 = vld [vmem:[#allocation2 + $0xf50] sm:$0xff]
    %v1539 = vld [vmem:[#allocation2 + $0xf58] sm:$0xff]
    %v1540 = vld [vmem:[#allocation2 + $0xf60] sm:$0xff]
    %v1541 = vld [vmem:[#allocation2 + $0xf68] sm:$0xff]
    %v1542 = vld [vmem:[#allocation2 + $0xf70] sm:$0xff]
    %v1543 = vld [vmem:[#allocation2 + $0xf78] sm:$0xff]
    %v1544 = vld [vmem:[#allocation2 + $0xf80] sm:$0xff]
    %v1545 = vld [vmem:[#allocation2 + $0xf88] sm:$0xff]
    %v1546 = vld [vmem:[#allocation2 + $0xf90] sm:$0xff]
    %v1547 = vld [vmem:[#allocation2 + $0xf98] sm:$0xff]
    %v1548 = vld [vmem:[#allocation2 + $0xfa0] sm:$0xff]
    %v1549 = vld [vmem:[#allocation2 + $0xfa8] sm:$0xff]
    %v1550 = vld [vmem:[#allocation2 + $0xfb0] sm:$0xff]
    %v1551 = vld [vmem:[#allocation2 + $0xfb8] sm:$0xff]
    %v1552 = vld [vmem:[#allocation2 + $0xfc0] sm:$0xff]
    %v1553 = vld [vmem:[#allocation2 + $0xfc8] sm:$0xff]
    %v1554 = vld [vmem:[#allocation2 + $0xfd0] sm:$0xff]
    %v1555 = vld [vmem:[#allocation2 + $0xfd8] sm:$0xff]
    %v1556 = vld [vmem:[#allocation2 + $0xfe0] sm:$0xff]
    %v1557 = vld [vmem:[#allocation2 + $0xfe8] sm:$0xff]
    %v1558 = vld [vmem:[#allocation2 + $0xff0] sm:$0xff]
    %v1559 = vld [vmem:[#allocation2 + $0xff8] sm:$0xff]
    %v1560 = vld [vmem:[#allocation2 + $0x1000] sm:$0xff]
    %v1561 = vld [vmem:[#allocation2 + $0x1008] sm:$0xff]
    %v1562 = vld [vmem:[#allocation2 + $0x1010] sm:$0xff]
    %v1563 = vld [vmem:[#allocation2 + $0x1018] sm:$0xff]
    %v1564 = vld [vmem:[#allocation2 + $0x1020] sm:$0xff]
    %v1565 = vld [vmem:[#allocation2 + $0x1028] sm:$0xff]
    %v1566 = vld [vmem:[#allocation2 + $0x1030] sm:$0xff]
    %v1567 = vld [vmem:[#allocation2 + $0x1038] sm:$0xff]
    %v1568 = vld [vmem:[#allocation2 + $0x1040] sm:$0xff]
    %v1569 = vld [vmem:[#allocation2 + $0x1048] sm:$0xff]
    %v1570 = vld [vmem:[#allocation2 + $0x1050] sm:$0xff]
    %v1571 = vld [vmem:[#allocation2 + $0x1058] sm:$0xff]
    %v1572 = vld [vmem:[#allocation2 + $0x1060] sm:$0xff]
    %v1573 = vld [vmem:[#allocation2 + $0x1068] sm:$0xff]
    %v1574 = vld [vmem:[#allocation2 + $0x1070] sm:$0xff]
    %v1575 = vld [vmem:[#allocation2 + $0x1078] sm:$0xff]
    %v1576 = vld [vmem:[#allocation2 + $0x1080] sm:$0xff]
    %v1577 = vld [vmem:[#allocation2 + $0x1088] sm:$0xff]
    %v1578 = vld [vmem:[#allocation2 + $0x1090] sm:$0xff]
    %v1579 = vld [vmem:[#allocation2 + $0x1098] sm:$0xff]
    %v1580 = vld [vmem:[#allocation2 + $0x10a0] sm:$0xff]
    %v1581 = vld [vmem:[#allocation2 + $0x10a8] sm:$0xff]
    %v1582 = vld [vmem:[#allocation2 + $0x10b0] sm:$0xff]
    %v1583 = vld [vmem:[#allocation2 + $0x10b8] sm:$0xff]
    %v1584 = vld [vmem:[#allocation2 + $0x10c0] sm:$0xff]
    %v1585 = vld [vmem:[#allocation2 + $0x10c8] sm:$0xff]
    %v1586 = vld [vmem:[#allocation2 + $0x10d0] sm:$0xff]
    %v1587 = vld [vmem:[#allocation2 + $0x10d8] sm:$0xff]
    %v1588 = vld [vmem:[#allocation2 + $0x10e0] sm:$0xff]
    %v1589 = vld [vmem:[#allocation2 + $0x10e8] sm:$0xff]
    %v1590 = vld [vmem:[#allocation2 + $0x10f0] sm:$0xff]
    %v1591 = vld [vmem:[#allocation2 + $0x10f8] sm:$0xff]
    %v1592 = vld [vmem:[#allocation2 + $0x1100] sm:$0xff]
    %v1593 = vld [vmem:[#allocation2 + $0x1108] sm:$0xff]
    %v1594 = vld [vmem:[#allocation2 + $0x1110] sm:$0xff]
    %v1595 = vld [vmem:[#allocation2 + $0x1118] sm:$0xff]
    %v1596 = vld [vmem:[#allocation2 + $0x1120] sm:$0xff]
    %v1597 = vld [vmem:[#allocation2 + $0x1128] sm:$0xff]
    %v1598 = vld [vmem:[#allocation2 + $0x1130] sm:$0xff]
    %v1599 = vld [vmem:[#allocation2 + $0x1138] sm:$0xff]
    %v1600 = vld [vmem:[#allocation2 + $0x1140] sm:$0xff]
    %v1601 = vld [vmem:[#allocation2 + $0x1148] sm:$0xff]
    %v1602 = vld [vmem:[#allocation2 + $0x1150] sm:$0xff]
    %v1603 = vld [vmem:[#allocation2 + $0x1158] sm:$0xff]
    %v1604 = vld [vmem:[#allocation2 + $0x1160] sm:$0xff]
    %v1605 = vld [vmem:[#allocation2 + $0x1168] sm:$0xff]
    %v1606 = vld [vmem:[#allocation2 + $0x1170] sm:$0xff]
    %v1607 = vld [vmem:[#allocation2 + $0x1178] sm:$0xff]
    %v1608 = vld [vmem:[#allocation2 + $0x1180] sm:$0xff]
    %v1609 = vld [vmem:[#allocation2 + $0x1188] sm:$0xff]
    %v1610 = vld [vmem:[#allocation2 + $0x1190] sm:$0xff]
    %v1611 = vld [vmem:[#allocation2 + $0x1198] sm:$0xff]
    %v1612 = vld [vmem:[#allocation2 + $0x11a0] sm:$0xff]
    %v1613 = vld [vmem:[#allocation2 + $0x11a8] sm:$0xff]
    %v1614 = vld [vmem:[#allocation2 + $0x11b0] sm:$0xff]
    %v1615 = vld [vmem:[#allocation2 + $0x11b8] sm:$0xff]
    %v1616 = vld [vmem:[#allocation2 + $0x11c0] sm:$0xff]
    %v1617 = vld [vmem:[#allocation2 + $0x11c8] sm:$0xff]
    %v1618 = vld [vmem:[#allocation2 + $0x11d0] sm:$0xff]
    %v1619 = vld [vmem:[#allocation2 + $0x11d8] sm:$0xff]
    %v1620 = vld [vmem:[#allocation2 + $0x11e0] sm:$0xff]
    %v1621 = vld [vmem:[#allocation2 + $0x11e8] sm:$0xff]
    %v1622 = vld [vmem:[#allocation2 + $0x11f0] sm:$0xff]
    %v1623 = vld [vmem:[#allocation2 + $0x11f8] sm:$0xff]
    %1624 = vmatprep.subr.bf16.mxu0 0
    %1625 = vmatpush1.bf16.msra.mxu0 %v1432
    %1626 = vmatprep.subr.bf16.mxu0 0
    %1627 = vmatpush1.bf16.msra.mxu0 %v1433
    %1628 = vmatprep.subr.bf16.mxu0 0
    %1629 = vmatpush1.bf16.msra.mxu0 %v1434
    %1630 = vmatprep.subr.bf16.mxu0 0
    %1631 = vmatpush1.bf16.msra.mxu0 %v1435
    %1632 = vmatprep.subr.bf16.mxu0 0
    %1633 = vmatpush1.bf16.msra.mxu0 %v1436
    %1634 = vmatprep.subr.bf16.mxu0 0
    %1635 = vmatpush1.bf16.msra.mxu0 %v1437
    %1636 = vmatprep.subr.bf16.mxu0 0
    %1637 = vmatpush1.bf16.msra.mxu0 %v1438
    %1638 = vmatprep.subr.bf16.mxu0 0
    %1639 = vmatpush1.bf16.msra.mxu0 %v1439
    %1640 = vmatprep.subr.bf16.mxu0 0
    %1641 = vmatpush1.bf16.msra.mxu0 %v1440
    %1642 = vmatprep.subr.bf16.mxu0 0
    %1643 = vmatpush1.bf16.msra.mxu0 %v1441
    %1644 = vmatprep.subr.bf16.mxu0 0
    %1645 = vmatpush1.bf16.msra.mxu0 %v1442
    %1646 = vmatprep.subr.bf16.mxu0 0
    %1647 = vmatpush1.bf16.msra.mxu0 %v1443
    %1648 = vmatprep.subr.bf16.mxu0 0
    %1649 = vmatpush1.bf16.msra.mxu0 %v1444
    %1650 = vmatprep.subr.bf16.mxu0 0
    %1651 = vmatpush1.bf16.msra.mxu0 %v1445
    %1652 = vmatprep.subr.bf16.mxu0 0
    %1653 = vmatpush1.bf16.msra.mxu0 %v1446
    %1654 = vmatprep.subr.bf16.mxu0 0
    %1655 = vmatpush1.bf16.msra.mxu0 %v1447
    %1656 = vmatprep.mubr.bf16.mxu0 %v65
    %1657 = vmatmul.mubr.bf16.gmra.mrb[0].mxu0 %v64
    %v1658 = vpop.f32.mrb[0].mxu0
    %v1659 = vadd.f32 0.0, %v1658
    %v1660 = vpop.f32.mrb[0].mxu0
    %v1661 = vpop.f32.mrb[0].mxu0
    %v1662 = vpop.f32.mrb[0].mxu0
    %1663 = vdwg.mxu0
    %1664 = vmatprep.subr.bf16.mxu0 0
    %1665 = vmatpush1.bf16.msra.mxu0 %v1448
    %1666 = vmatprep.subr.bf16.mxu0 0
    %1667 = vmatpush1.bf16.msra.mxu0 %v1449
    %1668 = vmatprep.subr.bf16.mxu0 0
    %1669 = vmatpush1.bf16.msra.mxu0 %v1450
    %1670 = vmatprep.subr.bf16.mxu0 0
    %1671 = vmatpush1.bf16.msra.mxu0 %v1451
    %1672 = vmatprep.subr.bf16.mxu0 0
    %1673 = vmatpush1.bf16.msra.mxu0 %v1452
    %1674 = vmatprep.subr.bf16.mxu0 0
    %1675 = vmatpush1.bf16.msra.mxu0 %v1453
    %1676 = vmatprep.subr.bf16.mxu0 0
    %1677 = vmatpush1.bf16.msra.mxu0 %v1454
    %1678 = vmatprep.subr.bf16.mxu0 0
    %1679 = vmatpush1.bf16.msra.mxu0 %v1455
    %1680 = vmatprep.subr.bf16.mxu0 0
    %1681 = vmatpush1.bf16.msra.mxu0 %v1456
    %1682 = vmatprep.subr.bf16.mxu0 0
    %1683 = vmatpush1.bf16.msra.mxu0 %v1457
    %1684 = vmatprep.subr.bf16.mxu0 0
    %1685 = vmatpush1.bf16.msra.mxu0 %v1458
    %1686 = vmatprep.subr.bf16.mxu0 0
    %1687 = vmatpush1.bf16.msra.mxu0 %v1459
    %1688 = vmatprep.subr.bf16.mxu0 0
    %1689 = vmatpush1.bf16.msra.mxu0 %v1460
    %1690 = vmatprep.subr.bf16.mxu0 0
    %1691 = vmatpush1.bf16.msra.mxu0 %v1461
    %1692 = vmatprep.subr.bf16.mxu0 0
    %1693 = vmatpush1.bf16.msra.mxu0 %v1462
    %1694 = vmatprep.subr.bf16.mxu0 0
    %1695 = vmatpush1.bf16.msra.mxu0 %v1463
    %1696 = vmatprep.mubr.bf16.mxu0 %v67
    %1697 = vmatmul.mubr.bf16.gmra.mrb[0].mxu0 %v66
    %v1698 = vpop.f32.mrb[0].mxu0
    %v1699 = vadd.f32 %v1659, %v1698
    %v1700 = vpop.f32.mrb[0].mxu0
    %v1701 = vpop.f32.mrb[0].mxu0
    %v1702 = vpop.f32.mrb[0].mxu0
    %1703 = vdwg.mxu0
    %1704 = vmatprep.subr.bf16.mxu0 0
    %1705 = vmatpush1.bf16.msra.mxu0 %v1464
    %1706 = vmatprep.subr.bf16.mxu0 0
    %1707 = vmatpush1.bf16.msra.mxu0 %v1465
    %1708 = vmatprep.subr.bf16.mxu0 0
    %1709 = vmatpush1.bf16.msra.mxu0 %v1466
    %1710 = vmatprep.subr.bf16.mxu0 0
    %1711 = vmatpush1.bf16.msra.mxu0 %v1467
    %1712 = vmatprep.subr.bf16.mxu0 0
    %1713 = vmatpush1.bf16.msra.mxu0 %v1468
    %1714 = vmatprep.subr.bf16.mxu0 0
    %1715 = vmatpush1.bf16.msra.mxu0 %v1469
    %1716 = vmatprep.subr.bf16.mxu0 0
    %1717 = vmatpush1.bf16.msra.mxu0 %v1470
    %1718 = vmatprep.subr.bf16.mxu0 0
    %1719 = vmatpush1.bf16.msra.mxu0 %v1471
    %1720 = vmatprep.subr.bf16.mxu0 0
    %1721 = vmatpush1.bf16.msra.mxu0 %v1472
    %1722 = vmatprep.subr.bf16.mxu0 0
    %1723 = vmatpush1.bf16.msra.mxu0 %v1473
    %1724 = vmatprep.subr.bf16.mxu0 0
    %1725 = vmatpush1.bf16.msra.mxu0 %v1474
    %1726 = vmatprep.subr.bf16.mxu0 0
    %1727 = vmatpush1.bf16.msra.mxu0 %v1475
    %1728 = vmatprep.subr.bf16.mxu0 0
    %1729 = vmatpush1.bf16.msra.mxu0 %v1476
    %1730 = vmatprep.subr.bf16.mxu0 0
    %1731 = vmatpush1.bf16.msra.mxu0 %v1477
    %1732 = vmatprep.subr.bf16.mxu0 0
    %1733 = vmatpush1.bf16.msra.mxu0 %v1478
    %1734 = vmatprep.subr.bf16.mxu0 0
    %1735 = vmatpush1.bf16.msra.mxu0 %v1479
    %1736 = vmatprep.mubr.bf16.mxu0 %v69
    %1737 = vmatmul.mubr.bf16.gmra.mrb[0].mxu0 %v68
    %v1738 = vpop.f32.mrb[0].mxu0
    %v1739 = vadd.f32 %v1699, %v1738
    %v1740 = vpop.f32.mrb[0].mxu0
    %v1741 = vpop.f32.mrb[0].mxu0
    %v1742 = vpop.f32.mrb[0].mxu0
    %1743 = vdwg.mxu0
    %1744 = vmatprep.subr.bf16.mxu0 0
    %1745 = vmatpush1.bf16.msra.mxu0 %v1480
    %1746 = vmatprep.subr.bf16.mxu0 0
    %1747 = vmatpush1.bf16.msra.mxu0 %v1481
    %1748 = vmatprep.subr.bf16.mxu0 0
    %1749 = vmatpush1.bf16.msra.mxu0 %v1482
    %1750 = vmatprep.subr.bf16.mxu0 0
    %1751 = vmatpush1.bf16.msra.mxu0 %v1483
    %1752 = vmatprep.subr.bf16.mxu0 0
    %1753 = vmatpush1.bf16.msra.mxu0 %v1484
    %1754 = vmatprep.subr.bf16.mxu0 0
    %1755 = vmatpush1.bf16.msra.mxu0 %v1485
    %1756 = vmatprep.subr.bf16.mxu0 0
    %1757 = vmatpush1.bf16.msra.mxu0 %v1486
    %1758 = vmatprep.subr.bf16.mxu0 0
    %1759 = vmatpush1.bf16.msra.mxu0 %v1487
    %1760 = vmatprep.subr.bf16.mxu0 0
    %1761 = vmatpush1.bf16.msra.mxu0 %v1488
    %1762 = vmatprep.subr.bf16.mxu0 0
    %1763 = vmatpush1.bf16.msra.mxu0 %v1489
    %1764 = vmatprep.subr.bf16.mxu0 0
    %1765 = vmatpush1.bf16.msra.mxu0 %v1490
    %1766 = vmatprep.subr.bf16.mxu0 0
    %1767 = vmatpush1.bf16.msra.mxu0 %v1491
    %1768 = vmatprep.subr.bf16.mxu0 0
    %1769 = vmatpush1.bf16.msra.mxu0 %v1492
    %1770 = vmatprep.subr.bf16.mxu0 0
    %1771 = vmatpush1.bf16.msra.mxu0 %v1493
    %1772 = vmatprep.subr.bf16.mxu0 0
    %1773 = vmatpush1.bf16.msra.mxu0 %v1494
    %1774 = vmatprep.subr.bf16.mxu0 0
    %1775 = vmatpush1.bf16.msra.mxu0 %v1495
    %1776 = vmatprep.mubr.bf16.mxu0 %v71
    %1777 = vmatmul.mubr.bf16.gmra.mrb[0].mxu0 %v70
    %v1778 = vpop.f32.mrb[0].mxu0
    %v1779 = vadd.f32 %v1739, %v1778
    %v1780 = vpop.f32.mrb[0].mxu0
    %v1781 = vpop.f32.mrb[0].mxu0
    %v1782 = vpop.f32.mrb[0].mxu0
    %1783 = vdwg.mxu0
    %1784 = vmatprep.subr.bf16.mxu0 0
    %1785 = vmatpush1.bf16.msra.mxu0 %v1496
    %1786 = vmatprep.subr.bf16.mxu0 0
    %1787 = vmatpush1.bf16.msra.mxu0 %v1497
    %1788 = vmatprep.subr.bf16.mxu0 0
    %1789 = vmatpush1.bf16.msra.mxu0 %v1498
    %1790 = vmatprep.subr.bf16.mxu0 0
    %1791 = vmatpush1.bf16.msra.mxu0 %v1499
    %1792 = vmatprep.subr.bf16.mxu0 0
    %1793 = vmatpush1.bf16.msra.mxu0 %v1500
    %1794 = vmatprep.subr.bf16.mxu0 0
    %1795 = vmatpush1.bf16.msra.mxu0 %v1501
    %1796 = vmatprep.subr.bf16.mxu0 0
    %1797 = vmatpush1.bf16.msra.mxu0 %v1502
    %1798 = vmatprep.subr.bf16.mxu0 0
    %1799 = vmatpush1.bf16.msra.mxu0 %v1503
    %1800 = vmatprep.subr.bf16.mxu0 0
    %1801 = vmatpush1.bf16.msra.mxu0 %v1504
    %1802 = vmatprep.subr.bf16.mxu0 0
    %1803 = vmatpush1.bf16.msra.mxu0 %v1505
    %1804 = vmatprep.subr.bf16.mxu0 0
    %1805 = vmatpush1.bf16.msra.mxu0 %v1506
    %1806 = vmatprep.subr.bf16.mxu0 0
    %1807 = vmatpush1.bf16.msra.mxu0 %v1507
    %1808 = vmatprep.subr.bf16.mxu0 0
    %1809 = vmatpush1.bf16.msra.mxu0 %v1508
    %1810 = vmatprep.subr.bf16.mxu0 0
    %1811 = vmatpush1.bf16.msra.mxu0 %v1509
    %1812 = vmatprep.subr.bf16.mxu0 0
    %1813 = vmatpush1.bf16.msra.mxu0 %v1510
    %1814 = vmatprep.subr.bf16.mxu0 0
    %1815 = vmatpush1.bf16.msra.mxu0 %v1511
    %1816 = vmatprep.mubr.bf16.mxu0 %v73
    %1817 = vmatmul.mubr.bf16.gmra.mrb[0].mxu0 %v72
    %v1818 = vpop.f32.mrb[0].mxu0
    %v1819 = vadd.f32 %v1779, %v1818
    %v1820 = vpop.f32.mrb[0].mxu0
    %v1821 = vpop.f32.mrb[0].mxu0
    %v1822 = vpop.f32.mrb[0].mxu0
    %1823 = vdwg.mxu0
    %1824 = vmatprep.subr.bf16.mxu0 0
    %1825 = vmatpush1.bf16.msra.mxu0 %v1512
    %1826 = vmatprep.subr.bf16.mxu0 0
    %1827 = vmatpush1.bf16.msra.mxu0 %v1513
    %1828 = vmatprep.subr.bf16.mxu0 0
    %1829 = vmatpush1.bf16.msra.mxu0 %v1514
    %1830 = vmatprep.subr.bf16.mxu0 0
    %1831 = vmatpush1.bf16.msra.mxu0 %v1515
    %1832 = vmatprep.subr.bf16.mxu0 0
    %1833 = vmatpush1.bf16.msra.mxu0 %v1516
    %1834 = vmatprep.subr.bf16.mxu0 0
    %1835 = vmatpush1.bf16.msra.mxu0 %v1517
    %1836 = vmatprep.subr.bf16.mxu0 0
    %1837 = vmatpush1.bf16.msra.mxu0 %v1518
    %1838 = vmatprep.subr.bf16.mxu0 0
    %1839 = vmatpush1.bf16.msra.mxu0 %v1519
    %1840 = vmatprep.subr.bf16.mxu0 0
    %1841 = vmatpush1.bf16.msra.mxu0 %v1520
    %1842 = vmatprep.subr.bf16.mxu0 0
    %1843 = vmatpush1.bf16.msra.mxu0 %v1521
    %1844 = vmatprep.subr.bf16.mxu0 0
    %1845 = vmatpush1.bf16.msra.mxu0 %v1522
    %1846 = vmatprep.subr.bf16.mxu0 0
    %1847 = vmatpush1.bf16.msra.mxu0 %v1523
    %1848 = vmatprep.subr.bf16.mxu0 0
    %1849 = vmatpush1.bf16.msra.mxu0 %v1524
    %1850 = vmatprep.subr.bf16.mxu0 0
    %1851 = vmatpush1.bf16.msra.mxu0 %v1525
    %1852 = vmatprep.subr.bf16.mxu0 0
    %1853 = vmatpush1.bf16.msra.mxu0 %v1526
    %1854 = vmatprep.subr.bf16.mxu0 0
    %1855 = vmatpush1.bf16.msra.mxu0 %v1527
    %1856 = vmatprep.mubr.bf16.mxu0 %v75
    %1857 = vmatmul.mubr.bf16.gmra.mrb[0].mxu0 %v74
    %v1858 = vpop.f32.mrb[0].mxu0
    %v1859 = vadd.f32 %v1819, %v1858
    %v1860 = vpop.f32.mrb[0].mxu0
    %v1861 = vpop.f32.mrb[0].mxu0
    %v1862 = vpop.f32.mrb[0].mxu0
    %1863 = vdwg.mxu0
    %1864 = vmatprep.subr.bf16.mxu0 0
    %1865 = vmatpush1.bf16.msra.mxu0 %v1528
    %1866 = vmatprep.subr.bf16.mxu0 0
    %1867 = vmatpush1.bf16.msra.mxu0 %v1529
    %1868 = vmatprep.subr.bf16.mxu0 0
    %1869 = vmatpush1.bf16.msra.mxu0 %v1530
    %1870 = vmatprep.subr.bf16.mxu0 0
    %1871 = vmatpush1.bf16.msra.mxu0 %v1531
    %1872 = vmatprep.subr.bf16.mxu0 0
    %1873 = vmatpush1.bf16.msra.mxu0 %v1532
    %1874 = vmatprep.subr.bf16.mxu0 0
    %1875 = vmatpush1.bf16.msra.mxu0 %v1533
    %1876 = vmatprep.subr.bf16.mxu0 0
    %1877 = vmatpush1.bf16.msra.mxu0 %v1534
    %1878 = vmatprep.subr.bf16.mxu0 0
    %1879 = vmatpush1.bf16.msra.mxu0 %v1535
    %1880 = vmatprep.subr.bf16.mxu0 0
    %1881 = vmatpush1.bf16.msra.mxu0 %v1536
    %1882 = vmatprep.subr.bf16.mxu0 0
    %1883 = vmatpush1.bf16.msra.mxu0 %v1537
    %1884 = vmatprep.subr.bf16.mxu0 0
    %1885 = vmatpush1.bf16.msra.mxu0 %v1538
    %1886 = vmatprep.subr.bf16.mxu0 0
    %1887 = vmatpush1.bf16.msra.mxu0 %v1539
    %1888 = vmatprep.subr.bf16.mxu0 0
    %1889 = vmatpush1.bf16.msra.mxu0 %v1540
    %1890 = vmatprep.subr.bf16.mxu0 0
    %1891 = vmatpush1.bf16.msra.mxu0 %v1541
    %1892 = vmatprep.subr.bf16.mxu0 0
    %1893 = vmatpush1.bf16.msra.mxu0 %v1542
    %1894 = vmatprep.subr.bf16.mxu0 0
    %1895 = vmatpush1.bf16.msra.mxu0 %v1543
    %1896 = vmatprep.mubr.bf16.mxu0 %v77
    %1897 = vmatmul.mubr.bf16.gmra.mrb[0].mxu0 %v76
    %v1898 = vpop.f32.mrb[0].mxu0
    %v1899 = vadd.f32 %v1859, %v1898
    %v1900 = vpop.f32.mrb[0].mxu0
    %v1901 = vpop.f32.mrb[0].mxu0
    %v1902 = vpop.f32.mrb[0].mxu0
    %1903 = vdwg.mxu0
    %1904 = vmatprep.subr.bf16.mxu0 0
    %1905 = vmatpush1.bf16.msra.mxu0 %v1544
    %1906 = vmatprep.subr.bf16.mxu0 0
    %1907 = vmatpush1.bf16.msra.mxu0 %v1545
    %1908 = vmatprep.subr.bf16.mxu0 0
    %1909 = vmatpush1.bf16.msra.mxu0 %v1546
    %1910 = vmatprep.subr.bf16.mxu0 0
    %1911 = vmatpush1.bf16.msra.mxu0 %v1547
    %1912 = vmatprep.subr.bf16.mxu0 0
    %1913 = vmatpush1.bf16.msra.mxu0 %v1548
    %1914 = vmatprep.subr.bf16.mxu0 0
    %1915 = vmatpush1.bf16.msra.mxu0 %v1549
    %1916 = vmatprep.subr.bf16.mxu0 0
    %1917 = vmatpush1.bf16.msra.mxu0 %v1550
    %1918 = vmatprep.subr.bf16.mxu0 0
    %1919 = vmatpush1.bf16.msra.mxu0 %v1551
    %1920 = vmatprep.subr.bf16.mxu0 0
    %1921 = vmatpush1.bf16.msra.mxu0 %v1552
    %1922 = vmatprep.subr.bf16.mxu0 0
    %1923 = vmatpush1.bf16.msra.mxu0 %v1553
    %1924 = vmatprep.subr.bf16.mxu0 0
    %1925 = vmatpush1.bf16.msra.mxu0 %v1554
    %1926 = vmatprep.subr.bf16.mxu0 0
    %1927 = vmatpush1.bf16.msra.mxu0 %v1555
    %1928 = vmatprep.subr.bf16.mxu0 0
    %1929 = vmatpush1.bf16.msra.mxu0 %v1556
    %1930 = vmatprep.subr.bf16.mxu0 0
    %1931 = vmatpush1.bf16.msra.mxu0 %v1557
    %1932 = vmatprep.subr.bf16.mxu0 0
    %1933 = vmatpush1.bf16.msra.mxu0 %v1558
    %1934 = vmatprep.subr.bf16.mxu0 0
    %1935 = vmatpush1.bf16.msra.mxu0 %v1559
    %1936 = vmatprep.mubr.bf16.mxu0 %v79
    %1937 = vmatmul.mubr.bf16.gmra.mrb[0].mxu0 %v78
    %v1938 = vpop.f32.mrb[0].mxu0
    %v1939 = vadd.f32 %v1899, %v1938
    %v1940 = vpop.f32.mrb[0].mxu0
    %v1941 = vpop.f32.mrb[0].mxu0
    %v1942 = vpop.f32.mrb[0].mxu0
    %1943 = vdwg.mxu0
    %1944 = vmatprep.subr.bf16.mxu0 0
    %1945 = vmatpush1.bf16.msra.mxu0 %v1560
    %1946 = vmatprep.subr.bf16.mxu0 0
    %1947 = vmatpush1.bf16.msra.mxu0 %v1561
    %1948 = vmatprep.subr.bf16.mxu0 0
    %1949 = vmatpush1.bf16.msra.mxu0 %v1562
    %1950 = vmatprep.subr.bf16.mxu0 0
    %1951 = vmatpush1.bf16.msra.mxu0 %v1563
    %1952 = vmatprep.subr.bf16.mxu0 0
    %1953 = vmatpush1.bf16.msra.mxu0 %v1564
    %1954 = vmatprep.subr.bf16.mxu0 0
    %1955 = vmatpush1.bf16.msra.mxu0 %v1565
    %1956 = vmatprep.subr.bf16.mxu0 0
    %1957 = vmatpush1.bf16.msra.mxu0 %v1566
    %1958 = vmatprep.subr.bf16.mxu0 0
    %1959 = vmatpush1.bf16.msra.mxu0 %v1567
    %1960 = vmatprep.subr.bf16.mxu0 0
    %1961 = vmatpush1.bf16.msra.mxu0 %v1568
    %1962 = vmatprep.subr.bf16.mxu0 0
    %1963 = vmatpush1.bf16.msra.mxu0 %v1569
    %1964 = vmatprep.subr.bf16.mxu0 0
    %1965 = vmatpush1.bf16.msra.mxu0 %v1570
    %1966 = vmatprep.subr.bf16.mxu0 0
    %1967 = vmatpush1.bf16.msra.mxu0 %v1571
    %1968 = vmatprep.subr.bf16.mxu0 0
    %1969 = vmatpush1.bf16.msra.mxu0 %v1572
    %1970 = vmatprep.subr.bf16.mxu0 0
    %1971 = vmatpush1.bf16.msra.mxu0 %v1573
    %1972 = vmatprep.subr.bf16.mxu0 0
    %1973 = vmatpush1.bf16.msra.mxu0 %v1574
    %1974 = vmatprep.subr.bf16.mxu0 0
    %1975 = vmatpush1.bf16.msra.mxu0 %v1575
    %1976 = vmatprep.mubr.bf16.mxu0 %v81
    %1977 = vmatmul.mubr.bf16.gmra.mrb[0].mxu0 %v80
    %v1978 = vpop.f32.mrb[0].mxu0
    %v1979 = vadd.f32 %v1939, %v1978
    %v1980 = vpop.f32.mrb[0].mxu0
    %v1981 = vpop.f32.mrb[0].mxu0
    %v1982 = vpop.f32.mrb[0].mxu0
    %1983 = vdwg.mxu0
    %1984 = vmatprep.subr.bf16.mxu0 0
    %1985 = vmatpush1.bf16.msra.mxu0 %v1576
    %1986 = vmatprep.subr.bf16.mxu0 0
    %1987 = vmatpush1.bf16.msra.mxu0 %v1577
    %1988 = vmatprep.subr.bf16.mxu0 0
    %1989 = vmatpush1.bf16.msra.mxu0 %v1578
    %1990 = vmatprep.subr.bf16.mxu0 0
    %1991 = vmatpush1.bf16.msra.mxu0 %v1579
    %1992 = vmatprep.subr.bf16.mxu0 0
    %1993 = vmatpush1.bf16.msra.mxu0 %v1580
    %1994 = vmatprep.subr.bf16.mxu0 0
    %1995 = vmatpush1.bf16.msra.mxu0 %v1581
    %1996 = vmatprep.subr.bf16.mxu0 0
    %1997 = vmatpush1.bf16.msra.mxu0 %v1582
    %1998 = vmatprep.subr.bf16.mxu0 0
    %1999 = vmatpush1.bf16.msra.mxu0 %v1583
    %2000 = vmatprep.subr.bf16.mxu0 0
    %2001 = vmatpush1.bf16.msra.mxu0 %v1584
    %2002 = vmatprep.subr.bf16.mxu0 0
    %2003 = vmatpush1.bf16.msra.mxu0 %v1585
    %2004 = vmatprep.subr.bf16.mxu0 0
    %2005 = vmatpush1.bf16.msra.mxu0 %v1586
    %2006 = vmatprep.subr.bf16.mxu0 0
    %2007 = vmatpush1.bf16.msra.mxu0 %v1587
    %2008 = vmatprep.subr.bf16.mxu0 0
    %2009 = vmatpush1.bf16.msra.mxu0 %v1588
    %2010 = vmatprep.subr.bf16.mxu0 0
    %2011 = vmatpush1.bf16.msra.mxu0 %v1589
    %2012 = vmatprep.subr.bf16.mxu0 0
    %2013 = vmatpush1.bf16.msra.mxu0 %v1590
    %2014 = vmatprep.subr.bf16.mxu0 0
    %2015 = vmatpush1.bf16.msra.mxu0 %v1591
    %2016 = vmatprep.mubr.bf16.mxu0 %v83
    %2017 = vmatmul.mubr.bf16.gmra.mrb[0].mxu0 %v82
    %v2018 = vpop.f32.mrb[0].mxu0
    %v2019 = vadd.f32 %v1979, %v2018
    %v2020 = vpop.f32.mrb[0].mxu0
    %v2021 = vpop.f32.mrb[0].mxu0
    %v2022 = vpop.f32.mrb[0].mxu0
    %2023 = vdwg.mxu0
    %2024 = vmatprep.subr.bf16.mxu0 0
    %2025 = vmatpush1.bf16.msra.mxu0 %v1592
    %2026 = vmatprep.subr.bf16.mxu0 0
    %2027 = vmatpush1.bf16.msra.mxu0 %v1593
    %2028 = vmatprep.subr.bf16.mxu0 0
    %2029 = vmatpush1.bf16.msra.mxu0 %v1594
    %2030 = vmatprep.subr.bf16.mxu0 0
    %2031 = vmatpush1.bf16.msra.mxu0 %v1595
    %2032 = vmatprep.subr.bf16.mxu0 0
    %2033 = vmatpush1.bf16.msra.mxu0 %v1596
    %2034 = vmatprep.subr.bf16.mxu0 0
    %2035 = vmatpush1.bf16.msra.mxu0 %v1597
    %2036 = vmatprep.subr.bf16.mxu0 0
    %2037 = vmatpush1.bf16.msra.mxu0 %v1598
    %2038 = vmatprep.subr.bf16.mxu0 0
    %2039 = vmatpush1.bf16.msra.mxu0 %v1599
    %2040 = vmatprep.subr.bf16.mxu0 0
    %2041 = vmatpush1.bf16.msra.mxu0 %v1600
    %2042 = vmatprep.subr.bf16.mxu0 0
    %2043 = vmatpush1.bf16.msra.mxu0 %v1601
    %2044 = vmatprep.subr.bf16.mxu0 0
    %2045 = vmatpush1.bf16.msra.mxu0 %v1602
    %2046 = vmatprep.subr.bf16.mxu0 0
    %2047 = vmatpush1.bf16.msra.mxu0 %v1603
    %2048 = vmatprep.subr.bf16.mxu0 0
    %2049 = vmatpush1.bf16.msra.mxu0 %v1604
    %2050 = vmatprep.subr.bf16.mxu0 0
    %2051 = vmatpush1.bf16.msra.mxu0 %v1605
    %2052 = vmatprep.subr.bf16.mxu0 0
    %2053 = vmatpush1.bf16.msra.mxu0 %v1606
    %2054 = vmatprep.subr.bf16.mxu0 0
    %2055 = vmatpush1.bf16.msra.mxu0 %v1607
    %2056 = vmatprep.mubr.bf16.mxu0 %v85
    %2057 = vmatmul.mubr.bf16.gmra.mrb[0].mxu0 %v84
    %v2058 = vpop.f32.mrb[0].mxu0
    %v2059 = vadd.f32 %v2019, %v2058
    %v2060 = vpop.f32.mrb[0].mxu0
    %v2061 = vpop.f32.mrb[0].mxu0
    %v2062 = vpop.f32.mrb[0].mxu0
    %2063 = vdwg.mxu0
    %2064 = vmatprep.subr.bf16.mxu0 0
    %2065 = vmatpush1.bf16.msra.mxu0 %v1608
    %2066 = vmatprep.subr.bf16.mxu0 0
    %2067 = vmatpush1.bf16.msra.mxu0 %v1609
    %2068 = vmatprep.subr.bf16.mxu0 0
    %2069 = vmatpush1.bf16.msra.mxu0 %v1610
    %2070 = vmatprep.subr.bf16.mxu0 0
    %2071 = vmatpush1.bf16.msra.mxu0 %v1611
    %2072 = vmatprep.subr.bf16.mxu0 0
    %2073 = vmatpush1.bf16.msra.mxu0 %v1612
    %2074 = vmatprep.subr.bf16.mxu0 0
    %2075 = vmatpush1.bf16.msra.mxu0 %v1613
    %2076 = vmatprep.subr.bf16.mxu0 0
    %2077 = vmatpush1.bf16.msra.mxu0 %v1614
    %2078 = vmatprep.subr.bf16.mxu0 0
    %2079 = vmatpush1.bf16.msra.mxu0 %v1615
    %2080 = vmatprep.subr.bf16.mxu0 0
    %2081 = vmatpush1.bf16.msra.mxu0 %v1616
    %2082 = vmatprep.subr.bf16.mxu0 0
    %2083 = vmatpush1.bf16.msra.mxu0 %v1617
    %2084 = vmatprep.subr.bf16.mxu0 0
    %2085 = vmatpush1.bf16.msra.mxu0 %v1618
    %2086 = vmatprep.subr.bf16.mxu0 0
    %2087 = vmatpush1.bf16.msra.mxu0 %v1619
    %2088 = vmatprep.subr.bf16.mxu0 0
    %2089 = vmatpush1.bf16.msra.mxu0 %v1620
    %2090 = vmatprep.subr.bf16.mxu0 0
    %2091 = vmatpush1.bf16.msra.mxu0 %v1621
    %2092 = vmatprep.subr.bf16.mxu0 0
    %2093 = vmatpush1.bf16.msra.mxu0 %v1622
    %2094 = vmatprep.subr.bf16.mxu0 0
    %2095 = vmatpush1.bf16.msra.mxu0 %v1623
    %2096 = vmatprep.mubr.bf16.mxu0 %v87
    %2097 = vmatmul.mubr.bf16.gmra.mrb[0].mxu0 %v86
    %v2098 = vpop.f32.mrb[0].mxu0
    %v2099 = vadd.f32 %v2059, %v2098
    %v2100 = vpop.f32.mrb[0].mxu0
    %v2101 = vpop.f32.mrb[0].mxu0
    %v2102 = vpop.f32.mrb[0].mxu0
    %2103 = vdwg.mxu0
    %v2104 = vld [vmem:[#allocation2 + $0x1200] sm:$0xff]
    %v2105 = vld [vmem:[#allocation2 + $0x1208] sm:$0xff]
    %v2106 = vld [vmem:[#allocation2 + $0x1210] sm:$0xff]
    %v2107 = vld [vmem:[#allocation2 + $0x1218] sm:$0xff]
    %v2108 = vld [vmem:[#allocation2 + $0x1220] sm:$0xff]
    %v2109 = vld [vmem:[#allocation2 + $0x1228] sm:$0xff]
    %v2110 = vld [vmem:[#allocation2 + $0x1230] sm:$0xff]
    %v2111 = vld [vmem:[#allocation2 + $0x1238] sm:$0xff]
    %v2112 = vld [vmem:[#allocation2 + $0x1240] sm:$0xff]
    %v2113 = vld [vmem:[#allocation2 + $0x1248] sm:$0xff]
    %v2114 = vld [vmem:[#allocation2 + $0x1250] sm:$0xff]
    %v2115 = vld [vmem:[#allocation2 + $0x1258] sm:$0xff]
    %v2116 = vld [vmem:[#allocation2 + $0x1260] sm:$0xff]
    %v2117 = vld [vmem:[#allocation2 + $0x1268] sm:$0xff]
    %v2118 = vld [vmem:[#allocation2 + $0x1270] sm:$0xff]
    %v2119 = vld [vmem:[#allocation2 + $0x1278] sm:$0xff]
    %v2120 = vld [vmem:[#allocation2 + $0x1280] sm:$0xff]
    %v2121 = vld [vmem:[#allocation2 + $0x1288] sm:$0xff]
    %v2122 = vld [vmem:[#allocation2 + $0x1290] sm:$0xff]
    %v2123 = vld [vmem:[#allocation2 + $0x1298] sm:$0xff]
    %v2124 = vld [vmem:[#allocation2 + $0x12a0] sm:$0xff]
    %v2125 = vld [vmem:[#allocation2 + $0x12a8] sm:$0xff]
    %v2126 = vld [vmem:[#allocation2 + $0x12b0] sm:$0xff]
    %v2127 = vld [vmem:[#allocation2 + $0x12b8] sm:$0xff]
    %v2128 = vld [vmem:[#allocation2 + $0x12c0] sm:$0xff]
    %v2129 = vld [vmem:[#allocation2 + $0x12c8] sm:$0xff]
    %v2130 = vld [vmem:[#allocation2 + $0x12d0] sm:$0xff]
    %v2131 = vld [vmem:[#allocation2 + $0x12d8] sm:$0xff]
    %v2132 = vld [vmem:[#allocation2 + $0x12e0] sm:$0xff]
    %v2133 = vld [vmem:[#allocation2 + $0x12e8] sm:$0xff]
    %v2134 = vld [vmem:[#allocation2 + $0x12f0] sm:$0xff]
    %v2135 = vld [vmem:[#allocation2 + $0x12f8] sm:$0xff]
    %v2136 = vld [vmem:[#allocation2 + $0x1300] sm:$0xff]
    %v2137 = vld [vmem:[#allocation2 + $0x1308] sm:$0xff]
    %v2138 = vld [vmem:[#allocation2 + $0x1310] sm:$0xff]
    %v2139 = vld [vmem:[#allocation2 + $0x1318] sm:$0xff]
    %v2140 = vld [vmem:[#allocation2 + $0x1320] sm:$0xff]
    %v2141 = vld [vmem:[#allocation2 + $0x1328] sm:$0xff]
    %v2142 = vld [vmem:[#allocation2 + $0x1330] sm:$0xff]
    %v2143 = vld [vmem:[#allocation2 + $0x1338] sm:$0xff]
    %v2144 = vld [vmem:[#allocation2 + $0x1340] sm:$0xff]
    %v2145 = vld [vmem:[#allocation2 + $0x1348] sm:$0xff]
    %v2146 = vld [vmem:[#allocation2 + $0x1350] sm:$0xff]
    %v2147 = vld [vmem:[#allocation2 + $0x1358] sm:$0xff]
    %v2148 = vld [vmem:[#allocation2 + $0x1360] sm:$0xff]
    %v2149 = vld [vmem:[#allocation2 + $0x1368] sm:$0xff]
    %v2150 = vld [vmem:[#allocation2 + $0x1370] sm:$0xff]
    %v2151 = vld [vmem:[#allocation2 + $0x1378] sm:$0xff]
    %v2152 = vld [vmem:[#allocation2 + $0x1380] sm:$0xff]
    %v2153 = vld [vmem:[#allocation2 + $0x1388] sm:$0xff]
    %v2154 = vld [vmem:[#allocation2 + $0x1390] sm:$0xff]
    %v2155 = vld [vmem:[#allocation2 + $0x1398] sm:$0xff]
    %v2156 = vld [vmem:[#allocation2 + $0x13a0] sm:$0xff]
    %v2157 = vld [vmem:[#allocation2 + $0x13a8] sm:$0xff]
    %v2158 = vld [vmem:[#allocation2 + $0x13b0] sm:$0xff]
    %v2159 = vld [vmem:[#allocation2 + $0x13b8] sm:$0xff]
    %v2160 = vld [vmem:[#allocation2 + $0x13c0] sm:$0xff]
    %v2161 = vld [vmem:[#allocation2 + $0x13c8] sm:$0xff]
    %v2162 = vld [vmem:[#allocation2 + $0x13d0] sm:$0xff]
    %v2163 = vld [vmem:[#allocation2 + $0x13d8] sm:$0xff]
    %v2164 = vld [vmem:[#allocation2 + $0x13e0] sm:$0xff]
    %v2165 = vld [vmem:[#allocation2 + $0x13e8] sm:$0xff]
    %v2166 = vld [vmem:[#allocation2 + $0x13f0] sm:$0xff]
    %v2167 = vld [vmem:[#allocation2 + $0x13f8] sm:$0xff]
    %v2168 = vld [vmem:[#allocation2 + $0x1400] sm:$0xff]
    %v2169 = vld [vmem:[#allocation2 + $0x1408] sm:$0xff]
    %v2170 = vld [vmem:[#allocation2 + $0x1410] sm:$0xff]
    %v2171 = vld [vmem:[#allocation2 + $0x1418] sm:$0xff]
    %v2172 = vld [vmem:[#allocation2 + $0x1420] sm:$0xff]
    %v2173 = vld [vmem:[#allocation2 + $0x1428] sm:$0xff]
    %v2174 = vld [vmem:[#allocation2 + $0x1430] sm:$0xff]
    %v2175 = vld [vmem:[#allocation2 + $0x1438] sm:$0xff]
    %v2176 = vld [vmem:[#allocation2 + $0x1440] sm:$0xff]
    %v2177 = vld [vmem:[#allocation2 + $0x1448] sm:$0xff]
    %v2178 = vld [vmem:[#allocation2 + $0x1450] sm:$0xff]
    %v2179 = vld [vmem:[#allocation2 + $0x1458] sm:$0xff]
    %v2180 = vld [vmem:[#allocation2 + $0x1460] sm:$0xff]
    %v2181 = vld [vmem:[#allocation2 + $0x1468] sm:$0xff]
    %v2182 = vld [vmem:[#allocation2 + $0x1470] sm:$0xff]
    %v2183 = vld [vmem:[#allocation2 + $0x1478] sm:$0xff]
    %v2184 = vld [vmem:[#allocation2 + $0x1480] sm:$0xff]
    %v2185 = vld [vmem:[#allocation2 + $0x1488] sm:$0xff]
    %v2186 = vld [vmem:[#allocation2 + $0x1490] sm:$0xff]
    %v2187 = vld [vmem:[#allocation2 + $0x1498] sm:$0xff]
    %v2188 = vld [vmem:[#allocation2 + $0x14a0] sm:$0xff]
    %v2189 = vld [vmem:[#allocation2 + $0x14a8] sm:$0xff]
    %v2190 = vld [vmem:[#allocation2 + $0x14b0] sm:$0xff]
    %v2191 = vld [vmem:[#allocation2 + $0x14b8] sm:$0xff]
    %v2192 = vld [vmem:[#allocation2 + $0x14c0] sm:$0xff]
    %v2193 = vld [vmem:[#allocation2 + $0x14c8] sm:$0xff]
    %v2194 = vld [vmem:[#allocation2 + $0x14d0] sm:$0xff]
    %v2195 = vld [vmem:[#allocation2 + $0x14d8] sm:$0xff]
    %v2196 = vld [vmem:[#allocation2 + $0x14e0] sm:$0xff]
    %v2197 = vld [vmem:[#allocation2 + $0x14e8] sm:$0xff]
    %v2198 = vld [vmem:[#allocation2 + $0x14f0] sm:$0xff]
    %v2199 = vld [vmem:[#allocation2 + $0x14f8] sm:$0xff]
    %v2200 = vld [vmem:[#allocation2 + $0x1500] sm:$0xff]
    %v2201 = vld [vmem:[#allocation2 + $0x1508] sm:$0xff]
    %v2202 = vld [vmem:[#allocation2 + $0x1510] sm:$0xff]
    %v2203 = vld [vmem:[#allocation2 + $0x1518] sm:$0xff]
    %v2204 = vld [vmem:[#allocation2 + $0x1520] sm:$0xff]
    %v2205 = vld [vmem:[#allocation2 + $0x1528] sm:$0xff]
    %v2206 = vld [vmem:[#allocation2 + $0x1530] sm:$0xff]
    %v2207 = vld [vmem:[#allocation2 + $0x1538] sm:$0xff]
    %v2208 = vld [vmem:[#allocation2 + $0x1540] sm:$0xff]
    %v2209 = vld [vmem:[#allocation2 + $0x1548] sm:$0xff]
    %v2210 = vld [vmem:[#allocation2 + $0x1550] sm:$0xff]
    %v2211 = vld [vmem:[#allocation2 + $0x1558] sm:$0xff]
    %v2212 = vld [vmem:[#allocation2 + $0x1560] sm:$0xff]
    %v2213 = vld [vmem:[#allocation2 + $0x1568] sm:$0xff]
    %v2214 = vld [vmem:[#allocation2 + $0x1570] sm:$0xff]
    %v2215 = vld [vmem:[#allocation2 + $0x1578] sm:$0xff]
    %v2216 = vld [vmem:[#allocation2 + $0x1580] sm:$0xff]
    %v2217 = vld [vmem:[#allocation2 + $0x1588] sm:$0xff]
    %v2218 = vld [vmem:[#allocation2 + $0x1590] sm:$0xff]
    %v2219 = vld [vmem:[#allocation2 + $0x1598] sm:$0xff]
    %v2220 = vld [vmem:[#allocation2 + $0x15a0] sm:$0xff]
    %v2221 = vld [vmem:[#allocation2 + $0x15a8] sm:$0xff]
    %v2222 = vld [vmem:[#allocation2 + $0x15b0] sm:$0xff]
    %v2223 = vld [vmem:[#allocation2 + $0x15b8] sm:$0xff]
    %v2224 = vld [vmem:[#allocation2 + $0x15c0] sm:$0xff]
    %v2225 = vld [vmem:[#allocation2 + $0x15c8] sm:$0xff]
    %v2226 = vld [vmem:[#allocation2 + $0x15d0] sm:$0xff]
    %v2227 = vld [vmem:[#allocation2 + $0x15d8] sm:$0xff]
    %v2228 = vld [vmem:[#allocation2 + $0x15e0] sm:$0xff]
    %v2229 = vld [vmem:[#allocation2 + $0x15e8] sm:$0xff]
    %v2230 = vld [vmem:[#allocation2 + $0x15f0] sm:$0xff]
    %v2231 = vld [vmem:[#allocation2 + $0x15f8] sm:$0xff]
    %v2232 = vld [vmem:[#allocation2 + $0x1600] sm:$0xff]
    %v2233 = vld [vmem:[#allocation2 + $0x1608] sm:$0xff]
    %v2234 = vld [vmem:[#allocation2 + $0x1610] sm:$0xff]
    %v2235 = vld [vmem:[#allocation2 + $0x1618] sm:$0xff]
    %v2236 = vld [vmem:[#allocation2 + $0x1620] sm:$0xff]
    %v2237 = vld [vmem:[#allocation2 + $0x1628] sm:$0xff]
    %v2238 = vld [vmem:[#allocation2 + $0x1630] sm:$0xff]
    %v2239 = vld [vmem:[#allocation2 + $0x1638] sm:$0xff]
    %v2240 = vld [vmem:[#allocation2 + $0x1640] sm:$0xff]
    %v2241 = vld [vmem:[#allocation2 + $0x1648] sm:$0xff]
    %v2242 = vld [vmem:[#allocation2 + $0x1650] sm:$0xff]
    %v2243 = vld [vmem:[#allocation2 + $0x1658] sm:$0xff]
    %v2244 = vld [vmem:[#allocation2 + $0x1660] sm:$0xff]
    %v2245 = vld [vmem:[#allocation2 + $0x1668] sm:$0xff]
    %v2246 = vld [vmem:[#allocation2 + $0x1670] sm:$0xff]
    %v2247 = vld [vmem:[#allocation2 + $0x1678] sm:$0xff]
    %v2248 = vld [vmem:[#allocation2 + $0x1680] sm:$0xff]
    %v2249 = vld [vmem:[#allocation2 + $0x1688] sm:$0xff]
    %v2250 = vld [vmem:[#allocation2 + $0x1690] sm:$0xff]
    %v2251 = vld [vmem:[#allocation2 + $0x1698] sm:$0xff]
    %v2252 = vld [vmem:[#allocation2 + $0x16a0] sm:$0xff]
    %v2253 = vld [vmem:[#allocation2 + $0x16a8] sm:$0xff]
    %v2254 = vld [vmem:[#allocation2 + $0x16b0] sm:$0xff]
    %v2255 = vld [vmem:[#allocation2 + $0x16b8] sm:$0xff]
    %v2256 = vld [vmem:[#allocation2 + $0x16c0] sm:$0xff]
    %v2257 = vld [vmem:[#allocation2 + $0x16c8] sm:$0xff]
    %v2258 = vld [vmem:[#allocation2 + $0x16d0] sm:$0xff]
    %v2259 = vld [vmem:[#allocation2 + $0x16d8] sm:$0xff]
    %v2260 = vld [vmem:[#allocation2 + $0x16e0] sm:$0xff]
    %v2261 = vld [vmem:[#allocation2 + $0x16e8] sm:$0xff]
    %v2262 = vld [vmem:[#allocation2 + $0x16f0] sm:$0xff]
    %v2263 = vld [vmem:[#allocation2 + $0x16f8] sm:$0xff]
    %v2264 = vld [vmem:[#allocation2 + $0x1700] sm:$0xff]
    %v2265 = vld [vmem:[#allocation2 + $0x1708] sm:$0xff]
    %v2266 = vld [vmem:[#allocation2 + $0x1710] sm:$0xff]
    %v2267 = vld [vmem:[#allocation2 + $0x1718] sm:$0xff]
    %v2268 = vld [vmem:[#allocation2 + $0x1720] sm:$0xff]
    %v2269 = vld [vmem:[#allocation2 + $0x1728] sm:$0xff]
    %v2270 = vld [vmem:[#allocation2 + $0x1730] sm:$0xff]
    %v2271 = vld [vmem:[#allocation2 + $0x1738] sm:$0xff]
    %v2272 = vld [vmem:[#allocation2 + $0x1740] sm:$0xff]
    %v2273 = vld [vmem:[#allocation2 + $0x1748] sm:$0xff]
    %v2274 = vld [vmem:[#allocation2 + $0x1750] sm:$0xff]
    %v2275 = vld [vmem:[#allocation2 + $0x1758] sm:$0xff]
    %v2276 = vld [vmem:[#allocation2 + $0x1760] sm:$0xff]
    %v2277 = vld [vmem:[#allocation2 + $0x1768] sm:$0xff]
    %v2278 = vld [vmem:[#allocation2 + $0x1770] sm:$0xff]
    %v2279 = vld [vmem:[#allocation2 + $0x1778] sm:$0xff]
    %v2280 = vld [vmem:[#allocation2 + $0x1780] sm:$0xff]
    %v2281 = vld [vmem:[#allocation2 + $0x1788] sm:$0xff]
    %v2282 = vld [vmem:[#allocation2 + $0x1790] sm:$0xff]
    %v2283 = vld [vmem:[#allocation2 + $0x1798] sm:$0xff]
    %v2284 = vld [vmem:[#allocation2 + $0x17a0] sm:$0xff]
    %v2285 = vld [vmem:[#allocation2 + $0x17a8] sm:$0xff]
    %v2286 = vld [vmem:[#allocation2 + $0x17b0] sm:$0xff]
    %v2287 = vld [vmem:[#allocation2 + $0x17b8] sm:$0xff]
    %v2288 = vld [vmem:[#allocation2 + $0x17c0] sm:$0xff]
    %v2289 = vld [vmem:[#allocation2 + $0x17c8] sm:$0xff]
    %v2290 = vld [vmem:[#allocation2 + $0x17d0] sm:$0xff]
    %v2291 = vld [vmem:[#allocation2 + $0x17d8] sm:$0xff]
    %v2292 = vld [vmem:[#allocation2 + $0x17e0] sm:$0xff]
    %v2293 = vld [vmem:[#allocation2 + $0x17e8] sm:$0xff]
    %v2294 = vld [vmem:[#allocation2 + $0x17f0] sm:$0xff]
    %v2295 = vld [vmem:[#allocation2 + $0x17f8] sm:$0xff]
    %2296 = vmatprep.subr.bf16.mxu0 0
    %2297 = vmatpush1.bf16.msra.mxu0 %v2104
    %2298 = vmatprep.subr.bf16.mxu0 0
    %2299 = vmatpush1.bf16.msra.mxu0 %v2105
    %2300 = vmatprep.subr.bf16.mxu0 0
    %2301 = vmatpush1.bf16.msra.mxu0 %v2106
    %2302 = vmatprep.subr.bf16.mxu0 0
    %2303 = vmatpush1.bf16.msra.mxu0 %v2107
    %2304 = vmatprep.subr.bf16.mxu0 0
    %2305 = vmatpush1.bf16.msra.mxu0 %v2108
    %2306 = vmatprep.subr.bf16.mxu0 0
    %2307 = vmatpush1.bf16.msra.mxu0 %v2109
    %2308 = vmatprep.subr.bf16.mxu0 0
    %2309 = vmatpush1.bf16.msra.mxu0 %v2110
    %2310 = vmatprep.subr.bf16.mxu0 0
    %2311 = vmatpush1.bf16.msra.mxu0 %v2111
    %2312 = vmatprep.subr.bf16.mxu0 0
    %2313 = vmatpush1.bf16.msra.mxu0 %v2112
    %2314 = vmatprep.subr.bf16.mxu0 0
    %2315 = vmatpush1.bf16.msra.mxu0 %v2113
    %2316 = vmatprep.subr.bf16.mxu0 0
    %2317 = vmatpush1.bf16.msra.mxu0 %v2114
    %2318 = vmatprep.subr.bf16.mxu0 0
    %2319 = vmatpush1.bf16.msra.mxu0 %v2115
    %2320 = vmatprep.subr.bf16.mxu0 0
    %2321 = vmatpush1.bf16.msra.mxu0 %v2116
    %2322 = vmatprep.subr.bf16.mxu0 0
    %2323 = vmatpush1.bf16.msra.mxu0 %v2117
    %2324 = vmatprep.subr.bf16.mxu0 0
    %2325 = vmatpush1.bf16.msra.mxu0 %v2118
    %2326 = vmatprep.subr.bf16.mxu0 0
    %2327 = vmatpush1.bf16.msra.mxu0 %v2119
    %2328 = vmatprep.mubr.bf16.mxu0 %v65
    %2329 = vmatmul.mubr.bf16.gmra.mrb[0].mxu0 %v64
    %v2330 = vpop.f32.mrb[0].mxu0
    %v2331 = vadd.f32 0.0, %v2330
    %v2332 = vpop.f32.mrb[0].mxu0
    %v2333 = vpop.f32.mrb[0].mxu0
    %v2334 = vpop.f32.mrb[0].mxu0
    %2335 = vdwg.mxu0
    %2336 = vmatprep.subr.bf16.mxu0 0
    %2337 = vmatpush1.bf16.msra.mxu0 %v2120
    %2338 = vmatprep.subr.bf16.mxu0 0
    %2339 = vmatpush1.bf16.msra.mxu0 %v2121
    %2340 = vmatprep.subr.bf16.mxu0 0
    %2341 = vmatpush1.bf16.msra.mxu0 %v2122
    %2342 = vmatprep.subr.bf16.mxu0 0
    %2343 = vmatpush1.bf16.msra.mxu0 %v2123
    %2344 = vmatprep.subr.bf16.mxu0 0
    %2345 = vmatpush1.bf16.msra.mxu0 %v2124
    %2346 = vmatprep.subr.bf16.mxu0 0
    %2347 = vmatpush1.bf16.msra.mxu0 %v2125
    %2348 = vmatprep.subr.bf16.mxu0 0
    %2349 = vmatpush1.bf16.msra.mxu0 %v2126
    %2350 = vmatprep.subr.bf16.mxu0 0
    %2351 = vmatpush1.bf16.msra.mxu0 %v2127
    %2352 = vmatprep.subr.bf16.mxu0 0
    %2353 = vmatpush1.bf16.msra.mxu0 %v2128
    %2354 = vmatprep.subr.bf16.mxu0 0
    %2355 = vmatpush1.bf16.msra.mxu0 %v2129
    %2356 = vmatprep.subr.bf16.mxu0 0
    %2357 = vmatpush1.bf16.msra.mxu0 %v2130
    %2358 = vmatprep.subr.bf16.mxu0 0
    %2359 = vmatpush1.bf16.msra.mxu0 %v2131
    %2360 = vmatprep.subr.bf16.mxu0 0
    %2361 = vmatpush1.bf16.msra.mxu0 %v2132
    %2362 = vmatprep.subr.bf16.mxu0 0
    %2363 = vmatpush1.bf16.msra.mxu0 %v2133
    %2364 = vmatprep.subr.bf16.mxu0 0
    %2365 = vmatpush1.bf16.msra.mxu0 %v2134
    %2366 = vmatprep.subr.bf16.mxu0 0
    %2367 = vmatpush1.bf16.msra.mxu0 %v2135
    %2368 = vmatprep.mubr.bf16.mxu0 %v67
    %2369 = vmatmul.mubr.bf16.gmra.mrb[0].mxu0 %v66
    %v2370 = vpop.f32.mrb[0].mxu0
    %v2371 = vadd.f32 %v2331, %v2370
    %v2372 = vpop.f32.mrb[0].mxu0
    %v2373 = vpop.f32.mrb[0].mxu0
    %v2374 = vpop.f32.mrb[0].mxu0
    %2375 = vdwg.mxu0
    %2376 = vmatprep.subr.bf16.mxu0 0
    %2377 = vmatpush1.bf16.msra.mxu0 %v2136
    %2378 = vmatprep.subr.bf16.mxu0 0
    %2379 = vmatpush1.bf16.msra.mxu0 %v2137
    %2380 = vmatprep.subr.bf16.mxu0 0
    %2381 = vmatpush1.bf16.msra.mxu0 %v2138
    %2382 = vmatprep.subr.bf16.mxu0 0
    %2383 = vmatpush1.bf16.msra.mxu0 %v2139
    %2384 = vmatprep.subr.bf16.mxu0 0
    %2385 = vmatpush1.bf16.msra.mxu0 %v2140
    %2386 = vmatprep.subr.bf16.mxu0 0
    %2387 = vmatpush1.bf16.msra.mxu0 %v2141
    %2388 = vmatprep.subr.bf16.mxu0 0
    %2389 = vmatpush1.bf16.msra.mxu0 %v2142
    %2390 = vmatprep.subr.bf16.mxu0 0
    %2391 = vmatpush1.bf16.msra.mxu0 %v2143
    %2392 = vmatprep.subr.bf16.mxu0 0
    %2393 = vmatpush1.bf16.msra.mxu0 %v2144
    %2394 = vmatprep.subr.bf16.mxu0 0
    %2395 = vmatpush1.bf16.msra.mxu0 %v2145
    %2396 = vmatprep.subr.bf16.mxu0 0
    %2397 = vmatpush1.bf16.msra.mxu0 %v2146
    %2398 = vmatprep.subr.bf16.mxu0 0
    %2399 = vmatpush1.bf16.msra.mxu0 %v2147
    %2400 = vmatprep.subr.bf16.mxu0 0
    %2401 = vmatpush1.bf16.msra.mxu0 %v2148
    %2402 = vmatprep.subr.bf16.mxu0 0
    %2403 = vmatpush1.bf16.msra.mxu0 %v2149
    %2404 = vmatprep.subr.bf16.mxu0 0
    %2405 = vmatpush1.bf16.msra.mxu0 %v2150
    %2406 = vmatprep.subr.bf16.mxu0 0
    %2407 = vmatpush1.bf16.msra.mxu0 %v2151
    %2408 = vmatprep.mubr.bf16.mxu0 %v69
    %2409 = vmatmul.mubr.bf16.gmra.mrb[0].mxu0 %v68
    %v2410 = vpop.f32.mrb[0].mxu0
    %v2411 = vadd.f32 %v2371, %v2410
    %v2412 = vpop.f32.mrb[0].mxu0
    %v2413 = vpop.f32.mrb[0].mxu0
    %v2414 = vpop.f32.mrb[0].mxu0
    %2415 = vdwg.mxu0
    %2416 = vmatprep.subr.bf16.mxu0 0
    %2417 = vmatpush1.bf16.msra.mxu0 %v2152
    %2418 = vmatprep.subr.bf16.mxu0 0
    %2419 = vmatpush1.bf16.msra.mxu0 %v2153
    %2420 = vmatprep.subr.bf16.mxu0 0
    %2421 = vmatpush1.bf16.msra.mxu0 %v2154
    %2422 = vmatprep.subr.bf16.mxu0 0
    %2423 = vmatpush1.bf16.msra.mxu0 %v2155
    %2424 = vmatprep.subr.bf16.mxu0 0
    %2425 = vmatpush1.bf16.msra.mxu0 %v2156
    %2426 = vmatprep.subr.bf16.mxu0 0
    %2427 = vmatpush1.bf16.msra.mxu0 %v2157
    %2428 = vmatprep.subr.bf16.mxu0 0
    %2429 = vmatpush1.bf16.msra.mxu0 %v2158
    %2430 = vmatprep.subr.bf16.mxu0 0
    %2431 = vmatpush1.bf16.msra.mxu0 %v2159
    %2432 = vmatprep.subr.bf16.mxu0 0
    %2433 = vmatpush1.bf16.msra.mxu0 %v2160
    %2434 = vmatprep.subr.bf16.mxu0 0
    %2435 = vmatpush1.bf16.msra.mxu0 %v2161
    %2436 = vmatprep.subr.bf16.mxu0 0
    %2437 = vmatpush1.bf16.msra.mxu0 %v2162
    %2438 = vmatprep.subr.bf16.mxu0 0
    %2439 = vmatpush1.bf16.msra.mxu0 %v2163
    %2440 = vmatprep.subr.bf16.mxu0 0
    %2441 = vmatpush1.bf16.msra.mxu0 %v2164
    %2442 = vmatprep.subr.bf16.mxu0 0
    %2443 = vmatpush1.bf16.msra.mxu0 %v2165
    %2444 = vmatprep.subr.bf16.mxu0 0
    %2445 = vmatpush1.bf16.msra.mxu0 %v2166
    %2446 = vmatprep.subr.bf16.mxu0 0
    %2447 = vmatpush1.bf16.msra.mxu0 %v2167
    %2448 = vmatprep.mubr.bf16.mxu0 %v71
    %2449 = vmatmul.mubr.bf16.gmra.mrb[0].mxu0 %v70
    %v2450 = vpop.f32.mrb[0].mxu0
    %v2451 = vadd.f32 %v2411, %v2450
    %v2452 = vpop.f32.mrb[0].mxu0
    %v2453 = vpop.f32.mrb[0].mxu0
    %v2454 = vpop.f32.mrb[0].mxu0
    %2455 = vdwg.mxu0
    %2456 = vmatprep.subr.bf16.mxu0 0
    %2457 = vmatpush1.bf16.msra.mxu0 %v2168
    %2458 = vmatprep.subr.bf16.mxu0 0
    %2459 = vmatpush1.bf16.msra.mxu0 %v2169
    %2460 = vmatprep.subr.bf16.mxu0 0
    %2461 = vmatpush1.bf16.msra.mxu0 %v2170
    %2462 = vmatprep.subr.bf16.mxu0 0
    %2463 = vmatpush1.bf16.msra.mxu0 %v2171
    %2464 = vmatprep.subr.bf16.mxu0 0
    %2465 = vmatpush1.bf16.msra.mxu0 %v2172
    %2466 = vmatprep.subr.bf16.mxu0 0
    %2467 = vmatpush1.bf16.msra.mxu0 %v2173
    %2468 = vmatprep.subr.bf16.mxu0 0
    %2469 = vmatpush1.bf16.msra.mxu0 %v2174
    %2470 = vmatprep.subr.bf16.mxu0 0
    %2471 = vmatpush1.bf16.msra.mxu0 %v2175
    %2472 = vmatprep.subr.bf16.mxu0 0
    %2473 = vmatpush1.bf16.msra.mxu0 %v2176
    %2474 = vmatprep.subr.bf16.mxu0 0
    %2475 = vmatpush1.bf16.msra.mxu0 %v2177
    %2476 = vmatprep.subr.bf16.mxu0 0
    %2477 = vmatpush1.bf16.msra.mxu0 %v2178
    %2478 = vmatprep.subr.bf16.mxu0 0
    %2479 = vmatpush1.bf16.msra.mxu0 %v2179
    %2480 = vmatprep.subr.bf16.mxu0 0
    %2481 = vmatpush1.bf16.msra.mxu0 %v2180
    %2482 = vmatprep.subr.bf16.mxu0 0
    %2483 = vmatpush1.bf16.msra.mxu0 %v2181
    %2484 = vmatprep.subr.bf16.mxu0 0
    %2485 = vmatpush1.bf16.msra.mxu0 %v2182
    %2486 = vmatprep.subr.bf16.mxu0 0
    %2487 = vmatpush1.bf16.msra.mxu0 %v2183
    %2488 = vmatprep.mubr.bf16.mxu0 %v73
    %2489 = vmatmul.mubr.bf16.gmra.mrb[0].mxu0 %v72
    %v2490 = vpop.f32.mrb[0].mxu0
    %v2491 = vadd.f32 %v2451, %v2490
    %v2492 = vpop.f32.mrb[0].mxu0
    %v2493 = vpop.f32.mrb[0].mxu0
    %v2494 = vpop.f32.mrb[0].mxu0
    %2495 = vdwg.mxu0
    %2496 = vmatprep.subr.bf16.mxu0 0
    %2497 = vmatpush1.bf16.msra.mxu0 %v2184
    %2498 = vmatprep.subr.bf16.mxu0 0
    %2499 = vmatpush1.bf16.msra.mxu0 %v2185
    %2500 = vmatprep.subr.bf16.mxu0 0
    %2501 = vmatpush1.bf16.msra.mxu0 %v2186
    %2502 = vmatprep.subr.bf16.mxu0 0
    %2503 = vmatpush1.bf16.msra.mxu0 %v2187
    %2504 = vmatprep.subr.bf16.mxu0 0
    %2505 = vmatpush1.bf16.msra.mxu0 %v2188
    %2506 = vmatprep.subr.bf16.mxu0 0
    %2507 = vmatpush1.bf16.msra.mxu0 %v2189
    %2508 = vmatprep.subr.bf16.mxu0 0
    %2509 = vmatpush1.bf16.msra.mxu0 %v2190
    %2510 = vmatprep.subr.bf16.mxu0 0
    %2511 = vmatpush1.bf16.msra.mxu0 %v2191
    %2512 = vmatprep.subr.bf16.mxu0 0
    %2513 = vmatpush1.bf16.msra.mxu0 %v2192
    %2514 = vmatprep.subr.bf16.mxu0 0
    %2515 = vmatpush1.bf16.msra.mxu0 %v2193
    %2516 = vmatprep.subr.bf16.mxu0 0
    %2517 = vmatpush1.bf16.msra.mxu0 %v2194
    %2518 = vmatprep.subr.bf16.mxu0 0
    %2519 = vmatpush1.bf16.msra.mxu0 %v2195
    %2520 = vmatprep.subr.bf16.mxu0 0
    %2521 = vmatpush1.bf16.msra.mxu0 %v2196
    %2522 = vmatprep.subr.bf16.mxu0 0
    %2523 = vmatpush1.bf16.msra.mxu0 %v2197
    %2524 = vmatprep.subr.bf16.mxu0 0
    %2525 = vmatpush1.bf16.msra.mxu0 %v2198
    %2526 = vmatprep.subr.bf16.mxu0 0
    %2527 = vmatpush1.bf16.msra.mxu0 %v2199
    %2528 = vmatprep.mubr.bf16.mxu0 %v75
    %2529 = vmatmul.mubr.bf16.gmra.mrb[0].mxu0 %v74
    %v2530 = vpop.f32.mrb[0].mxu0
    %v2531 = vadd.f32 %v2491, %v2530
    %v2532 = vpop.f32.mrb[0].mxu0
    %v2533 = vpop.f32.mrb[0].mxu0
    %v2534 = vpop.f32.mrb[0].mxu0
    %2535 = vdwg.mxu0
    %2536 = vmatprep.subr.bf16.mxu0 0
    %2537 = vmatpush1.bf16.msra.mxu0 %v2200
    %2538 = vmatprep.subr.bf16.mxu0 0
    %2539 = vmatpush1.bf16.msra.mxu0 %v2201
    %2540 = vmatprep.subr.bf16.mxu0 0
    %2541 = vmatpush1.bf16.msra.mxu0 %v2202
    %2542 = vmatprep.subr.bf16.mxu0 0
    %2543 = vmatpush1.bf16.msra.mxu0 %v2203
    %2544 = vmatprep.subr.bf16.mxu0 0
    %2545 = vmatpush1.bf16.msra.mxu0 %v2204
    %2546 = vmatprep.subr.bf16.mxu0 0
    %2547 = vmatpush1.bf16.msra.mxu0 %v2205
    %2548 = vmatprep.subr.bf16.mxu0 0
    %2549 = vmatpush1.bf16.msra.mxu0 %v2206
    %2550 = vmatprep.subr.bf16.mxu0 0
    %2551 = vmatpush1.bf16.msra.mxu0 %v2207
    %2552 = vmatprep.subr.bf16.mxu0 0
    %2553 = vmatpush1.bf16.msra.mxu0 %v2208
    %2554 = vmatprep.subr.bf16.mxu0 0
    %2555 = vmatpush1.bf16.msra.mxu0 %v2209
    %2556 = vmatprep.subr.bf16.mxu0 0
    %2557 = vmatpush1.bf16.msra.mxu0 %v2210
    %2558 = vmatprep.subr.bf16.mxu0 0
    %2559 = vmatpush1.bf16.msra.mxu0 %v2211
    %2560 = vmatprep.subr.bf16.mxu0 0
    %2561 = vmatpush1.bf16.msra.mxu0 %v2212
    %2562 = vmatprep.subr.bf16.mxu0 0
    %2563 = vmatpush1.bf16.msra.mxu0 %v2213
    %2564 = vmatprep.subr.bf16.mxu0 0
    %2565 = vmatpush1.bf16.msra.mxu0 %v2214
    %2566 = vmatprep.subr.bf16.mxu0 0
    %2567 = vmatpush1.bf16.msra.mxu0 %v2215
    %2568 = vmatprep.mubr.bf16.mxu0 %v77
    %2569 = vmatmul.mubr.bf16.gmra.mrb[0].mxu0 %v76
    %v2570 = vpop.f32.mrb[0].mxu0
    %v2571 = vadd.f32 %v2531, %v2570
    %v2572 = vpop.f32.mrb[0].mxu0
    %v2573 = vpop.f32.mrb[0].mxu0
    %v2574 = vpop.f32.mrb[0].mxu0
    %2575 = vdwg.mxu0
    %2576 = vmatprep.subr.bf16.mxu0 0
    %2577 = vmatpush1.bf16.msra.mxu0 %v2216
    %2578 = vmatprep.subr.bf16.mxu0 0
    %2579 = vmatpush1.bf16.msra.mxu0 %v2217
    %2580 = vmatprep.subr.bf16.mxu0 0
    %2581 = vmatpush1.bf16.msra.mxu0 %v2218
    %2582 = vmatprep.subr.bf16.mxu0 0
    %2583 = vmatpush1.bf16.msra.mxu0 %v2219
    %2584 = vmatprep.subr.bf16.mxu0 0
    %2585 = vmatpush1.bf16.msra.mxu0 %v2220
    %2586 = vmatprep.subr.bf16.mxu0 0
    %2587 = vmatpush1.bf16.msra.mxu0 %v2221
    %2588 = vmatprep.subr.bf16.mxu0 0
    %2589 = vmatpush1.bf16.msra.mxu0 %v2222
    %2590 = vmatprep.subr.bf16.mxu0 0
    %2591 = vmatpush1.bf16.msra.mxu0 %v2223
    %2592 = vmatprep.subr.bf16.mxu0 0
    %2593 = vmatpush1.bf16.msra.mxu0 %v2224
    %2594 = vmatprep.subr.bf16.mxu0 0
    %2595 = vmatpush1.bf16.msra.mxu0 %v2225
    %2596 = vmatprep.subr.bf16.mxu0 0
    %2597 = vmatpush1.bf16.msra.mxu0 %v2226
    %2598 = vmatprep.subr.bf16.mxu0 0
    %2599 = vmatpush1.bf16.msra.mxu0 %v2227
    %2600 = vmatprep.subr.bf16.mxu0 0
    %2601 = vmatpush1.bf16.msra.mxu0 %v2228
    %2602 = vmatprep.subr.bf16.mxu0 0
    %2603 = vmatpush1.bf16.msra.mxu0 %v2229
    %2604 = vmatprep.subr.bf16.mxu0 0
    %2605 = vmatpush1.bf16.msra.mxu0 %v2230
    %2606 = vmatprep.subr.bf16.mxu0 0
    %2607 = vmatpush1.bf16.msra.mxu0 %v2231
    %2608 = vmatprep.mubr.bf16.mxu0 %v79
    %2609 = vmatmul.mubr.bf16.gmra.mrb[0].mxu0 %v78
    %v2610 = vpop.f32.mrb[0].mxu0
    %v2611 = vadd.f32 %v2571, %v2610
    %v2612 = vpop.f32.mrb[0].mxu0
    %v2613 = vpop.f32.mrb[0].mxu0
    %v2614 = vpop.f32.mrb[0].mxu0
    %2615 = vdwg.mxu0
    %2616 = vmatprep.subr.bf16.mxu0 0
    %2617 = vmatpush1.bf16.msra.mxu0 %v2232
    %2618 = vmatprep.subr.bf16.mxu0 0
    %2619 = vmatpush1.bf16.msra.mxu0 %v2233
    %2620 = vmatprep.subr.bf16.mxu0 0
    %2621 = vmatpush1.bf16.msra.mxu0 %v2234
    %2622 = vmatprep.subr.bf16.mxu0 0
    %2623 = vmatpush1.bf16.msra.mxu0 %v2235
    %2624 = vmatprep.subr.bf16.mxu0 0
    %2625 = vmatpush1.bf16.msra.mxu0 %v2236
    %2626 = vmatprep.subr.bf16.mxu0 0
    %2627 = vmatpush1.bf16.msra.mxu0 %v2237
    %2628 = vmatprep.subr.bf16.mxu0 0
    %2629 = vmatpush1.bf16.msra.mxu0 %v2238
    %2630 = vmatprep.subr.bf16.mxu0 0
    %2631 = vmatpush1.bf16.msra.mxu0 %v2239
    %2632 = vmatprep.subr.bf16.mxu0 0
    %2633 = vmatpush1.bf16.msra.mxu0 %v2240
    %2634 = vmatprep.subr.bf16.mxu0 0
    %2635 = vmatpush1.bf16.msra.mxu0 %v2241
    %2636 = vmatprep.subr.bf16.mxu0 0
    %2637 = vmatpush1.bf16.msra.mxu0 %v2242
    %2638 = vmatprep.subr.bf16.mxu0 0
    %2639 = vmatpush1.bf16.msra.mxu0 %v2243
    %2640 = vmatprep.subr.bf16.mxu0 0
    %2641 = vmatpush1.bf16.msra.mxu0 %v2244
    %2642 = vmatprep.subr.bf16.mxu0 0
    %2643 = vmatpush1.bf16.msra.mxu0 %v2245
    %2644 = vmatprep.subr.bf16.mxu0 0
    %2645 = vmatpush1.bf16.msra.mxu0 %v2246
    %2646 = vmatprep.subr.bf16.mxu0 0
    %2647 = vmatpush1.bf16.msra.mxu0 %v2247
    %2648 = vmatprep.mubr.bf16.mxu0 %v81
    %2649 = vmatmul.mubr.bf16.gmra.mrb[0].mxu0 %v80
    %v2650 = vpop.f32.mrb[0].mxu0
    %v2651 = vadd.f32 %v2611, %v2650
    %v2652 = vpop.f32.mrb[0].mxu0
    %v2653 = vpop.f32.mrb[0].mxu0
    %v2654 = vpop.f32.mrb[0].mxu0
    %2655 = vdwg.mxu0
    %2656 = vmatprep.subr.bf16.mxu0 0
    %2657 = vmatpush1.bf16.msra.mxu0 %v2248
    %2658 = vmatprep.subr.bf16.mxu0 0
    %2659 = vmatpush1.bf16.msra.mxu0 %v2249
    %2660 = vmatprep.subr.bf16.mxu0 0
    %2661 = vmatpush1.bf16.msra.mxu0 %v2250
    %2662 = vmatprep.subr.bf16.mxu0 0
    %2663 = vmatpush1.bf16.msra.mxu0 %v2251
    %2664 = vmatprep.subr.bf16.mxu0 0
    %2665 = vmatpush1.bf16.msra.mxu0 %v2252
    %2666 = vmatprep.subr.bf16.mxu0 0
    %2667 = vmatpush1.bf16.msra.mxu0 %v2253
    %2668 = vmatprep.subr.bf16.mxu0 0
    %2669 = vmatpush1.bf16.msra.mxu0 %v2254
    %2670 = vmatprep.subr.bf16.mxu0 0
    %2671 = vmatpush1.bf16.msra.mxu0 %v2255
    %2672 = vmatprep.subr.bf16.mxu0 0
    %2673 = vmatpush1.bf16.msra.mxu0 %v2256
    %2674 = vmatprep.subr.bf16.mxu0 0
    %2675 = vmatpush1.bf16.msra.mxu0 %v2257
    %2676 = vmatprep.subr.bf16.mxu0 0
    %2677 = vmatpush1.bf16.msra.mxu0 %v2258
    %2678 = vmatprep.subr.bf16.mxu0 0
    %2679 = vmatpush1.bf16.msra.mxu0 %v2259
    %2680 = vmatprep.subr.bf16.mxu0 0
    %2681 = vmatpush1.bf16.msra.mxu0 %v2260
    %2682 = vmatprep.subr.bf16.mxu0 0
    %2683 = vmatpush1.bf16.msra.mxu0 %v2261
    %2684 = vmatprep.subr.bf16.mxu0 0
    %2685 = vmatpush1.bf16.msra.mxu0 %v2262
    %2686 = vmatprep.subr.bf16.mxu0 0
    %2687 = vmatpush1.bf16.msra.mxu0 %v2263
    %2688 = vmatprep.mubr.bf16.mxu0 %v83
    %2689 = vmatmul.mubr.bf16.gmra.mrb[0].mxu0 %v82
    %v2690 = vpop.f32.mrb[0].mxu0
    %v2691 = vadd.f32 %v2651, %v2690
    %v2692 = vpop.f32.mrb[0].mxu0
    %v2693 = vpop.f32.mrb[0].mxu0
    %v2694 = vpop.f32.mrb[0].mxu0
    %2695 = vdwg.mxu0
    %2696 = vmatprep.subr.bf16.mxu0 0
    %2697 = vmatpush1.bf16.msra.mxu0 %v2264
    %2698 = vmatprep.subr.bf16.mxu0 0
    %2699 = vmatpush1.bf16.msra.mxu0 %v2265
    %2700 = vmatprep.subr.bf16.mxu0 0
    %2701 = vmatpush1.bf16.msra.mxu0 %v2266
    %2702 = vmatprep.subr.bf16.mxu0 0
    %2703 = vmatpush1.bf16.msra.mxu0 %v2267
    %2704 = vmatprep.subr.bf16.mxu0 0
    %2705 = vmatpush1.bf16.msra.mxu0 %v2268
    %2706 = vmatprep.subr.bf16.mxu0 0
    %2707 = vmatpush1.bf16.msra.mxu0 %v2269
    %2708 = vmatprep.subr.bf16.mxu0 0
    %2709 = vmatpush1.bf16.msra.mxu0 %v2270
    %2710 = vmatprep.subr.bf16.mxu0 0
    %2711 = vmatpush1.bf16.msra.mxu0 %v2271
    %2712 = vmatprep.subr.bf16.mxu0 0
    %2713 = vmatpush1.bf16.msra.mxu0 %v2272
    %2714 = vmatprep.subr.bf16.mxu0 0
    %2715 = vmatpush1.bf16.msra.mxu0 %v2273
    %2716 = vmatprep.subr.bf16.mxu0 0
    %2717 = vmatpush1.bf16.msra.mxu0 %v2274
    %2718 = vmatprep.subr.bf16.mxu0 0
    %2719 = vmatpush1.bf16.msra.mxu0 %v2275
    %2720 = vmatprep.subr.bf16.mxu0 0
    %2721 = vmatpush1.bf16.msra.mxu0 %v2276
    %2722 = vmatprep.subr.bf16.mxu0 0
    %2723 = vmatpush1.bf16.msra.mxu0 %v2277
    %2724 = vmatprep.subr.bf16.mxu0 0
    %2725 = vmatpush1.bf16.msra.mxu0 %v2278
    %2726 = vmatprep.subr.bf16.mxu0 0
    %2727 = vmatpush1.bf16.msra.mxu0 %v2279
    %2728 = vmatprep.mubr.bf16.mxu0 %v85
    %2729 = vmatmul.mubr.bf16.gmra.mrb[0].mxu0 %v84
    %v2730 = vpop.f32.mrb[0].mxu0
    %v2731 = vadd.f32 %v2691, %v2730
    %v2732 = vpop.f32.mrb[0].mxu0
    %v2733 = vpop.f32.mrb[0].mxu0
    %v2734 = vpop.f32.mrb[0].mxu0
    %2735 = vdwg.mxu0
    %2736 = vmatprep.subr.bf16.mxu0 0
    %2737 = vmatpush1.bf16.msra.mxu0 %v2280
    %2738 = vmatprep.subr.bf16.mxu0 0
    %2739 = vmatpush1.bf16.msra.mxu0 %v2281
    %2740 = vmatprep.subr.bf16.mxu0 0
    %2741 = vmatpush1.bf16.msra.mxu0 %v2282
    %2742 = vmatprep.subr.bf16.mxu0 0
    %2743 = vmatpush1.bf16.msra.mxu0 %v2283
    %2744 = vmatprep.subr.bf16.mxu0 0
    %2745 = vmatpush1.bf16.msra.mxu0 %v2284
    %2746 = vmatprep.subr.bf16.mxu0 0
    %2747 = vmatpush1.bf16.msra.mxu0 %v2285
    %2748 = vmatprep.subr.bf16.mxu0 0
    %2749 = vmatpush1.bf16.msra.mxu0 %v2286
    %2750 = vmatprep.subr.bf16.mxu0 0
    %2751 = vmatpush1.bf16.msra.mxu0 %v2287
    %2752 = vmatprep.subr.bf16.mxu0 0
    %2753 = vmatpush1.bf16.msra.mxu0 %v2288
    %2754 = vmatprep.subr.bf16.mxu0 0
    %2755 = vmatpush1.bf16.msra.mxu0 %v2289
    %2756 = vmatprep.subr.bf16.mxu0 0
    %2757 = vmatpush1.bf16.msra.mxu0 %v2290
    %2758 = vmatprep.subr.bf16.mxu0 0
    %2759 = vmatpush1.bf16.msra.mxu0 %v2291
    %2760 = vmatprep.subr.bf16.mxu0 0
    %2761 = vmatpush1.bf16.msra.mxu0 %v2292
    %2762 = vmatprep.subr.bf16.mxu0 0
    %2763 = vmatpush1.bf16.msra.mxu0 %v2293
    %2764 = vmatprep.subr.bf16.mxu0 0
    %2765 = vmatpush1.bf16.msra.mxu0 %v2294
    %2766 = vmatprep.subr.bf16.mxu0 0
    %2767 = vmatpush1.bf16.msra.mxu0 %v2295
    %2768 = vmatprep.mubr.bf16.mxu0 %v87
    %2769 = vmatmul.mubr.bf16.gmra.mrb[0].mxu0 %v86
    %v2770 = vpop.f32.mrb[0].mxu0
    %v2771 = vadd.f32 %v2731, %v2770
    %v2772 = vpop.f32.mrb[0].mxu0
    %v2773 = vpop.f32.mrb[0].mxu0
    %v2774 = vpop.f32.mrb[0].mxu0
    %2775 = vdwg.mxu0
    %v2776 = vld [vmem:[#allocation2 + $0x1800] sm:$0xff]
    %v2777 = vld [vmem:[#allocation2 + $0x1808] sm:$0xff]
    %v2778 = vld [vmem:[#allocation2 + $0x1810] sm:$0xff]
    %v2779 = vld [vmem:[#allocation2 + $0x1818] sm:$0xff]
    %v2780 = vld [vmem:[#allocation2 + $0x1820] sm:$0xff]
    %v2781 = vld [vmem:[#allocation2 + $0x1828] sm:$0xff]
    %v2782 = vld [vmem:[#allocation2 + $0x1830] sm:$0xff]
    %v2783 = vld [vmem:[#allocation2 + $0x1838] sm:$0xff]
    %v2784 = vld [vmem:[#allocation2 + $0x1840] sm:$0xff]
    %v2785 = vld [vmem:[#allocation2 + $0x1848] sm:$0xff]
    %v2786 = vld [vmem:[#allocation2 + $0x1850] sm:$0xff]
    %v2787 = vld [vmem:[#allocation2 + $0x1858] sm:$0xff]
    %v2788 = vld [vmem:[#allocation2 + $0x1860] sm:$0xff]
    %v2789 = vld [vmem:[#allocation2 + $0x1868] sm:$0xff]
    %v2790 = vld [vmem:[#allocation2 + $0x1870] sm:$0xff]
    %v2791 = vld [vmem:[#allocation2 + $0x1878] sm:$0xff]
    %v2792 = vld [vmem:[#allocation2 + $0x1880] sm:$0xff]
    %v2793 = vld [vmem:[#allocation2 + $0x1888] sm:$0xff]
    %v2794 = vld [vmem:[#allocation2 + $0x1890] sm:$0xff]
    %v2795 = vld [vmem:[#allocation2 + $0x1898] sm:$0xff]
    %v2796 = vld [vmem:[#allocation2 + $0x18a0] sm:$0xff]
    %v2797 = vld [vmem:[#allocation2 + $0x18a8] sm:$0xff]
    %v2798 = vld [vmem:[#allocation2 + $0x18b0] sm:$0xff]
    %v2799 = vld [vmem:[#allocation2 + $0x18b8] sm:$0xff]
    %v2800 = vld [vmem:[#allocation2 + $0x18c0] sm:$0xff]
    %v2801 = vld [vmem:[#allocation2 + $0x18c8] sm:$0xff]
    %v2802 = vld [vmem:[#allocation2 + $0x18d0] sm:$0xff]
    %v2803 = vld [vmem:[#allocation2 + $0x18d8] sm:$0xff]
    %v2804 = vld [vmem:[#allocation2 + $0x18e0] sm:$0xff]
    %v2805 = vld [vmem:[#allocation2 + $0x18e8] sm:$0xff]
    %v2806 = vld [vmem:[#allocation2 + $0x18f0] sm:$0xff]
    %v2807 = vld [vmem:[#allocation2 + $0x18f8] sm:$0xff]
    %v2808 = vld [vmem:[#allocation2 + $0x1900] sm:$0xff]
    %v2809 = vld [vmem:[#allocation2 + $0x1908] sm:$0xff]
    %v2810 = vld [vmem:[#allocation2 + $0x1910] sm:$0xff]
    %v2811 = vld [vmem:[#allocation2 + $0x1918] sm:$0xff]
    %v2812 = vld [vmem:[#allocation2 + $0x1920] sm:$0xff]
    %v2813 = vld [vmem:[#allocation2 + $0x1928] sm:$0xff]
    %v2814 = vld [vmem:[#allocation2 + $0x1930] sm:$0xff]
    %v2815 = vld [vmem:[#allocation2 + $0x1938] sm:$0xff]
    %v2816 = vld [vmem:[#allocation2 + $0x1940] sm:$0xff]
    %v2817 = vld [vmem:[#allocation2 + $0x1948] sm:$0xff]
    %v2818 = vld [vmem:[#allocation2 + $0x1950] sm:$0xff]
    %v2819 = vld [vmem:[#allocation2 + $0x1958] sm:$0xff]
    %v2820 = vld [vmem:[#allocation2 + $0x1960] sm:$0xff]
    %v2821 = vld [vmem:[#allocation2 + $0x1968] sm:$0xff]
    %v2822 = vld [vmem:[#allocation2 + $0x1970] sm:$0xff]
    %v2823 = vld [vmem:[#allocation2 + $0x1978] sm:$0xff]
    %v2824 = vld [vmem:[#allocation2 + $0x1980] sm:$0xff]
    %v2825 = vld [vmem:[#allocation2 + $0x1988] sm:$0xff]
    %v2826 = vld [vmem:[#allocation2 + $0x1990] sm:$0xff]
    %v2827 = vld [vmem:[#allocation2 + $0x1998] sm:$0xff]
    %v2828 = vld [vmem:[#allocation2 + $0x19a0] sm:$0xff]
    %v2829 = vld [vmem:[#allocation2 + $0x19a8] sm:$0xff]
    %v2830 = vld [vmem:[#allocation2 + $0x19b0] sm:$0xff]
    %v2831 = vld [vmem:[#allocation2 + $0x19b8] sm:$0xff]
    %v2832 = vld [vmem:[#allocation2 + $0x19c0] sm:$0xff]
    %v2833 = vld [vmem:[#allocation2 + $0x19c8] sm:$0xff]
    %v2834 = vld [vmem:[#allocation2 + $0x19d0] sm:$0xff]
    %v2835 = vld [vmem:[#allocation2 + $0x19d8] sm:$0xff]
    %v2836 = vld [vmem:[#allocation2 + $0x19e0] sm:$0xff]
    %v2837 = vld [vmem:[#allocation2 + $0x19e8] sm:$0xff]
    %v2838 = vld [vmem:[#allocation2 + $0x19f0] sm:$0xff]
    %v2839 = vld [vmem:[#allocation2 + $0x19f8] sm:$0xff]
    %v2840 = vld [vmem:[#allocation2 + $0x1a00] sm:$0xff]
    %v2841 = vld [vmem:[#allocation2 + $0x1a08] sm:$0xff]
    %v2842 = vld [vmem:[#allocation2 + $0x1a10] sm:$0xff]
    %v2843 = vld [vmem:[#allocation2 + $0x1a18] sm:$0xff]
    %v2844 = vld [vmem:[#allocation2 + $0x1a20] sm:$0xff]
    %v2845 = vld [vmem:[#allocation2 + $0x1a28] sm:$0xff]
    %v2846 = vld [vmem:[#allocation2 + $0x1a30] sm:$0xff]
    %v2847 = vld [vmem:[#allocation2 + $0x1a38] sm:$0xff]
    %v2848 = vld [vmem:[#allocation2 + $0x1a40] sm:$0xff]
    %v2849 = vld [vmem:[#allocation2 + $0x1a48] sm:$0xff]
    %v2850 = vld [vmem:[#allocation2 + $0x1a50] sm:$0xff]
    %v2851 = vld [vmem:[#allocation2 + $0x1a58] sm:$0xff]
    %v2852 = vld [vmem:[#allocation2 + $0x1a60] sm:$0xff]
    %v2853 = vld [vmem:[#allocation2 + $0x1a68] sm:$0xff]
    %v2854 = vld [vmem:[#allocation2 + $0x1a70] sm:$0xff]
    %v2855 = vld [vmem:[#allocation2 + $0x1a78] sm:$0xff]
    %v2856 = vld [vmem:[#allocation2 + $0x1a80] sm:$0xff]
    %v2857 = vld [vmem:[#allocation2 + $0x1a88] sm:$0xff]
    %v2858 = vld [vmem:[#allocation2 + $0x1a90] sm:$0xff]
    %v2859 = vld [vmem:[#allocation2 + $0x1a98] sm:$0xff]
    %v2860 = vld [vmem:[#allocation2 + $0x1aa0] sm:$0xff]
    %v2861 = vld [vmem:[#allocation2 + $0x1aa8] sm:$0xff]
    %v2862 = vld [vmem:[#allocation2 + $0x1ab0] sm:$0xff]
    %v2863 = vld [vmem:[#allocation2 + $0x1ab8] sm:$0xff]
    %v2864 = vld [vmem:[#allocation2 + $0x1ac0] sm:$0xff]
    %v2865 = vld [vmem:[#allocation2 + $0x1ac8] sm:$0xff]
    %v2866 = vld [vmem:[#allocation2 + $0x1ad0] sm:$0xff]
    %v2867 = vld [vmem:[#allocation2 + $0x1ad8] sm:$0xff]
    %v2868 = vld [vmem:[#allocation2 + $0x1ae0] sm:$0xff]
    %v2869 = vld [vmem:[#allocation2 + $0x1ae8] sm:$0xff]
    %v2870 = vld [vmem:[#allocation2 + $0x1af0] sm:$0xff]
    %v2871 = vld [vmem:[#allocation2 + $0x1af8] sm:$0xff]
    %v2872 = vld [vmem:[#allocation2 + $0x1b00] sm:$0xff]
    %v2873 = vld [vmem:[#allocation2 + $0x1b08] sm:$0xff]
    %v2874 = vld [vmem:[#allocation2 + $0x1b10] sm:$0xff]
    %v2875 = vld [vmem:[#allocation2 + $0x1b18] sm:$0xff]
    %v2876 = vld [vmem:[#allocation2 + $0x1b20] sm:$0xff]
    %v2877 = vld [vmem:[#allocation2 + $0x1b28] sm:$0xff]
    %v2878 = vld [vmem:[#allocation2 + $0x1b30] sm:$0xff]
    %v2879 = vld [vmem:[#allocation2 + $0x1b38] sm:$0xff]
    %v2880 = vld [vmem:[#allocation2 + $0x1b40] sm:$0xff]
    %v2881 = vld [vmem:[#allocation2 + $0x1b48] sm:$0xff]
    %v2882 = vld [vmem:[#allocation2 + $0x1b50] sm:$0xff]
    %v2883 = vld [vmem:[#allocation2 + $0x1b58] sm:$0xff]
    %v2884 = vld [vmem:[#allocation2 + $0x1b60] sm:$0xff]
    %v2885 = vld [vmem:[#allocation2 + $0x1b68] sm:$0xff]
    %v2886 = vld [vmem:[#allocation2 + $0x1b70] sm:$0xff]
    %v2887 = vld [vmem:[#allocation2 + $0x1b78] sm:$0xff]
    %v2888 = vld [vmem:[#allocation2 + $0x1b80] sm:$0xff]
    %v2889 = vld [vmem:[#allocation2 + $0x1b88] sm:$0xff]
    %v2890 = vld [vmem:[#allocation2 + $0x1b90] sm:$0xff]
    %v2891 = vld [vmem:[#allocation2 + $0x1b98] sm:$0xff]
    %v2892 = vld [vmem:[#allocation2 + $0x1ba0] sm:$0xff]
    %v2893 = vld [vmem:[#allocation2 + $0x1ba8] sm:$0xff]
    %v2894 = vld [vmem:[#allocation2 + $0x1bb0] sm:$0xff]
    %v2895 = vld [vmem:[#allocation2 + $0x1bb8] sm:$0xff]
    %v2896 = vld [vmem:[#allocation2 + $0x1bc0] sm:$0xff]
    %v2897 = vld [vmem:[#allocation2 + $0x1bc8] sm:$0xff]
    %v2898 = vld [vmem:[#allocation2 + $0x1bd0] sm:$0xff]
    %v2899 = vld [vmem:[#allocation2 + $0x1bd8] sm:$0xff]
    %v2900 = vld [vmem:[#allocation2 + $0x1be0] sm:$0xff]
    %v2901 = vld [vmem:[#allocation2 + $0x1be8] sm:$0xff]
    %v2902 = vld [vmem:[#allocation2 + $0x1bf0] sm:$0xff]
    %v2903 = vld [vmem:[#allocation2 + $0x1bf8] sm:$0xff]
    %v2904 = vld [vmem:[#allocation2 + $0x1c00] sm:$0xff]
    %v2905 = vld [vmem:[#allocation2 + $0x1c08] sm:$0xff]
    %v2906 = vld [vmem:[#allocation2 + $0x1c10] sm:$0xff]
    %v2907 = vld [vmem:[#allocation2 + $0x1c18] sm:$0xff]
    %v2908 = vld [vmem:[#allocation2 + $0x1c20] sm:$0xff]
    %v2909 = vld [vmem:[#allocation2 + $0x1c28] sm:$0xff]
    %v2910 = vld [vmem:[#allocation2 + $0x1c30] sm:$0xff]
    %v2911 = vld [vmem:[#allocation2 + $0x1c38] sm:$0xff]
    %v2912 = vld [vmem:[#allocation2 + $0x1c40] sm:$0xff]
    %v2913 = vld [vmem:[#allocation2 + $0x1c48] sm:$0xff]
    %v2914 = vld [vmem:[#allocation2 + $0x1c50] sm:$0xff]
    %v2915 = vld [vmem:[#allocation2 + $0x1c58] sm:$0xff]
    %v2916 = vld [vmem:[#allocation2 + $0x1c60] sm:$0xff]
    %v2917 = vld [vmem:[#allocation2 + $0x1c68] sm:$0xff]
    %v2918 = vld [vmem:[#allocation2 + $0x1c70] sm:$0xff]
    %v2919 = vld [vmem:[#allocation2 + $0x1c78] sm:$0xff]
    %v2920 = vld [vmem:[#allocation2 + $0x1c80] sm:$0xff]
    %v2921 = vld [vmem:[#allocation2 + $0x1c88] sm:$0xff]
    %v2922 = vld [vmem:[#allocation2 + $0x1c90] sm:$0xff]
    %v2923 = vld [vmem:[#allocation2 + $0x1c98] sm:$0xff]
    %v2924 = vld [vmem:[#allocation2 + $0x1ca0] sm:$0xff]
    %v2925 = vld [vmem:[#allocation2 + $0x1ca8] sm:$0xff]
    %v2926 = vld [vmem:[#allocation2 + $0x1cb0] sm:$0xff]
    %v2927 = vld [vmem:[#allocation2 + $0x1cb8] sm:$0xff]
    %v2928 = vld [vmem:[#allocation2 + $0x1cc0] sm:$0xff]
    %v2929 = vld [vmem:[#allocation2 + $0x1cc8] sm:$0xff]
    %v2930 = vld [vmem:[#allocation2 + $0x1cd0] sm:$0xff]
    %v2931 = vld [vmem:[#allocation2 + $0x1cd8] sm:$0xff]
    %v2932 = vld [vmem:[#allocation2 + $0x1ce0] sm:$0xff]
    %v2933 = vld [vmem:[#allocation2 + $0x1ce8] sm:$0xff]
    %v2934 = vld [vmem:[#allocation2 + $0x1cf0] sm:$0xff]
    %v2935 = vld [vmem:[#allocation2 + $0x1cf8] sm:$0xff]
    %v2936 = vld [vmem:[#allocation2 + $0x1d00] sm:$0xff]
    %v2937 = vld [vmem:[#allocation2 + $0x1d08] sm:$0xff]
    %v2938 = vld [vmem:[#allocation2 + $0x1d10] sm:$0xff]
    %v2939 = vld [vmem:[#allocation2 + $0x1d18] sm:$0xff]
    %v2940 = vld [vmem:[#allocation2 + $0x1d20] sm:$0xff]
    %v2941 = vld [vmem:[#allocation2 + $0x1d28] sm:$0xff]
    %v2942 = vld [vmem:[#allocation2 + $0x1d30] sm:$0xff]
    %v2943 = vld [vmem:[#allocation2 + $0x1d38] sm:$0xff]
    %v2944 = vld [vmem:[#allocation2 + $0x1d40] sm:$0xff]
    %v2945 = vld [vmem:[#allocation2 + $0x1d48] sm:$0xff]
    %v2946 = vld [vmem:[#allocation2 + $0x1d50] sm:$0xff]
    %v2947 = vld [vmem:[#allocation2 + $0x1d58] sm:$0xff]
    %v2948 = vld [vmem:[#allocation2 + $0x1d60] sm:$0xff]
    %v2949 = vld [vmem:[#allocation2 + $0x1d68] sm:$0xff]
    %v2950 = vld [vmem:[#allocation2 + $0x1d70] sm:$0xff]
    %v2951 = vld [vmem:[#allocation2 + $0x1d78] sm:$0xff]
    %v2952 = vld [vmem:[#allocation2 + $0x1d80] sm:$0xff]
    %v2953 = vld [vmem:[#allocation2 + $0x1d88] sm:$0xff]
    %v2954 = vld [vmem:[#allocation2 + $0x1d90] sm:$0xff]
    %v2955 = vld [vmem:[#allocation2 + $0x1d98] sm:$0xff]
    %v2956 = vld [vmem:[#allocation2 + $0x1da0] sm:$0xff]
    %v2957 = vld [vmem:[#allocation2 + $0x1da8] sm:$0xff]
    %v2958 = vld [vmem:[#allocation2 + $0x1db0] sm:$0xff]
    %v2959 = vld [vmem:[#allocation2 + $0x1db8] sm:$0xff]
    %v2960 = vld [vmem:[#allocation2 + $0x1dc0] sm:$0xff]
    %v2961 = vld [vmem:[#allocation2 + $0x1dc8] sm:$0xff]
    %v2962 = vld [vmem:[#allocation2 + $0x1dd0] sm:$0xff]
    %v2963 = vld [vmem:[#allocation2 + $0x1dd8] sm:$0xff]
    %v2964 = vld [vmem:[#allocation2 + $0x1de0] sm:$0xff]
    %v2965 = vld [vmem:[#allocation2 + $0x1de8] sm:$0xff]
    %v2966 = vld [vmem:[#allocation2 + $0x1df0] sm:$0xff]
    %v2967 = vld [vmem:[#allocation2 + $0x1df8] sm:$0xff]
    %2968 = vmatprep.subr.bf16.mxu0 0
    %2969 = vmatpush1.bf16.msra.mxu0 %v2776
    %2970 = vmatprep.subr.bf16.mxu0 0
    %2971 = vmatpush1.bf16.msra.mxu0 %v2777
    %2972 = vmatprep.subr.bf16.mxu0 0
    %2973 = vmatpush1.bf16.msra.mxu0 %v2778
    %2974 = vmatprep.subr.bf16.mxu0 0
    %2975 = vmatpush1.bf16.msra.mxu0 %v2779
    %2976 = vmatprep.subr.bf16.mxu0 0
    %2977 = vmatpush1.bf16.msra.mxu0 %v2780
    %2978 = vmatprep.subr.bf16.mxu0 0
    %2979 = vmatpush1.bf16.msra.mxu0 %v2781
    %2980 = vmatprep.subr.bf16.mxu0 0
    %2981 = vmatpush1.bf16.msra.mxu0 %v2782
    %2982 = vmatprep.subr.bf16.mxu0 0
    %2983 = vmatpush1.bf16.msra.mxu0 %v2783
    %2984 = vmatprep.subr.bf16.mxu0 0
    %2985 = vmatpush1.bf16.msra.mxu0 %v2784
    %2986 = vmatprep.subr.bf16.mxu0 0
    %2987 = vmatpush1.bf16.msra.mxu0 %v2785
    %2988 = vmatprep.subr.bf16.mxu0 0
    %2989 = vmatpush1.bf16.msra.mxu0 %v2786
    %2990 = vmatprep.subr.bf16.mxu0 0
    %2991 = vmatpush1.bf16.msra.mxu0 %v2787
    %2992 = vmatprep.subr.bf16.mxu0 0
    %2993 = vmatpush1.bf16.msra.mxu0 %v2788
    %2994 = vmatprep.subr.bf16.mxu0 0
    %2995 = vmatpush1.bf16.msra.mxu0 %v2789
    %2996 = vmatprep.subr.bf16.mxu0 0
    %2997 = vmatpush1.bf16.msra.mxu0 %v2790
    %2998 = vmatprep.subr.bf16.mxu0 0
    %2999 = vmatpush1.bf16.msra.mxu0 %v2791
    %3000 = vmatprep.mubr.bf16.mxu0 %v65
    %3001 = vmatmul.mubr.bf16.gmra.mrb[0].mxu0 %v64
    %v3002 = vpop.f32.mrb[0].mxu0
    %v3003 = vadd.f32 0.0, %v3002
    %v3004 = vpop.f32.mrb[0].mxu0
    %v3005 = vpop.f32.mrb[0].mxu0
    %v3006 = vpop.f32.mrb[0].mxu0
    %3007 = vdwg.mxu0
    %3008 = vmatprep.subr.bf16.mxu0 0
    %3009 = vmatpush1.bf16.msra.mxu0 %v2792
    %3010 = vmatprep.subr.bf16.mxu0 0
    %3011 = vmatpush1.bf16.msra.mxu0 %v2793
    %3012 = vmatprep.subr.bf16.mxu0 0
    %3013 = vmatpush1.bf16.msra.mxu0 %v2794
    %3014 = vmatprep.subr.bf16.mxu0 0
    %3015 = vmatpush1.bf16.msra.mxu0 %v2795
    %3016 = vmatprep.subr.bf16.mxu0 0
    %3017 = vmatpush1.bf16.msra.mxu0 %v2796
    %3018 = vmatprep.subr.bf16.mxu0 0
    %3019 = vmatpush1.bf16.msra.mxu0 %v2797
    %3020 = vmatprep.subr.bf16.mxu0 0
    %3021 = vmatpush1.bf16.msra.mxu0 %v2798
    %3022 = vmatprep.subr.bf16.mxu0 0
    %3023 = vmatpush1.bf16.msra.mxu0 %v2799
    %3024 = vmatprep.subr.bf16.mxu0 0
    %3025 = vmatpush1.bf16.msra.mxu0 %v2800
    %3026 = vmatprep.subr.bf16.mxu0 0
    %3027 = vmatpush1.bf16.msra.mxu0 %v2801
    %3028 = vmatprep.subr.bf16.mxu0 0
    %3029 = vmatpush1.bf16.msra.mxu0 %v2802
    %3030 = vmatprep.subr.bf16.mxu0 0
    %3031 = vmatpush1.bf16.msra.mxu0 %v2803
    %3032 = vmatprep.subr.bf16.mxu0 0
    %3033 = vmatpush1.bf16.msra.mxu0 %v2804
    %3034 = vmatprep.subr.bf16.mxu0 0
    %3035 = vmatpush1.bf16.msra.mxu0 %v2805
    %3036 = vmatprep.subr.bf16.mxu0 0
    %3037 = vmatpush1.bf16.msra.mxu0 %v2806
    %3038 = vmatprep.subr.bf16.mxu0 0
    %3039 = vmatpush1.bf16.msra.mxu0 %v2807
    %3040 = vmatprep.mubr.bf16.mxu0 %v67
    %3041 = vmatmul.mubr.bf16.gmra.mrb[0].mxu0 %v66
    %v3042 = vpop.f32.mrb[0].mxu0
    %v3043 = vadd.f32 %v3003, %v3042
    %v3044 = vpop.f32.mrb[0].mxu0
    %v3045 = vpop.f32.mrb[0].mxu0
    %v3046 = vpop.f32.mrb[0].mxu0
    %3047 = vdwg.mxu0
    %3048 = vmatprep.subr.bf16.mxu0 0
    %3049 = vmatpush1.bf16.msra.mxu0 %v2808
    %3050 = vmatprep.subr.bf16.mxu0 0
    %3051 = vmatpush1.bf16.msra.mxu0 %v2809
    %3052 = vmatprep.subr.bf16.mxu0 0
    %3053 = vmatpush1.bf16.msra.mxu0 %v2810
    %3054 = vmatprep.subr.bf16.mxu0 0
    %3055 = vmatpush1.bf16.msra.mxu0 %v2811
    %3056 = vmatprep.subr.bf16.mxu0 0
    %3057 = vmatpush1.bf16.msra.mxu0 %v2812
    %3058 = vmatprep.subr.bf16.mxu0 0
    %3059 = vmatpush1.bf16.msra.mxu0 %v2813
    %3060 = vmatprep.subr.bf16.mxu0 0
    %3061 = vmatpush1.bf16.msra.mxu0 %v2814
    %3062 = vmatprep.subr.bf16.mxu0 0
    %3063 = vmatpush1.bf16.msra.mxu0 %v2815
    %3064 = vmatprep.subr.bf16.mxu0 0
    %3065 = vmatpush1.bf16.msra.mxu0 %v2816
    %3066 = vmatprep.subr.bf16.mxu0 0
    %3067 = vmatpush1.bf16.msra.mxu0 %v2817
    %3068 = vmatprep.subr.bf16.mxu0 0
    %3069 = vmatpush1.bf16.msra.mxu0 %v2818
    %3070 = vmatprep.subr.bf16.mxu0 0
    %3071 = vmatpush1.bf16.msra.mxu0 %v2819
    %3072 = vmatprep.subr.bf16.mxu0 0
    %3073 = vmatpush1.bf16.msra.mxu0 %v2820
    %3074 = vmatprep.subr.bf16.mxu0 0
    %3075 = vmatpush1.bf16.msra.mxu0 %v2821
    %3076 = vmatprep.subr.bf16.mxu0 0
    %3077 = vmatpush1.bf16.msra.mxu0 %v2822
    %3078 = vmatprep.subr.bf16.mxu0 0
    %3079 = vmatpush1.bf16.msra.mxu0 %v2823
    %3080 = vmatprep.mubr.bf16.mxu0 %v69
    %3081 = vmatmul.mubr.bf16.gmra.mrb[0].mxu0 %v68
    %v3082 = vpop.f32.mrb[0].mxu0
    %v3083 = vadd.f32 %v3043, %v3082
    %v3084 = vpop.f32.mrb[0].mxu0
    %v3085 = vpop.f32.mrb[0].mxu0
    %v3086 = vpop.f32.mrb[0].mxu0
    %3087 = vdwg.mxu0
    %3088 = vmatprep.subr.bf16.mxu0 0
    %3089 = vmatpush1.bf16.msra.mxu0 %v2824
    %3090 = vmatprep.subr.bf16.mxu0 0
    %3091 = vmatpush1.bf16.msra.mxu0 %v2825
    %3092 = vmatprep.subr.bf16.mxu0 0
    %3093 = vmatpush1.bf16.msra.mxu0 %v2826
    %3094 = vmatprep.subr.bf16.mxu0 0
    %3095 = vmatpush1.bf16.msra.mxu0 %v2827
    %3096 = vmatprep.subr.bf16.mxu0 0
    %3097 = vmatpush1.bf16.msra.mxu0 %v2828
    %3098 = vmatprep.subr.bf16.mxu0 0
    %3099 = vmatpush1.bf16.msra.mxu0 %v2829
    %3100 = vmatprep.subr.bf16.mxu0 0
    %3101 = vmatpush1.bf16.msra.mxu0 %v2830
    %3102 = vmatprep.subr.bf16.mxu0 0
    %3103 = vmatpush1.bf16.msra.mxu0 %v2831
    %3104 = vmatprep.subr.bf16.mxu0 0
    %3105 = vmatpush1.bf16.msra.mxu0 %v2832
    %3106 = vmatprep.subr.bf16.mxu0 0
    %3107 = vmatpush1.bf16.msra.mxu0 %v2833
    %3108 = vmatprep.subr.bf16.mxu0 0
    %3109 = vmatpush1.bf16.msra.mxu0 %v2834
    %3110 = vmatprep.subr.bf16.mxu0 0
    %3111 = vmatpush1.bf16.msra.mxu0 %v2835
    %3112 = vmatprep.subr.bf16.mxu0 0
    %3113 = vmatpush1.bf16.msra.mxu0 %v2836
    %3114 = vmatprep.subr.bf16.mxu0 0
    %3115 = vmatpush1.bf16.msra.mxu0 %v2837
    %3116 = vmatprep.subr.bf16.mxu0 0
    %3117 = vmatpush1.bf16.msra.mxu0 %v2838
    %3118 = vmatprep.subr.bf16.mxu0 0
    %3119 = vmatpush1.bf16.msra.mxu0 %v2839
    %3120 = vmatprep.mubr.bf16.mxu0 %v71
    %3121 = vmatmul.mubr.bf16.gmra.mrb[0].mxu0 %v70
    %v3122 = vpop.f32.mrb[0].mxu0
    %v3123 = vadd.f32 %v3083, %v3122
    %v3124 = vpop.f32.mrb[0].mxu0
    %v3125 = vpop.f32.mrb[0].mxu0
    %v3126 = vpop.f32.mrb[0].mxu0
    %3127 = vdwg.mxu0
    %3128 = vmatprep.subr.bf16.mxu0 0
    %3129 = vmatpush1.bf16.msra.mxu0 %v2840
    %3130 = vmatprep.subr.bf16.mxu0 0
    %3131 = vmatpush1.bf16.msra.mxu0 %v2841
    %3132 = vmatprep.subr.bf16.mxu0 0
    %3133 = vmatpush1.bf16.msra.mxu0 %v2842
    %3134 = vmatprep.subr.bf16.mxu0 0
    %3135 = vmatpush1.bf16.msra.mxu0 %v2843
    %3136 = vmatprep.subr.bf16.mxu0 0
    %3137 = vmatpush1.bf16.msra.mxu0 %v2844
    %3138 = vmatprep.subr.bf16.mxu0 0
    %3139 = vmatpush1.bf16.msra.mxu0 %v2845
    %3140 = vmatprep.subr.bf16.mxu0 0
    %3141 = vmatpush1.bf16.msra.mxu0 %v2846
    %3142 = vmatprep.subr.bf16.mxu0 0
    %3143 = vmatpush1.bf16.msra.mxu0 %v2847
    %3144 = vmatprep.subr.bf16.mxu0 0
    %3145 = vmatpush1.bf16.msra.mxu0 %v2848
    %3146 = vmatprep.subr.bf16.mxu0 0
    %3147 = vmatpush1.bf16.msra.mxu0 %v2849
    %3148 = vmatprep.subr.bf16.mxu0 0
    %3149 = vmatpush1.bf16.msra.mxu0 %v2850
    %3150 = vmatprep.subr.bf16.mxu0 0
    %3151 = vmatpush1.bf16.msra.mxu0 %v2851
    %3152 = vmatprep.subr.bf16.mxu0 0
    %3153 = vmatpush1.bf16.msra.mxu0 %v2852
    %3154 = vmatprep.subr.bf16.mxu0 0
    %3155 = vmatpush1.bf16.msra.mxu0 %v2853
    %3156 = vmatprep.subr.bf16.mxu0 0
    %3157 = vmatpush1.bf16.msra.mxu0 %v2854
    %3158 = vmatprep.subr.bf16.mxu0 0
    %3159 = vmatpush1.bf16.msra.mxu0 %v2855
    %3160 = vmatprep.mubr.bf16.mxu0 %v73
    %3161 = vmatmul.mubr.bf16.gmra.mrb[0].mxu0 %v72
    %v3162 = vpop.f32.mrb[0].mxu0
    %v3163 = vadd.f32 %v3123, %v3162
    %v3164 = vpop.f32.mrb[0].mxu0
    %v3165 = vpop.f32.mrb[0].mxu0
    %v3166 = vpop.f32.mrb[0].mxu0
    %3167 = vdwg.mxu0
    %3168 = vmatprep.subr.bf16.mxu0 0
    %3169 = vmatpush1.bf16.msra.mxu0 %v2856
    %3170 = vmatprep.subr.bf16.mxu0 0
    %3171 = vmatpush1.bf16.msra.mxu0 %v2857
    %3172 = vmatprep.subr.bf16.mxu0 0
    %3173 = vmatpush1.bf16.msra.mxu0 %v2858
    %3174 = vmatprep.subr.bf16.mxu0 0
    %3175 = vmatpush1.bf16.msra.mxu0 %v2859
    %3176 = vmatprep.subr.bf16.mxu0 0
    %3177 = vmatpush1.bf16.msra.mxu0 %v2860
    %3178 = vmatprep.subr.bf16.mxu0 0
    %3179 = vmatpush1.bf16.msra.mxu0 %v2861
    %3180 = vmatprep.subr.bf16.mxu0 0
    %3181 = vmatpush1.bf16.msra.mxu0 %v2862
    %3182 = vmatprep.subr.bf16.mxu0 0
    %3183 = vmatpush1.bf16.msra.mxu0 %v2863
    %3184 = vmatprep.subr.bf16.mxu0 0
    %3185 = vmatpush1.bf16.msra.mxu0 %v2864
    %3186 = vmatprep.subr.bf16.mxu0 0
    %3187 = vmatpush1.bf16.msra.mxu0 %v2865
    %3188 = vmatprep.subr.bf16.mxu0 0
    %3189 = vmatpush1.bf16.msra.mxu0 %v2866
    %3190 = vmatprep.subr.bf16.mxu0 0
    %3191 = vmatpush1.bf16.msra.mxu0 %v2867
    %3192 = vmatprep.subr.bf16.mxu0 0
    %3193 = vmatpush1.bf16.msra.mxu0 %v2868
    %3194 = vmatprep.subr.bf16.mxu0 0
    %3195 = vmatpush1.bf16.msra.mxu0 %v2869
    %3196 = vmatprep.subr.bf16.mxu0 0
    %3197 = vmatpush1.bf16.msra.mxu0 %v2870
    %3198 = vmatprep.subr.bf16.mxu0 0
    %3199 = vmatpush1.bf16.msra.mxu0 %v2871
    %3200 = vmatprep.mubr.bf16.mxu0 %v75
    %3201 = vmatmul.mubr.bf16.gmra.mrb[0].mxu0 %v74
    %v3202 = vpop.f32.mrb[0].mxu0
    %v3203 = vadd.f32 %v3163, %v3202
    %v3204 = vpop.f32.mrb[0].mxu0
    %v3205 = vpop.f32.mrb[0].mxu0
    %v3206 = vpop.f32.mrb[0].mxu0
    %3207 = vdwg.mxu0
    %3208 = vmatprep.subr.bf16.mxu0 0
    %3209 = vmatpush1.bf16.msra.mxu0 %v2872
    %3210 = vmatprep.subr.bf16.mxu0 0
    %3211 = vmatpush1.bf16.msra.mxu0 %v2873
    %3212 = vmatprep.subr.bf16.mxu0 0
    %3213 = vmatpush1.bf16.msra.mxu0 %v2874
    %3214 = vmatprep.subr.bf16.mxu0 0
    %3215 = vmatpush1.bf16.msra.mxu0 %v2875
    %3216 = vmatprep.subr.bf16.mxu0 0
    %3217 = vmatpush1.bf16.msra.mxu0 %v2876
    %3218 = vmatprep.subr.bf16.mxu0 0
    %3219 = vmatpush1.bf16.msra.mxu0 %v2877
    %3220 = vmatprep.subr.bf16.mxu0 0
    %3221 = vmatpush1.bf16.msra.mxu0 %v2878
    %3222 = vmatprep.subr.bf16.mxu0 0
    %3223 = vmatpush1.bf16.msra.mxu0 %v2879
    %3224 = vmatprep.subr.bf16.mxu0 0
    %3225 = vmatpush1.bf16.msra.mxu0 %v2880
    %3226 = vmatprep.subr.bf16.mxu0 0
    %3227 = vmatpush1.bf16.msra.mxu0 %v2881
    %3228 = vmatprep.subr.bf16.mxu0 0
    %3229 = vmatpush1.bf16.msra.mxu0 %v2882
    %3230 = vmatprep.subr.bf16.mxu0 0
    %3231 = vmatpush1.bf16.msra.mxu0 %v2883
    %3232 = vmatprep.subr.bf16.mxu0 0
    %3233 = vmatpush1.bf16.msra.mxu0 %v2884
    %3234 = vmatprep.subr.bf16.mxu0 0
    %3235 = vmatpush1.bf16.msra.mxu0 %v2885
    %3236 = vmatprep.subr.bf16.mxu0 0
    %3237 = vmatpush1.bf16.msra.mxu0 %v2886
    %3238 = vmatprep.subr.bf16.mxu0 0
    %3239 = vmatpush1.bf16.msra.mxu0 %v2887
    %3240 = vmatprep.mubr.bf16.mxu0 %v77
    %3241 = vmatmul.mubr.bf16.gmra.mrb[0].mxu0 %v76
    %v3242 = vpop.f32.mrb[0].mxu0
    %v3243 = vadd.f32 %v3203, %v3242
    %v3244 = vpop.f32.mrb[0].mxu0
    %v3245 = vpop.f32.mrb[0].mxu0
    %v3246 = vpop.f32.mrb[0].mxu0
    %3247 = vdwg.mxu0
    %3248 = vmatprep.subr.bf16.mxu0 0
    %3249 = vmatpush1.bf16.msra.mxu0 %v2888
    %3250 = vmatprep.subr.bf16.mxu0 0
    %3251 = vmatpush1.bf16.msra.mxu0 %v2889
    %3252 = vmatprep.subr.bf16.mxu0 0
    %3253 = vmatpush1.bf16.msra.mxu0 %v2890
    %3254 = vmatprep.subr.bf16.mxu0 0
    %3255 = vmatpush1.bf16.msra.mxu0 %v2891
    %3256 = vmatprep.subr.bf16.mxu0 0
    %3257 = vmatpush1.bf16.msra.mxu0 %v2892
    %3258 = vmatprep.subr.bf16.mxu0 0
    %3259 = vmatpush1.bf16.msra.mxu0 %v2893
    %3260 = vmatprep.subr.bf16.mxu0 0
    %3261 = vmatpush1.bf16.msra.mxu0 %v2894
    %3262 = vmatprep.subr.bf16.mxu0 0
    %3263 = vmatpush1.bf16.msra.mxu0 %v2895
    %3264 = vmatprep.subr.bf16.mxu0 0
    %3265 = vmatpush1.bf16.msra.mxu0 %v2896
    %3266 = vmatprep.subr.bf16.mxu0 0
    %3267 = vmatpush1.bf16.msra.mxu0 %v2897
    %3268 = vmatprep.subr.bf16.mxu0 0
    %3269 = vmatpush1.bf16.msra.mxu0 %v2898
    %3270 = vmatprep.subr.bf16.mxu0 0
    %3271 = vmatpush1.bf16.msra.mxu0 %v2899
    %3272 = vmatprep.subr.bf16.mxu0 0
    %3273 = vmatpush1.bf16.msra.mxu0 %v2900
    %3274 = vmatprep.subr.bf16.mxu0 0
    %3275 = vmatpush1.bf16.msra.mxu0 %v2901
    %3276 = vmatprep.subr.bf16.mxu0 0
    %3277 = vmatpush1.bf16.msra.mxu0 %v2902
    %3278 = vmatprep.subr.bf16.mxu0 0
    %3279 = vmatpush1.bf16.msra.mxu0 %v2903
    %3280 = vmatprep.mubr.bf16.mxu0 %v79
    %3281 = vmatmul.mubr.bf16.gmra.mrb[0].mxu0 %v78
    %v3282 = vpop.f32.mrb[0].mxu0
    %v3283 = vadd.f32 %v3243, %v3282
    %v3284 = vpop.f32.mrb[0].mxu0
    %v3285 = vpop.f32.mrb[0].mxu0
    %v3286 = vpop.f32.mrb[0].mxu0
    %3287 = vdwg.mxu0
    %3288 = vmatprep.subr.bf16.mxu0 0
    %3289 = vmatpush1.bf16.msra.mxu0 %v2904
    %3290 = vmatprep.subr.bf16.mxu0 0
    %3291 = vmatpush1.bf16.msra.mxu0 %v2905
    %3292 = vmatprep.subr.bf16.mxu0 0
    %3293 = vmatpush1.bf16.msra.mxu0 %v2906
    %3294 = vmatprep.subr.bf16.mxu0 0
    %3295 = vmatpush1.bf16.msra.mxu0 %v2907
    %3296 = vmatprep.subr.bf16.mxu0 0
    %3297 = vmatpush1.bf16.msra.mxu0 %v2908
    %3298 = vmatprep.subr.bf16.mxu0 0
    %3299 = vmatpush1.bf16.msra.mxu0 %v2909
    %3300 = vmatprep.subr.bf16.mxu0 0
    %3301 = vmatpush1.bf16.msra.mxu0 %v2910
    %3302 = vmatprep.subr.bf16.mxu0 0
    %3303 = vmatpush1.bf16.msra.mxu0 %v2911
    %3304 = vmatprep.subr.bf16.mxu0 0
    %3305 = vmatpush1.bf16.msra.mxu0 %v2912
    %3306 = vmatprep.subr.bf16.mxu0 0
    %3307 = vmatpush1.bf16.msra.mxu0 %v2913
    %3308 = vmatprep.subr.bf16.mxu0 0
    %3309 = vmatpush1.bf16.msra.mxu0 %v2914
    %3310 = vmatprep.subr.bf16.mxu0 0
    %3311 = vmatpush1.bf16.msra.mxu0 %v2915
    %3312 = vmatprep.subr.bf16.mxu0 0
    %3313 = vmatpush1.bf16.msra.mxu0 %v2916
    %3314 = vmatprep.subr.bf16.mxu0 0
    %3315 = vmatpush1.bf16.msra.mxu0 %v2917
    %3316 = vmatprep.subr.bf16.mxu0 0
    %3317 = vmatpush1.bf16.msra.mxu0 %v2918
    %3318 = vmatprep.subr.bf16.mxu0 0
    %3319 = vmatpush1.bf16.msra.mxu0 %v2919
    %3320 = vmatprep.mubr.bf16.mxu0 %v81
    %3321 = vmatmul.mubr.bf16.gmra.mrb[0].mxu0 %v80
    %v3322 = vpop.f32.mrb[0].mxu0
    %v3323 = vadd.f32 %v3283, %v3322
    %v3324 = vpop.f32.mrb[0].mxu0
    %v3325 = vpop.f32.mrb[0].mxu0
    %v3326 = vpop.f32.mrb[0].mxu0
    %3327 = vdwg.mxu0
    %3328 = vmatprep.subr.bf16.mxu0 0
    %3329 = vmatpush1.bf16.msra.mxu0 %v2920
    %3330 = vmatprep.subr.bf16.mxu0 0
    %3331 = vmatpush1.bf16.msra.mxu0 %v2921
    %3332 = vmatprep.subr.bf16.mxu0 0
    %3333 = vmatpush1.bf16.msra.mxu0 %v2922
    %3334 = vmatprep.subr.bf16.mxu0 0
    %3335 = vmatpush1.bf16.msra.mxu0 %v2923
    %3336 = vmatprep.subr.bf16.mxu0 0
    %3337 = vmatpush1.bf16.msra.mxu0 %v2924
    %3338 = vmatprep.subr.bf16.mxu0 0
    %3339 = vmatpush1.bf16.msra.mxu0 %v2925
    %3340 = vmatprep.subr.bf16.mxu0 0
    %3341 = vmatpush1.bf16.msra.mxu0 %v2926
    %3342 = vmatprep.subr.bf16.mxu0 0
    %3343 = vmatpush1.bf16.msra.mxu0 %v2927
    %3344 = vmatprep.subr.bf16.mxu0 0
    %3345 = vmatpush1.bf16.msra.mxu0 %v2928
    %3346 = vmatprep.subr.bf16.mxu0 0
    %3347 = vmatpush1.bf16.msra.mxu0 %v2929
    %3348 = vmatprep.subr.bf16.mxu0 0
    %3349 = vmatpush1.bf16.msra.mxu0 %v2930
    %3350 = vmatprep.subr.bf16.mxu0 0
    %3351 = vmatpush1.bf16.msra.mxu0 %v2931
    %3352 = vmatprep.subr.bf16.mxu0 0
    %3353 = vmatpush1.bf16.msra.mxu0 %v2932
    %3354 = vmatprep.subr.bf16.mxu0 0
    %3355 = vmatpush1.bf16.msra.mxu0 %v2933
    %3356 = vmatprep.subr.bf16.mxu0 0
    %3357 = vmatpush1.bf16.msra.mxu0 %v2934
    %3358 = vmatprep.subr.bf16.mxu0 0
    %3359 = vmatpush1.bf16.msra.mxu0 %v2935
    %3360 = vmatprep.mubr.bf16.mxu0 %v83
    %3361 = vmatmul.mubr.bf16.gmra.mrb[0].mxu0 %v82
    %v3362 = vpop.f32.mrb[0].mxu0
    %v3363 = vadd.f32 %v3323, %v3362
    %v3364 = vpop.f32.mrb[0].mxu0
    %v3365 = vpop.f32.mrb[0].mxu0
    %v3366 = vpop.f32.mrb[0].mxu0
    %3367 = vdwg.mxu0
    %3368 = vmatprep.subr.bf16.mxu0 0
    %3369 = vmatpush1.bf16.msra.mxu0 %v2936
    %3370 = vmatprep.subr.bf16.mxu0 0
    %3371 = vmatpush1.bf16.msra.mxu0 %v2937
    %3372 = vmatprep.subr.bf16.mxu0 0
    %3373 = vmatpush1.bf16.msra.mxu0 %v2938
    %3374 = vmatprep.subr.bf16.mxu0 0
    %3375 = vmatpush1.bf16.msra.mxu0 %v2939
    %3376 = vmatprep.subr.bf16.mxu0 0
    %3377 = vmatpush1.bf16.msra.mxu0 %v2940
    %3378 = vmatprep.subr.bf16.mxu0 0
    %3379 = vmatpush1.bf16.msra.mxu0 %v2941
    %3380 = vmatprep.subr.bf16.mxu0 0
    %3381 = vmatpush1.bf16.msra.mxu0 %v2942
    %3382 = vmatprep.subr.bf16.mxu0 0
    %3383 = vmatpush1.bf16.msra.mxu0 %v2943
    %3384 = vmatprep.subr.bf16.mxu0 0
    %3385 = vmatpush1.bf16.msra.mxu0 %v2944
    %3386 = vmatprep.subr.bf16.mxu0 0
    %3387 = vmatpush1.bf16.msra.mxu0 %v2945
    %3388 = vmatprep.subr.bf16.mxu0 0
    %3389 = vmatpush1.bf16.msra.mxu0 %v2946
    %3390 = vmatprep.subr.bf16.mxu0 0
    %3391 = vmatpush1.bf16.msra.mxu0 %v2947
    %3392 = vmatprep.subr.bf16.mxu0 0
    %3393 = vmatpush1.bf16.msra.mxu0 %v2948
    %3394 = vmatprep.subr.bf16.mxu0 0
    %3395 = vmatpush1.bf16.msra.mxu0 %v2949
    %3396 = vmatprep.subr.bf16.mxu0 0
    %3397 = vmatpush1.bf16.msra.mxu0 %v2950
    %3398 = vmatprep.subr.bf16.mxu0 0
    %3399 = vmatpush1.bf16.msra.mxu0 %v2951
    %3400 = vmatprep.mubr.bf16.mxu0 %v85
    %3401 = vmatmul.mubr.bf16.gmra.mrb[0].mxu0 %v84
    %v3402 = vpop.f32.mrb[0].mxu0
    %v3403 = vadd.f32 %v3363, %v3402
    %v3404 = vpop.f32.mrb[0].mxu0
    %v3405 = vpop.f32.mrb[0].mxu0
    %v3406 = vpop.f32.mrb[0].mxu0
    %3407 = vdwg.mxu0
    %3408 = vmatprep.subr.bf16.mxu0 0
    %3409 = vmatpush1.bf16.msra.mxu0 %v2952
    %3410 = vmatprep.subr.bf16.mxu0 0
    %3411 = vmatpush1.bf16.msra.mxu0 %v2953
    %3412 = vmatprep.subr.bf16.mxu0 0
    %3413 = vmatpush1.bf16.msra.mxu0 %v2954
    %3414 = vmatprep.subr.bf16.mxu0 0
    %3415 = vmatpush1.bf16.msra.mxu0 %v2955
    %3416 = vmatprep.subr.bf16.mxu0 0
    %3417 = vmatpush1.bf16.msra.mxu0 %v2956
    %3418 = vmatprep.subr.bf16.mxu0 0
    %3419 = vmatpush1.bf16.msra.mxu0 %v2957
    %3420 = vmatprep.subr.bf16.mxu0 0
    %3421 = vmatpush1.bf16.msra.mxu0 %v2958
    %3422 = vmatprep.subr.bf16.mxu0 0
    %3423 = vmatpush1.bf16.msra.mxu0 %v2959
    %3424 = vmatprep.subr.bf16.mxu0 0
    %3425 = vmatpush1.bf16.msra.mxu0 %v2960
    %3426 = vmatprep.subr.bf16.mxu0 0
    %3427 = vmatpush1.bf16.msra.mxu0 %v2961
    %3428 = vmatprep.subr.bf16.mxu0 0
    %3429 = vmatpush1.bf16.msra.mxu0 %v2962
    %3430 = vmatprep.subr.bf16.mxu0 0
    %3431 = vmatpush1.bf16.msra.mxu0 %v2963
    %3432 = vmatprep.subr.bf16.mxu0 0
    %3433 = vmatpush1.bf16.msra.mxu0 %v2964
    %3434 = vmatprep.subr.bf16.mxu0 0
    %3435 = vmatpush1.bf16.msra.mxu0 %v2965
    %3436 = vmatprep.subr.bf16.mxu0 0
    %3437 = vmatpush1.bf16.msra.mxu0 %v2966
    %3438 = vmatprep.subr.bf16.mxu0 0
    %3439 = vmatpush1.bf16.msra.mxu0 %v2967
    %3440 = vmatprep.mubr.bf16.mxu0 %v87
    %3441 = vmatmul.mubr.bf16.gmra.mrb[0].mxu0 %v86
    %v3442 = vpop.f32.mrb[0].mxu0
    %v3443 = vadd.f32 %v3403, %v3442
    %v3444 = vpop.f32.mrb[0].mxu0
    %v3445 = vpop.f32.mrb[0].mxu0
    %v3446 = vpop.f32.mrb[0].mxu0
    %3447 = vdwg.mxu0
    %v3448 = vld [vmem:[#allocation2 + $0x1e00] sm:$0xff]
    %v3449 = vld [vmem:[#allocation2 + $0x1e08] sm:$0xff]
    %v3450 = vld [vmem:[#allocation2 + $0x1e10] sm:$0xff]
    %v3451 = vld [vmem:[#allocation2 + $0x1e18] sm:$0xff]
    %v3452 = vld [vmem:[#allocation2 + $0x1e20] sm:$0xff]
    %v3453 = vld [vmem:[#allocation2 + $0x1e28] sm:$0xff]
    %v3454 = vld [vmem:[#allocation2 + $0x1e30] sm:$0xff]
    %v3455 = vld [vmem:[#allocation2 + $0x1e38] sm:$0xff]
    %v3456 = vld [vmem:[#allocation2 + $0x1e40] sm:$0xff]
    %v3457 = vld [vmem:[#allocation2 + $0x1e48] sm:$0xff]
    %v3458 = vld [vmem:[#allocation2 + $0x1e50] sm:$0xff]
    %v3459 = vld [vmem:[#allocation2 + $0x1e58] sm:$0xff]
    %v3460 = vld [vmem:[#allocation2 + $0x1e60] sm:$0xff]
    %v3461 = vld [vmem:[#allocation2 + $0x1e68] sm:$0xff]
    %v3462 = vld [vmem:[#allocation2 + $0x1e70] sm:$0xff]
    %v3463 = vld [vmem:[#allocation2 + $0x1e78] sm:$0xff]
    %v3464 = vld [vmem:[#allocation2 + $0x1e80] sm:$0xff]
    %v3465 = vld [vmem:[#allocation2 + $0x1e88] sm:$0xff]
    %v3466 = vld [vmem:[#allocation2 + $0x1e90] sm:$0xff]
    %v3467 = vld [vmem:[#allocation2 + $0x1e98] sm:$0xff]
    %v3468 = vld [vmem:[#allocation2 + $0x1ea0] sm:$0xff]
    %v3469 = vld [vmem:[#allocation2 + $0x1ea8] sm:$0xff]
    %v3470 = vld [vmem:[#allocation2 + $0x1eb0] sm:$0xff]
    %v3471 = vld [vmem:[#allocation2 + $0x1eb8] sm:$0xff]
    %v3472 = vld [vmem:[#allocation2 + $0x1ec0] sm:$0xff]
    %v3473 = vld [vmem:[#allocation2 + $0x1ec8] sm:$0xff]
    %v3474 = vld [vmem:[#allocation2 + $0x1ed0] sm:$0xff]
    %v3475 = vld [vmem:[#allocation2 + $0x1ed8] sm:$0xff]
    %v3476 = vld [vmem:[#allocation2 + $0x1ee0] sm:$0xff]
    %v3477 = vld [vmem:[#allocation2 + $0x1ee8] sm:$0xff]
    %v3478 = vld [vmem:[#allocation2 + $0x1ef0] sm:$0xff]
    %v3479 = vld [vmem:[#allocation2 + $0x1ef8] sm:$0xff]
    %v3480 = vld [vmem:[#allocation2 + $0x1f00] sm:$0xff]
    %v3481 = vld [vmem:[#allocation2 + $0x1f08] sm:$0xff]
    %v3482 = vld [vmem:[#allocation2 + $0x1f10] sm:$0xff]
    %v3483 = vld [vmem:[#allocation2 + $0x1f18] sm:$0xff]
    %v3484 = vld [vmem:[#allocation2 + $0x1f20] sm:$0xff]
    %v3485 = vld [vmem:[#allocation2 + $0x1f28] sm:$0xff]
    %v3486 = vld [vmem:[#allocation2 + $0x1f30] sm:$0xff]
    %v3487 = vld [vmem:[#allocation2 + $0x1f38] sm:$0xff]
    %v3488 = vld [vmem:[#allocation2 + $0x1f40] sm:$0xff]
    %v3489 = vld [vmem:[#allocation2 + $0x1f48] sm:$0xff]
    %v3490 = vld [vmem:[#allocation2 + $0x1f50] sm:$0xff]
    %v3491 = vld [vmem:[#allocation2 + $0x1f58] sm:$0xff]
    %v3492 = vld [vmem:[#allocation2 + $0x1f60] sm:$0xff]
    %v3493 = vld [vmem:[#allocation2 + $0x1f68] sm:$0xff]
    %v3494 = vld [vmem:[#allocation2 + $0x1f70] sm:$0xff]
    %v3495 = vld [vmem:[#allocation2 + $0x1f78] sm:$0xff]
    %v3496 = vld [vmem:[#allocation2 + $0x1f80] sm:$0xff]
    %v3497 = vld [vmem:[#allocation2 + $0x1f88] sm:$0xff]
    %v3498 = vld [vmem:[#allocation2 + $0x1f90] sm:$0xff]
    %v3499 = vld [vmem:[#allocation2 + $0x1f98] sm:$0xff]
    %v3500 = vld [vmem:[#allocation2 + $0x1fa0] sm:$0xff]
    %v3501 = vld [vmem:[#allocation2 + $0x1fa8] sm:$0xff]
    %v3502 = vld [vmem:[#allocation2 + $0x1fb0] sm:$0xff]
    %v3503 = vld [vmem:[#allocation2 + $0x1fb8] sm:$0xff]
    %v3504 = vld [vmem:[#allocation2 + $0x1fc0] sm:$0xff]
    %v3505 = vld [vmem:[#allocation2 + $0x1fc8] sm:$0xff]
    %v3506 = vld [vmem:[#allocation2 + $0x1fd0] sm:$0xff]
    %v3507 = vld [vmem:[#allocation2 + $0x1fd8] sm:$0xff]
    %v3508 = vld [vmem:[#allocation2 + $0x1fe0] sm:$0xff]
    %v3509 = vld [vmem:[#allocation2 + $0x1fe8] sm:$0xff]
    %v3510 = vld [vmem:[#allocation2 + $0x1ff0] sm:$0xff]
    %v3511 = vld [vmem:[#allocation2 + $0x1ff8] sm:$0xff]
    %v3512 = vld [vmem:[#allocation2 + $0x2000] sm:$0xff]
    %v3513 = vld [vmem:[#allocation2 + $0x2008] sm:$0xff]
    %v3514 = vld [vmem:[#allocation2 + $0x2010] sm:$0xff]
    %v3515 = vld [vmem:[#allocation2 + $0x2018] sm:$0xff]
    %v3516 = vld [vmem:[#allocation2 + $0x2020] sm:$0xff]
    %v3517 = vld [vmem:[#allocation2 + $0x2028] sm:$0xff]
    %v3518 = vld [vmem:[#allocation2 + $0x2030] sm:$0xff]
    %v3519 = vld [vmem:[#allocation2 + $0x2038] sm:$0xff]
    %v3520 = vld [vmem:[#allocation2 + $0x2040] sm:$0xff]
    %v3521 = vld [vmem:[#allocation2 + $0x2048] sm:$0xff]
    %v3522 = vld [vmem:[#allocation2 + $0x2050] sm:$0xff]
    %v3523 = vld [vmem:[#allocation2 + $0x2058] sm:$0xff]
    %v3524 = vld [vmem:[#allocation2 + $0x2060] sm:$0xff]
    %v3525 = vld [vmem:[#allocation2 + $0x2068] sm:$0xff]
    %v3526 = vld [vmem:[#allocation2 + $0x2070] sm:$0xff]
    %v3527 = vld [vmem:[#allocation2 + $0x2078] sm:$0xff]
    %v3528 = vld [vmem:[#allocation2 + $0x2080] sm:$0xff]
    %v3529 = vld [vmem:[#allocation2 + $0x2088] sm:$0xff]
    %v3530 = vld [vmem:[#allocation2 + $0x2090] sm:$0xff]
    %v3531 = vld [vmem:[#allocation2 + $0x2098] sm:$0xff]
    %v3532 = vld [vmem:[#allocation2 + $0x20a0] sm:$0xff]
    %v3533 = vld [vmem:[#allocation2 + $0x20a8] sm:$0xff]
    %v3534 = vld [vmem:[#allocation2 + $0x20b0] sm:$0xff]
    %v3535 = vld [vmem:[#allocation2 + $0x20b8] sm:$0xff]
    %v3536 = vld [vmem:[#allocation2 + $0x20c0] sm:$0xff]
    %v3537 = vld [vmem:[#allocation2 + $0x20c8] sm:$0xff]
    %v3538 = vld [vmem:[#allocation2 + $0x20d0] sm:$0xff]
    %v3539 = vld [vmem:[#allocation2 + $0x20d8] sm:$0xff]
    %v3540 = vld [vmem:[#allocation2 + $0x20e0] sm:$0xff]
    %v3541 = vld [vmem:[#allocation2 + $0x20e8] sm:$0xff]
    %v3542 = vld [vmem:[#allocation2 + $0x20f0] sm:$0xff]
    %v3543 = vld [vmem:[#allocation2 + $0x20f8] sm:$0xff]
    %v3544 = vld [vmem:[#allocation2 + $0x2100] sm:$0xff]
    %v3545 = vld [vmem:[#allocation2 + $0x2108] sm:$0xff]
    %v3546 = vld [vmem:[#allocation2 + $0x2110] sm:$0xff]
    %v3547 = vld [vmem:[#allocation2 + $0x2118] sm:$0xff]
    %v3548 = vld [vmem:[#allocation2 + $0x2120] sm:$0xff]
    %v3549 = vld [vmem:[#allocation2 + $0x2128] sm:$0xff]
    %v3550 = vld [vmem:[#allocation2 + $0x2130] sm:$0xff]
    %v3551 = vld [vmem:[#allocation2 + $0x2138] sm:$0xff]
    %v3552 = vld [vmem:[#allocation2 + $0x2140] sm:$0xff]
    %v3553 = vld [vmem:[#allocation2 + $0x2148] sm:$0xff]
    %v3554 = vld [vmem:[#allocation2 + $0x2150] sm:$0xff]
    %v3555 = vld [vmem:[#allocation2 + $0x2158] sm:$0xff]
    %v3556 = vld [vmem:[#allocation2 + $0x2160] sm:$0xff]
    %v3557 = vld [vmem:[#allocation2 + $0x2168] sm:$0xff]
    %v3558 = vld [vmem:[#allocation2 + $0x2170] sm:$0xff]
    %v3559 = vld [vmem:[#allocation2 + $0x2178] sm:$0xff]
    %v3560 = vld [vmem:[#allocation2 + $0x2180] sm:$0xff]
    %v3561 = vld [vmem:[#allocation2 + $0x2188] sm:$0xff]
    %v3562 = vld [vmem:[#allocation2 + $0x2190] sm:$0xff]
    %v3563 = vld [vmem:[#allocation2 + $0x2198] sm:$0xff]
    %v3564 = vld [vmem:[#allocation2 + $0x21a0] sm:$0xff]
    %v3565 = vld [vmem:[#allocation2 + $0x21a8] sm:$0xff]
    %v3566 = vld [vmem:[#allocation2 + $0x21b0] sm:$0xff]
    %v3567 = vld [vmem:[#allocation2 + $0x21b8] sm:$0xff]
    %v3568 = vld [vmem:[#allocation2 + $0x21c0] sm:$0xff]
    %v3569 = vld [vmem:[#allocation2 + $0x21c8] sm:$0xff]
    %v3570 = vld [vmem:[#allocation2 + $0x21d0] sm:$0xff]
    %v3571 = vld [vmem:[#allocation2 + $0x21d8] sm:$0xff]
    %v3572 = vld [vmem:[#allocation2 + $0x21e0] sm:$0xff]
    %v3573 = vld [vmem:[#allocation2 + $0x21e8] sm:$0xff]
    %v3574 = vld [vmem:[#allocation2 + $0x21f0] sm:$0xff]
    %v3575 = vld [vmem:[#allocation2 + $0x21f8] sm:$0xff]
    %v3576 = vld [vmem:[#allocation2 + $0x2200] sm:$0xff]
    %v3577 = vld [vmem:[#allocation2 + $0x2208] sm:$0xff]
    %v3578 = vld [vmem:[#allocation2 + $0x2210] sm:$0xff]
    %v3579 = vld [vmem:[#allocation2 + $0x2218] sm:$0xff]
    %v3580 = vld [vmem:[#allocation2 + $0x2220] sm:$0xff]
    %v3581 = vld [vmem:[#allocation2 + $0x2228] sm:$0xff]
    %v3582 = vld [vmem:[#allocation2 + $0x2230] sm:$0xff]
    %v3583 = vld [vmem:[#allocation2 + $0x2238] sm:$0xff]
    %v3584 = vld [vmem:[#allocation2 + $0x2240] sm:$0xff]
    %v3585 = vld [vmem:[#allocation2 + $0x2248] sm:$0xff]
    %v3586 = vld [vmem:[#allocation2 + $0x2250] sm:$0xff]
    %v3587 = vld [vmem:[#allocation2 + $0x2258] sm:$0xff]
    %v3588 = vld [vmem:[#allocation2 + $0x2260] sm:$0xff]
    %v3589 = vld [vmem:[#allocation2 + $0x2268] sm:$0xff]
    %v3590 = vld [vmem:[#allocation2 + $0x2270] sm:$0xff]
    %v3591 = vld [vmem:[#allocation2 + $0x2278] sm:$0xff]
    %v3592 = vld [vmem:[#allocation2 + $0x2280] sm:$0xff]
    %v3593 = vld [vmem:[#allocation2 + $0x2288] sm:$0xff]
    %v3594 = vld [vmem:[#allocation2 + $0x2290] sm:$0xff]
    %v3595 = vld [vmem:[#allocation2 + $0x2298] sm:$0xff]
    %v3596 = vld [vmem:[#allocation2 + $0x22a0] sm:$0xff]
    %v3597 = vld [vmem:[#allocation2 + $0x22a8] sm:$0xff]
    %v3598 = vld [vmem:[#allocation2 + $0x22b0] sm:$0xff]
    %v3599 = vld [vmem:[#allocation2 + $0x22b8] sm:$0xff]
    %v3600 = vld [vmem:[#allocation2 + $0x22c0] sm:$0xff]
    %v3601 = vld [vmem:[#allocation2 + $0x22c8] sm:$0xff]
    %v3602 = vld [vmem:[#allocation2 + $0x22d0] sm:$0xff]
    %v3603 = vld [vmem:[#allocation2 + $0x22d8] sm:$0xff]
    %v3604 = vld [vmem:[#allocation2 + $0x22e0] sm:$0xff]
    %v3605 = vld [vmem:[#allocation2 + $0x22e8] sm:$0xff]
    %v3606 = vld [vmem:[#allocation2 + $0x22f0] sm:$0xff]
    %v3607 = vld [vmem:[#allocation2 + $0x22f8] sm:$0xff]
    %v3608 = vld [vmem:[#allocation2 + $0x2300] sm:$0xff]
    %v3609 = vld [vmem:[#allocation2 + $0x2308] sm:$0xff]
    %v3610 = vld [vmem:[#allocation2 + $0x2310] sm:$0xff]
    %v3611 = vld [vmem:[#allocation2 + $0x2318] sm:$0xff]
    %v3612 = vld [vmem:[#allocation2 + $0x2320] sm:$0xff]
    %v3613 = vld [vmem:[#allocation2 + $0x2328] sm:$0xff]
    %v3614 = vld [vmem:[#allocation2 + $0x2330] sm:$0xff]
    %v3615 = vld [vmem:[#allocation2 + $0x2338] sm:$0xff]
    %v3616 = vld [vmem:[#allocation2 + $0x2340] sm:$0xff]
    %v3617 = vld [vmem:[#allocation2 + $0x2348] sm:$0xff]
    %v3618 = vld [vmem:[#allocation2 + $0x2350] sm:$0xff]
    %v3619 = vld [vmem:[#allocation2 + $0x2358] sm:$0xff]
    %v3620 = vld [vmem:[#allocation2 + $0x2360] sm:$0xff]
    %v3621 = vld [vmem:[#allocation2 + $0x2368] sm:$0xff]
    %v3622 = vld [vmem:[#allocation2 + $0x2370] sm:$0xff]
    %v3623 = vld [vmem:[#allocation2 + $0x2378] sm:$0xff]
    %v3624 = vld [vmem:[#allocation2 + $0x2380] sm:$0xff]
    %v3625 = vld [vmem:[#allocation2 + $0x2388] sm:$0xff]
    %v3626 = vld [vmem:[#allocation2 + $0x2390] sm:$0xff]
    %v3627 = vld [vmem:[#allocation2 + $0x2398] sm:$0xff]
    %v3628 = vld [vmem:[#allocation2 + $0x23a0] sm:$0xff]
    %v3629 = vld [vmem:[#allocation2 + $0x23a8] sm:$0xff]
    %v3630 = vld [vmem:[#allocation2 + $0x23b0] sm:$0xff]
    %v3631 = vld [vmem:[#allocation2 + $0x23b8] sm:$0xff]
    %v3632 = vld [vmem:[#allocation2 + $0x23c0] sm:$0xff]
    %v3633 = vld [vmem:[#allocation2 + $0x23c8] sm:$0xff]
    %v3634 = vld [vmem:[#allocation2 + $0x23d0] sm:$0xff]
    %v3635 = vld [vmem:[#allocation2 + $0x23d8] sm:$0xff]
    %v3636 = vld [vmem:[#allocation2 + $0x23e0] sm:$0xff]
    %v3637 = vld [vmem:[#allocation2 + $0x23e8] sm:$0xff]
    %v3638 = vld [vmem:[#allocation2 + $0x23f0] sm:$0xff]
    %v3639 = vld [vmem:[#allocation2 + $0x23f8] sm:$0xff]
    %3640 = vmatprep.subr.bf16.mxu0 0
    %3641 = vmatpush1.bf16.msra.mxu0 %v3448
    %3642 = vmatprep.subr.bf16.mxu0 0
    %3643 = vmatpush1.bf16.msra.mxu0 %v3449
    %3644 = vmatprep.subr.bf16.mxu0 0
    %3645 = vmatpush1.bf16.msra.mxu0 %v3450
    %3646 = vmatprep.subr.bf16.mxu0 0
    %3647 = vmatpush1.bf16.msra.mxu0 %v3451
    %3648 = vmatprep.subr.bf16.mxu0 0
    %3649 = vmatpush1.bf16.msra.mxu0 %v3452
    %3650 = vmatprep.subr.bf16.mxu0 0
    %3651 = vmatpush1.bf16.msra.mxu0 %v3453
    %3652 = vmatprep.subr.bf16.mxu0 0
    %3653 = vmatpush1.bf16.msra.mxu0 %v3454
    %3654 = vmatprep.subr.bf16.mxu0 0
    %3655 = vmatpush1.bf16.msra.mxu0 %v3455
    %3656 = vmatprep.subr.bf16.mxu0 0
    %3657 = vmatpush1.bf16.msra.mxu0 %v3456
    %3658 = vmatprep.subr.bf16.mxu0 0
    %3659 = vmatpush1.bf16.msra.mxu0 %v3457
    %3660 = vmatprep.subr.bf16.mxu0 0
    %3661 = vmatpush1.bf16.msra.mxu0 %v3458
    %3662 = vmatprep.subr.bf16.mxu0 0
    %3663 = vmatpush1.bf16.msra.mxu0 %v3459
    %3664 = vmatprep.subr.bf16.mxu0 0
    %3665 = vmatpush1.bf16.msra.mxu0 %v3460
    %3666 = vmatprep.subr.bf16.mxu0 0
    %3667 = vmatpush1.bf16.msra.mxu0 %v3461
    %3668 = vmatprep.subr.bf16.mxu0 0
    %3669 = vmatpush1.bf16.msra.mxu0 %v3462
    %3670 = vmatprep.subr.bf16.mxu0 0
    %3671 = vmatpush1.bf16.msra.mxu0 %v3463
    %3672 = vmatprep.mubr.bf16.mxu0 %v65
    %3673 = vmatmul.mubr.bf16.gmra.mrb[0].mxu0 %v64
    %v3674 = vpop.f32.mrb[0].mxu0
    %v3675 = vadd.f32 0.0, %v3674
    %v3676 = vpop.f32.mrb[0].mxu0
    %v3677 = vpop.f32.mrb[0].mxu0
    %v3678 = vpop.f32.mrb[0].mxu0
    %3679 = vdwg.mxu0
    %3680 = vmatprep.subr.bf16.mxu0 0
    %3681 = vmatpush1.bf16.msra.mxu0 %v3464
    %3682 = vmatprep.subr.bf16.mxu0 0
    %3683 = vmatpush1.bf16.msra.mxu0 %v3465
    %3684 = vmatprep.subr.bf16.mxu0 0
    %3685 = vmatpush1.bf16.msra.mxu0 %v3466
    %3686 = vmatprep.subr.bf16.mxu0 0
    %3687 = vmatpush1.bf16.msra.mxu0 %v3467
    %3688 = vmatprep.subr.bf16.mxu0 0
    %3689 = vmatpush1.bf16.msra.mxu0 %v3468
    %3690 = vmatprep.subr.bf16.mxu0 0
    %3691 = vmatpush1.bf16.msra.mxu0 %v3469
    %3692 = vmatprep.subr.bf16.mxu0 0
    %3693 = vmatpush1.bf16.msra.mxu0 %v3470
    %3694 = vmatprep.subr.bf16.mxu0 0
    %3695 = vmatpush1.bf16.msra.mxu0 %v3471
    %3696 = vmatprep.subr.bf16.mxu0 0
    %3697 = vmatpush1.bf16.msra.mxu0 %v3472
    %3698 = vmatprep.subr.bf16.mxu0 0
    %3699 = vmatpush1.bf16.msra.mxu0 %v3473
    %3700 = vmatprep.subr.bf16.mxu0 0
    %3701 = vmatpush1.bf16.msra.mxu0 %v3474
    %3702 = vmatprep.subr.bf16.mxu0 0
    %3703 = vmatpush1.bf16.msra.mxu0 %v3475
    %3704 = vmatprep.subr.bf16.mxu0 0
    %3705 = vmatpush1.bf16.msra.mxu0 %v3476
    %3706 = vmatprep.subr.bf16.mxu0 0
    %3707 = vmatpush1.bf16.msra.mxu0 %v3477
    %3708 = vmatprep.subr.bf16.mxu0 0
    %3709 = vmatpush1.bf16.msra.mxu0 %v3478
    %3710 = vmatprep.subr.bf16.mxu0 0
    %3711 = vmatpush1.bf16.msra.mxu0 %v3479
    %3712 = vmatprep.mubr.bf16.mxu0 %v67
    %3713 = vmatmul.mubr.bf16.gmra.mrb[0].mxu0 %v66
    %v3714 = vpop.f32.mrb[0].mxu0
    %v3715 = vadd.f32 %v3675, %v3714
    %v3716 = vpop.f32.mrb[0].mxu0
    %v3717 = vpop.f32.mrb[0].mxu0
    %v3718 = vpop.f32.mrb[0].mxu0
    %3719 = vdwg.mxu0
    %3720 = vmatprep.subr.bf16.mxu0 0
    %3721 = vmatpush1.bf16.msra.mxu0 %v3480
    %3722 = vmatprep.subr.bf16.mxu0 0
    %3723 = vmatpush1.bf16.msra.mxu0 %v3481
    %3724 = vmatprep.subr.bf16.mxu0 0
    %3725 = vmatpush1.bf16.msra.mxu0 %v3482
    %3726 = vmatprep.subr.bf16.mxu0 0
    %3727 = vmatpush1.bf16.msra.mxu0 %v3483
    %3728 = vmatprep.subr.bf16.mxu0 0
    %3729 = vmatpush1.bf16.msra.mxu0 %v3484
    %3730 = vmatprep.subr.bf16.mxu0 0
    %3731 = vmatpush1.bf16.msra.mxu0 %v3485
    %3732 = vmatprep.subr.bf16.mxu0 0
    %3733 = vmatpush1.bf16.msra.mxu0 %v3486
    %3734 = vmatprep.subr.bf16.mxu0 0
    %3735 = vmatpush1.bf16.msra.mxu0 %v3487
    %3736 = vmatprep.subr.bf16.mxu0 0
    %3737 = vmatpush1.bf16.msra.mxu0 %v3488
    %3738 = vmatprep.subr.bf16.mxu0 0
    %3739 = vmatpush1.bf16.msra.mxu0 %v3489
    %3740 = vmatprep.subr.bf16.mxu0 0
    %3741 = vmatpush1.bf16.msra.mxu0 %v3490
    %3742 = vmatprep.subr.bf16.mxu0 0
    %3743 = vmatpush1.bf16.msra.mxu0 %v3491
    %3744 = vmatprep.subr.bf16.mxu0 0
    %3745 = vmatpush1.bf16.msra.mxu0 %v3492
    %3746 = vmatprep.subr.bf16.mxu0 0
    %3747 = vmatpush1.bf16.msra.mxu0 %v3493
    %3748 = vmatprep.subr.bf16.mxu0 0
    %3749 = vmatpush1.bf16.msra.mxu0 %v3494
    %3750 = vmatprep.subr.bf16.mxu0 0
    %3751 = vmatpush1.bf16.msra.mxu0 %v3495
    %3752 = vmatprep.mubr.bf16.mxu0 %v69
    %3753 = vmatmul.mubr.bf16.gmra.mrb[0].mxu0 %v68
    %v3754 = vpop.f32.mrb[0].mxu0
    %v3755 = vadd.f32 %v3715, %v3754
    %v3756 = vpop.f32.mrb[0].mxu0
    %v3757 = vpop.f32.mrb[0].mxu0
    %v3758 = vpop.f32.mrb[0].mxu0
    %3759 = vdwg.mxu0
    %3760 = vmatprep.subr.bf16.mxu0 0
    %3761 = vmatpush1.bf16.msra.mxu0 %v3496
    %3762 = vmatprep.subr.bf16.mxu0 0
    %3763 = vmatpush1.bf16.msra.mxu0 %v3497
    %3764 = vmatprep.subr.bf16.mxu0 0
    %3765 = vmatpush1.bf16.msra.mxu0 %v3498
    %3766 = vmatprep.subr.bf16.mxu0 0
    %3767 = vmatpush1.bf16.msra.mxu0 %v3499
    %3768 = vmatprep.subr.bf16.mxu0 0
    %3769 = vmatpush1.bf16.msra.mxu0 %v3500
    %3770 = vmatprep.subr.bf16.mxu0 0
    %3771 = vmatpush1.bf16.msra.mxu0 %v3501
    %3772 = vmatprep.subr.bf16.mxu0 0
    %3773 = vmatpush1.bf16.msra.mxu0 %v3502
    %3774 = vmatprep.subr.bf16.mxu0 0
    %3775 = vmatpush1.bf16.msra.mxu0 %v3503
    %3776 = vmatprep.subr.bf16.mxu0 0
    %3777 = vmatpush1.bf16.msra.mxu0 %v3504
    %3778 = vmatprep.subr.bf16.mxu0 0
    %3779 = vmatpush1.bf16.msra.mxu0 %v3505
    %3780 = vmatprep.subr.bf16.mxu0 0
    %3781 = vmatpush1.bf16.msra.mxu0 %v3506
    %3782 = vmatprep.subr.bf16.mxu0 0
    %3783 = vmatpush1.bf16.msra.mxu0 %v3507
    %3784 = vmatprep.subr.bf16.mxu0 0
    %3785 = vmatpush1.bf16.msra.mxu0 %v3508
    %3786 = vmatprep.subr.bf16.mxu0 0
    %3787 = vmatpush1.bf16.msra.mxu0 %v3509
    %3788 = vmatprep.subr.bf16.mxu0 0
    %3789 = vmatpush1.bf16.msra.mxu0 %v3510
    %3790 = vmatprep.subr.bf16.mxu0 0
    %3791 = vmatpush1.bf16.msra.mxu0 %v3511
    %3792 = vmatprep.mubr.bf16.mxu0 %v71
    %3793 = vmatmul.mubr.bf16.gmra.mrb[0].mxu0 %v70
    %v3794 = vpop.f32.mrb[0].mxu0
    %v3795 = vadd.f32 %v3755, %v3794
    %v3796 = vpop.f32.mrb[0].mxu0
    %v3797 = vpop.f32.mrb[0].mxu0
    %v3798 = vpop.f32.mrb[0].mxu0
    %3799 = vdwg.mxu0
    %3800 = vmatprep.subr.bf16.mxu0 0
    %3801 = vmatpush1.bf16.msra.mxu0 %v3512
    %3802 = vmatprep.subr.bf16.mxu0 0
    %3803 = vmatpush1.bf16.msra.mxu0 %v3513
    %3804 = vmatprep.subr.bf16.mxu0 0
    %3805 = vmatpush1.bf16.msra.mxu0 %v3514
    %3806 = vmatprep.subr.bf16.mxu0 0
    %3807 = vmatpush1.bf16.msra.mxu0 %v3515
    %3808 = vmatprep.subr.bf16.mxu0 0
    %3809 = vmatpush1.bf16.msra.mxu0 %v3516
    %3810 = vmatprep.subr.bf16.mxu0 0
    %3811 = vmatpush1.bf16.msra.mxu0 %v3517
    %3812 = vmatprep.subr.bf16.mxu0 0
    %3813 = vmatpush1.bf16.msra.mxu0 %v3518
    %3814 = vmatprep.subr.bf16.mxu0 0
    %3815 = vmatpush1.bf16.msra.mxu0 %v3519
    %3816 = vmatprep.subr.bf16.mxu0 0
    %3817 = vmatpush1.bf16.msra.mxu0 %v3520
    %3818 = vmatprep.subr.bf16.mxu0 0
    %3819 = vmatpush1.bf16.msra.mxu0 %v3521
    %3820 = vmatprep.subr.bf16.mxu0 0
    %3821 = vmatpush1.bf16.msra.mxu0 %v3522
    %3822 = vmatprep.subr.bf16.mxu0 0
    %3823 = vmatpush1.bf16.msra.mxu0 %v3523
    %3824 = vmatprep.subr.bf16.mxu0 0
    %3825 = vmatpush1.bf16.msra.mxu0 %v3524
    %3826 = vmatprep.subr.bf16.mxu0 0
    %3827 = vmatpush1.bf16.msra.mxu0 %v3525
    %3828 = vmatprep.subr.bf16.mxu0 0
    %3829 = vmatpush1.bf16.msra.mxu0 %v3526
    %3830 = vmatprep.subr.bf16.mxu0 0
    %3831 = vmatpush1.bf16.msra.mxu0 %v3527
    %3832 = vmatprep.mubr.bf16.mxu0 %v73
    %3833 = vmatmul.mubr.bf16.gmra.mrb[0].mxu0 %v72
    %v3834 = vpop.f32.mrb[0].mxu0
    %v3835 = vadd.f32 %v3795, %v3834
    %v3836 = vpop.f32.mrb[0].mxu0
    %v3837 = vpop.f32.mrb[0].mxu0
    %v3838 = vpop.f32.mrb[0].mxu0
    %3839 = vdwg.mxu0
    %3840 = vmatprep.subr.bf16.mxu0 0
    %3841 = vmatpush1.bf16.msra.mxu0 %v3528
    %3842 = vmatprep.subr.bf16.mxu0 0
    %3843 = vmatpush1.bf16.msra.mxu0 %v3529
    %3844 = vmatprep.subr.bf16.mxu0 0
    %3845 = vmatpush1.bf16.msra.mxu0 %v3530
    %3846 = vmatprep.subr.bf16.mxu0 0
    %3847 = vmatpush1.bf16.msra.mxu0 %v3531
    %3848 = vmatprep.subr.bf16.mxu0 0
    %3849 = vmatpush1.bf16.msra.mxu0 %v3532
    %3850 = vmatprep.subr.bf16.mxu0 0
    %3851 = vmatpush1.bf16.msra.mxu0 %v3533
    %3852 = vmatprep.subr.bf16.mxu0 0
    %3853 = vmatpush1.bf16.msra.mxu0 %v3534
    %3854 = vmatprep.subr.bf16.mxu0 0
    %3855 = vmatpush1.bf16.msra.mxu0 %v3535
    %3856 = vmatprep.subr.bf16.mxu0 0
    %3857 = vmatpush1.bf16.msra.mxu0 %v3536
    %3858 = vmatprep.subr.bf16.mxu0 0
    %3859 = vmatpush1.bf16.msra.mxu0 %v3537
    %3860 = vmatprep.subr.bf16.mxu0 0
    %3861 = vmatpush1.bf16.msra.mxu0 %v3538
    %3862 = vmatprep.subr.bf16.mxu0 0
    %3863 = vmatpush1.bf16.msra.mxu0 %v3539
    %3864 = vmatprep.subr.bf16.mxu0 0
    %3865 = vmatpush1.bf16.msra.mxu0 %v3540
    %3866 = vmatprep.subr.bf16.mxu0 0
    %3867 = vmatpush1.bf16.msra.mxu0 %v3541
    %3868 = vmatprep.subr.bf16.mxu0 0
    %3869 = vmatpush1.bf16.msra.mxu0 %v3542
    %3870 = vmatprep.subr.bf16.mxu0 0
    %3871 = vmatpush1.bf16.msra.mxu0 %v3543
    %3872 = vmatprep.mubr.bf16.mxu0 %v75
    %3873 = vmatmul.mubr.bf16.gmra.mrb[0].mxu0 %v74
    %v3874 = vpop.f32.mrb[0].mxu0
    %v3875 = vadd.f32 %v3835, %v3874
    %v3876 = vpop.f32.mrb[0].mxu0
    %v3877 = vpop.f32.mrb[0].mxu0
    %v3878 = vpop.f32.mrb[0].mxu0
    %3879 = vdwg.mxu0
    %3880 = vmatprep.subr.bf16.mxu0 0
    %3881 = vmatpush1.bf16.msra.mxu0 %v3544
    %3882 = vmatprep.subr.bf16.mxu0 0
    %3883 = vmatpush1.bf16.msra.mxu0 %v3545
    %3884 = vmatprep.subr.bf16.mxu0 0
    %3885 = vmatpush1.bf16.msra.mxu0 %v3546
    %3886 = vmatprep.subr.bf16.mxu0 0
    %3887 = vmatpush1.bf16.msra.mxu0 %v3547
    %3888 = vmatprep.subr.bf16.mxu0 0
    %3889 = vmatpush1.bf16.msra.mxu0 %v3548
    %3890 = vmatprep.subr.bf16.mxu0 0
    %3891 = vmatpush1.bf16.msra.mxu0 %v3549
    %3892 = vmatprep.subr.bf16.mxu0 0
    %3893 = vmatpush1.bf16.msra.mxu0 %v3550
    %3894 = vmatprep.subr.bf16.mxu0 0
    %3895 = vmatpush1.bf16.msra.mxu0 %v3551
    %3896 = vmatprep.subr.bf16.mxu0 0
    %3897 = vmatpush1.bf16.msra.mxu0 %v3552
    %3898 = vmatprep.subr.bf16.mxu0 0
    %3899 = vmatpush1.bf16.msra.mxu0 %v3553
    %3900 = vmatprep.subr.bf16.mxu0 0
    %3901 = vmatpush1.bf16.msra.mxu0 %v3554
    %3902 = vmatprep.subr.bf16.mxu0 0
    %3903 = vmatpush1.bf16.msra.mxu0 %v3555
    %3904 = vmatprep.subr.bf16.mxu0 0
    %3905 = vmatpush1.bf16.msra.mxu0 %v3556
    %3906 = vmatprep.subr.bf16.mxu0 0
    %3907 = vmatpush1.bf16.msra.mxu0 %v3557
    %3908 = vmatprep.subr.bf16.mxu0 0
    %3909 = vmatpush1.bf16.msra.mxu0 %v3558
    %3910 = vmatprep.subr.bf16.mxu0 0
    %3911 = vmatpush1.bf16.msra.mxu0 %v3559
    %3912 = vmatprep.mubr.bf16.mxu0 %v77
    %3913 = vmatmul.mubr.bf16.gmra.mrb[0].mxu0 %v76
    %v3914 = vpop.f32.mrb[0].mxu0
    %v3915 = vadd.f32 %v3875, %v3914
    %v3916 = vpop.f32.mrb[0].mxu0
    %v3917 = vpop.f32.mrb[0].mxu0
    %v3918 = vpop.f32.mrb[0].mxu0
    %3919 = vdwg.mxu0
    %3920 = vmatprep.subr.bf16.mxu0 0
    %3921 = vmatpush1.bf16.msra.mxu0 %v3560
    %3922 = vmatprep.subr.bf16.mxu0 0
    %3923 = vmatpush1.bf16.msra.mxu0 %v3561
    %3924 = vmatprep.subr.bf16.mxu0 0
    %3925 = vmatpush1.bf16.msra.mxu0 %v3562
    %3926 = vmatprep.subr.bf16.mxu0 0
    %3927 = vmatpush1.bf16.msra.mxu0 %v3563
    %3928 = vmatprep.subr.bf16.mxu0 0
    %3929 = vmatpush1.bf16.msra.mxu0 %v3564
    %3930 = vmatprep.subr.bf16.mxu0 0
    %3931 = vmatpush1.bf16.msra.mxu0 %v3565
    %3932 = vmatprep.subr.bf16.mxu0 0
    %3933 = vmatpush1.bf16.msra.mxu0 %v3566
    %3934 = vmatprep.subr.bf16.mxu0 0
    %3935 = vmatpush1.bf16.msra.mxu0 %v3567
    %3936 = vmatprep.subr.bf16.mxu0 0
    %3937 = vmatpush1.bf16.msra.mxu0 %v3568
    %3938 = vmatprep.subr.bf16.mxu0 0
    %3939 = vmatpush1.bf16.msra.mxu0 %v3569
    %3940 = vmatprep.subr.bf16.mxu0 0
    %3941 = vmatpush1.bf16.msra.mxu0 %v3570
    %3942 = vmatprep.subr.bf16.mxu0 0
    %3943 = vmatpush1.bf16.msra.mxu0 %v3571
    %3944 = vmatprep.subr.bf16.mxu0 0
    %3945 = vmatpush1.bf16.msra.mxu0 %v3572
    %3946 = vmatprep.subr.bf16.mxu0 0
    %3947 = vmatpush1.bf16.msra.mxu0 %v3573
    %3948 = vmatprep.subr.bf16.mxu0 0
    %3949 = vmatpush1.bf16.msra.mxu0 %v3574
    %3950 = vmatprep.subr.bf16.mxu0 0
    %3951 = vmatpush1.bf16.msra.mxu0 %v3575
    %3952 = vmatprep.mubr.bf16.mxu0 %v79
    %3953 = vmatmul.mubr.bf16.gmra.mrb[0].mxu0 %v78
    %v3954 = vpop.f32.mrb[0].mxu0
    %v3955 = vadd.f32 %v3915, %v3954
    %v3956 = vpop.f32.mrb[0].mxu0
    %v3957 = vpop.f32.mrb[0].mxu0
    %v3958 = vpop.f32.mrb[0].mxu0
    %3959 = vdwg.mxu0
    %3960 = vmatprep.subr.bf16.mxu0 0
    %3961 = vmatpush1.bf16.msra.mxu0 %v3576
    %3962 = vmatprep.subr.bf16.mxu0 0
    %3963 = vmatpush1.bf16.msra.mxu0 %v3577
    %3964 = vmatprep.subr.bf16.mxu0 0
    %3965 = vmatpush1.bf16.msra.mxu0 %v3578
    %3966 = vmatprep.subr.bf16.mxu0 0
    %3967 = vmatpush1.bf16.msra.mxu0 %v3579
    %3968 = vmatprep.subr.bf16.mxu0 0
    %3969 = vmatpush1.bf16.msra.mxu0 %v3580
    %3970 = vmatprep.subr.bf16.mxu0 0
    %3971 = vmatpush1.bf16.msra.mxu0 %v3581
    %3972 = vmatprep.subr.bf16.mxu0 0
    %3973 = vmatpush1.bf16.msra.mxu0 %v3582
    %3974 = vmatprep.subr.bf16.mxu0 0
    %3975 = vmatpush1.bf16.msra.mxu0 %v3583
    %3976 = vmatprep.subr.bf16.mxu0 0
    %3977 = vmatpush1.bf16.msra.mxu0 %v3584
    %3978 = vmatprep.subr.bf16.mxu0 0
    %3979 = vmatpush1.bf16.msra.mxu0 %v3585
    %3980 = vmatprep.subr.bf16.mxu0 0
    %3981 = vmatpush1.bf16.msra.mxu0 %v3586
    %3982 = vmatprep.subr.bf16.mxu0 0
    %3983 = vmatpush1.bf16.msra.mxu0 %v3587
    %3984 = vmatprep.subr.bf16.mxu0 0
    %3985 = vmatpush1.bf16.msra.mxu0 %v3588
    %3986 = vmatprep.subr.bf16.mxu0 0
    %3987 = vmatpush1.bf16.msra.mxu0 %v3589
    %3988 = vmatprep.subr.bf16.mxu0 0
    %3989 = vmatpush1.bf16.msra.mxu0 %v3590
    %3990 = vmatprep.subr.bf16.mxu0 0
    %3991 = vmatpush1.bf16.msra.mxu0 %v3591
    %3992 = vmatprep.mubr.bf16.mxu0 %v81
    %3993 = vmatmul.mubr.bf16.gmra.mrb[0].mxu0 %v80
    %v3994 = vpop.f32.mrb[0].mxu0
    %v3995 = vadd.f32 %v3955, %v3994
    %v3996 = vpop.f32.mrb[0].mxu0
    %v3997 = vpop.f32.mrb[0].mxu0
    %v3998 = vpop.f32.mrb[0].mxu0
    %3999 = vdwg.mxu0
    %4000 = vmatprep.subr.bf16.mxu0 0
    %4001 = vmatpush1.bf16.msra.mxu0 %v3592
    %4002 = vmatprep.subr.bf16.mxu0 0
    %4003 = vmatpush1.bf16.msra.mxu0 %v3593
    %4004 = vmatprep.subr.bf16.mxu0 0
    %4005 = vmatpush1.bf16.msra.mxu0 %v3594
    %4006 = vmatprep.subr.bf16.mxu0 0
    %4007 = vmatpush1.bf16.msra.mxu0 %v3595
    %4008 = vmatprep.subr.bf16.mxu0 0
    %4009 = vmatpush1.bf16.msra.mxu0 %v3596
    %4010 = vmatprep.subr.bf16.mxu0 0
    %4011 = vmatpush1.bf16.msra.mxu0 %v3597
    %4012 = vmatprep.subr.bf16.mxu0 0
    %4013 = vmatpush1.bf16.msra.mxu0 %v3598
    %4014 = vmatprep.subr.bf16.mxu0 0
    %4015 = vmatpush1.bf16.msra.mxu0 %v3599
    %4016 = vmatprep.subr.bf16.mxu0 0
    %4017 = vmatpush1.bf16.msra.mxu0 %v3600
    %4018 = vmatprep.subr.bf16.mxu0 0
    %4019 = vmatpush1.bf16.msra.mxu0 %v3601
    %4020 = vmatprep.subr.bf16.mxu0 0
    %4021 = vmatpush1.bf16.msra.mxu0 %v3602
    %4022 = vmatprep.subr.bf16.mxu0 0
    %4023 = vmatpush1.bf16.msra.mxu0 %v3603
    %4024 = vmatprep.subr.bf16.mxu0 0
    %4025 = vmatpush1.bf16.msra.mxu0 %v3604
    %4026 = vmatprep.subr.bf16.mxu0 0
    %4027 = vmatpush1.bf16.msra.mxu0 %v3605
    %4028 = vmatprep.subr.bf16.mxu0 0
    %4029 = vmatpush1.bf16.msra.mxu0 %v3606
    %4030 = vmatprep.subr.bf16.mxu0 0
    %4031 = vmatpush1.bf16.msra.mxu0 %v3607
    %4032 = vmatprep.mubr.bf16.mxu0 %v83
    %4033 = vmatmul.mubr.bf16.gmra.mrb[0].mxu0 %v82
    %v4034 = vpop.f32.mrb[0].mxu0
    %v4035 = vadd.f32 %v3995, %v4034
    %v4036 = vpop.f32.mrb[0].mxu0
    %v4037 = vpop.f32.mrb[0].mxu0
    %v4038 = vpop.f32.mrb[0].mxu0
    %4039 = vdwg.mxu0
    %4040 = vmatprep.subr.bf16.mxu0 0
    %4041 = vmatpush1.bf16.msra.mxu0 %v3608
    %4042 = vmatprep.subr.bf16.mxu0 0
    %4043 = vmatpush1.bf16.msra.mxu0 %v3609
    %4044 = vmatprep.subr.bf16.mxu0 0
    %4045 = vmatpush1.bf16.msra.mxu0 %v3610
    %4046 = vmatprep.subr.bf16.mxu0 0
    %4047 = vmatpush1.bf16.msra.mxu0 %v3611
    %4048 = vmatprep.subr.bf16.mxu0 0
    %4049 = vmatpush1.bf16.msra.mxu0 %v3612
    %4050 = vmatprep.subr.bf16.mxu0 0
    %4051 = vmatpush1.bf16.msra.mxu0 %v3613
    %4052 = vmatprep.subr.bf16.mxu0 0
    %4053 = vmatpush1.bf16.msra.mxu0 %v3614
    %4054 = vmatprep.subr.bf16.mxu0 0
    %4055 = vmatpush1.bf16.msra.mxu0 %v3615
    %4056 = vmatprep.subr.bf16.mxu0 0
    %4057 = vmatpush1.bf16.msra.mxu0 %v3616
    %4058 = vmatprep.subr.bf16.mxu0 0
    %4059 = vmatpush1.bf16.msra.mxu0 %v3617
    %4060 = vmatprep.subr.bf16.mxu0 0
    %4061 = vmatpush1.bf16.msra.mxu0 %v3618
    %4062 = vmatprep.subr.bf16.mxu0 0
    %4063 = vmatpush1.bf16.msra.mxu0 %v3619
    %4064 = vmatprep.subr.bf16.mxu0 0
    %4065 = vmatpush1.bf16.msra.mxu0 %v3620
    %4066 = vmatprep.subr.bf16.mxu0 0
    %4067 = vmatpush1.bf16.msra.mxu0 %v3621
    %4068 = vmatprep.subr.bf16.mxu0 0
    %4069 = vmatpush1.bf16.msra.mxu0 %v3622
    %4070 = vmatprep.subr.bf16.mxu0 0
    %4071 = vmatpush1.bf16.msra.mxu0 %v3623
    %4072 = vmatprep.mubr.bf16.mxu0 %v85
    %4073 = vmatmul.mubr.bf16.gmra.mrb[0].mxu0 %v84
    %v4074 = vpop.f32.mrb[0].mxu0
    %v4075 = vadd.f32 %v4035, %v4074
    %v4076 = vpop.f32.mrb[0].mxu0
    %v4077 = vpop.f32.mrb[0].mxu0
    %v4078 = vpop.f32.mrb[0].mxu0
    %4079 = vdwg.mxu0
    %4080 = vmatprep.subr.bf16.mxu0 0
    %4081 = vmatpush1.bf16.msra.mxu0 %v3624
    %4082 = vmatprep.subr.bf16.mxu0 0
    %4083 = vmatpush1.bf16.msra.mxu0 %v3625
    %4084 = vmatprep.subr.bf16.mxu0 0
    %4085 = vmatpush1.bf16.msra.mxu0 %v3626
    %4086 = vmatprep.subr.bf16.mxu0 0
    %4087 = vmatpush1.bf16.msra.mxu0 %v3627
    %4088 = vmatprep.subr.bf16.mxu0 0
    %4089 = vmatpush1.bf16.msra.mxu0 %v3628
    %4090 = vmatprep.subr.bf16.mxu0 0
    %4091 = vmatpush1.bf16.msra.mxu0 %v3629
    %4092 = vmatprep.subr.bf16.mxu0 0
    %4093 = vmatpush1.bf16.msra.mxu0 %v3630
    %4094 = vmatprep.subr.bf16.mxu0 0
    %4095 = vmatpush1.bf16.msra.mxu0 %v3631
    %4096 = vmatprep.subr.bf16.mxu0 0
    %4097 = vmatpush1.bf16.msra.mxu0 %v3632
    %4098 = vmatprep.subr.bf16.mxu0 0
    %4099 = vmatpush1.bf16.msra.mxu0 %v3633
    %4100 = vmatprep.subr.bf16.mxu0 0
    %4101 = vmatpush1.bf16.msra.mxu0 %v3634
    %4102 = vmatprep.subr.bf16.mxu0 0
    %4103 = vmatpush1.bf16.msra.mxu0 %v3635
    %4104 = vmatprep.subr.bf16.mxu0 0
    %4105 = vmatpush1.bf16.msra.mxu0 %v3636
    %4106 = vmatprep.subr.bf16.mxu0 0
    %4107 = vmatpush1.bf16.msra.mxu0 %v3637
    %4108 = vmatprep.subr.bf16.mxu0 0
    %4109 = vmatpush1.bf16.msra.mxu0 %v3638
    %4110 = vmatprep.subr.bf16.mxu0 0
    %4111 = vmatpush1.bf16.msra.mxu0 %v3639
    %4112 = vmatprep.mubr.bf16.mxu0 %v87
    %4113 = vmatmul.mubr.bf16.gmra.mrb[0].mxu0 %v86
    %v4114 = vpop.f32.mrb[0].mxu0
    %v4115 = vadd.f32 %v4075, %v4114
    %v4116 = vpop.f32.mrb[0].mxu0
    %v4117 = vpop.f32.mrb[0].mxu0
    %v4118 = vpop.f32.mrb[0].mxu0
    %4119 = vdwg.mxu0
    %v4120 = vld [vmem:[#allocation2 + $0x2400] sm:$0xff]
    %v4121 = vld [vmem:[#allocation2 + $0x2408] sm:$0xff]
    %v4122 = vld [vmem:[#allocation2 + $0x2410] sm:$0xff]
    %v4123 = vld [vmem:[#allocation2 + $0x2418] sm:$0xff]
    %v4124 = vld [vmem:[#allocation2 + $0x2420] sm:$0xff]
    %v4125 = vld [vmem:[#allocation2 + $0x2428] sm:$0xff]
    %v4126 = vld [vmem:[#allocation2 + $0x2430] sm:$0xff]
    %v4127 = vld [vmem:[#allocation2 + $0x2438] sm:$0xff]
    %v4128 = vld [vmem:[#allocation2 + $0x2440] sm:$0xff]
    %v4129 = vld [vmem:[#allocation2 + $0x2448] sm:$0xff]
    %v4130 = vld [vmem:[#allocation2 + $0x2450] sm:$0xff]
    %v4131 = vld [vmem:[#allocation2 + $0x2458] sm:$0xff]
    %v4132 = vld [vmem:[#allocation2 + $0x2460] sm:$0xff]
    %v4133 = vld [vmem:[#allocation2 + $0x2468] sm:$0xff]
    %v4134 = vld [vmem:[#allocation2 + $0x2470] sm:$0xff]
    %v4135 = vld [vmem:[#allocation2 + $0x2478] sm:$0xff]
    %v4136 = vld [vmem:[#allocation2 + $0x2480] sm:$0xff]
    %v4137 = vld [vmem:[#allocation2 + $0x2488] sm:$0xff]
    %v4138 = vld [vmem:[#allocation2 + $0x2490] sm:$0xff]
    %v4139 = vld [vmem:[#allocation2 + $0x2498] sm:$0xff]
    %v4140 = vld [vmem:[#allocation2 + $0x24a0] sm:$0xff]
    %v4141 = vld [vmem:[#allocation2 + $0x24a8] sm:$0xff]
    %v4142 = vld [vmem:[#allocation2 + $0x24b0] sm:$0xff]
    %v4143 = vld [vmem:[#allocation2 + $0x24b8] sm:$0xff]
    %v4144 = vld [vmem:[#allocation2 + $0x24c0] sm:$0xff]
    %v4145 = vld [vmem:[#allocation2 + $0x24c8] sm:$0xff]
    %v4146 = vld [vmem:[#allocation2 + $0x24d0] sm:$0xff]
    %v4147 = vld [vmem:[#allocation2 + $0x24d8] sm:$0xff]
    %v4148 = vld [vmem:[#allocation2 + $0x24e0] sm:$0xff]
    %v4149 = vld [vmem:[#allocation2 + $0x24e8] sm:$0xff]
    %v4150 = vld [vmem:[#allocation2 + $0x24f0] sm:$0xff]
    %v4151 = vld [vmem:[#allocation2 + $0x24f8] sm:$0xff]
    %v4152 = vld [vmem:[#allocation2 + $0x2500] sm:$0xff]
    %v4153 = vld [vmem:[#allocation2 + $0x2508] sm:$0xff]
    %v4154 = vld [vmem:[#allocation2 + $0x2510] sm:$0xff]
    %v4155 = vld [vmem:[#allocation2 + $0x2518] sm:$0xff]
    %v4156 = vld [vmem:[#allocation2 + $0x2520] sm:$0xff]
    %v4157 = vld [vmem:[#allocation2 + $0x2528] sm:$0xff]
    %v4158 = vld [vmem:[#allocation2 + $0x2530] sm:$0xff]
    %v4159 = vld [vmem:[#allocation2 + $0x2538] sm:$0xff]
    %v4160 = vld [vmem:[#allocation2 + $0x2540] sm:$0xff]
    %v4161 = vld [vmem:[#allocation2 + $0x2548] sm:$0xff]
    %v4162 = vld [vmem:[#allocation2 + $0x2550] sm:$0xff]
    %v4163 = vld [vmem:[#allocation2 + $0x2558] sm:$0xff]
    %v4164 = vld [vmem:[#allocation2 + $0x2560] sm:$0xff]
    %v4165 = vld [vmem:[#allocation2 + $0x2568] sm:$0xff]
    %v4166 = vld [vmem:[#allocation2 + $0x2570] sm:$0xff]
    %v4167 = vld [vmem:[#allocation2 + $0x2578] sm:$0xff]
    %v4168 = vld [vmem:[#allocation2 + $0x2580] sm:$0xff]
    %v4169 = vld [vmem:[#allocation2 + $0x2588] sm:$0xff]
    %v4170 = vld [vmem:[#allocation2 + $0x2590] sm:$0xff]
    %v4171 = vld [vmem:[#allocation2 + $0x2598] sm:$0xff]
    %v4172 = vld [vmem:[#allocation2 + $0x25a0] sm:$0xff]
    %v4173 = vld [vmem:[#allocation2 + $0x25a8] sm:$0xff]
    %v4174 = vld [vmem:[#allocation2 + $0x25b0] sm:$0xff]
    %v4175 = vld [vmem:[#allocation2 + $0x25b8] sm:$0xff]
    %v4176 = vld [vmem:[#allocation2 + $0x25c0] sm:$0xff]
    %v4177 = vld [vmem:[#allocation2 + $0x25c8] sm:$0xff]
    %v4178 = vld [vmem:[#allocation2 + $0x25d0] sm:$0xff]
    %v4179 = vld [vmem:[#allocation2 + $0x25d8] sm:$0xff]
    %v4180 = vld [vmem:[#allocation2 + $0x25e0] sm:$0xff]
    %v4181 = vld [vmem:[#allocation2 + $0x25e8] sm:$0xff]
    %v4182 = vld [vmem:[#allocation2 + $0x25f0] sm:$0xff]
    %v4183 = vld [vmem:[#allocation2 + $0x25f8] sm:$0xff]
    %v4184 = vld [vmem:[#allocation2 + $0x2600] sm:$0xff]
    %v4185 = vld [vmem:[#allocation2 + $0x2608] sm:$0xff]
    %v4186 = vld [vmem:[#allocation2 + $0x2610] sm:$0xff]
    %v4187 = vld [vmem:[#allocation2 + $0x2618] sm:$0xff]
    %v4188 = vld [vmem:[#allocation2 + $0x2620] sm:$0xff]
    %v4189 = vld [vmem:[#allocation2 + $0x2628] sm:$0xff]
    %v4190 = vld [vmem:[#allocation2 + $0x2630] sm:$0xff]
    %v4191 = vld [vmem:[#allocation2 + $0x2638] sm:$0xff]
    %v4192 = vld [vmem:[#allocation2 + $0x2640] sm:$0xff]
    %v4193 = vld [vmem:[#allocation2 + $0x2648] sm:$0xff]
    %v4194 = vld [vmem:[#allocation2 + $0x2650] sm:$0xff]
    %v4195 = vld [vmem:[#allocation2 + $0x2658] sm:$0xff]
    %v4196 = vld [vmem:[#allocation2 + $0x2660] sm:$0xff]
    %v4197 = vld [vmem:[#allocation2 + $0x2668] sm:$0xff]
    %v4198 = vld [vmem:[#allocation2 + $0x2670] sm:$0xff]
    %v4199 = vld [vmem:[#allocation2 + $0x2678] sm:$0xff]
    %v4200 = vld [vmem:[#allocation2 + $0x2680] sm:$0xff]
    %v4201 = vld [vmem:[#allocation2 + $0x2688] sm:$0xff]
    %v4202 = vld [vmem:[#allocation2 + $0x2690] sm:$0xff]
    %v4203 = vld [vmem:[#allocation2 + $0x2698] sm:$0xff]
    %v4204 = vld [vmem:[#allocation2 + $0x26a0] sm:$0xff]
    %v4205 = vld [vmem:[#allocation2 + $0x26a8] sm:$0xff]
    %v4206 = vld [vmem:[#allocation2 + $0x26b0] sm:$0xff]
    %v4207 = vld [vmem:[#allocation2 + $0x26b8] sm:$0xff]
    %v4208 = vld [vmem:[#allocation2 + $0x26c0] sm:$0xff]
    %v4209 = vld [vmem:[#allocation2 + $0x26c8] sm:$0xff]
    %v4210 = vld [vmem:[#allocation2 + $0x26d0] sm:$0xff]
    %v4211 = vld [vmem:[#allocation2 + $0x26d8] sm:$0xff]
    %v4212 = vld [vmem:[#allocation2 + $0x26e0] sm:$0xff]
    %v4213 = vld [vmem:[#allocation2 + $0x26e8] sm:$0xff]
    %v4214 = vld [vmem:[#allocation2 + $0x26f0] sm:$0xff]
    %v4215 = vld [vmem:[#allocation2 + $0x26f8] sm:$0xff]
    %v4216 = vld [vmem:[#allocation2 + $0x2700] sm:$0xff]
    %v4217 = vld [vmem:[#allocation2 + $0x2708] sm:$0xff]
    %v4218 = vld [vmem:[#allocation2 + $0x2710] sm:$0xff]
    %v4219 = vld [vmem:[#allocation2 + $0x2718] sm:$0xff]
    %v4220 = vld [vmem:[#allocation2 + $0x2720] sm:$0xff]
    %v4221 = vld [vmem:[#allocation2 + $0x2728] sm:$0xff]
    %v4222 = vld [vmem:[#allocation2 + $0x2730] sm:$0xff]
    %v4223 = vld [vmem:[#allocation2 + $0x2738] sm:$0xff]
    %v4224 = vld [vmem:[#allocation2 + $0x2740] sm:$0xff]
    %v4225 = vld [vmem:[#allocation2 + $0x2748] sm:$0xff]
    %v4226 = vld [vmem:[#allocation2 + $0x2750] sm:$0xff]
    %v4227 = vld [vmem:[#allocation2 + $0x2758] sm:$0xff]
    %v4228 = vld [vmem:[#allocation2 + $0x2760] sm:$0xff]
    %v4229 = vld [vmem:[#allocation2 + $0x2768] sm:$0xff]
    %v4230 = vld [vmem:[#allocation2 + $0x2770] sm:$0xff]
    %v4231 = vld [vmem:[#allocation2 + $0x2778] sm:$0xff]
    %v4232 = vld [vmem:[#allocation2 + $0x2780] sm:$0xff]
    %v4233 = vld [vmem:[#allocation2 + $0x2788] sm:$0xff]
    %v4234 = vld [vmem:[#allocation2 + $0x2790] sm:$0xff]
    %v4235 = vld [vmem:[#allocation2 + $0x2798] sm:$0xff]
    %v4236 = vld [vmem:[#allocation2 + $0x27a0] sm:$0xff]
    %v4237 = vld [vmem:[#allocation2 + $0x27a8] sm:$0xff]
    %v4238 = vld [vmem:[#allocation2 + $0x27b0] sm:$0xff]
    %v4239 = vld [vmem:[#allocation2 + $0x27b8] sm:$0xff]
    %v4240 = vld [vmem:[#allocation2 + $0x27c0] sm:$0xff]
    %v4241 = vld [vmem:[#allocation2 + $0x27c8] sm:$0xff]
    %v4242 = vld [vmem:[#allocation2 + $0x27d0] sm:$0xff]
    %v4243 = vld [vmem:[#allocation2 + $0x27d8] sm:$0xff]
    %v4244 = vld [vmem:[#allocation2 + $0x27e0] sm:$0xff]
    %v4245 = vld [vmem:[#allocation2 + $0x27e8] sm:$0xff]
    %v4246 = vld [vmem:[#allocation2 + $0x27f0] sm:$0xff]
    %v4247 = vld [vmem:[#allocation2 + $0x27f8] sm:$0xff]
    %v4248 = vld [vmem:[#allocation2 + $0x2800] sm:$0xff]
    %v4249 = vld [vmem:[#allocation2 + $0x2808] sm:$0xff]
    %v4250 = vld [vmem:[#allocation2 + $0x2810] sm:$0xff]
    %v4251 = vld [vmem:[#allocation2 + $0x2818] sm:$0xff]
    %v4252 = vld [vmem:[#allocation2 + $0x2820] sm:$0xff]
    %v4253 = vld [vmem:[#allocation2 + $0x2828] sm:$0xff]
    %v4254 = vld [vmem:[#allocation2 + $0x2830] sm:$0xff]
    %v4255 = vld [vmem:[#allocation2 + $0x2838] sm:$0xff]
    %v4256 = vld [vmem:[#allocation2 + $0x2840] sm:$0xff]
    %v4257 = vld [vmem:[#allocation2 + $0x2848] sm:$0xff]
    %v4258 = vld [vmem:[#allocation2 + $0x2850] sm:$0xff]
    %v4259 = vld [vmem:[#allocation2 + $0x2858] sm:$0xff]
    %v4260 = vld [vmem:[#allocation2 + $0x2860] sm:$0xff]
    %v4261 = vld [vmem:[#allocation2 + $0x2868] sm:$0xff]
    %v4262 = vld [vmem:[#allocation2 + $0x2870] sm:$0xff]
    %v4263 = vld [vmem:[#allocation2 + $0x2878] sm:$0xff]
    %v4264 = vld [vmem:[#allocation2 + $0x2880] sm:$0xff]
    %v4265 = vld [vmem:[#allocation2 + $0x2888] sm:$0xff]
    %v4266 = vld [vmem:[#allocation2 + $0x2890] sm:$0xff]
    %v4267 = vld [vmem:[#allocation2 + $0x2898] sm:$0xff]
    %v4268 = vld [vmem:[#allocation2 + $0x28a0] sm:$0xff]
    %v4269 = vld [vmem:[#allocation2 + $0x28a8] sm:$0xff]
    %v4270 = vld [vmem:[#allocation2 + $0x28b0] sm:$0xff]
    %v4271 = vld [vmem:[#allocation2 + $0x28b8] sm:$0xff]
    %v4272 = vld [vmem:[#allocation2 + $0x28c0] sm:$0xff]
    %v4273 = vld [vmem:[#allocation2 + $0x28c8] sm:$0xff]
    %v4274 = vld [vmem:[#allocation2 + $0x28d0] sm:$0xff]
    %v4275 = vld [vmem:[#allocation2 + $0x28d8] sm:$0xff]
    %v4276 = vld [vmem:[#allocation2 + $0x28e0] sm:$0xff]
    %v4277 = vld [vmem:[#allocation2 + $0x28e8] sm:$0xff]
    %v4278 = vld [vmem:[#allocation2 + $0x28f0] sm:$0xff]
    %v4279 = vld [vmem:[#allocation2 + $0x28f8] sm:$0xff]
    %v4280 = vld [vmem:[#allocation2 + $0x2900] sm:$0xff]
    %v4281 = vld [vmem:[#allocation2 + $0x2908] sm:$0xff]
    %v4282 = vld [vmem:[#allocation2 + $0x2910] sm:$0xff]
    %v4283 = vld [vmem:[#allocation2 + $0x2918] sm:$0xff]
    %v4284 = vld [vmem:[#allocation2 + $0x2920] sm:$0xff]
    %v4285 = vld [vmem:[#allocation2 + $0x2928] sm:$0xff]
    %v4286 = vld [vmem:[#allocation2 + $0x2930] sm:$0xff]
    %v4287 = vld [vmem:[#allocation2 + $0x2938] sm:$0xff]
    %v4288 = vld [vmem:[#allocation2 + $0x2940] sm:$0xff]
    %v4289 = vld [vmem:[#allocation2 + $0x2948] sm:$0xff]
    %v4290 = vld [vmem:[#allocation2 + $0x2950] sm:$0xff]
    %v4291 = vld [vmem:[#allocation2 + $0x2958] sm:$0xff]
    %v4292 = vld [vmem:[#allocation2 + $0x2960] sm:$0xff]
    %v4293 = vld [vmem:[#allocation2 + $0x2968] sm:$0xff]
    %v4294 = vld [vmem:[#allocation2 + $0x2970] sm:$0xff]
    %v4295 = vld [vmem:[#allocation2 + $0x2978] sm:$0xff]
    %v4296 = vld [vmem:[#allocation2 + $0x2980] sm:$0xff]
    %v4297 = vld [vmem:[#allocation2 + $0x2988] sm:$0xff]
    %v4298 = vld [vmem:[#allocation2 + $0x2990] sm:$0xff]
    %v4299 = vld [vmem:[#allocation2 + $0x2998] sm:$0xff]
    %v4300 = vld [vmem:[#allocation2 + $0x29a0] sm:$0xff]
    %v4301 = vld [vmem:[#allocation2 + $0x29a8] sm:$0xff]
    %v4302 = vld [vmem:[#allocation2 + $0x29b0] sm:$0xff]
    %v4303 = vld [vmem:[#allocation2 + $0x29b8] sm:$0xff]
    %v4304 = vld [vmem:[#allocation2 + $0x29c0] sm:$0xff]
    %v4305 = vld [vmem:[#allocation2 + $0x29c8] sm:$0xff]
    %v4306 = vld [vmem:[#allocation2 + $0x29d0] sm:$0xff]
    %v4307 = vld [vmem:[#allocation2 + $0x29d8] sm:$0xff]
    %v4308 = vld [vmem:[#allocation2 + $0x29e0] sm:$0xff]
    %v4309 = vld [vmem:[#allocation2 + $0x29e8] sm:$0xff]
    %v4310 = vld [vmem:[#allocation2 + $0x29f0] sm:$0xff]
    %v4311 = vld [vmem:[#allocation2 + $0x29f8] sm:$0xff]
    %4312 = vmatprep.subr.bf16.mxu0 0
    %4313 = vmatpush1.bf16.msra.mxu0 %v4120
    %4314 = vmatprep.subr.bf16.mxu0 0
    %4315 = vmatpush1.bf16.msra.mxu0 %v4121
    %4316 = vmatprep.subr.bf16.mxu0 0
    %4317 = vmatpush1.bf16.msra.mxu0 %v4122
    %4318 = vmatprep.subr.bf16.mxu0 0
    %4319 = vmatpush1.bf16.msra.mxu0 %v4123
    %4320 = vmatprep.subr.bf16.mxu0 0
    %4321 = vmatpush1.bf16.msra.mxu0 %v4124
    %4322 = vmatprep.subr.bf16.mxu0 0
    %4323 = vmatpush1.bf16.msra.mxu0 %v4125
    %4324 = vmatprep.subr.bf16.mxu0 0
    %4325 = vmatpush1.bf16.msra.mxu0 %v4126
    %4326 = vmatprep.subr.bf16.mxu0 0
    %4327 = vmatpush1.bf16.msra.mxu0 %v4127
    %4328 = vmatprep.subr.bf16.mxu0 0
    %4329 = vmatpush1.bf16.msra.mxu0 %v4128
    %4330 = vmatprep.subr.bf16.mxu0 0
    %4331 = vmatpush1.bf16.msra.mxu0 %v4129
    %4332 = vmatprep.subr.bf16.mxu0 0
    %4333 = vmatpush1.bf16.msra.mxu0 %v4130
    %4334 = vmatprep.subr.bf16.mxu0 0
    %4335 = vmatpush1.bf16.msra.mxu0 %v4131
    %4336 = vmatprep.subr.bf16.mxu0 0
    %4337 = vmatpush1.bf16.msra.mxu0 %v4132
    %4338 = vmatprep.subr.bf16.mxu0 0
    %4339 = vmatpush1.bf16.msra.mxu0 %v4133
    %4340 = vmatprep.subr.bf16.mxu0 0
    %4341 = vmatpush1.bf16.msra.mxu0 %v4134
    %4342 = vmatprep.subr.bf16.mxu0 0
    %4343 = vmatpush1.bf16.msra.mxu0 %v4135
    %4344 = vmatprep.mubr.bf16.mxu0 %v65
    %4345 = vmatmul.mubr.bf16.gmra.mrb[0].mxu0 %v64
    %v4346 = vpop.f32.mrb[0].mxu0
    %v4347 = vadd.f32 0.0, %v4346
    %v4348 = vpop.f32.mrb[0].mxu0
    %v4349 = vpop.f32.mrb[0].mxu0
    %v4350 = vpop.f32.mrb[0].mxu0
    %4351 = vdwg.mxu0
    %4352 = vmatprep.subr.bf16.mxu0 0
    %4353 = vmatpush1.bf16.msra.mxu0 %v4136
    %4354 = vmatprep.subr.bf16.mxu0 0
    %4355 = vmatpush1.bf16.msra.mxu0 %v4137
    %4356 = vmatprep.subr.bf16.mxu0 0
    %4357 = vmatpush1.bf16.msra.mxu0 %v4138
    %4358 = vmatprep.subr.bf16.mxu0 0
    %4359 = vmatpush1.bf16.msra.mxu0 %v4139
    %4360 = vmatprep.subr.bf16.mxu0 0
    %4361 = vmatpush1.bf16.msra.mxu0 %v4140
    %4362 = vmatprep.subr.bf16.mxu0 0
    %4363 = vmatpush1.bf16.msra.mxu0 %v4141
    %4364 = vmatprep.subr.bf16.mxu0 0
    %4365 = vmatpush1.bf16.msra.mxu0 %v4142
    %4366 = vmatprep.subr.bf16.mxu0 0
    %4367 = vmatpush1.bf16.msra.mxu0 %v4143
    %4368 = vmatprep.subr.bf16.mxu0 0
    %4369 = vmatpush1.bf16.msra.mxu0 %v4144
    %4370 = vmatprep.subr.bf16.mxu0 0
    %4371 = vmatpush1.bf16.msra.mxu0 %v4145
    %4372 = vmatprep.subr.bf16.mxu0 0
    %4373 = vmatpush1.bf16.msra.mxu0 %v4146
    %4374 = vmatprep.subr.bf16.mxu0 0
    %4375 = vmatpush1.bf16.msra.mxu0 %v4147
    %4376 = vmatprep.subr.bf16.mxu0 0
    %4377 = vmatpush1.bf16.msra.mxu0 %v4148
    %4378 = vmatprep.subr.bf16.mxu0 0
    %4379 = vmatpush1.bf16.msra.mxu0 %v4149
    %4380 = vmatprep.subr.bf16.mxu0 0
    %4381 = vmatpush1.bf16.msra.mxu0 %v4150
    %4382 = vmatprep.subr.bf16.mxu0 0
    %4383 = vmatpush1.bf16.msra.mxu0 %v4151
    %4384 = vmatprep.mubr.bf16.mxu0 %v67
    %4385 = vmatmul.mubr.bf16.gmra.mrb[0].mxu0 %v66
    %v4386 = vpop.f32.mrb[0].mxu0
    %v4387 = vadd.f32 %v4347, %v4386
    %v4388 = vpop.f32.mrb[0].mxu0
    %v4389 = vpop.f32.mrb[0].mxu0
    %v4390 = vpop.f32.mrb[0].mxu0
    %4391 = vdwg.mxu0
    %4392 = vmatprep.subr.bf16.mxu0 0
    %4393 = vmatpush1.bf16.msra.mxu0 %v4152
    %4394 = vmatprep.subr.bf16.mxu0 0
    %4395 = vmatpush1.bf16.msra.mxu0 %v4153
    %4396 = vmatprep.subr.bf16.mxu0 0
    %4397 = vmatpush1.bf16.msra.mxu0 %v4154
    %4398 = vmatprep.subr.bf16.mxu0 0
    %4399 = vmatpush1.bf16.msra.mxu0 %v4155
    %4400 = vmatprep.subr.bf16.mxu0 0
    %4401 = vmatpush1.bf16.msra.mxu0 %v4156
    %4402 = vmatprep.subr.bf16.mxu0 0
    %4403 = vmatpush1.bf16.msra.mxu0 %v4157
    %4404 = vmatprep.subr.bf16.mxu0 0
    %4405 = vmatpush1.bf16.msra.mxu0 %v4158
    %4406 = vmatprep.subr.bf16.mxu0 0
    %4407 = vmatpush1.bf16.msra.mxu0 %v4159
    %4408 = vmatprep.subr.bf16.mxu0 0
    %4409 = vmatpush1.bf16.msra.mxu0 %v4160
    %4410 = vmatprep.subr.bf16.mxu0 0
    %4411 = vmatpush1.bf16.msra.mxu0 %v4161
    %4412 = vmatprep.subr.bf16.mxu0 0
    %4413 = vmatpush1.bf16.msra.mxu0 %v4162
    %4414 = vmatprep.subr.bf16.mxu0 0
    %4415 = vmatpush1.bf16.msra.mxu0 %v4163
    %4416 = vmatprep.subr.bf16.mxu0 0
    %4417 = vmatpush1.bf16.msra.mxu0 %v4164
    %4418 = vmatprep.subr.bf16.mxu0 0
    %4419 = vmatpush1.bf16.msra.mxu0 %v4165
    %4420 = vmatprep.subr.bf16.mxu0 0
    %4421 = vmatpush1.bf16.msra.mxu0 %v4166
    %4422 = vmatprep.subr.bf16.mxu0 0
    %4423 = vmatpush1.bf16.msra.mxu0 %v4167
    %4424 = vmatprep.mubr.bf16.mxu0 %v69
    %4425 = vmatmul.mubr.bf16.gmra.mrb[0].mxu0 %v68
    %v4426 = vpop.f32.mrb[0].mxu0
    %v4427 = vadd.f32 %v4387, %v4426
    %v4428 = vpop.f32.mrb[0].mxu0
    %v4429 = vpop.f32.mrb[0].mxu0
    %v4430 = vpop.f32.mrb[0].mxu0
    %4431 = vdwg.mxu0
    %4432 = vmatprep.subr.bf16.mxu0 0
    %4433 = vmatpush1.bf16.msra.mxu0 %v4168
    %4434 = vmatprep.subr.bf16.mxu0 0
    %4435 = vmatpush1.bf16.msra.mxu0 %v4169
    %4436 = vmatprep.subr.bf16.mxu0 0
    %4437 = vmatpush1.bf16.msra.mxu0 %v4170
    %4438 = vmatprep.subr.bf16.mxu0 0
    %4439 = vmatpush1.bf16.msra.mxu0 %v4171
    %4440 = vmatprep.subr.bf16.mxu0 0
    %4441 = vmatpush1.bf16.msra.mxu0 %v4172
    %4442 = vmatprep.subr.bf16.mxu0 0
    %4443 = vmatpush1.bf16.msra.mxu0 %v4173
    %4444 = vmatprep.subr.bf16.mxu0 0
    %4445 = vmatpush1.bf16.msra.mxu0 %v4174
    %4446 = vmatprep.subr.bf16.mxu0 0
    %4447 = vmatpush1.bf16.msra.mxu0 %v4175
    %4448 = vmatprep.subr.bf16.mxu0 0
    %4449 = vmatpush1.bf16.msra.mxu0 %v4176
    %4450 = vmatprep.subr.bf16.mxu0 0
    %4451 = vmatpush1.bf16.msra.mxu0 %v4177
    %4452 = vmatprep.subr.bf16.mxu0 0
    %4453 = vmatpush1.bf16.msra.mxu0 %v4178
    %4454 = vmatprep.subr.bf16.mxu0 0
    %4455 = vmatpush1.bf16.msra.mxu0 %v4179
    %4456 = vmatprep.subr.bf16.mxu0 0
    %4457 = vmatpush1.bf16.msra.mxu0 %v4180
    %4458 = vmatprep.subr.bf16.mxu0 0
    %4459 = vmatpush1.bf16.msra.mxu0 %v4181
    %4460 = vmatprep.subr.bf16.mxu0 0
    %4461 = vmatpush1.bf16.msra.mxu0 %v4182
    %4462 = vmatprep.subr.bf16.mxu0 0
    %4463 = vmatpush1.bf16.msra.mxu0 %v4183
    %4464 = vmatprep.mubr.bf16.mxu0 %v71
    %4465 = vmatmul.mubr.bf16.gmra.mrb[0].mxu0 %v70
    %v4466 = vpop.f32.mrb[0].mxu0
    %v4467 = vadd.f32 %v4427, %v4466
    %v4468 = vpop.f32.mrb[0].mxu0
    %v4469 = vpop.f32.mrb[0].mxu0
    %v4470 = vpop.f32.mrb[0].mxu0
    %4471 = vdwg.mxu0
    %4472 = vmatprep.subr.bf16.mxu0 0
    %4473 = vmatpush1.bf16.msra.mxu0 %v4184
    %4474 = vmatprep.subr.bf16.mxu0 0
    %4475 = vmatpush1.bf16.msra.mxu0 %v4185
    %4476 = vmatprep.subr.bf16.mxu0 0
    %4477 = vmatpush1.bf16.msra.mxu0 %v4186
    %4478 = vmatprep.subr.bf16.mxu0 0
    %4479 = vmatpush1.bf16.msra.mxu0 %v4187
    %4480 = vmatprep.subr.bf16.mxu0 0
    %4481 = vmatpush1.bf16.msra.mxu0 %v4188
    %4482 = vmatprep.subr.bf16.mxu0 0
    %4483 = vmatpush1.bf16.msra.mxu0 %v4189
    %4484 = vmatprep.subr.bf16.mxu0 0
    %4485 = vmatpush1.bf16.msra.mxu0 %v4190
    %4486 = vmatprep.subr.bf16.mxu0 0
    %4487 = vmatpush1.bf16.msra.mxu0 %v4191
    %4488 = vmatprep.subr.bf16.mxu0 0
    %4489 = vmatpush1.bf16.msra.mxu0 %v4192
    %4490 = vmatprep.subr.bf16.mxu0 0
    %4491 = vmatpush1.bf16.msra.mxu0 %v4193
    %4492 = vmatprep.subr.bf16.mxu0 0
    %4493 = vmatpush1.bf16.msra.mxu0 %v4194
    %4494 = vmatprep.subr.bf16.mxu0 0
    %4495 = vmatpush1.bf16.msra.mxu0 %v4195
    %4496 = vmatprep.subr.bf16.mxu0 0
    %4497 = vmatpush1.bf16.msra.mxu0 %v4196
    %4498 = vmatprep.subr.bf16.mxu0 0
    %4499 = vmatpush1.bf16.msra.mxu0 %v4197
    %4500 = vmatprep.subr.bf16.mxu0 0
    %4501 = vmatpush1.bf16.msra.mxu0 %v4198
    %4502 = vmatprep.subr.bf16.mxu0 0
    %4503 = vmatpush1.bf16.msra.mxu0 %v4199
    %4504 = vmatprep.mubr.bf16.mxu0 %v73
    %4505 = vmatmul.mubr.bf16.gmra.mrb[0].mxu0 %v72
    %v4506 = vpop.f32.mrb[0].mxu0
    %v4507 = vadd.f32 %v4467, %v4506
    %v4508 = vpop.f32.mrb[0].mxu0
    %v4509 = vpop.f32.mrb[0].mxu0
    %v4510 = vpop.f32.mrb[0].mxu0
    %4511 = vdwg.mxu0
    %4512 = vmatprep.subr.bf16.mxu0 0
    %4513 = vmatpush1.bf16.msra.mxu0 %v4200
    %4514 = vmatprep.subr.bf16.mxu0 0
    %4515 = vmatpush1.bf16.msra.mxu0 %v4201
    %4516 = vmatprep.subr.bf16.mxu0 0
    %4517 = vmatpush1.bf16.msra.mxu0 %v4202
    %4518 = vmatprep.subr.bf16.mxu0 0
    %4519 = vmatpush1.bf16.msra.mxu0 %v4203
    %4520 = vmatprep.subr.bf16.mxu0 0
    %4521 = vmatpush1.bf16.msra.mxu0 %v4204
    %4522 = vmatprep.subr.bf16.mxu0 0
    %4523 = vmatpush1.bf16.msra.mxu0 %v4205
    %4524 = vmatprep.subr.bf16.mxu0 0
    %4525 = vmatpush1.bf16.msra.mxu0 %v4206
    %4526 = vmatprep.subr.bf16.mxu0 0
    %4527 = vmatpush1.bf16.msra.mxu0 %v4207
    %4528 = vmatprep.subr.bf16.mxu0 0
    %4529 = vmatpush1.bf16.msra.mxu0 %v4208
    %4530 = vmatprep.subr.bf16.mxu0 0
    %4531 = vmatpush1.bf16.msra.mxu0 %v4209
    %4532 = vmatprep.subr.bf16.mxu0 0
    %4533 = vmatpush1.bf16.msra.mxu0 %v4210
    %4534 = vmatprep.subr.bf16.mxu0 0
    %4535 = vmatpush1.bf16.msra.mxu0 %v4211
    %4536 = vmatprep.subr.bf16.mxu0 0
    %4537 = vmatpush1.bf16.msra.mxu0 %v4212
    %4538 = vmatprep.subr.bf16.mxu0 0
    %4539 = vmatpush1.bf16.msra.mxu0 %v4213
    %4540 = vmatprep.subr.bf16.mxu0 0
    %4541 = vmatpush1.bf16.msra.mxu0 %v4214
    %4542 = vmatprep.subr.bf16.mxu0 0
    %4543 = vmatpush1.bf16.msra.mxu0 %v4215
    %4544 = vmatprep.mubr.bf16.mxu0 %v75
    %4545 = vmatmul.mubr.bf16.gmra.mrb[0].mxu0 %v74
    %v4546 = vpop.f32.mrb[0].mxu0
    %v4547 = vadd.f32 %v4507, %v4546
    %v4548 = vpop.f32.mrb[0].mxu0
    %v4549 = vpop.f32.mrb[0].mxu0
    %v4550 = vpop.f32.mrb[0].mxu0
    %4551 = vdwg.mxu0
    %4552 = vmatprep.subr.bf16.mxu0 0
    %4553 = vmatpush1.bf16.msra.mxu0 %v4216
    %4554 = vmatprep.subr.bf16.mxu0 0
    %4555 = vmatpush1.bf16.msra.mxu0 %v4217
    %4556 = vmatprep.subr.bf16.mxu0 0
    %4557 = vmatpush1.bf16.msra.mxu0 %v4218
    %4558 = vmatprep.subr.bf16.mxu0 0
    %4559 = vmatpush1.bf16.msra.mxu0 %v4219
    %4560 = vmatprep.subr.bf16.mxu0 0
    %4561 = vmatpush1.bf16.msra.mxu0 %v4220
    %4562 = vmatprep.subr.bf16.mxu0 0
    %4563 = vmatpush1.bf16.msra.mxu0 %v4221
    %4564 = vmatprep.subr.bf16.mxu0 0
    %4565 = vmatpush1.bf16.msra.mxu0 %v4222
    %4566 = vmatprep.subr.bf16.mxu0 0
    %4567 = vmatpush1.bf16.msra.mxu0 %v4223
    %4568 = vmatprep.subr.bf16.mxu0 0
    %4569 = vmatpush1.bf16.msra.mxu0 %v4224
    %4570 = vmatprep.subr.bf16.mxu0 0
    %4571 = vmatpush1.bf16.msra.mxu0 %v4225
    %4572 = vmatprep.subr.bf16.mxu0 0
    %4573 = vmatpush1.bf16.msra.mxu0 %v4226
    %4574 = vmatprep.subr.bf16.mxu0 0
    %4575 = vmatpush1.bf16.msra.mxu0 %v4227
    %4576 = vmatprep.subr.bf16.mxu0 0
    %4577 = vmatpush1.bf16.msra.mxu0 %v4228
    %4578 = vmatprep.subr.bf16.mxu0 0
    %4579 = vmatpush1.bf16.msra.mxu0 %v4229
    %4580 = vmatprep.subr.bf16.mxu0 0
    %4581 = vmatpush1.bf16.msra.mxu0 %v4230
    %4582 = vmatprep.subr.bf16.mxu0 0
    %4583 = vmatpush1.bf16.msra.mxu0 %v4231
    %4584 = vmatprep.mubr.bf16.mxu0 %v77
    %4585 = vmatmul.mubr.bf16.gmra.mrb[0].mxu0 %v76
    %v4586 = vpop.f32.mrb[0].mxu0
    %v4587 = vadd.f32 %v4547, %v4586
    %v4588 = vpop.f32.mrb[0].mxu0
    %v4589 = vpop.f32.mrb[0].mxu0
    %v4590 = vpop.f32.mrb[0].mxu0
    %4591 = vdwg.mxu0
    %4592 = vmatprep.subr.bf16.mxu0 0
    %4593 = vmatpush1.bf16.msra.mxu0 %v4232
    %4594 = vmatprep.subr.bf16.mxu0 0
    %4595 = vmatpush1.bf16.msra.mxu0 %v4233
    %4596 = vmatprep.subr.bf16.mxu0 0
    %4597 = vmatpush1.bf16.msra.mxu0 %v4234
    %4598 = vmatprep.subr.bf16.mxu0 0
    %4599 = vmatpush1.bf16.msra.mxu0 %v4235
    %4600 = vmatprep.subr.bf16.mxu0 0
    %4601 = vmatpush1.bf16.msra.mxu0 %v4236
    %4602 = vmatprep.subr.bf16.mxu0 0
    %4603 = vmatpush1.bf16.msra.mxu0 %v4237
    %4604 = vmatprep.subr.bf16.mxu0 0
    %4605 = vmatpush1.bf16.msra.mxu0 %v4238
    %4606 = vmatprep.subr.bf16.mxu0 0
    %4607 = vmatpush1.bf16.msra.mxu0 %v4239
    %4608 = vmatprep.subr.bf16.mxu0 0
    %4609 = vmatpush1.bf16.msra.mxu0 %v4240
    %4610 = vmatprep.subr.bf16.mxu0 0
    %4611 = vmatpush1.bf16.msra.mxu0 %v4241
    %4612 = vmatprep.subr.bf16.mxu0 0
    %4613 = vmatpush1.bf16.msra.mxu0 %v4242
    %4614 = vmatprep.subr.bf16.mxu0 0
    %4615 = vmatpush1.bf16.msra.mxu0 %v4243
    %4616 = vmatprep.subr.bf16.mxu0 0
    %4617 = vmatpush1.bf16.msra.mxu0 %v4244
    %4618 = vmatprep.subr.bf16.mxu0 0
    %4619 = vmatpush1.bf16.msra.mxu0 %v4245
    %4620 = vmatprep.subr.bf16.mxu0 0
    %4621 = vmatpush1.bf16.msra.mxu0 %v4246
    %4622 = vmatprep.subr.bf16.mxu0 0
    %4623 = vmatpush1.bf16.msra.mxu0 %v4247
    %4624 = vmatprep.mubr.bf16.mxu0 %v79
    %4625 = vmatmul.mubr.bf16.gmra.mrb[0].mxu0 %v78
    %v4626 = vpop.f32.mrb[0].mxu0
    %v4627 = vadd.f32 %v4587, %v4626
    %v4628 = vpop.f32.mrb[0].mxu0
    %v4629 = vpop.f32.mrb[0].mxu0
    %v4630 = vpop.f32.mrb[0].mxu0
    %4631 = vdwg.mxu0
    %4632 = vmatprep.subr.bf16.mxu0 0
    %4633 = vmatpush1.bf16.msra.mxu0 %v4248
    %4634 = vmatprep.subr.bf16.mxu0 0
    %4635 = vmatpush1.bf16.msra.mxu0 %v4249
    %4636 = vmatprep.subr.bf16.mxu0 0
    %4637 = vmatpush1.bf16.msra.mxu0 %v4250
    %4638 = vmatprep.subr.bf16.mxu0 0
    %4639 = vmatpush1.bf16.msra.mxu0 %v4251
    %4640 = vmatprep.subr.bf16.mxu0 0
    %4641 = vmatpush1.bf16.msra.mxu0 %v4252
    %4642 = vmatprep.subr.bf16.mxu0 0
    %4643 = vmatpush1.bf16.msra.mxu0 %v4253
    %4644 = vmatprep.subr.bf16.mxu0 0
    %4645 = vmatpush1.bf16.msra.mxu0 %v4254
    %4646 = vmatprep.subr.bf16.mxu0 0
    %4647 = vmatpush1.bf16.msra.mxu0 %v4255
    %4648 = vmatprep.subr.bf16.mxu0 0
    %4649 = vmatpush1.bf16.msra.mxu0 %v4256
    %4650 = vmatprep.subr.bf16.mxu0 0
    %4651 = vmatpush1.bf16.msra.mxu0 %v4257
    %4652 = vmatprep.subr.bf16.mxu0 0
    %4653 = vmatpush1.bf16.msra.mxu0 %v4258
    %4654 = vmatprep.subr.bf16.mxu0 0
    %4655 = vmatpush1.bf16.msra.mxu0 %v4259
    %4656 = vmatprep.subr.bf16.mxu0 0
    %4657 = vmatpush1.bf16.msra.mxu0 %v4260
    %4658 = vmatprep.subr.bf16.mxu0 0
    %4659 = vmatpush1.bf16.msra.mxu0 %v4261
    %4660 = vmatprep.subr.bf16.mxu0 0
    %4661 = vmatpush1.bf16.msra.mxu0 %v4262
    %4662 = vmatprep.subr.bf16.mxu0 0
    %4663 = vmatpush1.bf16.msra.mxu0 %v4263
    %4664 = vmatprep.mubr.bf16.mxu0 %v81
    %4665 = vmatmul.mubr.bf16.gmra.mrb[0].mxu0 %v80
    %v4666 = vpop.f32.mrb[0].mxu0
    %v4667 = vadd.f32 %v4627, %v4666
    %v4668 = vpop.f32.mrb[0].mxu0
    %v4669 = vpop.f32.mrb[0].mxu0
    %v4670 = vpop.f32.mrb[0].mxu0
    %4671 = vdwg.mxu0
    %4672 = vmatprep.subr.bf16.mxu0 0
    %4673 = vmatpush1.bf16.msra.mxu0 %v4264
    %4674 = vmatprep.subr.bf16.mxu0 0
    %4675 = vmatpush1.bf16.msra.mxu0 %v4265
    %4676 = vmatprep.subr.bf16.mxu0 0
    %4677 = vmatpush1.bf16.msra.mxu0 %v4266
    %4678 = vmatprep.subr.bf16.mxu0 0
    %4679 = vmatpush1.bf16.msra.mxu0 %v4267
    %4680 = vmatprep.subr.bf16.mxu0 0
    %4681 = vmatpush1.bf16.msra.mxu0 %v4268
    %4682 = vmatprep.subr.bf16.mxu0 0
    %4683 = vmatpush1.bf16.msra.mxu0 %v4269
    %4684 = vmatprep.subr.bf16.mxu0 0
    %4685 = vmatpush1.bf16.msra.mxu0 %v4270
    %4686 = vmatprep.subr.bf16.mxu0 0
    %4687 = vmatpush1.bf16.msra.mxu0 %v4271
    %4688 = vmatprep.subr.bf16.mxu0 0
    %4689 = vmatpush1.bf16.msra.mxu0 %v4272
    %4690 = vmatprep.subr.bf16.mxu0 0
    %4691 = vmatpush1.bf16.msra.mxu0 %v4273
    %4692 = vmatprep.subr.bf16.mxu0 0
    %4693 = vmatpush1.bf16.msra.mxu0 %v4274
    %4694 = vmatprep.subr.bf16.mxu0 0
    %4695 = vmatpush1.bf16.msra.mxu0 %v4275
    %4696 = vmatprep.subr.bf16.mxu0 0
    %4697 = vmatpush1.bf16.msra.mxu0 %v4276
    %4698 = vmatprep.subr.bf16.mxu0 0
    %4699 = vmatpush1.bf16.msra.mxu0 %v4277
    %4700 = vmatprep.subr.bf16.mxu0 0
    %4701 = vmatpush1.bf16.msra.mxu0 %v4278
    %4702 = vmatprep.subr.bf16.mxu0 0
    %4703 = vmatpush1.bf16.msra.mxu0 %v4279
    %4704 = vmatprep.mubr.bf16.mxu0 %v83
    %4705 = vmatmul.mubr.bf16.gmra.mrb[0].mxu0 %v82
    %v4706 = vpop.f32.mrb[0].mxu0
    %v4707 = vadd.f32 %v4667, %v4706
    %v4708 = vpop.f32.mrb[0].mxu0
    %v4709 = vpop.f32.mrb[0].mxu0
    %v4710 = vpop.f32.mrb[0].mxu0
    %4711 = vdwg.mxu0
    %4712 = vmatprep.subr.bf16.mxu0 0
    %4713 = vmatpush1.bf16.msra.mxu0 %v4280
    %4714 = vmatprep.subr.bf16.mxu0 0
    %4715 = vmatpush1.bf16.msra.mxu0 %v4281
    %4716 = vmatprep.subr.bf16.mxu0 0
    %4717 = vmatpush1.bf16.msra.mxu0 %v4282
    %4718 = vmatprep.subr.bf16.mxu0 0
    %4719 = vmatpush1.bf16.msra.mxu0 %v4283
    %4720 = vmatprep.subr.bf16.mxu0 0
    %4721 = vmatpush1.bf16.msra.mxu0 %v4284
    %4722 = vmatprep.subr.bf16.mxu0 0
    %4723 = vmatpush1.bf16.msra.mxu0 %v4285
    %4724 = vmatprep.subr.bf16.mxu0 0
    %4725 = vmatpush1.bf16.msra.mxu0 %v4286
    %4726 = vmatprep.subr.bf16.mxu0 0
    %4727 = vmatpush1.bf16.msra.mxu0 %v4287
    %4728 = vmatprep.subr.bf16.mxu0 0
    %4729 = vmatpush1.bf16.msra.mxu0 %v4288
    %4730 = vmatprep.subr.bf16.mxu0 0
    %4731 = vmatpush1.bf16.msra.mxu0 %v4289
    %4732 = vmatprep.subr.bf16.mxu0 0
    %4733 = vmatpush1.bf16.msra.mxu0 %v4290
    %4734 = vmatprep.subr.bf16.mxu0 0
    %4735 = vmatpush1.bf16.msra.mxu0 %v4291
    %4736 = vmatprep.subr.bf16.mxu0 0
    %4737 = vmatpush1.bf16.msra.mxu0 %v4292
    %4738 = vmatprep.subr.bf16.mxu0 0
    %4739 = vmatpush1.bf16.msra.mxu0 %v4293
    %4740 = vmatprep.subr.bf16.mxu0 0
    %4741 = vmatpush1.bf16.msra.mxu0 %v4294
    %4742 = vmatprep.subr.bf16.mxu0 0
    %4743 = vmatpush1.bf16.msra.mxu0 %v4295
    %4744 = vmatprep.mubr.bf16.mxu0 %v85
    %4745 = vmatmul.mubr.bf16.gmra.mrb[0].mxu0 %v84
    %v4746 = vpop.f32.mrb[0].mxu0
    %v4747 = vadd.f32 %v4707, %v4746
    %v4748 = vpop.f32.mrb[0].mxu0
    %v4749 = vpop.f32.mrb[0].mxu0
    %v4750 = vpop.f32.mrb[0].mxu0
    %4751 = vdwg.mxu0
    %4752 = vmatprep.subr.bf16.mxu0 0
    %4753 = vmatpush1.bf16.msra.mxu0 %v4296
    %4754 = vmatprep.subr.bf16.mxu0 0
    %4755 = vmatpush1.bf16.msra.mxu0 %v4297
    %4756 = vmatprep.subr.bf16.mxu0 0
    %4757 = vmatpush1.bf16.msra.mxu0 %v4298
    %4758 = vmatprep.subr.bf16.mxu0 0
    %4759 = vmatpush1.bf16.msra.mxu0 %v4299
    %4760 = vmatprep.subr.bf16.mxu0 0
    %4761 = vmatpush1.bf16.msra.mxu0 %v4300
    %4762 = vmatprep.subr.bf16.mxu0 0
    %4763 = vmatpush1.bf16.msra.mxu0 %v4301
    %4764 = vmatprep.subr.bf16.mxu0 0
    %4765 = vmatpush1.bf16.msra.mxu0 %v4302
    %4766 = vmatprep.subr.bf16.mxu0 0
    %4767 = vmatpush1.bf16.msra.mxu0 %v4303
    %4768 = vmatprep.subr.bf16.mxu0 0
    %4769 = vmatpush1.bf16.msra.mxu0 %v4304
    %4770 = vmatprep.subr.bf16.mxu0 0
    %4771 = vmatpush1.bf16.msra.mxu0 %v4305
    %4772 = vmatprep.subr.bf16.mxu0 0
    %4773 = vmatpush1.bf16.msra.mxu0 %v4306
    %4774 = vmatprep.subr.bf16.mxu0 0
    %4775 = vmatpush1.bf16.msra.mxu0 %v4307
    %4776 = vmatprep.subr.bf16.mxu0 0
    %4777 = vmatpush1.bf16.msra.mxu0 %v4308
    %4778 = vmatprep.subr.bf16.mxu0 0
    %4779 = vmatpush1.bf16.msra.mxu0 %v4309
    %4780 = vmatprep.subr.bf16.mxu0 0
    %4781 = vmatpush1.bf16.msra.mxu0 %v4310
    %4782 = vmatprep.subr.bf16.mxu0 0
    %4783 = vmatpush1.bf16.msra.mxu0 %v4311
    %4784 = vmatprep.mubr.bf16.mxu0 %v87
    %4785 = vmatmul.mubr.bf16.gmra.mrb[0].mxu0 %v86
    %v4786 = vpop.f32.mrb[0].mxu0
    %v4787 = vadd.f32 %v4747, %v4786
    %v4788 = vpop.f32.mrb[0].mxu0
    %v4789 = vpop.f32.mrb[0].mxu0
    %v4790 = vpop.f32.mrb[0].mxu0
    %4791 = vdwg.mxu0
    %v4792 = vld [vmem:[#allocation2 + $0x2a00] sm:$0xff]
    %v4793 = vld [vmem:[#allocation2 + $0x2a08] sm:$0xff]
    %v4794 = vld [vmem:[#allocation2 + $0x2a10] sm:$0xff]
    %v4795 = vld [vmem:[#allocation2 + $0x2a18] sm:$0xff]
    %v4796 = vld [vmem:[#allocation2 + $0x2a20] sm:$0xff]
    %v4797 = vld [vmem:[#allocation2 + $0x2a28] sm:$0xff]
    %v4798 = vld [vmem:[#allocation2 + $0x2a30] sm:$0xff]
    %v4799 = vld [vmem:[#allocation2 + $0x2a38] sm:$0xff]
    %v4800 = vld [vmem:[#allocation2 + $0x2a40] sm:$0xff]
    %v4801 = vld [vmem:[#allocation2 + $0x2a48] sm:$0xff]
    %v4802 = vld [vmem:[#allocation2 + $0x2a50] sm:$0xff]
    %v4803 = vld [vmem:[#allocation2 + $0x2a58] sm:$0xff]
    %v4804 = vld [vmem:[#allocation2 + $0x2a60] sm:$0xff]
    %v4805 = vld [vmem:[#allocation2 + $0x2a68] sm:$0xff]
    %v4806 = vld [vmem:[#allocation2 + $0x2a70] sm:$0xff]
    %v4807 = vld [vmem:[#allocation2 + $0x2a78] sm:$0xff]
    %v4808 = vld [vmem:[#allocation2 + $0x2a80] sm:$0xff]
    %v4809 = vld [vmem:[#allocation2 + $0x2a88] sm:$0xff]
    %v4810 = vld [vmem:[#allocation2 + $0x2a90] sm:$0xff]
    %v4811 = vld [vmem:[#allocation2 + $0x2a98] sm:$0xff]
    %v4812 = vld [vmem:[#allocation2 + $0x2aa0] sm:$0xff]
    %v4813 = vld [vmem:[#allocation2 + $0x2aa8] sm:$0xff]
    %v4814 = vld [vmem:[#allocation2 + $0x2ab0] sm:$0xff]
    %v4815 = vld [vmem:[#allocation2 + $0x2ab8] sm:$0xff]
    %v4816 = vld [vmem:[#allocation2 + $0x2ac0] sm:$0xff]
    %v4817 = vld [vmem:[#allocation2 + $0x2ac8] sm:$0xff]
    %v4818 = vld [vmem:[#allocation2 + $0x2ad0] sm:$0xff]
    %v4819 = vld [vmem:[#allocation2 + $0x2ad8] sm:$0xff]
    %v4820 = vld [vmem:[#allocation2 + $0x2ae0] sm:$0xff]
    %v4821 = vld [vmem:[#allocation2 + $0x2ae8] sm:$0xff]
    %v4822 = vld [vmem:[#allocation2 + $0x2af0] sm:$0xff]
    %v4823 = vld [vmem:[#allocation2 + $0x2af8] sm:$0xff]
    %v4824 = vld [vmem:[#allocation2 + $0x2b00] sm:$0xff]
    %v4825 = vld [vmem:[#allocation2 + $0x2b08] sm:$0xff]
    %v4826 = vld [vmem:[#allocation2 + $0x2b10] sm:$0xff]
    %v4827 = vld [vmem:[#allocation2 + $0x2b18] sm:$0xff]
    %v4828 = vld [vmem:[#allocation2 + $0x2b20] sm:$0xff]
    %v4829 = vld [vmem:[#allocation2 + $0x2b28] sm:$0xff]
    %v4830 = vld [vmem:[#allocation2 + $0x2b30] sm:$0xff]
    %v4831 = vld [vmem:[#allocation2 + $0x2b38] sm:$0xff]
    %v4832 = vld [vmem:[#allocation2 + $0x2b40] sm:$0xff]
    %v4833 = vld [vmem:[#allocation2 + $0x2b48] sm:$0xff]
    %v4834 = vld [vmem:[#allocation2 + $0x2b50] sm:$0xff]
    %v4835 = vld [vmem:[#allocation2 + $0x2b58] sm:$0xff]
    %v4836 = vld [vmem:[#allocation2 + $0x2b60] sm:$0xff]
    %v4837 = vld [vmem:[#allocation2 + $0x2b68] sm:$0xff]
    %v4838 = vld [vmem:[#allocation2 + $0x2b70] sm:$0xff]
    %v4839 = vld [vmem:[#allocation2 + $0x2b78] sm:$0xff]
    %v4840 = vld [vmem:[#allocation2 + $0x2b80] sm:$0xff]
    %v4841 = vld [vmem:[#allocation2 + $0x2b88] sm:$0xff]
    %v4842 = vld [vmem:[#allocation2 + $0x2b90] sm:$0xff]
    %v4843 = vld [vmem:[#allocation2 + $0x2b98] sm:$0xff]
    %v4844 = vld [vmem:[#allocation2 + $0x2ba0] sm:$0xff]
    %v4845 = vld [vmem:[#allocation2 + $0x2ba8] sm:$0xff]
    %v4846 = vld [vmem:[#allocation2 + $0x2bb0] sm:$0xff]
    %v4847 = vld [vmem:[#allocation2 + $0x2bb8] sm:$0xff]
    %v4848 = vld [vmem:[#allocation2 + $0x2bc0] sm:$0xff]
    %v4849 = vld [vmem:[#allocation2 + $0x2bc8] sm:$0xff]
    %v4850 = vld [vmem:[#allocation2 + $0x2bd0] sm:$0xff]
    %v4851 = vld [vmem:[#allocation2 + $0x2bd8] sm:$0xff]
    %v4852 = vld [vmem:[#allocation2 + $0x2be0] sm:$0xff]
    %v4853 = vld [vmem:[#allocation2 + $0x2be8] sm:$0xff]
    %v4854 = vld [vmem:[#allocation2 + $0x2bf0] sm:$0xff]
    %v4855 = vld [vmem:[#allocation2 + $0x2bf8] sm:$0xff]
    %v4856 = vld [vmem:[#allocation2 + $0x2c00] sm:$0xff]
    %v4857 = vld [vmem:[#allocation2 + $0x2c08] sm:$0xff]
    %v4858 = vld [vmem:[#allocation2 + $0x2c10] sm:$0xff]
    %v4859 = vld [vmem:[#allocation2 + $0x2c18] sm:$0xff]
    %v4860 = vld [vmem:[#allocation2 + $0x2c20] sm:$0xff]
    %v4861 = vld [vmem:[#allocation2 + $0x2c28] sm:$0xff]
    %v4862 = vld [vmem:[#allocation2 + $0x2c30] sm:$0xff]
    %v4863 = vld [vmem:[#allocation2 + $0x2c38] sm:$0xff]
    %v4864 = vld [vmem:[#allocation2 + $0x2c40] sm:$0xff]
    %v4865 = vld [vmem:[#allocation2 + $0x2c48] sm:$0xff]
    %v4866 = vld [vmem:[#allocation2 + $0x2c50] sm:$0xff]
    %v4867 = vld [vmem:[#allocation2 + $0x2c58] sm:$0xff]
    %v4868 = vld [vmem:[#allocation2 + $0x2c60] sm:$0xff]
    %v4869 = vld [vmem:[#allocation2 + $0x2c68] sm:$0xff]
    %v4870 = vld [vmem:[#allocation2 + $0x2c70] sm:$0xff]
    %v4871 = vld [vmem:[#allocation2 + $0x2c78] sm:$0xff]
    %v4872 = vld [vmem:[#allocation2 + $0x2c80] sm:$0xff]
    %v4873 = vld [vmem:[#allocation2 + $0x2c88] sm:$0xff]
    %v4874 = vld [vmem:[#allocation2 + $0x2c90] sm:$0xff]
    %v4875 = vld [vmem:[#allocation2 + $0x2c98] sm:$0xff]
    %v4876 = vld [vmem:[#allocation2 + $0x2ca0] sm:$0xff]
    %v4877 = vld [vmem:[#allocation2 + $0x2ca8] sm:$0xff]
    %v4878 = vld [vmem:[#allocation2 + $0x2cb0] sm:$0xff]
    %v4879 = vld [vmem:[#allocation2 + $0x2cb8] sm:$0xff]
    %v4880 = vld [vmem:[#allocation2 + $0x2cc0] sm:$0xff]
    %v4881 = vld [vmem:[#allocation2 + $0x2cc8] sm:$0xff]
    %v4882 = vld [vmem:[#allocation2 + $0x2cd0] sm:$0xff]
    %v4883 = vld [vmem:[#allocation2 + $0x2cd8] sm:$0xff]
    %v4884 = vld [vmem:[#allocation2 + $0x2ce0] sm:$0xff]
    %v4885 = vld [vmem:[#allocation2 + $0x2ce8] sm:$0xff]
    %v4886 = vld [vmem:[#allocation2 + $0x2cf0] sm:$0xff]
    %v4887 = vld [vmem:[#allocation2 + $0x2cf8] sm:$0xff]
    %v4888 = vld [vmem:[#allocation2 + $0x2d00] sm:$0xff]
    %v4889 = vld [vmem:[#allocation2 + $0x2d08] sm:$0xff]
    %v4890 = vld [vmem:[#allocation2 + $0x2d10] sm:$0xff]
    %v4891 = vld [vmem:[#allocation2 + $0x2d18] sm:$0xff]
    %v4892 = vld [vmem:[#allocation2 + $0x2d20] sm:$0xff]
    %v4893 = vld [vmem:[#allocation2 + $0x2d28] sm:$0xff]
    %v4894 = vld [vmem:[#allocation2 + $0x2d30] sm:$0xff]
    %v4895 = vld [vmem:[#allocation2 + $0x2d38] sm:$0xff]
    %v4896 = vld [vmem:[#allocation2 + $0x2d40] sm:$0xff]
    %v4897 = vld [vmem:[#allocation2 + $0x2d48] sm:$0xff]
    %v4898 = vld [vmem:[#allocation2 + $0x2d50] sm:$0xff]
    %v4899 = vld [vmem:[#allocation2 + $0x2d58] sm:$0xff]
    %v4900 = vld [vmem:[#allocation2 + $0x2d60] sm:$0xff]
    %v4901 = vld [vmem:[#allocation2 + $0x2d68] sm:$0xff]
    %v4902 = vld [vmem:[#allocation2 + $0x2d70] sm:$0xff]
    %v4903 = vld [vmem:[#allocation2 + $0x2d78] sm:$0xff]
    %v4904 = vld [vmem:[#allocation2 + $0x2d80] sm:$0xff]
    %v4905 = vld [vmem:[#allocation2 + $0x2d88] sm:$0xff]
    %v4906 = vld [vmem:[#allocation2 + $0x2d90] sm:$0xff]
    %v4907 = vld [vmem:[#allocation2 + $0x2d98] sm:$0xff]
    %v4908 = vld [vmem:[#allocation2 + $0x2da0] sm:$0xff]
    %v4909 = vld [vmem:[#allocation2 + $0x2da8] sm:$0xff]
    %v4910 = vld [vmem:[#allocation2 + $0x2db0] sm:$0xff]
    %v4911 = vld [vmem:[#allocation2 + $0x2db8] sm:$0xff]
    %v4912 = vld [vmem:[#allocation2 + $0x2dc0] sm:$0xff]
    %v4913 = vld [vmem:[#allocation2 + $0x2dc8] sm:$0xff]
    %v4914 = vld [vmem:[#allocation2 + $0x2dd0] sm:$0xff]
    %v4915 = vld [vmem:[#allocation2 + $0x2dd8] sm:$0xff]
    %v4916 = vld [vmem:[#allocation2 + $0x2de0] sm:$0xff]
    %v4917 = vld [vmem:[#allocation2 + $0x2de8] sm:$0xff]
    %v4918 = vld [vmem:[#allocation2 + $0x2df0] sm:$0xff]
    %v4919 = vld [vmem:[#allocation2 + $0x2df8] sm:$0xff]
    %v4920 = vld [vmem:[#allocation2 + $0x2e00] sm:$0xff]
    %v4921 = vld [vmem:[#allocation2 + $0x2e08] sm:$0xff]
    %v4922 = vld [vmem:[#allocation2 + $0x2e10] sm:$0xff]
    %v4923 = vld [vmem:[#allocation2 + $0x2e18] sm:$0xff]
    %v4924 = vld [vmem:[#allocation2 + $0x2e20] sm:$0xff]
    %v4925 = vld [vmem:[#allocation2 + $0x2e28] sm:$0xff]
    %v4926 = vld [vmem:[#allocation2 + $0x2e30] sm:$0xff]
    %v4927 = vld [vmem:[#allocation2 + $0x2e38] sm:$0xff]
    %v4928 = vld [vmem:[#allocation2 + $0x2e40] sm:$0xff]
    %v4929 = vld [vmem:[#allocation2 + $0x2e48] sm:$0xff]
    %v4930 = vld [vmem:[#allocation2 + $0x2e50] sm:$0xff]
    %v4931 = vld [vmem:[#allocation2 + $0x2e58] sm:$0xff]
    %v4932 = vld [vmem:[#allocation2 + $0x2e60] sm:$0xff]
    %v4933 = vld [vmem:[#allocation2 + $0x2e68] sm:$0xff]
    %v4934 = vld [vmem:[#allocation2 + $0x2e70] sm:$0xff]
    %v4935 = vld [vmem:[#allocation2 + $0x2e78] sm:$0xff]
    %v4936 = vld [vmem:[#allocation2 + $0x2e80] sm:$0xff]
    %v4937 = vld [vmem:[#allocation2 + $0x2e88] sm:$0xff]
    %v4938 = vld [vmem:[#allocation2 + $0x2e90] sm:$0xff]
    %v4939 = vld [vmem:[#allocation2 + $0x2e98] sm:$0xff]
    %v4940 = vld [vmem:[#allocation2 + $0x2ea0] sm:$0xff]
    %v4941 = vld [vmem:[#allocation2 + $0x2ea8] sm:$0xff]
    %v4942 = vld [vmem:[#allocation2 + $0x2eb0] sm:$0xff]
    %v4943 = vld [vmem:[#allocation2 + $0x2eb8] sm:$0xff]
    %v4944 = vld [vmem:[#allocation2 + $0x2ec0] sm:$0xff]
    %v4945 = vld [vmem:[#allocation2 + $0x2ec8] sm:$0xff]
    %v4946 = vld [vmem:[#allocation2 + $0x2ed0] sm:$0xff]
    %v4947 = vld [vmem:[#allocation2 + $0x2ed8] sm:$0xff]
    %v4948 = vld [vmem:[#allocation2 + $0x2ee0] sm:$0xff]
    %v4949 = vld [vmem:[#allocation2 + $0x2ee8] sm:$0xff]
    %v4950 = vld [vmem:[#allocation2 + $0x2ef0] sm:$0xff]
    %v4951 = vld [vmem:[#allocation2 + $0x2ef8] sm:$0xff]
    %v4952 = vld [vmem:[#allocation2 + $0x2f00] sm:$0xff]
    %v4953 = vld [vmem:[#allocation2 + $0x2f08] sm:$0xff]
    %v4954 = vld [vmem:[#allocation2 + $0x2f10] sm:$0xff]
    %v4955 = vld [vmem:[#allocation2 + $0x2f18] sm:$0xff]
    %v4956 = vld [vmem:[#allocation2 + $0x2f20] sm:$0xff]
    %v4957 = vld [vmem:[#allocation2 + $0x2f28] sm:$0xff]
    %v4958 = vld [vmem:[#allocation2 + $0x2f30] sm:$0xff]
    %v4959 = vld [vmem:[#allocation2 + $0x2f38] sm:$0xff]
    %v4960 = vld [vmem:[#allocation2 + $0x2f40] sm:$0xff]
    %v4961 = vld [vmem:[#allocation2 + $0x2f48] sm:$0xff]
    %v4962 = vld [vmem:[#allocation2 + $0x2f50] sm:$0xff]
    %v4963 = vld [vmem:[#allocation2 + $0x2f58] sm:$0xff]
    %v4964 = vld [vmem:[#allocation2 + $0x2f60] sm:$0xff]
    %v4965 = vld [vmem:[#allocation2 + $0x2f68] sm:$0xff]
    %v4966 = vld [vmem:[#allocation2 + $0x2f70] sm:$0xff]
    %v4967 = vld [vmem:[#allocation2 + $0x2f78] sm:$0xff]
    %v4968 = vld [vmem:[#allocation2 + $0x2f80] sm:$0xff]
    %v4969 = vld [vmem:[#allocation2 + $0x2f88] sm:$0xff]
    %v4970 = vld [vmem:[#allocation2 + $0x2f90] sm:$0xff]
    %v4971 = vld [vmem:[#allocation2 + $0x2f98] sm:$0xff]
    %v4972 = vld [vmem:[#allocation2 + $0x2fa0] sm:$0xff]
    %v4973 = vld [vmem:[#allocation2 + $0x2fa8] sm:$0xff]
    %v4974 = vld [vmem:[#allocation2 + $0x2fb0] sm:$0xff]
    %v4975 = vld [vmem:[#allocation2 + $0x2fb8] sm:$0xff]
    %v4976 = vld [vmem:[#allocation2 + $0x2fc0] sm:$0xff]
    %v4977 = vld [vmem:[#allocation2 + $0x2fc8] sm:$0xff]
    %v4978 = vld [vmem:[#allocation2 + $0x2fd0] sm:$0xff]
    %v4979 = vld [vmem:[#allocation2 + $0x2fd8] sm:$0xff]
    %v4980 = vld [vmem:[#allocation2 + $0x2fe0] sm:$0xff]
    %v4981 = vld [vmem:[#allocation2 + $0x2fe8] sm:$0xff]
    %v4982 = vld [vmem:[#allocation2 + $0x2ff0] sm:$0xff]
    %v4983 = vld [vmem:[#allocation2 + $0x2ff8] sm:$0xff]
    %4984 = vmatprep.subr.bf16.mxu0 0
    %4985 = vmatpush1.bf16.msra.mxu0 %v4792
    %4986 = vmatprep.subr.bf16.mxu0 0
    %4987 = vmatpush1.bf16.msra.mxu0 %v4793
    %4988 = vmatprep.subr.bf16.mxu0 0
    %4989 = vmatpush1.bf16.msra.mxu0 %v4794
    %4990 = vmatprep.subr.bf16.mxu0 0
    %4991 = vmatpush1.bf16.msra.mxu0 %v4795
    %4992 = vmatprep.subr.bf16.mxu0 0
    %4993 = vmatpush1.bf16.msra.mxu0 %v4796
    %4994 = vmatprep.subr.bf16.mxu0 0
    %4995 = vmatpush1.bf16.msra.mxu0 %v4797
    %4996 = vmatprep.subr.bf16.mxu0 0
    %4997 = vmatpush1.bf16.msra.mxu0 %v4798
    %4998 = vmatprep.subr.bf16.mxu0 0
    %4999 = vmatpush1.bf16.msra.mxu0 %v4799
    %5000 = vmatprep.subr.bf16.mxu0 0
    %5001 = vmatpush1.bf16.msra.mxu0 %v4800
    %5002 = vmatprep.subr.bf16.mxu0 0
    %5003 = vmatpush1.bf16.msra.mxu0 %v4801
    %5004 = vmatprep.subr.bf16.mxu0 0
    %5005 = vmatpush1.bf16.msra.mxu0 %v4802
    %5006 = vmatprep.subr.bf16.mxu0 0
    %5007 = vmatpush1.bf16.msra.mxu0 %v4803
    %5008 = vmatprep.subr.bf16.mxu0 0
    %5009 = vmatpush1.bf16.msra.mxu0 %v4804
    %5010 = vmatprep.subr.bf16.mxu0 0
    %5011 = vmatpush1.bf16.msra.mxu0 %v4805
    %5012 = vmatprep.subr.bf16.mxu0 0
    %5013 = vmatpush1.bf16.msra.mxu0 %v4806
    %5014 = vmatprep.subr.bf16.mxu0 0
    %5015 = vmatpush1.bf16.msra.mxu0 %v4807
    %5016 = vmatprep.mubr.bf16.mxu0 %v65
    %5017 = vmatmul.mubr.bf16.gmra.mrb[0].mxu0 %v64
    %v5018 = vpop.f32.mrb[0].mxu0
    %v5019 = vadd.f32 0.0, %v5018
    %v5020 = vpop.f32.mrb[0].mxu0
    %v5021 = vpop.f32.mrb[0].mxu0
    %v5022 = vpop.f32.mrb[0].mxu0
    %5023 = vdwg.mxu0
    %5024 = vmatprep.subr.bf16.mxu0 0
    %5025 = vmatpush1.bf16.msra.mxu0 %v4808
    %5026 = vmatprep.subr.bf16.mxu0 0
    %5027 = vmatpush1.bf16.msra.mxu0 %v4809
    %5028 = vmatprep.subr.bf16.mxu0 0
    %5029 = vmatpush1.bf16.msra.mxu0 %v4810
    %5030 = vmatprep.subr.bf16.mxu0 0
    %5031 = vmatpush1.bf16.msra.mxu0 %v4811
    %5032 = vmatprep.subr.bf16.mxu0 0
    %5033 = vmatpush1.bf16.msra.mxu0 %v4812
    %5034 = vmatprep.subr.bf16.mxu0 0
    %5035 = vmatpush1.bf16.msra.mxu0 %v4813
    %5036 = vmatprep.subr.bf16.mxu0 0
    %5037 = vmatpush1.bf16.msra.mxu0 %v4814
    %5038 = vmatprep.subr.bf16.mxu0 0
    %5039 = vmatpush1.bf16.msra.mxu0 %v4815
    %5040 = vmatprep.subr.bf16.mxu0 0
    %5041 = vmatpush1.bf16.msra.mxu0 %v4816
    %5042 = vmatprep.subr.bf16.mxu0 0
    %5043 = vmatpush1.bf16.msra.mxu0 %v4817
    %5044 = vmatprep.subr.bf16.mxu0 0
    %5045 = vmatpush1.bf16.msra.mxu0 %v4818
    %5046 = vmatprep.subr.bf16.mxu0 0
    %5047 = vmatpush1.bf16.msra.mxu0 %v4819
    %5048 = vmatprep.subr.bf16.mxu0 0
    %5049 = vmatpush1.bf16.msra.mxu0 %v4820
    %5050 = vmatprep.subr.bf16.mxu0 0
    %5051 = vmatpush1.bf16.msra.mxu0 %v4821
    %5052 = vmatprep.subr.bf16.mxu0 0
    %5053 = vmatpush1.bf16.msra.mxu0 %v4822
    %5054 = vmatprep.subr.bf16.mxu0 0
    %5055 = vmatpush1.bf16.msra.mxu0 %v4823
    %5056 = vmatprep.mubr.bf16.mxu0 %v67
    %5057 = vmatmul.mubr.bf16.gmra.mrb[0].mxu0 %v66
    %v5058 = vpop.f32.mrb[0].mxu0
    %v5059 = vadd.f32 %v5019, %v5058
    %v5060 = vpop.f32.mrb[0].mxu0
    %v5061 = vpop.f32.mrb[0].mxu0
    %v5062 = vpop.f32.mrb[0].mxu0
    %5063 = vdwg.mxu0
    %5064 = vmatprep.subr.bf16.mxu0 0
    %5065 = vmatpush1.bf16.msra.mxu0 %v4824
    %5066 = vmatprep.subr.bf16.mxu0 0
    %5067 = vmatpush1.bf16.msra.mxu0 %v4825
    %5068 = vmatprep.subr.bf16.mxu0 0
    %5069 = vmatpush1.bf16.msra.mxu0 %v4826
    %5070 = vmatprep.subr.bf16.mxu0 0
    %5071 = vmatpush1.bf16.msra.mxu0 %v4827
    %5072 = vmatprep.subr.bf16.mxu0 0
    %5073 = vmatpush1.bf16.msra.mxu0 %v4828
    %5074 = vmatprep.subr.bf16.mxu0 0
    %5075 = vmatpush1.bf16.msra.mxu0 %v4829
    %5076 = vmatprep.subr.bf16.mxu0 0
    %5077 = vmatpush1.bf16.msra.mxu0 %v4830
    %5078 = vmatprep.subr.bf16.mxu0 0
    %5079 = vmatpush1.bf16.msra.mxu0 %v4831
    %5080 = vmatprep.subr.bf16.mxu0 0
    %5081 = vmatpush1.bf16.msra.mxu0 %v4832
    %5082 = vmatprep.subr.bf16.mxu0 0
    %5083 = vmatpush1.bf16.msra.mxu0 %v4833
    %5084 = vmatprep.subr.bf16.mxu0 0
    %5085 = vmatpush1.bf16.msra.mxu0 %v4834
    %5086 = vmatprep.subr.bf16.mxu0 0
    %5087 = vmatpush1.bf16.msra.mxu0 %v4835
    %5088 = vmatprep.subr.bf16.mxu0 0
    %5089 = vmatpush1.bf16.msra.mxu0 %v4836
    %5090 = vmatprep.subr.bf16.mxu0 0
    %5091 = vmatpush1.bf16.msra.mxu0 %v4837
    %5092 = vmatprep.subr.bf16.mxu0 0
    %5093 = vmatpush1.bf16.msra.mxu0 %v4838
    %5094 = vmatprep.subr.bf16.mxu0 0
    %5095 = vmatpush1.bf16.msra.mxu0 %v4839
    %5096 = vmatprep.mubr.bf16.mxu0 %v69
    %5097 = vmatmul.mubr.bf16.gmra.mrb[0].mxu0 %v68
    %v5098 = vpop.f32.mrb[0].mxu0
    %v5099 = vadd.f32 %v5059, %v5098
    %v5100 = vpop.f32.mrb[0].mxu0
    %v5101 = vpop.f32.mrb[0].mxu0
    %v5102 = vpop.f32.mrb[0].mxu0
    %5103 = vdwg.mxu0
    %5104 = vmatprep.subr.bf16.mxu0 0
    %5105 = vmatpush1.bf16.msra.mxu0 %v4840
    %5106 = vmatprep.subr.bf16.mxu0 0
    %5107 = vmatpush1.bf16.msra.mxu0 %v4841
    %5108 = vmatprep.subr.bf16.mxu0 0
    %5109 = vmatpush1.bf16.msra.mxu0 %v4842
    %5110 = vmatprep.subr.bf16.mxu0 0
    %5111 = vmatpush1.bf16.msra.mxu0 %v4843
    %5112 = vmatprep.subr.bf16.mxu0 0
    %5113 = vmatpush1.bf16.msra.mxu0 %v4844
    %5114 = vmatprep.subr.bf16.mxu0 0
    %5115 = vmatpush1.bf16.msra.mxu0 %v4845
    %5116 = vmatprep.subr.bf16.mxu0 0
    %5117 = vmatpush1.bf16.msra.mxu0 %v4846
    %5118 = vmatprep.subr.bf16.mxu0 0
    %5119 = vmatpush1.bf16.msra.mxu0 %v4847
    %5120 = vmatprep.subr.bf16.mxu0 0
    %5121 = vmatpush1.bf16.msra.mxu0 %v4848
    %5122 = vmatprep.subr.bf16.mxu0 0
    %5123 = vmatpush1.bf16.msra.mxu0 %v4849
    %5124 = vmatprep.subr.bf16.mxu0 0
    %5125 = vmatpush1.bf16.msra.mxu0 %v4850
    %5126 = vmatprep.subr.bf16.mxu0 0
    %5127 = vmatpush1.bf16.msra.mxu0 %v4851
    %5128 = vmatprep.subr.bf16.mxu0 0
    %5129 = vmatpush1.bf16.msra.mxu0 %v4852
    %5130 = vmatprep.subr.bf16.mxu0 0
    %5131 = vmatpush1.bf16.msra.mxu0 %v4853
    %5132 = vmatprep.subr.bf16.mxu0 0
    %5133 = vmatpush1.bf16.msra.mxu0 %v4854
    %5134 = vmatprep.subr.bf16.mxu0 0
    %5135 = vmatpush1.bf16.msra.mxu0 %v4855
    %5136 = vmatprep.mubr.bf16.mxu0 %v71
    %5137 = vmatmul.mubr.bf16.gmra.mrb[0].mxu0 %v70
    %v5138 = vpop.f32.mrb[0].mxu0
    %v5139 = vadd.f32 %v5099, %v5138
    %v5140 = vpop.f32.mrb[0].mxu0
    %v5141 = vpop.f32.mrb[0].mxu0
    %v5142 = vpop.f32.mrb[0].mxu0
    %5143 = vdwg.mxu0
    %5144 = vmatprep.subr.bf16.mxu0 0
    %5145 = vmatpush1.bf16.msra.mxu0 %v4856
    %5146 = vmatprep.subr.bf16.mxu0 0
    %5147 = vmatpush1.bf16.msra.mxu0 %v4857
    %5148 = vmatprep.subr.bf16.mxu0 0
    %5149 = vmatpush1.bf16.msra.mxu0 %v4858
    %5150 = vmatprep.subr.bf16.mxu0 0
    %5151 = vmatpush1.bf16.msra.mxu0 %v4859
    %5152 = vmatprep.subr.bf16.mxu0 0
    %5153 = vmatpush1.bf16.msra.mxu0 %v4860
    %5154 = vmatprep.subr.bf16.mxu0 0
    %5155 = vmatpush1.bf16.msra.mxu0 %v4861
    %5156 = vmatprep.subr.bf16.mxu0 0
    %5157 = vmatpush1.bf16.msra.mxu0 %v4862
    %5158 = vmatprep.subr.bf16.mxu0 0
    %5159 = vmatpush1.bf16.msra.mxu0 %v4863
    %5160 = vmatprep.subr.bf16.mxu0 0
    %5161 = vmatpush1.bf16.msra.mxu0 %v4864
    %5162 = vmatprep.subr.bf16.mxu0 0
    %5163 = vmatpush1.bf16.msra.mxu0 %v4865
    %5164 = vmatprep.subr.bf16.mxu0 0
    %5165 = vmatpush1.bf16.msra.mxu0 %v4866
    %5166 = vmatprep.subr.bf16.mxu0 0
    %5167 = vmatpush1.bf16.msra.mxu0 %v4867
    %5168 = vmatprep.subr.bf16.mxu0 0
    %5169 = vmatpush1.bf16.msra.mxu0 %v4868
    %5170 = vmatprep.subr.bf16.mxu0 0
    %5171 = vmatpush1.bf16.msra.mxu0 %v4869
    %5172 = vmatprep.subr.bf16.mxu0 0
    %5173 = vmatpush1.bf16.msra.mxu0 %v4870
    %5174 = vmatprep.subr.bf16.mxu0 0
    %5175 = vmatpush1.bf16.msra.mxu0 %v4871
    %5176 = vmatprep.mubr.bf16.mxu0 %v73
    %5177 = vmatmul.mubr.bf16.gmra.mrb[0].mxu0 %v72
    %v5178 = vpop.f32.mrb[0].mxu0
    %v5179 = vadd.f32 %v5139, %v5178
    %v5180 = vpop.f32.mrb[0].mxu0
    %v5181 = vpop.f32.mrb[0].mxu0
    %v5182 = vpop.f32.mrb[0].mxu0
    %5183 = vdwg.mxu0
    %5184 = vmatprep.subr.bf16.mxu0 0
    %5185 = vmatpush1.bf16.msra.mxu0 %v4872
    %5186 = vmatprep.subr.bf16.mxu0 0
    %5187 = vmatpush1.bf16.msra.mxu0 %v4873
    %5188 = vmatprep.subr.bf16.mxu0 0
    %5189 = vmatpush1.bf16.msra.mxu0 %v4874
    %5190 = vmatprep.subr.bf16.mxu0 0
    %5191 = vmatpush1.bf16.msra.mxu0 %v4875
    %5192 = vmatprep.subr.bf16.mxu0 0
    %5193 = vmatpush1.bf16.msra.mxu0 %v4876
    %5194 = vmatprep.subr.bf16.mxu0 0
    %5195 = vmatpush1.bf16.msra.mxu0 %v4877
    %5196 = vmatprep.subr.bf16.mxu0 0
    %5197 = vmatpush1.bf16.msra.mxu0 %v4878
    %5198 = vmatprep.subr.bf16.mxu0 0
    %5199 = vmatpush1.bf16.msra.mxu0 %v4879
    %5200 = vmatprep.subr.bf16.mxu0 0
    %5201 = vmatpush1.bf16.msra.mxu0 %v4880
    %5202 = vmatprep.subr.bf16.mxu0 0
    %5203 = vmatpush1.bf16.msra.mxu0 %v4881
    %5204 = vmatprep.subr.bf16.mxu0 0
    %5205 = vmatpush1.bf16.msra.mxu0 %v4882
    %5206 = vmatprep.subr.bf16.mxu0 0
    %5207 = vmatpush1.bf16.msra.mxu0 %v4883
    %5208 = vmatprep.subr.bf16.mxu0 0
    %5209 = vmatpush1.bf16.msra.mxu0 %v4884
    %5210 = vmatprep.subr.bf16.mxu0 0
    %5211 = vmatpush1.bf16.msra.mxu0 %v4885
    %5212 = vmatprep.subr.bf16.mxu0 0
    %5213 = vmatpush1.bf16.msra.mxu0 %v4886
    %5214 = vmatprep.subr.bf16.mxu0 0
    %5215 = vmatpush1.bf16.msra.mxu0 %v4887
    %5216 = vmatprep.mubr.bf16.mxu0 %v75
    %5217 = vmatmul.mubr.bf16.gmra.mrb[0].mxu0 %v74
    %v5218 = vpop.f32.mrb[0].mxu0
    %v5219 = vadd.f32 %v5179, %v5218
    %v5220 = vpop.f32.mrb[0].mxu0
    %v5221 = vpop.f32.mrb[0].mxu0
    %v5222 = vpop.f32.mrb[0].mxu0
    %5223 = vdwg.mxu0
    %5224 = vmatprep.subr.bf16.mxu0 0
    %5225 = vmatpush1.bf16.msra.mxu0 %v4888
    %5226 = vmatprep.subr.bf16.mxu0 0
    %5227 = vmatpush1.bf16.msra.mxu0 %v4889
    %5228 = vmatprep.subr.bf16.mxu0 0
    %5229 = vmatpush1.bf16.msra.mxu0 %v4890
    %5230 = vmatprep.subr.bf16.mxu0 0
    %5231 = vmatpush1.bf16.msra.mxu0 %v4891
    %5232 = vmatprep.subr.bf16.mxu0 0
    %5233 = vmatpush1.bf16.msra.mxu0 %v4892
    %5234 = vmatprep.subr.bf16.mxu0 0
    %5235 = vmatpush1.bf16.msra.mxu0 %v4893
    %5236 = vmatprep.subr.bf16.mxu0 0
    %5237 = vmatpush1.bf16.msra.mxu0 %v4894
    %5238 = vmatprep.subr.bf16.mxu0 0
    %5239 = vmatpush1.bf16.msra.mxu0 %v4895
    %5240 = vmatprep.subr.bf16.mxu0 0
    %5241 = vmatpush1.bf16.msra.mxu0 %v4896
    %5242 = vmatprep.subr.bf16.mxu0 0
    %5243 = vmatpush1.bf16.msra.mxu0 %v4897
    %5244 = vmatprep.subr.bf16.mxu0 0
    %5245 = vmatpush1.bf16.msra.mxu0 %v4898
    %5246 = vmatprep.subr.bf16.mxu0 0
    %5247 = vmatpush1.bf16.msra.mxu0 %v4899
    %5248 = vmatprep.subr.bf16.mxu0 0
    %5249 = vmatpush1.bf16.msra.mxu0 %v4900
    %5250 = vmatprep.subr.bf16.mxu0 0
    %5251 = vmatpush1.bf16.msra.mxu0 %v4901
    %5252 = vmatprep.subr.bf16.mxu0 0
    %5253 = vmatpush1.bf16.msra.mxu0 %v4902
    %5254 = vmatprep.subr.bf16.mxu0 0
    %5255 = vmatpush1.bf16.msra.mxu0 %v4903
    %5256 = vmatprep.mubr.bf16.mxu0 %v77
    %5257 = vmatmul.mubr.bf16.gmra.mrb[0].mxu0 %v76
    %v5258 = vpop.f32.mrb[0].mxu0
    %v5259 = vadd.f32 %v5219, %v5258
    %v5260 = vpop.f32.mrb[0].mxu0
    %v5261 = vpop.f32.mrb[0].mxu0
    %v5262 = vpop.f32.mrb[0].mxu0
    %5263 = vdwg.mxu0
    %5264 = vmatprep.subr.bf16.mxu0 0
    %5265 = vmatpush1.bf16.msra.mxu0 %v4904
    %5266 = vmatprep.subr.bf16.mxu0 0
    %5267 = vmatpush1.bf16.msra.mxu0 %v4905
    %5268 = vmatprep.subr.bf16.mxu0 0
    %5269 = vmatpush1.bf16.msra.mxu0 %v4906
    %5270 = vmatprep.subr.bf16.mxu0 0
    %5271 = vmatpush1.bf16.msra.mxu0 %v4907
    %5272 = vmatprep.subr.bf16.mxu0 0
    %5273 = vmatpush1.bf16.msra.mxu0 %v4908
    %5274 = vmatprep.subr.bf16.mxu0 0
    %5275 = vmatpush1.bf16.msra.mxu0 %v4909
    %5276 = vmatprep.subr.bf16.mxu0 0
    %5277 = vmatpush1.bf16.msra.mxu0 %v4910
    %5278 = vmatprep.subr.bf16.mxu0 0
    %5279 = vmatpush1.bf16.msra.mxu0 %v4911
    %5280 = vmatprep.subr.bf16.mxu0 0
    %5281 = vmatpush1.bf16.msra.mxu0 %v4912
    %5282 = vmatprep.subr.bf16.mxu0 0
    %5283 = vmatpush1.bf16.msra.mxu0 %v4913
    %5284 = vmatprep.subr.bf16.mxu0 0
    %5285 = vmatpush1.bf16.msra.mxu0 %v4914
    %5286 = vmatprep.subr.bf16.mxu0 0
    %5287 = vmatpush1.bf16.msra.mxu0 %v4915
    %5288 = vmatprep.subr.bf16.mxu0 0
    %5289 = vmatpush1.bf16.msra.mxu0 %v4916
    %5290 = vmatprep.subr.bf16.mxu0 0
    %5291 = vmatpush1.bf16.msra.mxu0 %v4917
    %5292 = vmatprep.subr.bf16.mxu0 0
    %5293 = vmatpush1.bf16.msra.mxu0 %v4918
    %5294 = vmatprep.subr.bf16.mxu0 0
    %5295 = vmatpush1.bf16.msra.mxu0 %v4919
    %5296 = vmatprep.mubr.bf16.mxu0 %v79
    %5297 = vmatmul.mubr.bf16.gmra.mrb[0].mxu0 %v78
    %v5298 = vpop.f32.mrb[0].mxu0
    %v5299 = vadd.f32 %v5259, %v5298
    %v5300 = vpop.f32.mrb[0].mxu0
    %v5301 = vpop.f32.mrb[0].mxu0
    %v5302 = vpop.f32.mrb[0].mxu0
    %5303 = vdwg.mxu0
    %5304 = vmatprep.subr.bf16.mxu0 0
    %5305 = vmatpush1.bf16.msra.mxu0 %v4920
    %5306 = vmatprep.subr.bf16.mxu0 0
    %5307 = vmatpush1.bf16.msra.mxu0 %v4921
    %5308 = vmatprep.subr.bf16.mxu0 0
    %5309 = vmatpush1.bf16.msra.mxu0 %v4922
    %5310 = vmatprep.subr.bf16.mxu0 0
    %5311 = vmatpush1.bf16.msra.mxu0 %v4923
    %5312 = vmatprep.subr.bf16.mxu0 0
    %5313 = vmatpush1.bf16.msra.mxu0 %v4924
    %5314 = vmatprep.subr.bf16.mxu0 0
    %5315 = vmatpush1.bf16.msra.mxu0 %v4925
    %5316 = vmatprep.subr.bf16.mxu0 0
    %5317 = vmatpush1.bf16.msra.mxu0 %v4926
    %5318 = vmatprep.subr.bf16.mxu0 0
    %5319 = vmatpush1.bf16.msra.mxu0 %v4927
    %5320 = vmatprep.subr.bf16.mxu0 0
    %5321 = vmatpush1.bf16.msra.mxu0 %v4928
    %5322 = vmatprep.subr.bf16.mxu0 0
    %5323 = vmatpush1.bf16.msra.mxu0 %v4929
    %5324 = vmatprep.subr.bf16.mxu0 0
    %5325 = vmatpush1.bf16.msra.mxu0 %v4930
    %5326 = vmatprep.subr.bf16.mxu0 0
    %5327 = vmatpush1.bf16.msra.mxu0 %v4931
    %5328 = vmatprep.subr.bf16.mxu0 0
    %5329 = vmatpush1.bf16.msra.mxu0 %v4932
    %5330 = vmatprep.subr.bf16.mxu0 0
    %5331 = vmatpush1.bf16.msra.mxu0 %v4933
    %5332 = vmatprep.subr.bf16.mxu0 0
    %5333 = vmatpush1.bf16.msra.mxu0 %v4934
    %5334 = vmatprep.subr.bf16.mxu0 0
    %5335 = vmatpush1.bf16.msra.mxu0 %v4935
    %5336 = vmatprep.mubr.bf16.mxu0 %v81
    %5337 = vmatmul.mubr.bf16.gmra.mrb[0].mxu0 %v80
    %v5338 = vpop.f32.mrb[0].mxu0
    %v5339 = vadd.f32 %v5299, %v5338
    %v5340 = vpop.f32.mrb[0].mxu0
    %v5341 = vpop.f32.mrb[0].mxu0
    %v5342 = vpop.f32.mrb[0].mxu0
    %5343 = vdwg.mxu0
    %5344 = vmatprep.subr.bf16.mxu0 0
    %5345 = vmatpush1.bf16.msra.mxu0 %v4936
    %5346 = vmatprep.subr.bf16.mxu0 0
    %5347 = vmatpush1.bf16.msra.mxu0 %v4937
    %5348 = vmatprep.subr.bf16.mxu0 0
    %5349 = vmatpush1.bf16.msra.mxu0 %v4938
    %5350 = vmatprep.subr.bf16.mxu0 0
    %5351 = vmatpush1.bf16.msra.mxu0 %v4939
    %5352 = vmatprep.subr.bf16.mxu0 0
    %5353 = vmatpush1.bf16.msra.mxu0 %v4940
    %5354 = vmatprep.subr.bf16.mxu0 0
    %5355 = vmatpush1.bf16.msra.mxu0 %v4941
    %5356 = vmatprep.subr.bf16.mxu0 0
    %5357 = vmatpush1.bf16.msra.mxu0 %v4942
    %5358 = vmatprep.subr.bf16.mxu0 0
    %5359 = vmatpush1.bf16.msra.mxu0 %v4943
    %5360 = vmatprep.subr.bf16.mxu0 0
    %5361 = vmatpush1.bf16.msra.mxu0 %v4944
    %5362 = vmatprep.subr.bf16.mxu0 0
    %5363 = vmatpush1.bf16.msra.mxu0 %v4945
    %5364 = vmatprep.subr.bf16.mxu0 0
    %5365 = vmatpush1.bf16.msra.mxu0 %v4946
    %5366 = vmatprep.subr.bf16.mxu0 0
    %5367 = vmatpush1.bf16.msra.mxu0 %v4947
    %5368 = vmatprep.subr.bf16.mxu0 0
    %5369 = vmatpush1.bf16.msra.mxu0 %v4948
    %5370 = vmatprep.subr.bf16.mxu0 0
    %5371 = vmatpush1.bf16.msra.mxu0 %v4949
    %5372 = vmatprep.subr.bf16.mxu0 0
    %5373 = vmatpush1.bf16.msra.mxu0 %v4950
    %5374 = vmatprep.subr.bf16.mxu0 0
    %5375 = vmatpush1.bf16.msra.mxu0 %v4951
    %5376 = vmatprep.mubr.bf16.mxu0 %v83
    %5377 = vmatmul.mubr.bf16.gmra.mrb[0].mxu0 %v82
    %v5378 = vpop.f32.mrb[0].mxu0
    %v5379 = vadd.f32 %v5339, %v5378
    %v5380 = vpop.f32.mrb[0].mxu0
    %v5381 = vpop.f32.mrb[0].mxu0
    %v5382 = vpop.f32.mrb[0].mxu0
    %5383 = vdwg.mxu0
    %5384 = vmatprep.subr.bf16.mxu0 0
    %5385 = vmatpush1.bf16.msra.mxu0 %v4952
    %5386 = vmatprep.subr.bf16.mxu0 0
    %5387 = vmatpush1.bf16.msra.mxu0 %v4953
    %5388 = vmatprep.subr.bf16.mxu0 0
    %5389 = vmatpush1.bf16.msra.mxu0 %v4954
    %5390 = vmatprep.subr.bf16.mxu0 0
    %5391 = vmatpush1.bf16.msra.mxu0 %v4955
    %5392 = vmatprep.subr.bf16.mxu0 0
    %5393 = vmatpush1.bf16.msra.mxu0 %v4956
    %5394 = vmatprep.subr.bf16.mxu0 0
    %5395 = vmatpush1.bf16.msra.mxu0 %v4957
    %5396 = vmatprep.subr.bf16.mxu0 0
    %5397 = vmatpush1.bf16.msra.mxu0 %v4958
    %5398 = vmatprep.subr.bf16.mxu0 0
    %5399 = vmatpush1.bf16.msra.mxu0 %v4959
    %5400 = vmatprep.subr.bf16.mxu0 0
    %5401 = vmatpush1.bf16.msra.mxu0 %v4960
    %5402 = vmatprep.subr.bf16.mxu0 0
    %5403 = vmatpush1.bf16.msra.mxu0 %v4961
    %5404 = vmatprep.subr.bf16.mxu0 0
    %5405 = vmatpush1.bf16.msra.mxu0 %v4962
    %5406 = vmatprep.subr.bf16.mxu0 0
    %5407 = vmatpush1.bf16.msra.mxu0 %v4963
    %5408 = vmatprep.subr.bf16.mxu0 0
    %5409 = vmatpush1.bf16.msra.mxu0 %v4964
    %5410 = vmatprep.subr.bf16.mxu0 0
    %5411 = vmatpush1.bf16.msra.mxu0 %v4965
    %5412 = vmatprep.subr.bf16.mxu0 0
    %5413 = vmatpush1.bf16.msra.mxu0 %v4966
    %5414 = vmatprep.subr.bf16.mxu0 0
    %5415 = vmatpush1.bf16.msra.mxu0 %v4967
    %5416 = vmatprep.mubr.bf16.mxu0 %v85
    %5417 = vmatmul.mubr.bf16.gmra.mrb[0].mxu0 %v84
    %v5418 = vpop.f32.mrb[0].mxu0
    %v5419 = vadd.f32 %v5379, %v5418
    %v5420 = vpop.f32.mrb[0].mxu0
    %v5421 = vpop.f32.mrb[0].mxu0
    %v5422 = vpop.f32.mrb[0].mxu0
    %5423 = vdwg.mxu0
    %5424 = vmatprep.subr.bf16.mxu0 0
    %5425 = vmatpush1.bf16.msra.mxu0 %v4968
    %5426 = vmatprep.subr.bf16.mxu0 0
    %5427 = vmatpush1.bf16.msra.mxu0 %v4969
    %5428 = vmatprep.subr.bf16.mxu0 0
    %5429 = vmatpush1.bf16.msra.mxu0 %v4970
    %5430 = vmatprep.subr.bf16.mxu0 0
    %5431 = vmatpush1.bf16.msra.mxu0 %v4971
    %5432 = vmatprep.subr.bf16.mxu0 0
    %5433 = vmatpush1.bf16.msra.mxu0 %v4972
    %5434 = vmatprep.subr.bf16.mxu0 0
    %5435 = vmatpush1.bf16.msra.mxu0 %v4973
    %5436 = vmatprep.subr.bf16.mxu0 0
    %5437 = vmatpush1.bf16.msra.mxu0 %v4974
    %5438 = vmatprep.subr.bf16.mxu0 0
    %5439 = vmatpush1.bf16.msra.mxu0 %v4975
    %5440 = vmatprep.subr.bf16.mxu0 0
    %5441 = vmatpush1.bf16.msra.mxu0 %v4976
    %5442 = vmatprep.subr.bf16.mxu0 0
    %5443 = vmatpush1.bf16.msra.mxu0 %v4977
    %5444 = vmatprep.subr.bf16.mxu0 0
    %5445 = vmatpush1.bf16.msra.mxu0 %v4978
    %5446 = vmatprep.subr.bf16.mxu0 0
    %5447 = vmatpush1.bf16.msra.mxu0 %v4979
    %5448 = vmatprep.subr.bf16.mxu0 0
    %5449 = vmatpush1.bf16.msra.mxu0 %v4980
    %5450 = vmatprep.subr.bf16.mxu0 0
    %5451 = vmatpush1.bf16.msra.mxu0 %v4981
    %5452 = vmatprep.subr.bf16.mxu0 0
    %5453 = vmatpush1.bf16.msra.mxu0 %v4982
    %5454 = vmatprep.subr.bf16.mxu0 0
    %5455 = vmatpush1.bf16.msra.mxu0 %v4983
    %5456 = vmatprep.mubr.bf16.mxu0 %v87
    %5457 = vmatmul.mubr.bf16.gmra.mrb[0].mxu0 %v86
    %v5458 = vpop.f32.mrb[0].mxu0
    %v5459 = vadd.f32 %v5419, %v5458
    %v5460 = vpop.f32.mrb[0].mxu0
    %v5461 = vpop.f32.mrb[0].mxu0
    %v5462 = vpop.f32.mrb[0].mxu0
    %5463 = vdwg.mxu0
    %v5464 = vld [vmem:[#allocation4] sm:$0xff]
    %v5466 = vlaneseq
    %v5467 = vshrl.u32 %v5466, 7
    %v5468 = vsub.s32 0, %v5467
    %v5469 = vrot.slane %v5464, %v5468
    %v5470 = vlaneseq
    %v5471 = vshrl.u32 %v5470, 7
    %v5472 = vsub.s32 1, %v5471
    %v5473 = vrot.slane %v5464, %v5472
    %v5474 = vlaneseq
    %v5475 = vshrl.u32 %v5474, 7
    %v5476 = vsub.s32 2, %v5475
    %v5477 = vrot.slane %v5464, %v5476
    %v5478 = vlaneseq
    %v5479 = vshrl.u32 %v5478, 7
    %v5480 = vsub.s32 3, %v5479
    %v5481 = vrot.slane %v5464, %v5480
    %v5482 = vlaneseq
    %v5483 = vshrl.u32 %v5482, 7
    %v5484 = vsub.s32 4, %v5483
    %v5485 = vrot.slane %v5464, %v5484
    %v5486 = vlaneseq
    %v5487 = vshrl.u32 %v5486, 7
    %v5488 = vsub.s32 5, %v5487
    %v5489 = vrot.slane %v5464, %v5488
    %v5490 = vlaneseq
    %v5491 = vshrl.u32 %v5490, 7
    %v5492 = vsub.s32 6, %v5491
    %v5493 = vrot.slane %v5464, %v5492
    %v5494 = vlaneseq
    %v5495 = vshrl.u32 %v5494, 7
    %v5496 = vsub.s32 7, %v5495
    %v5497 = vrot.slane %v5464, %v5496
    %v5506 = vadd.f32 %v755, %v5469
    %v5507 = vadd.f32 %v1427, %v5473
    %v5508 = vadd.f32 %v2099, %v5477
    %v5509 = vadd.f32 %v2771, %v5481
    %v5510 = vadd.f32 %v3443, %v5485
    %v5511 = vadd.f32 %v4115, %v5489
    %v5512 = vadd.f32 %v4787, %v5493
    %v5513 = vadd.f32 %v5459, %v5497
    %v5514 = vmax.f32 %v5506, 0.0
    %v5515 = vmax.f32 %v5507, 0.0
    %v5516 = vmax.f32 %v5508, 0.0
    %v5517 = vmax.f32 %v5509, 0.0
    %v5518 = vmax.f32 %v5510, 0.0
    %v5519 = vmax.f32 %v5511, 0.0
    %v5520 = vmax.f32 %v5512, 0.0
    %v5521 = vmax.f32 %v5513, 0.0
    %v5522 = vpack.c.bf16 %v5514, %v5514
    %v5523 = vpack.c.bf16 %v5515, %v5515
    %v5524 = vpack.c.bf16 %v5516, %v5516
    %v5525 = vpack.c.bf16 %v5517, %v5517
    %v5526 = vpack.c.bf16 %v5518, %v5518
    %v5527 = vpack.c.bf16 %v5519, %v5519
    %v5528 = vpack.c.bf16 %v5520, %v5520
    %v5529 = vpack.c.bf16 %v5521, %v5521
    %v5530 = vld [vmem:[#allocation2 + $0x3000] sm:$0xff]
    %v5531 = vld [vmem:[#allocation2 + $0x3008] sm:$0xff]
    %v5532 = vld [vmem:[#allocation2 + $0x3010] sm:$0xff]
    %v5533 = vld [vmem:[#allocation2 + $0x3018] sm:$0xff]
    %v5534 = vld [vmem:[#allocation2 + $0x3020] sm:$0xff]
    %v5535 = vld [vmem:[#allocation2 + $0x3028] sm:$0xff]
    %v5536 = vld [vmem:[#allocation2 + $0x3030] sm:$0xff]
    %v5537 = vld [vmem:[#allocation2 + $0x3038] sm:$0xff]
    %v5538 = vld [vmem:[#allocation2 + $0x3040] sm:$0xff]
    %v5539 = vld [vmem:[#allocation2 + $0x3048] sm:$0xff]
    %v5540 = vld [vmem:[#allocation2 + $0x3050] sm:$0xff]
    %v5541 = vld [vmem:[#allocation2 + $0x3058] sm:$0xff]
    %v5542 = vld [vmem:[#allocation2 + $0x3060] sm:$0xff]
    %v5543 = vld [vmem:[#allocation2 + $0x3068] sm:$0xff]
    %v5544 = vld [vmem:[#allocation2 + $0x3070] sm:$0xff]
    %v5545 = vld [vmem:[#allocation2 + $0x3078] sm:$0xff]
    %v5546 = vld [vmem:[#allocation2 + $0x3080] sm:$0xff]
    %v5547 = vld [vmem:[#allocation2 + $0x3088] sm:$0xff]
    %v5548 = vld [vmem:[#allocation2 + $0x3090] sm:$0xff]
    %v5549 = vld [vmem:[#allocation2 + $0x3098] sm:$0xff]
    %v5550 = vld [vmem:[#allocation2 + $0x30a0] sm:$0xff]
    %v5551 = vld [vmem:[#allocation2 + $0x30a8] sm:$0xff]
    %v5552 = vld [vmem:[#allocation2 + $0x30b0] sm:$0xff]
    %v5553 = vld [vmem:[#allocation2 + $0x30b8] sm:$0xff]
    %v5554 = vld [vmem:[#allocation2 + $0x30c0] sm:$0xff]
    %v5555 = vld [vmem:[#allocation2 + $0x30c8] sm:$0xff]
    %v5556 = vld [vmem:[#allocation2 + $0x30d0] sm:$0xff]
    %v5557 = vld [vmem:[#allocation2 + $0x30d8] sm:$0xff]
    %v5558 = vld [vmem:[#allocation2 + $0x30e0] sm:$0xff]
    %v5559 = vld [vmem:[#allocation2 + $0x30e8] sm:$0xff]
    %v5560 = vld [vmem:[#allocation2 + $0x30f0] sm:$0xff]
    %v5561 = vld [vmem:[#allocation2 + $0x30f8] sm:$0xff]
    %v5562 = vld [vmem:[#allocation2 + $0x3100] sm:$0xff]
    %v5563 = vld [vmem:[#allocation2 + $0x3108] sm:$0xff]
    %v5564 = vld [vmem:[#allocation2 + $0x3110] sm:$0xff]
    %v5565 = vld [vmem:[#allocation2 + $0x3118] sm:$0xff]
    %v5566 = vld [vmem:[#allocation2 + $0x3120] sm:$0xff]
    %v5567 = vld [vmem:[#allocation2 + $0x3128] sm:$0xff]
    %v5568 = vld [vmem:[#allocation2 + $0x3130] sm:$0xff]
    %v5569 = vld [vmem:[#allocation2 + $0x3138] sm:$0xff]
    %v5570 = vld [vmem:[#allocation2 + $0x3140] sm:$0xff]
    %v5571 = vld [vmem:[#allocation2 + $0x3148] sm:$0xff]
    %v5572 = vld [vmem:[#allocation2 + $0x3150] sm:$0xff]
    %v5573 = vld [vmem:[#allocation2 + $0x3158] sm:$0xff]
    %v5574 = vld [vmem:[#allocation2 + $0x3160] sm:$0xff]
    %v5575 = vld [vmem:[#allocation2 + $0x3168] sm:$0xff]
    %v5576 = vld [vmem:[#allocation2 + $0x3170] sm:$0xff]
    %v5577 = vld [vmem:[#allocation2 + $0x3178] sm:$0xff]
    %v5578 = vld [vmem:[#allocation2 + $0x3180] sm:$0xff]
    %v5579 = vld [vmem:[#allocation2 + $0x3188] sm:$0xff]
    %v5580 = vld [vmem:[#allocation2 + $0x3190] sm:$0xff]
    %v5581 = vld [vmem:[#allocation2 + $0x3198] sm:$0xff]
    %v5582 = vld [vmem:[#allocation2 + $0x31a0] sm:$0xff]
    %v5583 = vld [vmem:[#allocation2 + $0x31a8] sm:$0xff]
    %v5584 = vld [vmem:[#allocation2 + $0x31b0] sm:$0xff]
    %v5585 = vld [vmem:[#allocation2 + $0x31b8] sm:$0xff]
    %v5586 = vld [vmem:[#allocation2 + $0x31c0] sm:$0xff]
    %v5587 = vld [vmem:[#allocation2 + $0x31c8] sm:$0xff]
    %v5588 = vld [vmem:[#allocation2 + $0x31d0] sm:$0xff]
    %v5589 = vld [vmem:[#allocation2 + $0x31d8] sm:$0xff]
    %v5590 = vld [vmem:[#allocation2 + $0x31e0] sm:$0xff]
    %v5591 = vld [vmem:[#allocation2 + $0x31e8] sm:$0xff]
    %v5592 = vld [vmem:[#allocation2 + $0x31f0] sm:$0xff]
    %v5593 = vld [vmem:[#allocation2 + $0x31f8] sm:$0xff]
    %5594 = vmatprep.subr.bf16.mxu0 0
    %5595 = vmatpush1.bf16.msra.mxu0 %v5530
    %5596 = vmatprep.subr.bf16.mxu0 0
    %5597 = vmatpush1.bf16.msra.mxu0 %v5531
    %5598 = vmatprep.subr.bf16.mxu0 0
    %5599 = vmatpush1.bf16.msra.mxu0 %v5532
    %5600 = vmatprep.subr.bf16.mxu0 0
    %5601 = vmatpush1.bf16.msra.mxu0 %v5533
    %5602 = vmatprep.subr.bf16.mxu0 0
    %5603 = vmatpush1.bf16.msra.mxu0 %v5534
    %5604 = vmatprep.subr.bf16.mxu0 0
    %5605 = vmatpush1.bf16.msra.mxu0 %v5535
    %5606 = vmatprep.subr.bf16.mxu0 0
    %5607 = vmatpush1.bf16.msra.mxu0 %v5536
    %5608 = vmatprep.subr.bf16.mxu0 0
    %5609 = vmatpush1.bf16.msra.mxu0 %v5537
    %5610 = vmatprep.subr.bf16.mxu0 0
    %5611 = vmatpush1.bf16.msra.mxu0 %v5538
    %5612 = vmatprep.subr.bf16.mxu0 0
    %5613 = vmatpush1.bf16.msra.mxu0 %v5539
    %5614 = vmatprep.subr.bf16.mxu0 0
    %5615 = vmatpush1.bf16.msra.mxu0 %v5540
    %5616 = vmatprep.subr.bf16.mxu0 0
    %5617 = vmatpush1.bf16.msra.mxu0 %v5541
    %5618 = vmatprep.subr.bf16.mxu0 0
    %5619 = vmatpush1.bf16.msra.mxu0 %v5542
    %5620 = vmatprep.subr.bf16.mxu0 0
    %5621 = vmatpush1.bf16.msra.mxu0 %v5543
    %5622 = vmatprep.subr.bf16.mxu0 0
    %5623 = vmatpush1.bf16.msra.mxu0 %v5544
    %5624 = vmatprep.subr.bf16.mxu0 0
    %5625 = vmatpush1.bf16.msra.mxu0 %v5545
    %5626 = vmatprep.mubr.bf16.mxu0 %v5523
    %5627 = vmatmul.mubr.bf16.gmra.mrb[0].mxu0 %v5522
    %v5628 = vpop.f32.mrb[0].mxu0
    %v5629 = vadd.f32 0.0, %v5628
    %v5630 = vpop.f32.mrb[0].mxu0
    %v5631 = vpop.f32.mrb[0].mxu0
    %v5632 = vpop.f32.mrb[0].mxu0
    %5633 = vdwg.mxu0
    %5634 = vmatprep.subr.bf16.mxu0 0
    %5635 = vmatpush1.bf16.msra.mxu0 %v5546
    %5636 = vmatprep.subr.bf16.mxu0 0
    %5637 = vmatpush1.bf16.msra.mxu0 %v5547
    %5638 = vmatprep.subr.bf16.mxu0 0
    %5639 = vmatpush1.bf16.msra.mxu0 %v5548
    %5640 = vmatprep.subr.bf16.mxu0 0
    %5641 = vmatpush1.bf16.msra.mxu0 %v5549
    %5642 = vmatprep.subr.bf16.mxu0 0
    %5643 = vmatpush1.bf16.msra.mxu0 %v5550
    %5644 = vmatprep.subr.bf16.mxu0 0
    %5645 = vmatpush1.bf16.msra.mxu0 %v5551
    %5646 = vmatprep.subr.bf16.mxu0 0
    %5647 = vmatpush1.bf16.msra.mxu0 %v5552
    %5648 = vmatprep.subr.bf16.mxu0 0
    %5649 = vmatpush1.bf16.msra.mxu0 %v5553
    %5650 = vmatprep.subr.bf16.mxu0 0
    %5651 = vmatpush1.bf16.msra.mxu0 %v5554
    %5652 = vmatprep.subr.bf16.mxu0 0
    %5653 = vmatpush1.bf16.msra.mxu0 %v5555
    %5654 = vmatprep.subr.bf16.mxu0 0
    %5655 = vmatpush1.bf16.msra.mxu0 %v5556
    %5656 = vmatprep.subr.bf16.mxu0 0
    %5657 = vmatpush1.bf16.msra.mxu0 %v5557
    %5658 = vmatprep.subr.bf16.mxu0 0
    %5659 = vmatpush1.bf16.msra.mxu0 %v5558
    %5660 = vmatprep.subr.bf16.mxu0 0
    %5661 = vmatpush1.bf16.msra.mxu0 %v5559
    %5662 = vmatprep.subr.bf16.mxu0 0
    %5663 = vmatpush1.bf16.msra.mxu0 %v5560
    %5664 = vmatprep.subr.bf16.mxu0 0
    %5665 = vmatpush1.bf16.msra.mxu0 %v5561
    %5666 = vmatprep.mubr.bf16.mxu0 %v5525
    %5667 = vmatmul.mubr.bf16.gmra.mrb[0].mxu0 %v5524
    %v5668 = vpop.f32.mrb[0].mxu0
    %v5669 = vadd.f32 %v5629, %v5668
    %v5670 = vpop.f32.mrb[0].mxu0
    %v5671 = vpop.f32.mrb[0].mxu0
    %v5672 = vpop.f32.mrb[0].mxu0
    %5673 = vdwg.mxu0
    %5674 = vmatprep.subr.bf16.mxu0 0
    %5675 = vmatpush1.bf16.msra.mxu0 %v5562
    %5676 = vmatprep.subr.bf16.mxu0 0
    %5677 = vmatpush1.bf16.msra.mxu0 %v5563
    %5678 = vmatprep.subr.bf16.mxu0 0
    %5679 = vmatpush1.bf16.msra.mxu0 %v5564
    %5680 = vmatprep.subr.bf16.mxu0 0
    %5681 = vmatpush1.bf16.msra.mxu0 %v5565
    %5682 = vmatprep.subr.bf16.mxu0 0
    %5683 = vmatpush1.bf16.msra.mxu0 %v5566
    %5684 = vmatprep.subr.bf16.mxu0 0
    %5685 = vmatpush1.bf16.msra.mxu0 %v5567
    %5686 = vmatprep.subr.bf16.mxu0 0
    %5687 = vmatpush1.bf16.msra.mxu0 %v5568
    %5688 = vmatprep.subr.bf16.mxu0 0
    %5689 = vmatpush1.bf16.msra.mxu0 %v5569
    %5690 = vmatprep.subr.bf16.mxu0 0
    %5691 = vmatpush1.bf16.msra.mxu0 %v5570
    %5692 = vmatprep.subr.bf16.mxu0 0
    %5693 = vmatpush1.bf16.msra.mxu0 %v5571
    %5694 = vmatprep.subr.bf16.mxu0 0
    %5695 = vmatpush1.bf16.msra.mxu0 %v5572
    %5696 = vmatprep.subr.bf16.mxu0 0
    %5697 = vmatpush1.bf16.msra.mxu0 %v5573
    %5698 = vmatprep.subr.bf16.mxu0 0
    %5699 = vmatpush1.bf16.msra.mxu0 %v5574
    %5700 = vmatprep.subr.bf16.mxu0 0
    %5701 = vmatpush1.bf16.msra.mxu0 %v5575
    %5702 = vmatprep.subr.bf16.mxu0 0
    %5703 = vmatpush1.bf16.msra.mxu0 %v5576
    %5704 = vmatprep.subr.bf16.mxu0 0
    %5705 = vmatpush1.bf16.msra.mxu0 %v5577
    %5706 = vmatprep.mubr.bf16.mxu0 %v5527
    %5707 = vmatmul.mubr.bf16.gmra.mrb[0].mxu0 %v5526
    %v5708 = vpop.f32.mrb[0].mxu0
    %v5709 = vadd.f32 %v5669, %v5708
    %v5710 = vpop.f32.mrb[0].mxu0
    %v5711 = vpop.f32.mrb[0].mxu0
    %v5712 = vpop.f32.mrb[0].mxu0
    %5713 = vdwg.mxu0
    %5714 = vmatprep.subr.bf16.mxu0 0
    %5715 = vmatpush1.bf16.msra.mxu0 %v5578
    %5716 = vmatprep.subr.bf16.mxu0 0
    %5717 = vmatpush1.bf16.msra.mxu0 %v5579
    %5718 = vmatprep.subr.bf16.mxu0 0
    %5719 = vmatpush1.bf16.msra.mxu0 %v5580
    %5720 = vmatprep.subr.bf16.mxu0 0
    %5721 = vmatpush1.bf16.msra.mxu0 %v5581
    %5722 = vmatprep.subr.bf16.mxu0 0
    %5723 = vmatpush1.bf16.msra.mxu0 %v5582
    %5724 = vmatprep.subr.bf16.mxu0 0
    %5725 = vmatpush1.bf16.msra.mxu0 %v5583
    %5726 = vmatprep.subr.bf16.mxu0 0
    %5727 = vmatpush1.bf16.msra.mxu0 %v5584
    %5728 = vmatprep.subr.bf16.mxu0 0
    %5729 = vmatpush1.bf16.msra.mxu0 %v5585
    %5730 = vmatprep.subr.bf16.mxu0 0
    %5731 = vmatpush1.bf16.msra.mxu0 %v5586
    %5732 = vmatprep.subr.bf16.mxu0 0
    %5733 = vmatpush1.bf16.msra.mxu0 %v5587
    %5734 = vmatprep.subr.bf16.mxu0 0
    %5735 = vmatpush1.bf16.msra.mxu0 %v5588
    %5736 = vmatprep.subr.bf16.mxu0 0
    %5737 = vmatpush1.bf16.msra.mxu0 %v5589
    %5738 = vmatprep.subr.bf16.mxu0 0
    %5739 = vmatpush1.bf16.msra.mxu0 %v5590
    %5740 = vmatprep.subr.bf16.mxu0 0
    %5741 = vmatpush1.bf16.msra.mxu0 %v5591
    %5742 = vmatprep.subr.bf16.mxu0 0
    %5743 = vmatpush1.bf16.msra.mxu0 %v5592
    %5744 = vmatprep.subr.bf16.mxu0 0
    %5745 = vmatpush1.bf16.msra.mxu0 %v5593
    %5746 = vmatprep.mubr.bf16.mxu0 %v5529
    %5747 = vmatmul.mubr.bf16.gmra.mrb[0].mxu0 %v5528
    %v5748 = vpop.f32.mrb[0].mxu0
    %v5749 = vadd.f32 %v5709, %v5748
    %v5750 = vpop.f32.mrb[0].mxu0
    %v5751 = vpop.f32.mrb[0].mxu0
    %v5752 = vpop.f32.mrb[0].mxu0
    %5753 = vdwg.mxu0
    %v5754 = vld [vmem:[#allocation2 + $0x3200] sm:$0xff]
    %v5755 = vld [vmem:[#allocation2 + $0x3208] sm:$0xff]
    %v5756 = vld [vmem:[#allocation2 + $0x3210] sm:$0xff]
    %v5757 = vld [vmem:[#allocation2 + $0x3218] sm:$0xff]
    %v5758 = vld [vmem:[#allocation2 + $0x3220] sm:$0xff]
    %v5759 = vld [vmem:[#allocation2 + $0x3228] sm:$0xff]
    %v5760 = vld [vmem:[#allocation2 + $0x3230] sm:$0xff]
    %v5761 = vld [vmem:[#allocation2 + $0x3238] sm:$0xff]
    %v5762 = vld [vmem:[#allocation2 + $0x3240] sm:$0xff]
    %v5763 = vld [vmem:[#allocation2 + $0x3248] sm:$0xff]
    %v5764 = vld [vmem:[#allocation2 + $0x3250] sm:$0xff]
    %v5765 = vld [vmem:[#allocation2 + $0x3258] sm:$0xff]
    %v5766 = vld [vmem:[#allocation2 + $0x3260] sm:$0xff]
    %v5767 = vld [vmem:[#allocation2 + $0x3268] sm:$0xff]
    %v5768 = vld [vmem:[#allocation2 + $0x3270] sm:$0xff]
    %v5769 = vld [vmem:[#allocation2 + $0x3278] sm:$0xff]
    %v5770 = vld [vmem:[#allocation2 + $0x3280] sm:$0xff]
    %v5771 = vld [vmem:[#allocation2 + $0x3288] sm:$0xff]
    %v5772 = vld [vmem:[#allocation2 + $0x3290] sm:$0xff]
    %v5773 = vld [vmem:[#allocation2 + $0x3298] sm:$0xff]
    %v5774 = vld [vmem:[#allocation2 + $0x32a0] sm:$0xff]
    %v5775 = vld [vmem:[#allocation2 + $0x32a8] sm:$0xff]
    %v5776 = vld [vmem:[#allocation2 + $0x32b0] sm:$0xff]
    %v5777 = vld [vmem:[#allocation2 + $0x32b8] sm:$0xff]
    %v5778 = vld [vmem:[#allocation2 + $0x32c0] sm:$0xff]
    %v5779 = vld [vmem:[#allocation2 + $0x32c8] sm:$0xff]
    %v5780 = vld [vmem:[#allocation2 + $0x32d0] sm:$0xff]
    %v5781 = vld [vmem:[#allocation2 + $0x32d8] sm:$0xff]
    %v5782 = vld [vmem:[#allocation2 + $0x32e0] sm:$0xff]
    %v5783 = vld [vmem:[#allocation2 + $0x32e8] sm:$0xff]
    %v5784 = vld [vmem:[#allocation2 + $0x32f0] sm:$0xff]
    %v5785 = vld [vmem:[#allocation2 + $0x32f8] sm:$0xff]
    %v5786 = vld [vmem:[#allocation2 + $0x3300] sm:$0xff]
    %v5787 = vld [vmem:[#allocation2 + $0x3308] sm:$0xff]
    %v5788 = vld [vmem:[#allocation2 + $0x3310] sm:$0xff]
    %v5789 = vld [vmem:[#allocation2 + $0x3318] sm:$0xff]
    %v5790 = vld [vmem:[#allocation2 + $0x3320] sm:$0xff]
    %v5791 = vld [vmem:[#allocation2 + $0x3328] sm:$0xff]
    %v5792 = vld [vmem:[#allocation2 + $0x3330] sm:$0xff]
    %v5793 = vld [vmem:[#allocation2 + $0x3338] sm:$0xff]
    %v5794 = vld [vmem:[#allocation2 + $0x3340] sm:$0xff]
    %v5795 = vld [vmem:[#allocation2 + $0x3348] sm:$0xff]
    %v5796 = vld [vmem:[#allocation2 + $0x3350] sm:$0xff]
    %v5797 = vld [vmem:[#allocation2 + $0x3358] sm:$0xff]
    %v5798 = vld [vmem:[#allocation2 + $0x3360] sm:$0xff]
    %v5799 = vld [vmem:[#allocation2 + $0x3368] sm:$0xff]
    %v5800 = vld [vmem:[#allocation2 + $0x3370] sm:$0xff]
    %v5801 = vld [vmem:[#allocation2 + $0x3378] sm:$0xff]
    %v5802 = vld [vmem:[#allocation2 + $0x3380] sm:$0xff]
    %v5803 = vld [vmem:[#allocation2 + $0x3388] sm:$0xff]
    %v5804 = vld [vmem:[#allocation2 + $0x3390] sm:$0xff]
    %v5805 = vld [vmem:[#allocation2 + $0x3398] sm:$0xff]
    %v5806 = vld [vmem:[#allocation2 + $0x33a0] sm:$0xff]
    %v5807 = vld [vmem:[#allocation2 + $0x33a8] sm:$0xff]
    %v5808 = vld [vmem:[#allocation2 + $0x33b0] sm:$0xff]
    %v5809 = vld [vmem:[#allocation2 + $0x33b8] sm:$0xff]
    %v5810 = vld [vmem:[#allocation2 + $0x33c0] sm:$0xff]
    %v5811 = vld [vmem:[#allocation2 + $0x33c8] sm:$0xff]
    %v5812 = vld [vmem:[#allocation2 + $0x33d0] sm:$0xff]
    %v5813 = vld [vmem:[#allocation2 + $0x33d8] sm:$0xff]
    %v5814 = vld [vmem:[#allocation2 + $0x33e0] sm:$0xff]
    %v5815 = vld [vmem:[#allocation2 + $0x33e8] sm:$0xff]
    %v5816 = vld [vmem:[#allocation2 + $0x33f0] sm:$0xff]
    %v5817 = vld [vmem:[#allocation2 + $0x33f8] sm:$0xff]
    %5818 = vmatprep.subr.bf16.mxu0 0
    %5819 = vmatpush1.bf16.msra.mxu0 %v5754
    %5820 = vmatprep.subr.bf16.mxu0 0
    %5821 = vmatpush1.bf16.msra.mxu0 %v5755
    %5822 = vmatprep.subr.bf16.mxu0 0
    %5823 = vmatpush1.bf16.msra.mxu0 %v5756
    %5824 = vmatprep.subr.bf16.mxu0 0
    %5825 = vmatpush1.bf16.msra.mxu0 %v5757
    %5826 = vmatprep.subr.bf16.mxu0 0
    %5827 = vmatpush1.bf16.msra.mxu0 %v5758
    %5828 = vmatprep.subr.bf16.mxu0 0
    %5829 = vmatpush1.bf16.msra.mxu0 %v5759
    %5830 = vmatprep.subr.bf16.mxu0 0
    %5831 = vmatpush1.bf16.msra.mxu0 %v5760
    %5832 = vmatprep.subr.bf16.mxu0 0
    %5833 = vmatpush1.bf16.msra.mxu0 %v5761
    %5834 = vmatprep.subr.bf16.mxu0 0
    %5835 = vmatpush1.bf16.msra.mxu0 %v5762
    %5836 = vmatprep.subr.bf16.mxu0 0
    %5837 = vmatpush1.bf16.msra.mxu0 %v5763
    %5838 = vmatprep.subr.bf16.mxu0 0
    %5839 = vmatpush1.bf16.msra.mxu0 %v5764
    %5840 = vmatprep.subr.bf16.mxu0 0
    %5841 = vmatpush1.bf16.msra.mxu0 %v5765
    %5842 = vmatprep.subr.bf16.mxu0 0
    %5843 = vmatpush1.bf16.msra.mxu0 %v5766
    %5844 = vmatprep.subr.bf16.mxu0 0
    %5845 = vmatpush1.bf16.msra.mxu0 %v5767
    %5846 = vmatprep.subr.bf16.mxu0 0
    %5847 = vmatpush1.bf16.msra.mxu0 %v5768
    %5848 = vmatprep.subr.bf16.mxu0 0
    %5849 = vmatpush1.bf16.msra.mxu0 %v5769
    %5850 = vmatprep.mubr.bf16.mxu0 %v5523
    %5851 = vmatmul.mubr.bf16.gmra.mrb[0].mxu0 %v5522
    %v5852 = vpop.f32.mrb[0].mxu0
    %v5853 = vadd.f32 0.0, %v5852
    %v5854 = vpop.f32.mrb[0].mxu0
    %v5855 = vpop.f32.mrb[0].mxu0
    %v5856 = vpop.f32.mrb[0].mxu0
    %5857 = vdwg.mxu0
    %5858 = vmatprep.subr.bf16.mxu0 0
    %5859 = vmatpush1.bf16.msra.mxu0 %v5770
    %5860 = vmatprep.subr.bf16.mxu0 0
    %5861 = vmatpush1.bf16.msra.mxu0 %v5771
    %5862 = vmatprep.subr.bf16.mxu0 0
    %5863 = vmatpush1.bf16.msra.mxu0 %v5772
    %5864 = vmatprep.subr.bf16.mxu0 0
    %5865 = vmatpush1.bf16.msra.mxu0 %v5773
    %5866 = vmatprep.subr.bf16.mxu0 0
    %5867 = vmatpush1.bf16.msra.mxu0 %v5774
    %5868 = vmatprep.subr.bf16.mxu0 0
    %5869 = vmatpush1.bf16.msra.mxu0 %v5775
    %5870 = vmatprep.subr.bf16.mxu0 0
    %5871 = vmatpush1.bf16.msra.mxu0 %v5776
    %5872 = vmatprep.subr.bf16.mxu0 0
    %5873 = vmatpush1.bf16.msra.mxu0 %v5777
    %5874 = vmatprep.subr.bf16.mxu0 0
    %5875 = vmatpush1.bf16.msra.mxu0 %v5778
    %5876 = vmatprep.subr.bf16.mxu0 0
    %5877 = vmatpush1.bf16.msra.mxu0 %v5779
    %5878 = vmatprep.subr.bf16.mxu0 0
    %5879 = vmatpush1.bf16.msra.mxu0 %v5780
    %5880 = vmatprep.subr.bf16.mxu0 0
    %5881 = vmatpush1.bf16.msra.mxu0 %v5781
    %5882 = vmatprep.subr.bf16.mxu0 0
    %5883 = vmatpush1.bf16.msra.mxu0 %v5782
    %5884 = vmatprep.subr.bf16.mxu0 0
    %5885 = vmatpush1.bf16.msra.mxu0 %v5783
    %5886 = vmatprep.subr.bf16.mxu0 0
    %5887 = vmatpush1.bf16.msra.mxu0 %v5784
    %5888 = vmatprep.subr.bf16.mxu0 0
    %5889 = vmatpush1.bf16.msra.mxu0 %v5785
    %5890 = vmatprep.mubr.bf16.mxu0 %v5525
    %5891 = vmatmul.mubr.bf16.gmra.mrb[0].mxu0 %v5524
    %v5892 = vpop.f32.mrb[0].mxu0
    %v5893 = vadd.f32 %v5853, %v5892
    %v5894 = vpop.f32.mrb[0].mxu0
    %v5895 = vpop.f32.mrb[0].mxu0
    %v5896 = vpop.f32.mrb[0].mxu0
    %5897 = vdwg.mxu0
    %5898 = vmatprep.subr.bf16.mxu0 0
    %5899 = vmatpush1.bf16.msra.mxu0 %v5786
    %5900 = vmatprep.subr.bf16.mxu0 0
    %5901 = vmatpush1.bf16.msra.mxu0 %v5787
    %5902 = vmatprep.subr.bf16.mxu0 0
    %5903 = vmatpush1.bf16.msra.mxu0 %v5788
    %5904 = vmatprep.subr.bf16.mxu0 0
    %5905 = vmatpush1.bf16.msra.mxu0 %v5789
    %5906 = vmatprep.subr.bf16.mxu0 0
    %5907 = vmatpush1.bf16.msra.mxu0 %v5790
    %5908 = vmatprep.subr.bf16.mxu0 0
    %5909 = vmatpush1.bf16.msra.mxu0 %v5791
    %5910 = vmatprep.subr.bf16.mxu0 0
    %5911 = vmatpush1.bf16.msra.mxu0 %v5792
    %5912 = vmatprep.subr.bf16.mxu0 0
    %5913 = vmatpush1.bf16.msra.mxu0 %v5793
    %5914 = vmatprep.subr.bf16.mxu0 0
    %5915 = vmatpush1.bf16.msra.mxu0 %v5794
    %5916 = vmatprep.subr.bf16.mxu0 0
    %5917 = vmatpush1.bf16.msra.mxu0 %v5795
    %5918 = vmatprep.subr.bf16.mxu0 0
    %5919 = vmatpush1.bf16.msra.mxu0 %v5796
    %5920 = vmatprep.subr.bf16.mxu0 0
    %5921 = vmatpush1.bf16.msra.mxu0 %v5797
    %5922 = vmatprep.subr.bf16.mxu0 0
    %5923 = vmatpush1.bf16.msra.mxu0 %v5798
    %5924 = vmatprep.subr.bf16.mxu0 0
    %5925 = vmatpush1.bf16.msra.mxu0 %v5799
    %5926 = vmatprep.subr.bf16.mxu0 0
    %5927 = vmatpush1.bf16.msra.mxu0 %v5800
    %5928 = vmatprep.subr.bf16.mxu0 0
    %5929 = vmatpush1.bf16.msra.mxu0 %v5801
    %5930 = vmatprep.mubr.bf16.mxu0 %v5527
    %5931 = vmatmul.mubr.bf16.gmra.mrb[0].mxu0 %v5526
    %v5932 = vpop.f32.mrb[0].mxu0
    %v5933 = vadd.f32 %v5893, %v5932
    %v5934 = vpop.f32.mrb[0].mxu0
    %v5935 = vpop.f32.mrb[0].mxu0
    %v5936 = vpop.f32.mrb[0].mxu0
    %5937 = vdwg.mxu0
    %5938 = vmatprep.subr.bf16.mxu0 0
    %5939 = vmatpush1.bf16.msra.mxu0 %v5802
    %5940 = vmatprep.subr.bf16.mxu0 0
    %5941 = vmatpush1.bf16.msra.mxu0 %v5803
    %5942 = vmatprep.subr.bf16.mxu0 0
    %5943 = vmatpush1.bf16.msra.mxu0 %v5804
    %5944 = vmatprep.subr.bf16.mxu0 0
    %5945 = vmatpush1.bf16.msra.mxu0 %v5805
    %5946 = vmatprep.subr.bf16.mxu0 0
    %5947 = vmatpush1.bf16.msra.mxu0 %v5806
    %5948 = vmatprep.subr.bf16.mxu0 0
    %5949 = vmatpush1.bf16.msra.mxu0 %v5807
    %5950 = vmatprep.subr.bf16.mxu0 0
    %5951 = vmatpush1.bf16.msra.mxu0 %v5808
    %5952 = vmatprep.subr.bf16.mxu0 0
    %5953 = vmatpush1.bf16.msra.mxu0 %v5809
    %5954 = vmatprep.subr.bf16.mxu0 0
    %5955 = vmatpush1.bf16.msra.mxu0 %v5810
    %5956 = vmatprep.subr.bf16.mxu0 0
    %5957 = vmatpush1.bf16.msra.mxu0 %v5811
    %5958 = vmatprep.subr.bf16.mxu0 0
    %5959 = vmatpush1.bf16.msra.mxu0 %v5812
    %5960 = vmatprep.subr.bf16.mxu0 0
    %5961 = vmatpush1.bf16.msra.mxu0 %v5813
    %5962 = vmatprep.subr.bf16.mxu0 0
    %5963 = vmatpush1.bf16.msra.mxu0 %v5814
    %5964 = vmatprep.subr.bf16.mxu0 0
    %5965 = vmatpush1.bf16.msra.mxu0 %v5815
    %5966 = vmatprep.subr.bf16.mxu0 0
    %5967 = vmatpush1.bf16.msra.mxu0 %v5816
    %5968 = vmatprep.subr.bf16.mxu0 0
    %5969 = vmatpush1.bf16.msra.mxu0 %v5817
    %5970 = vmatprep.mubr.bf16.mxu0 %v5529
    %5971 = vmatmul.mubr.bf16.gmra.mrb[0].mxu0 %v5528
    %v5972 = vpop.f32.mrb[0].mxu0
    %v5973 = vadd.f32 %v5933, %v5972
    %v5974 = vpop.f32.mrb[0].mxu0
    %v5975 = vpop.f32.mrb[0].mxu0
    %v5976 = vpop.f32.mrb[0].mxu0
    %5977 = vdwg.mxu0
    %v5978 = vld [vmem:[#allocation2 + $0x3400] sm:$0xff]
    %v5979 = vld [vmem:[#allocation2 + $0x3408] sm:$0xff]
    %v5980 = vld [vmem:[#allocation2 + $0x3410] sm:$0xff]
    %v5981 = vld [vmem:[#allocation2 + $0x3418] sm:$0xff]
    %v5982 = vld [vmem:[#allocation2 + $0x3420] sm:$0xff]
    %v5983 = vld [vmem:[#allocation2 + $0x3428] sm:$0xff]
    %v5984 = vld [vmem:[#allocation2 + $0x3430] sm:$0xff]
    %v5985 = vld [vmem:[#allocation2 + $0x3438] sm:$0xff]
    %v5986 = vld [vmem:[#allocation2 + $0x3440] sm:$0xff]
    %v5987 = vld [vmem:[#allocation2 + $0x3448] sm:$0xff]
    %v5988 = vld [vmem:[#allocation2 + $0x3450] sm:$0xff]
    %v5989 = vld [vmem:[#allocation2 + $0x3458] sm:$0xff]
    %v5990 = vld [vmem:[#allocation2 + $0x3460] sm:$0xff]
    %v5991 = vld [vmem:[#allocation2 + $0x3468] sm:$0xff]
    %v5992 = vld [vmem:[#allocation2 + $0x3470] sm:$0xff]
    %v5993 = vld [vmem:[#allocation2 + $0x3478] sm:$0xff]
    %v5994 = vld [vmem:[#allocation2 + $0x3480] sm:$0xff]
    %v5995 = vld [vmem:[#allocation2 + $0x3488] sm:$0xff]
    %v5996 = vld [vmem:[#allocation2 + $0x3490] sm:$0xff]
    %v5997 = vld [vmem:[#allocation2 + $0x3498] sm:$0xff]
    %v5998 = vld [vmem:[#allocation2 + $0x34a0] sm:$0xff]
    %v5999 = vld [vmem:[#allocation2 + $0x34a8] sm:$0xff]
    %v6000 = vld [vmem:[#allocation2 + $0x34b0] sm:$0xff]
    %v6001 = vld [vmem:[#allocation2 + $0x34b8] sm:$0xff]
    %v6002 = vld [vmem:[#allocation2 + $0x34c0] sm:$0xff]
    %v6003 = vld [vmem:[#allocation2 + $0x34c8] sm:$0xff]
    %v6004 = vld [vmem:[#allocation2 + $0x34d0] sm:$0xff]
    %v6005 = vld [vmem:[#allocation2 + $0x34d8] sm:$0xff]
    %v6006 = vld [vmem:[#allocation2 + $0x34e0] sm:$0xff]
    %v6007 = vld [vmem:[#allocation2 + $0x34e8] sm:$0xff]
    %v6008 = vld [vmem:[#allocation2 + $0x34f0] sm:$0xff]
    %v6009 = vld [vmem:[#allocation2 + $0x34f8] sm:$0xff]
    %v6010 = vld [vmem:[#allocation2 + $0x3500] sm:$0xff]
    %v6011 = vld [vmem:[#allocation2 + $0x3508] sm:$0xff]
    %v6012 = vld [vmem:[#allocation2 + $0x3510] sm:$0xff]
    %v6013 = vld [vmem:[#allocation2 + $0x3518] sm:$0xff]
    %v6014 = vld [vmem:[#allocation2 + $0x3520] sm:$0xff]
    %v6015 = vld [vmem:[#allocation2 + $0x3528] sm:$0xff]
    %v6016 = vld [vmem:[#allocation2 + $0x3530] sm:$0xff]
    %v6017 = vld [vmem:[#allocation2 + $0x3538] sm:$0xff]
    %v6018 = vld [vmem:[#allocation2 + $0x3540] sm:$0xff]
    %v6019 = vld [vmem:[#allocation2 + $0x3548] sm:$0xff]
    %v6020 = vld [vmem:[#allocation2 + $0x3550] sm:$0xff]
    %v6021 = vld [vmem:[#allocation2 + $0x3558] sm:$0xff]
    %v6022 = vld [vmem:[#allocation2 + $0x3560] sm:$0xff]
    %v6023 = vld [vmem:[#allocation2 + $0x3568] sm:$0xff]
    %v6024 = vld [vmem:[#allocation2 + $0x3570] sm:$0xff]
    %v6025 = vld [vmem:[#allocation2 + $0x3578] sm:$0xff]
    %v6026 = vld [vmem:[#allocation2 + $0x3580] sm:$0xff]
    %v6027 = vld [vmem:[#allocation2 + $0x3588] sm:$0xff]
    %v6028 = vld [vmem:[#allocation2 + $0x3590] sm:$0xff]
    %v6029 = vld [vmem:[#allocation2 + $0x3598] sm:$0xff]
    %v6030 = vld [vmem:[#allocation2 + $0x35a0] sm:$0xff]
    %v6031 = vld [vmem:[#allocation2 + $0x35a8] sm:$0xff]
    %v6032 = vld [vmem:[#allocation2 + $0x35b0] sm:$0xff]
    %v6033 = vld [vmem:[#allocation2 + $0x35b8] sm:$0xff]
    %v6034 = vld [vmem:[#allocation2 + $0x35c0] sm:$0xff]
    %v6035 = vld [vmem:[#allocation2 + $0x35c8] sm:$0xff]
    %v6036 = vld [vmem:[#allocation2 + $0x35d0] sm:$0xff]
    %v6037 = vld [vmem:[#allocation2 + $0x35d8] sm:$0xff]
    %v6038 = vld [vmem:[#allocation2 + $0x35e0] sm:$0xff]
    %v6039 = vld [vmem:[#allocation2 + $0x35e8] sm:$0xff]
    %v6040 = vld [vmem:[#allocation2 + $0x35f0] sm:$0xff]
    %v6041 = vld [vmem:[#allocation2 + $0x35f8] sm:$0xff]
    %6042 = vmatprep.subr.bf16.mxu0 0
    %6043 = vmatpush1.bf16.msra.mxu0 %v5978
    %6044 = vmatprep.subr.bf16.mxu0 0
    %6045 = vmatpush1.bf16.msra.mxu0 %v5979
    %6046 = vmatprep.subr.bf16.mxu0 0
    %6047 = vmatpush1.bf16.msra.mxu0 %v5980
    %6048 = vmatprep.subr.bf16.mxu0 0
    %6049 = vmatpush1.bf16.msra.mxu0 %v5981
    %6050 = vmatprep.subr.bf16.mxu0 0
    %6051 = vmatpush1.bf16.msra.mxu0 %v5982
    %6052 = vmatprep.subr.bf16.mxu0 0
    %6053 = vmatpush1.bf16.msra.mxu0 %v5983
    %6054 = vmatprep.subr.bf16.mxu0 0
    %6055 = vmatpush1.bf16.msra.mxu0 %v5984
    %6056 = vmatprep.subr.bf16.mxu0 0
    %6057 = vmatpush1.bf16.msra.mxu0 %v5985
    %6058 = vmatprep.subr.bf16.mxu0 0
    %6059 = vmatpush1.bf16.msra.mxu0 %v5986
    %6060 = vmatprep.subr.bf16.mxu0 0
    %6061 = vmatpush1.bf16.msra.mxu0 %v5987
    %6062 = vmatprep.subr.bf16.mxu0 0
    %6063 = vmatpush1.bf16.msra.mxu0 %v5988
    %6064 = vmatprep.subr.bf16.mxu0 0
    %6065 = vmatpush1.bf16.msra.mxu0 %v5989
    %6066 = vmatprep.subr.bf16.mxu0 0
    %6067 = vmatpush1.bf16.msra.mxu0 %v5990
    %6068 = vmatprep.subr.bf16.mxu0 0
    %6069 = vmatpush1.bf16.msra.mxu0 %v5991
    %6070 = vmatprep.subr.bf16.mxu0 0
    %6071 = vmatpush1.bf16.msra.mxu0 %v5992
    %6072 = vmatprep.subr.bf16.mxu0 0
    %6073 = vmatpush1.bf16.msra.mxu0 %v5993
    %6074 = vmatprep.mubr.bf16.mxu0 %v5523
    %6075 = vmatmul.mubr.bf16.gmra.mrb[0].mxu0 %v5522
    %v6076 = vpop.f32.mrb[0].mxu0
    %v6077 = vadd.f32 0.0, %v6076
    %v6078 = vpop.f32.mrb[0].mxu0
    %v6079 = vpop.f32.mrb[0].mxu0
    %v6080 = vpop.f32.mrb[0].mxu0
    %6081 = vdwg.mxu0
    %6082 = vmatprep.subr.bf16.mxu0 0
    %6083 = vmatpush1.bf16.msra.mxu0 %v5994
    %6084 = vmatprep.subr.bf16.mxu0 0
    %6085 = vmatpush1.bf16.msra.mxu0 %v5995
    %6086 = vmatprep.subr.bf16.mxu0 0
    %6087 = vmatpush1.bf16.msra.mxu0 %v5996
    %6088 = vmatprep.subr.bf16.mxu0 0
    %6089 = vmatpush1.bf16.msra.mxu0 %v5997
    %6090 = vmatprep.subr.bf16.mxu0 0
    %6091 = vmatpush1.bf16.msra.mxu0 %v5998
    %6092 = vmatprep.subr.bf16.mxu0 0
    %6093 = vmatpush1.bf16.msra.mxu0 %v5999
    %6094 = vmatprep.subr.bf16.mxu0 0
    %6095 = vmatpush1.bf16.msra.mxu0 %v6000
    %6096 = vmatprep.subr.bf16.mxu0 0
    %6097 = vmatpush1.bf16.msra.mxu0 %v6001
    %6098 = vmatprep.subr.bf16.mxu0 0
    %6099 = vmatpush1.bf16.msra.mxu0 %v6002
    %6100 = vmatprep.subr.bf16.mxu0 0
    %6101 = vmatpush1.bf16.msra.mxu0 %v6003
    %6102 = vmatprep.subr.bf16.mxu0 0
    %6103 = vmatpush1.bf16.msra.mxu0 %v6004
    %6104 = vmatprep.subr.bf16.mxu0 0
    %6105 = vmatpush1.bf16.msra.mxu0 %v6005
    %6106 = vmatprep.subr.bf16.mxu0 0
    %6107 = vmatpush1.bf16.msra.mxu0 %v6006
    %6108 = vmatprep.subr.bf16.mxu0 0
    %6109 = vmatpush1.bf16.msra.mxu0 %v6007
    %6110 = vmatprep.subr.bf16.mxu0 0
    %6111 = vmatpush1.bf16.msra.mxu0 %v6008
    %6112 = vmatprep.subr.bf16.mxu0 0
    %6113 = vmatpush1.bf16.msra.mxu0 %v6009
    %6114 = vmatprep.mubr.bf16.mxu0 %v5525
    %6115 = vmatmul.mubr.bf16.gmra.mrb[0].mxu0 %v5524
    %v6116 = vpop.f32.mrb[0].mxu0
    %v6117 = vadd.f32 %v6077, %v6116
    %v6118 = vpop.f32.mrb[0].mxu0
    %v6119 = vpop.f32.mrb[0].mxu0
    %v6120 = vpop.f32.mrb[0].mxu0
    %6121 = vdwg.mxu0
    %6122 = vmatprep.subr.bf16.mxu0 0
    %6123 = vmatpush1.bf16.msra.mxu0 %v6010
    %6124 = vmatprep.subr.bf16.mxu0 0
    %6125 = vmatpush1.bf16.msra.mxu0 %v6011
    %6126 = vmatprep.subr.bf16.mxu0 0
    %6127 = vmatpush1.bf16.msra.mxu0 %v6012
    %6128 = vmatprep.subr.bf16.mxu0 0
    %6129 = vmatpush1.bf16.msra.mxu0 %v6013
    %6130 = vmatprep.subr.bf16.mxu0 0
    %6131 = vmatpush1.bf16.msra.mxu0 %v6014
    %6132 = vmatprep.subr.bf16.mxu0 0
    %6133 = vmatpush1.bf16.msra.mxu0 %v6015
    %6134 = vmatprep.subr.bf16.mxu0 0
    %6135 = vmatpush1.bf16.msra.mxu0 %v6016
    %6136 = vmatprep.subr.bf16.mxu0 0
    %6137 = vmatpush1.bf16.msra.mxu0 %v6017
    %6138 = vmatprep.subr.bf16.mxu0 0
    %6139 = vmatpush1.bf16.msra.mxu0 %v6018
    %6140 = vmatprep.subr.bf16.mxu0 0
    %6141 = vmatpush1.bf16.msra.mxu0 %v6019
    %6142 = vmatprep.subr.bf16.mxu0 0
    %6143 = vmatpush1.bf16.msra.mxu0 %v6020
    %6144 = vmatprep.subr.bf16.mxu0 0
    %6145 = vmatpush1.bf16.msra.mxu0 %v6021
    %6146 = vmatprep.subr.bf16.mxu0 0
    %6147 = vmatpush1.bf16.msra.mxu0 %v6022
    %6148 = vmatprep.subr.bf16.mxu0 0
    %6149 = vmatpush1.bf16.msra.mxu0 %v6023
    %6150 = vmatprep.subr.bf16.mxu0 0
    %6151 = vmatpush1.bf16.msra.mxu0 %v6024
    %6152 = vmatprep.subr.bf16.mxu0 0
    %6153 = vmatpush1.bf16.msra.mxu0 %v6025
    %6154 = vmatprep.mubr.bf16.mxu0 %v5527
    %6155 = vmatmul.mubr.bf16.gmra.mrb[0].mxu0 %v5526
    %v6156 = vpop.f32.mrb[0].mxu0
    %v6157 = vadd.f32 %v6117, %v6156
    %v6158 = vpop.f32.mrb[0].mxu0
    %v6159 = vpop.f32.mrb[0].mxu0
    %v6160 = vpop.f32.mrb[0].mxu0
    %6161 = vdwg.mxu0
    %6162 = vmatprep.subr.bf16.mxu0 0
    %6163 = vmatpush1.bf16.msra.mxu0 %v6026
    %6164 = vmatprep.subr.bf16.mxu0 0
    %6165 = vmatpush1.bf16.msra.mxu0 %v6027
    %6166 = vmatprep.subr.bf16.mxu0 0
    %6167 = vmatpush1.bf16.msra.mxu0 %v6028
    %6168 = vmatprep.subr.bf16.mxu0 0
    %6169 = vmatpush1.bf16.msra.mxu0 %v6029
    %6170 = vmatprep.subr.bf16.mxu0 0
    %6171 = vmatpush1.bf16.msra.mxu0 %v6030
    %6172 = vmatprep.subr.bf16.mxu0 0
    %6173 = vmatpush1.bf16.msra.mxu0 %v6031
    %6174 = vmatprep.subr.bf16.mxu0 0
    %6175 = vmatpush1.bf16.msra.mxu0 %v6032
    %6176 = vmatprep.subr.bf16.mxu0 0
    %6177 = vmatpush1.bf16.msra.mxu0 %v6033
    %6178 = vmatprep.subr.bf16.mxu0 0
    %6179 = vmatpush1.bf16.msra.mxu0 %v6034
    %6180 = vmatprep.subr.bf16.mxu0 0
    %6181 = vmatpush1.bf16.msra.mxu0 %v6035
    %6182 = vmatprep.subr.bf16.mxu0 0
    %6183 = vmatpush1.bf16.msra.mxu0 %v6036
    %6184 = vmatprep.subr.bf16.mxu0 0
    %6185 = vmatpush1.bf16.msra.mxu0 %v6037
    %6186 = vmatprep.subr.bf16.mxu0 0
    %6187 = vmatpush1.bf16.msra.mxu0 %v6038
    %6188 = vmatprep.subr.bf16.mxu0 0
    %6189 = vmatpush1.bf16.msra.mxu0 %v6039
    %6190 = vmatprep.subr.bf16.mxu0 0
    %6191 = vmatpush1.bf16.msra.mxu0 %v6040
    %6192 = vmatprep.subr.bf16.mxu0 0
    %6193 = vmatpush1.bf16.msra.mxu0 %v6041
    %6194 = vmatprep.mubr.bf16.mxu0 %v5529
    %6195 = vmatmul.mubr.bf16.gmra.mrb[0].mxu0 %v5528
    %v6196 = vpop.f32.mrb[0].mxu0
    %v6197 = vadd.f32 %v6157, %v6196
    %v6198 = vpop.f32.mrb[0].mxu0
    %v6199 = vpop.f32.mrb[0].mxu0
    %v6200 = vpop.f32.mrb[0].mxu0
    %6201 = vdwg.mxu0
    %v6202 = vld [vmem:[#allocation2 + $0x3600] sm:$0xff]
    %v6203 = vld [vmem:[#allocation2 + $0x3608] sm:$0xff]
    %v6204 = vld [vmem:[#allocation2 + $0x3610] sm:$0xff]
    %v6205 = vld [vmem:[#allocation2 + $0x3618] sm:$0xff]
    %v6206 = vld [vmem:[#allocation2 + $0x3620] sm:$0xff]
    %v6207 = vld [vmem:[#allocation2 + $0x3628] sm:$0xff]
    %v6208 = vld [vmem:[#allocation2 + $0x3630] sm:$0xff]
    %v6209 = vld [vmem:[#allocation2 + $0x3638] sm:$0xff]
    %v6210 = vld [vmem:[#allocation2 + $0x3640] sm:$0xff]
    %v6211 = vld [vmem:[#allocation2 + $0x3648] sm:$0xff]
    %v6212 = vld [vmem:[#allocation2 + $0x3650] sm:$0xff]
    %v6213 = vld [vmem:[#allocation2 + $0x3658] sm:$0xff]
    %v6214 = vld [vmem:[#allocation2 + $0x3660] sm:$0xff]
    %v6215 = vld [vmem:[#allocation2 + $0x3668] sm:$0xff]
    %v6216 = vld [vmem:[#allocation2 + $0x3670] sm:$0xff]
    %v6217 = vld [vmem:[#allocation2 + $0x3678] sm:$0xff]
    %v6218 = vld [vmem:[#allocation2 + $0x3680] sm:$0xff]
    %v6219 = vld [vmem:[#allocation2 + $0x3688] sm:$0xff]
    %v6220 = vld [vmem:[#allocation2 + $0x3690] sm:$0xff]
    %v6221 = vld [vmem:[#allocation2 + $0x3698] sm:$0xff]
    %v6222 = vld [vmem:[#allocation2 + $0x36a0] sm:$0xff]
    %v6223 = vld [vmem:[#allocation2 + $0x36a8] sm:$0xff]
    %v6224 = vld [vmem:[#allocation2 + $0x36b0] sm:$0xff]
    %v6225 = vld [vmem:[#allocation2 + $0x36b8] sm:$0xff]
    %v6226 = vld [vmem:[#allocation2 + $0x36c0] sm:$0xff]
    %v6227 = vld [vmem:[#allocation2 + $0x36c8] sm:$0xff]
    %v6228 = vld [vmem:[#allocation2 + $0x36d0] sm:$0xff]
    %v6229 = vld [vmem:[#allocation2 + $0x36d8] sm:$0xff]
    %v6230 = vld [vmem:[#allocation2 + $0x36e0] sm:$0xff]
    %v6231 = vld [vmem:[#allocation2 + $0x36e8] sm:$0xff]
    %v6232 = vld [vmem:[#allocation2 + $0x36f0] sm:$0xff]
    %v6233 = vld [vmem:[#allocation2 + $0x36f8] sm:$0xff]
    %v6234 = vld [vmem:[#allocation2 + $0x3700] sm:$0xff]
    %v6235 = vld [vmem:[#allocation2 + $0x3708] sm:$0xff]
    %v6236 = vld [vmem:[#allocation2 + $0x3710] sm:$0xff]
    %v6237 = vld [vmem:[#allocation2 + $0x3718] sm:$0xff]
    %v6238 = vld [vmem:[#allocation2 + $0x3720] sm:$0xff]
    %v6239 = vld [vmem:[#allocation2 + $0x3728] sm:$0xff]
    %v6240 = vld [vmem:[#allocation2 + $0x3730] sm:$0xff]
    %v6241 = vld [vmem:[#allocation2 + $0x3738] sm:$0xff]
    %v6242 = vld [vmem:[#allocation2 + $0x3740] sm:$0xff]
    %v6243 = vld [vmem:[#allocation2 + $0x3748] sm:$0xff]
    %v6244 = vld [vmem:[#allocation2 + $0x3750] sm:$0xff]
    %v6245 = vld [vmem:[#allocation2 + $0x3758] sm:$0xff]
    %v6246 = vld [vmem:[#allocation2 + $0x3760] sm:$0xff]
    %v6247 = vld [vmem:[#allocation2 + $0x3768] sm:$0xff]
    %v6248 = vld [vmem:[#allocation2 + $0x3770] sm:$0xff]
    %v6249 = vld [vmem:[#allocation2 + $0x3778] sm:$0xff]
    %v6250 = vld [vmem:[#allocation2 + $0x3780] sm:$0xff]
    %v6251 = vld [vmem:[#allocation2 + $0x3788] sm:$0xff]
    %v6252 = vld [vmem:[#allocation2 + $0x3790] sm:$0xff]
    %v6253 = vld [vmem:[#allocation2 + $0x3798] sm:$0xff]
    %v6254 = vld [vmem:[#allocation2 + $0x37a0] sm:$0xff]
    %v6255 = vld [vmem:[#allocation2 + $0x37a8] sm:$0xff]
    %v6256 = vld [vmem:[#allocation2 + $0x37b0] sm:$0xff]
    %v6257 = vld [vmem:[#allocation2 + $0x37b8] sm:$0xff]
    %v6258 = vld [vmem:[#allocation2 + $0x37c0] sm:$0xff]
    %v6259 = vld [vmem:[#allocation2 + $0x37c8] sm:$0xff]
    %v6260 = vld [vmem:[#allocation2 + $0x37d0] sm:$0xff]
    %v6261 = vld [vmem:[#allocation2 + $0x37d8] sm:$0xff]
    %v6262 = vld [vmem:[#allocation2 + $0x37e0] sm:$0xff]
    %v6263 = vld [vmem:[#allocation2 + $0x37e8] sm:$0xff]
    %v6264 = vld [vmem:[#allocation2 + $0x37f0] sm:$0xff]
    %v6265 = vld [vmem:[#allocation2 + $0x37f8] sm:$0xff]
    %6266 = vmatprep.subr.bf16.mxu0 0
    %6267 = vmatpush1.bf16.msra.mxu0 %v6202
    %6268 = vmatprep.subr.bf16.mxu0 0
    %6269 = vmatpush1.bf16.msra.mxu0 %v6203
    %6270 = vmatprep.subr.bf16.mxu0 0
    %6271 = vmatpush1.bf16.msra.mxu0 %v6204
    %6272 = vmatprep.subr.bf16.mxu0 0
    %6273 = vmatpush1.bf16.msra.mxu0 %v6205
    %6274 = vmatprep.subr.bf16.mxu0 0
    %6275 = vmatpush1.bf16.msra.mxu0 %v6206
    %6276 = vmatprep.subr.bf16.mxu0 0
    %6277 = vmatpush1.bf16.msra.mxu0 %v6207
    %6278 = vmatprep.subr.bf16.mxu0 0
    %6279 = vmatpush1.bf16.msra.mxu0 %v6208
    %6280 = vmatprep.subr.bf16.mxu0 0
    %6281 = vmatpush1.bf16.msra.mxu0 %v6209
    %6282 = vmatprep.subr.bf16.mxu0 0
    %6283 = vmatpush1.bf16.msra.mxu0 %v6210
    %6284 = vmatprep.subr.bf16.mxu0 0
    %6285 = vmatpush1.bf16.msra.mxu0 %v6211
    %6286 = vmatprep.subr.bf16.mxu0 0
    %6287 = vmatpush1.bf16.msra.mxu0 %v6212
    %6288 = vmatprep.subr.bf16.mxu0 0
    %6289 = vmatpush1.bf16.msra.mxu0 %v6213
    %6290 = vmatprep.subr.bf16.mxu0 0
    %6291 = vmatpush1.bf16.msra.mxu0 %v6214
    %6292 = vmatprep.subr.bf16.mxu0 0
    %6293 = vmatpush1.bf16.msra.mxu0 %v6215
    %6294 = vmatprep.subr.bf16.mxu0 0
    %6295 = vmatpush1.bf16.msra.mxu0 %v6216
    %6296 = vmatprep.subr.bf16.mxu0 0
    %6297 = vmatpush1.bf16.msra.mxu0 %v6217
    %6298 = vmatprep.mubr.bf16.mxu0 %v5523
    %6299 = vmatmul.mubr.bf16.gmra.mrb[0].mxu0 %v5522
    %v6300 = vpop.f32.mrb[0].mxu0
    %v6301 = vadd.f32 0.0, %v6300
    %v6302 = vpop.f32.mrb[0].mxu0
    %v6303 = vpop.f32.mrb[0].mxu0
    %v6304 = vpop.f32.mrb[0].mxu0
    %6305 = vdwg.mxu0
    %6306 = vmatprep.subr.bf16.mxu0 0
    %6307 = vmatpush1.bf16.msra.mxu0 %v6218
    %6308 = vmatprep.subr.bf16.mxu0 0
    %6309 = vmatpush1.bf16.msra.mxu0 %v6219
    %6310 = vmatprep.subr.bf16.mxu0 0
    %6311 = vmatpush1.bf16.msra.mxu0 %v6220
    %6312 = vmatprep.subr.bf16.mxu0 0
    %6313 = vmatpush1.bf16.msra.mxu0 %v6221
    %6314 = vmatprep.subr.bf16.mxu0 0
    %6315 = vmatpush1.bf16.msra.mxu0 %v6222
    %6316 = vmatprep.subr.bf16.mxu0 0
    %6317 = vmatpush1.bf16.msra.mxu0 %v6223
    %6318 = vmatprep.subr.bf16.mxu0 0
    %6319 = vmatpush1.bf16.msra.mxu0 %v6224
    %6320 = vmatprep.subr.bf16.mxu0 0
    %6321 = vmatpush1.bf16.msra.mxu0 %v6225
    %6322 = vmatprep.subr.bf16.mxu0 0
    %6323 = vmatpush1.bf16.msra.mxu0 %v6226
    %6324 = vmatprep.subr.bf16.mxu0 0
    %6325 = vmatpush1.bf16.msra.mxu0 %v6227
    %6326 = vmatprep.subr.bf16.mxu0 0
    %6327 = vmatpush1.bf16.msra.mxu0 %v6228
    %6328 = vmatprep.subr.bf16.mxu0 0
    %6329 = vmatpush1.bf16.msra.mxu0 %v6229
    %6330 = vmatprep.subr.bf16.mxu0 0
    %6331 = vmatpush1.bf16.msra.mxu0 %v6230
    %6332 = vmatprep.subr.bf16.mxu0 0
    %6333 = vmatpush1.bf16.msra.mxu0 %v6231
    %6334 = vmatprep.subr.bf16.mxu0 0
    %6335 = vmatpush1.bf16.msra.mxu0 %v6232
    %6336 = vmatprep.subr.bf16.mxu0 0
    %6337 = vmatpush1.bf16.msra.mxu0 %v6233
    %6338 = vmatprep.mubr.bf16.mxu0 %v5525
    %6339 = vmatmul.mubr.bf16.gmra.mrb[0].mxu0 %v5524
    %v6340 = vpop.f32.mrb[0].mxu0
    %v6341 = vadd.f32 %v6301, %v6340
    %v6342 = vpop.f32.mrb[0].mxu0
    %v6343 = vpop.f32.mrb[0].mxu0
    %v6344 = vpop.f32.mrb[0].mxu0
    %6345 = vdwg.mxu0
    %6346 = vmatprep.subr.bf16.mxu0 0
    %6347 = vmatpush1.bf16.msra.mxu0 %v6234
    %6348 = vmatprep.subr.bf16.mxu0 0
    %6349 = vmatpush1.bf16.msra.mxu0 %v6235
    %6350 = vmatprep.subr.bf16.mxu0 0
    %6351 = vmatpush1.bf16.msra.mxu0 %v6236
    %6352 = vmatprep.subr.bf16.mxu0 0
    %6353 = vmatpush1.bf16.msra.mxu0 %v6237
    %6354 = vmatprep.subr.bf16.mxu0 0
    %6355 = vmatpush1.bf16.msra.mxu0 %v6238
    %6356 = vmatprep.subr.bf16.mxu0 0
    %6357 = vmatpush1.bf16.msra.mxu0 %v6239
    %6358 = vmatprep.subr.bf16.mxu0 0
    %6359 = vmatpush1.bf16.msra.mxu0 %v6240
    %6360 = vmatprep.subr.bf16.mxu0 0
    %6361 = vmatpush1.bf16.msra.mxu0 %v6241
    %6362 = vmatprep.subr.bf16.mxu0 0
    %6363 = vmatpush1.bf16.msra.mxu0 %v6242
    %6364 = vmatprep.subr.bf16.mxu0 0
    %6365 = vmatpush1.bf16.msra.mxu0 %v6243
    %6366 = vmatprep.subr.bf16.mxu0 0
    %6367 = vmatpush1.bf16.msra.mxu0 %v6244
    %6368 = vmatprep.subr.bf16.mxu0 0
    %6369 = vmatpush1.bf16.msra.mxu0 %v6245
    %6370 = vmatprep.subr.bf16.mxu0 0
    %6371 = vmatpush1.bf16.msra.mxu0 %v6246
    %6372 = vmatprep.subr.bf16.mxu0 0
    %6373 = vmatpush1.bf16.msra.mxu0 %v6247
    %6374 = vmatprep.subr.bf16.mxu0 0
    %6375 = vmatpush1.bf16.msra.mxu0 %v6248
    %6376 = vmatprep.subr.bf16.mxu0 0
    %6377 = vmatpush1.bf16.msra.mxu0 %v6249
    %6378 = vmatprep.mubr.bf16.mxu0 %v5527
    %6379 = vmatmul.mubr.bf16.gmra.mrb[0].mxu0 %v5526
    %v6380 = vpop.f32.mrb[0].mxu0
    %v6381 = vadd.f32 %v6341, %v6380
    %v6382 = vpop.f32.mrb[0].mxu0
    %v6383 = vpop.f32.mrb[0].mxu0
    %v6384 = vpop.f32.mrb[0].mxu0
    %6385 = vdwg.mxu0
    %6386 = vmatprep.subr.bf16.mxu0 0
    %6387 = vmatpush1.bf16.msra.mxu0 %v6250
    %6388 = vmatprep.subr.bf16.mxu0 0
    %6389 = vmatpush1.bf16.msra.mxu0 %v6251
    %6390 = vmatprep.subr.bf16.mxu0 0
    %6391 = vmatpush1.bf16.msra.mxu0 %v6252
    %6392 = vmatprep.subr.bf16.mxu0 0
    %6393 = vmatpush1.bf16.msra.mxu0 %v6253
    %6394 = vmatprep.subr.bf16.mxu0 0
    %6395 = vmatpush1.bf16.msra.mxu0 %v6254
    %6396 = vmatprep.subr.bf16.mxu0 0
    %6397 = vmatpush1.bf16.msra.mxu0 %v6255
    %6398 = vmatprep.subr.bf16.mxu0 0
    %6399 = vmatpush1.bf16.msra.mxu0 %v6256
    %6400 = vmatprep.subr.bf16.mxu0 0
    %6401 = vmatpush1.bf16.msra.mxu0 %v6257
    %6402 = vmatprep.subr.bf16.mxu0 0
    %6403 = vmatpush1.bf16.msra.mxu0 %v6258
    %6404 = vmatprep.subr.bf16.mxu0 0
    %6405 = vmatpush1.bf16.msra.mxu0 %v6259
    %6406 = vmatprep.subr.bf16.mxu0 0
    %6407 = vmatpush1.bf16.msra.mxu0 %v6260
    %6408 = vmatprep.subr.bf16.mxu0 0
    %6409 = vmatpush1.bf16.msra.mxu0 %v6261
    %6410 = vmatprep.subr.bf16.mxu0 0
    %6411 = vmatpush1.bf16.msra.mxu0 %v6262
    %6412 = vmatprep.subr.bf16.mxu0 0
    %6413 = vmatpush1.bf16.msra.mxu0 %v6263
    %6414 = vmatprep.subr.bf16.mxu0 0
    %6415 = vmatpush1.bf16.msra.mxu0 %v6264
    %6416 = vmatprep.subr.bf16.mxu0 0
    %6417 = vmatpush1.bf16.msra.mxu0 %v6265
    %6418 = vmatprep.mubr.bf16.mxu0 %v5529
    %6419 = vmatmul.mubr.bf16.gmra.mrb[0].mxu0 %v5528
    %v6420 = vpop.f32.mrb[0].mxu0
    %v6421 = vadd.f32 %v6381, %v6420
    %v6422 = vpop.f32.mrb[0].mxu0
    %v6423 = vpop.f32.mrb[0].mxu0
    %v6424 = vpop.f32.mrb[0].mxu0
    %6425 = vdwg.mxu0
    %v6426 = vld [vmem:[#allocation4 + $0x8] sm:$0xf]
    %v6428 = vlaneseq
    %v6429 = vshrl.u32 %v6428, 7
    %v6430 = vsub.s32 0, %v6429
    %v6431 = vrot.slane %v6426, %v6430
    %v6432 = vlaneseq
    %v6433 = vshrl.u32 %v6432, 7
    %v6434 = vsub.s32 1, %v6433
    %v6435 = vrot.slane %v6426, %v6434
    %v6436 = vlaneseq
    %v6437 = vshrl.u32 %v6436, 7
    %v6438 = vsub.s32 2, %v6437
    %v6439 = vrot.slane %v6426, %v6438
    %v6440 = vlaneseq
    %v6441 = vshrl.u32 %v6440, 7
    %v6442 = vsub.s32 3, %v6441
    %v6443 = vrot.slane %v6426, %v6442
    %v6448 = vadd.f32 %v5749, %v6431
    %v6449 = vadd.f32 %v5973, %v6435
    %v6450 = vadd.f32 %v6197, %v6439
    %v6451 = vadd.f32 %v6421, %v6443
    %v6452 = vmax.f32 %v6448, 0.0
    %v6453 = vmax.f32 %v6449, 0.0
    %v6454 = vmax.f32 %v6450, 0.0
    %v6455 = vmax.f32 %v6451, 0.0
    %v6456 = vpack.c.bf16 %v6452, %v6452
    %v6457 = vpack.c.bf16 %v6453, %v6453
    %v6458 = vpack.c.bf16 %v6454, %v6454
    %v6459 = vpack.c.bf16 %v6455, %v6455
    %v6460 = vld [vmem:[#allocation2 + $0x3800] sm:$0xff]
    %v6461 = vld [vmem:[#allocation2 + $0x3808] sm:$0xff]
    %v6462 = vld [vmem:[#allocation2 + $0x3810] sm:$0xff]
    %v6463 = vld [vmem:[#allocation2 + $0x3818] sm:$0xff]
    %v6464 = vld [vmem:[#allocation2 + $0x3820] sm:$0xff]
    %v6465 = vld [vmem:[#allocation2 + $0x3828] sm:$0xff]
    %v6466 = vld [vmem:[#allocation2 + $0x3830] sm:$0xff]
    %v6467 = vld [vmem:[#allocation2 + $0x3838] sm:$0xff]
    %v6468 = vld [vmem:[#allocation2 + $0x3840] sm:$0xff]
    %v6469 = vld [vmem:[#allocation2 + $0x3848] sm:$0xff]
    %v6470 = vld [vmem:[#allocation2 + $0x3850] sm:$0xff]
    %v6471 = vld [vmem:[#allocation2 + $0x3858] sm:$0xff]
    %v6472 = vld [vmem:[#allocation2 + $0x3860] sm:$0xff]
    %v6473 = vld [vmem:[#allocation2 + $0x3868] sm:$0xff]
    %v6474 = vld [vmem:[#allocation2 + $0x3870] sm:$0xff]
    %v6475 = vld [vmem:[#allocation2 + $0x3878] sm:$0xff]
    %v6476 = vld [vmem:[#allocation2 + $0x3880] sm:$0xff]
    %v6477 = vld [vmem:[#allocation2 + $0x3888] sm:$0xff]
    %v6478 = vld [vmem:[#allocation2 + $0x3890] sm:$0xff]
    %v6479 = vld [vmem:[#allocation2 + $0x3898] sm:$0xff]
    %v6480 = vld [vmem:[#allocation2 + $0x38a0] sm:$0xff]
    %v6481 = vld [vmem:[#allocation2 + $0x38a8] sm:$0xff]
    %v6482 = vld [vmem:[#allocation2 + $0x38b0] sm:$0xff]
    %v6483 = vld [vmem:[#allocation2 + $0x38b8] sm:$0xff]
    %v6484 = vld [vmem:[#allocation2 + $0x38c0] sm:$0xff]
    %v6485 = vld [vmem:[#allocation2 + $0x38c8] sm:$0xff]
    %v6486 = vld [vmem:[#allocation2 + $0x38d0] sm:$0xff]
    %v6487 = vld [vmem:[#allocation2 + $0x38d8] sm:$0xff]
    %v6488 = vld [vmem:[#allocation2 + $0x38e0] sm:$0xff]
    %v6489 = vld [vmem:[#allocation2 + $0x38e8] sm:$0xff]
    %v6490 = vld [vmem:[#allocation2 + $0x38f0] sm:$0xff]
    %v6491 = vld [vmem:[#allocation2 + $0x38f8] sm:$0xff]
    %6492 = vmatprep.subr.bf16.mxu0 0
    %6493 = vmatpush1.bf16.msra.mxu0 %v6460
    %6494 = vmatprep.subr.bf16.mxu0 0
    %6495 = vmatpush1.bf16.msra.mxu0 %v6461
    %6496 = vmatprep.subr.bf16.mxu0 0
    %6497 = vmatpush1.bf16.msra.mxu0 %v6462
    %6498 = vmatprep.subr.bf16.mxu0 0
    %6499 = vmatpush1.bf16.msra.mxu0 %v6463
    %6500 = vmatprep.subr.bf16.mxu0 0
    %6501 = vmatpush1.bf16.msra.mxu0 %v6464
    %6502 = vmatprep.subr.bf16.mxu0 0
    %6503 = vmatpush1.bf16.msra.mxu0 %v6465
    %6504 = vmatprep.subr.bf16.mxu0 0
    %6505 = vmatpush1.bf16.msra.mxu0 %v6466
    %6506 = vmatprep.subr.bf16.mxu0 0
    %6507 = vmatpush1.bf16.msra.mxu0 %v6467
    %6508 = vmatprep.subr.bf16.mxu0 0
    %6509 = vmatpush1.bf16.msra.mxu0 %v6468
    %6510 = vmatprep.subr.bf16.mxu0 0
    %6511 = vmatpush1.bf16.msra.mxu0 %v6469
    %6512 = vmatprep.subr.bf16.mxu0 0
    %6513 = vmatpush1.bf16.msra.mxu0 %v6470
    %6514 = vmatprep.subr.bf16.mxu0 0
    %6515 = vmatpush1.bf16.msra.mxu0 %v6471
    %6516 = vmatprep.subr.bf16.mxu0 0
    %6517 = vmatpush1.bf16.msra.mxu0 %v6472
    %6518 = vmatprep.subr.bf16.mxu0 0
    %6519 = vmatpush1.bf16.msra.mxu0 %v6473
    %6520 = vmatprep.subr.bf16.mxu0 0
    %6521 = vmatpush1.bf16.msra.mxu0 %v6474
    %6522 = vmatprep.subr.bf16.mxu0 0
    %6523 = vmatpush1.bf16.msra.mxu0 %v6475
    %6524 = vmatprep.mubr.bf16.mxu0 %v6457
    %6525 = vmatmul.mubr.bf16.gmra.mrb[0].mxu0 %v6456
    %v6526 = vpop.f32.mrb[0].mxu0
    %v6527 = vadd.f32 0.0, %v6526
    %v6528 = vpop.f32.mrb[0].mxu0
    %v6529 = vpop.f32.mrb[0].mxu0
    %v6530 = vpop.f32.mrb[0].mxu0
    %6531 = vdwg.mxu0
    %6532 = vmatprep.subr.bf16.mxu0 0
    %6533 = vmatpush1.bf16.msra.mxu0 %v6476
    %6534 = vmatprep.subr.bf16.mxu0 0
    %6535 = vmatpush1.bf16.msra.mxu0 %v6477
    %6536 = vmatprep.subr.bf16.mxu0 0
    %6537 = vmatpush1.bf16.msra.mxu0 %v6478
    %6538 = vmatprep.subr.bf16.mxu0 0
    %6539 = vmatpush1.bf16.msra.mxu0 %v6479
    %6540 = vmatprep.subr.bf16.mxu0 0
    %6541 = vmatpush1.bf16.msra.mxu0 %v6480
    %6542 = vmatprep.subr.bf16.mxu0 0
    %6543 = vmatpush1.bf16.msra.mxu0 %v6481
    %6544 = vmatprep.subr.bf16.mxu0 0
    %6545 = vmatpush1.bf16.msra.mxu0 %v6482
    %6546 = vmatprep.subr.bf16.mxu0 0
    %6547 = vmatpush1.bf16.msra.mxu0 %v6483
    %6548 = vmatprep.subr.bf16.mxu0 0
    %6549 = vmatpush1.bf16.msra.mxu0 %v6484
    %6550 = vmatprep.subr.bf16.mxu0 0
    %6551 = vmatpush1.bf16.msra.mxu0 %v6485
    %6552 = vmatprep.subr.bf16.mxu0 0
    %6553 = vmatpush1.bf16.msra.mxu0 %v6486
    %6554 = vmatprep.subr.bf16.mxu0 0
    %6555 = vmatpush1.bf16.msra.mxu0 %v6487
    %6556 = vmatprep.subr.bf16.mxu0 0
    %6557 = vmatpush1.bf16.msra.mxu0 %v6488
    %6558 = vmatprep.subr.bf16.mxu0 0
    %6559 = vmatpush1.bf16.msra.mxu0 %v6489
    %6560 = vmatprep.subr.bf16.mxu0 0
    %6561 = vmatpush1.bf16.msra.mxu0 %v6490
    %6562 = vmatprep.subr.bf16.mxu0 0
    %6563 = vmatpush1.bf16.msra.mxu0 %v6491
    %6564 = vmatprep.mubr.bf16.mxu0 %v6459
    %6565 = vmatmul.mubr.bf16.gmra.mrb[0].mxu0 %v6458
    %v6566 = vpop.f32.mrb[0].mxu0
    %v6567 = vadd.f32 %v6527, %v6566
    %v6568 = vpop.f32.mrb[0].mxu0
    %v6569 = vpop.f32.mrb[0].mxu0
    %v6570 = vpop.f32.mrb[0].mxu0
    %6571 = vdwg.mxu0
    %v6572 = vld [vmem:[#allocation2 + $0x3900] sm:$0xff]
    %v6573 = vld [vmem:[#allocation2 + $0x3908] sm:$0xff]
    %v6574 = vld [vmem:[#allocation2 + $0x3910] sm:$0xff]
    %v6575 = vld [vmem:[#allocation2 + $0x3918] sm:$0xff]
    %v6576 = vld [vmem:[#allocation2 + $0x3920] sm:$0xff]
    %v6577 = vld [vmem:[#allocation2 + $0x3928] sm:$0xff]
    %v6578 = vld [vmem:[#allocation2 + $0x3930] sm:$0xff]
    %v6579 = vld [vmem:[#allocation2 + $0x3938] sm:$0xff]
    %v6580 = vld [vmem:[#allocation2 + $0x3940] sm:$0xff]
    %v6581 = vld [vmem:[#allocation2 + $0x3948] sm:$0xff]
    %v6582 = vld [vmem:[#allocation2 + $0x3950] sm:$0xff]
    %v6583 = vld [vmem:[#allocation2 + $0x3958] sm:$0xff]
    %v6584 = vld [vmem:[#allocation2 + $0x3960] sm:$0xff]
    %v6585 = vld [vmem:[#allocation2 + $0x3968] sm:$0xff]
    %v6586 = vld [vmem:[#allocation2 + $0x3970] sm:$0xff]
    %v6587 = vld [vmem:[#allocation2 + $0x3978] sm:$0xff]
    %v6588 = vld [vmem:[#allocation2 + $0x3980] sm:$0xff]
    %v6589 = vld [vmem:[#allocation2 + $0x3988] sm:$0xff]
    %v6590 = vld [vmem:[#allocation2 + $0x3990] sm:$0xff]
    %v6591 = vld [vmem:[#allocation2 + $0x3998] sm:$0xff]
    %v6592 = vld [vmem:[#allocation2 + $0x39a0] sm:$0xff]
    %v6593 = vld [vmem:[#allocation2 + $0x39a8] sm:$0xff]
    %v6594 = vld [vmem:[#allocation2 + $0x39b0] sm:$0xff]
    %v6595 = vld [vmem:[#allocation2 + $0x39b8] sm:$0xff]
    %v6596 = vld [vmem:[#allocation2 + $0x39c0] sm:$0xff]
    %v6597 = vld [vmem:[#allocation2 + $0x39c8] sm:$0xff]
    %v6598 = vld [vmem:[#allocation2 + $0x39d0] sm:$0xff]
    %v6599 = vld [vmem:[#allocation2 + $0x39d8] sm:$0xff]
    %v6600 = vld [vmem:[#allocation2 + $0x39e0] sm:$0xff]
    %v6601 = vld [vmem:[#allocation2 + $0x39e8] sm:$0xff]
    %v6602 = vld [vmem:[#allocation2 + $0x39f0] sm:$0xff]
    %v6603 = vld [vmem:[#allocation2 + $0x39f8] sm:$0xff]
    %6604 = vmatprep.subr.bf16.mxu0 0
    %6605 = vmatpush1.bf16.msra.mxu0 %v6572
    %6606 = vmatprep.subr.bf16.mxu0 0
    %6607 = vmatpush1.bf16.msra.mxu0 %v6573
    %6608 = vmatprep.subr.bf16.mxu0 0
    %6609 = vmatpush1.bf16.msra.mxu0 %v6574
    %6610 = vmatprep.subr.bf16.mxu0 0
    %6611 = vmatpush1.bf16.msra.mxu0 %v6575
    %6612 = vmatprep.subr.bf16.mxu0 0
    %6613 = vmatpush1.bf16.msra.mxu0 %v6576
    %6614 = vmatprep.subr.bf16.mxu0 0
    %6615 = vmatpush1.bf16.msra.mxu0 %v6577
    %6616 = vmatprep.subr.bf16.mxu0 0
    %6617 = vmatpush1.bf16.msra.mxu0 %v6578
    %6618 = vmatprep.subr.bf16.mxu0 0
    %6619 = vmatpush1.bf16.msra.mxu0 %v6579
    %6620 = vmatprep.subr.bf16.mxu0 0
    %6621 = vmatpush1.bf16.msra.mxu0 %v6580
    %6622 = vmatprep.subr.bf16.mxu0 0
    %6623 = vmatpush1.bf16.msra.mxu0 %v6581
    %6624 = vmatprep.subr.bf16.mxu0 0
    %6625 = vmatpush1.bf16.msra.mxu0 %v6582
    %6626 = vmatprep.subr.bf16.mxu0 0
    %6627 = vmatpush1.bf16.msra.mxu0 %v6583
    %6628 = vmatprep.subr.bf16.mxu0 0
    %6629 = vmatpush1.bf16.msra.mxu0 %v6584
    %6630 = vmatprep.subr.bf16.mxu0 0
    %6631 = vmatpush1.bf16.msra.mxu0 %v6585
    %6632 = vmatprep.subr.bf16.mxu0 0
    %6633 = vmatpush1.bf16.msra.mxu0 %v6586
    %6634 = vmatprep.subr.bf16.mxu0 0
    %6635 = vmatpush1.bf16.msra.mxu0 %v6587
    %6636 = vmatprep.mubr.bf16.mxu0 %v6457
    %6637 = vmatmul.mubr.bf16.gmra.mrb[0].mxu0 %v6456
    %v6638 = vpop.f32.mrb[0].mxu0
    %v6639 = vadd.f32 0.0, %v6638
    %v6640 = vpop.f32.mrb[0].mxu0
    %v6641 = vpop.f32.mrb[0].mxu0
    %v6642 = vpop.f32.mrb[0].mxu0
    %6643 = vdwg.mxu0
    %6644 = vmatprep.subr.bf16.mxu0 0
    %6645 = vmatpush1.bf16.msra.mxu0 %v6588
    %6646 = vmatprep.subr.bf16.mxu0 0
    %6647 = vmatpush1.bf16.msra.mxu0 %v6589
    %6648 = vmatprep.subr.bf16.mxu0 0
    %6649 = vmatpush1.bf16.msra.mxu0 %v6590
    %6650 = vmatprep.subr.bf16.mxu0 0
    %6651 = vmatpush1.bf16.msra.mxu0 %v6591
    %6652 = vmatprep.subr.bf16.mxu0 0
    %6653 = vmatpush1.bf16.msra.mxu0 %v6592
    %6654 = vmatprep.subr.bf16.mxu0 0
    %6655 = vmatpush1.bf16.msra.mxu0 %v6593
    %6656 = vmatprep.subr.bf16.mxu0 0
    %6657 = vmatpush1.bf16.msra.mxu0 %v6594
    %6658 = vmatprep.subr.bf16.mxu0 0
    %6659 = vmatpush1.bf16.msra.mxu0 %v6595
    %6660 = vmatprep.subr.bf16.mxu0 0
    %6661 = vmatpush1.bf16.msra.mxu0 %v6596
    %6662 = vmatprep.subr.bf16.mxu0 0
    %6663 = vmatpush1.bf16.msra.mxu0 %v6597
    %6664 = vmatprep.subr.bf16.mxu0 0
    %6665 = vmatpush1.bf16.msra.mxu0 %v6598
    %6666 = vmatprep.subr.bf16.mxu0 0
    %6667 = vmatpush1.bf16.msra.mxu0 %v6599
    %6668 = vmatprep.subr.bf16.mxu0 0
    %6669 = vmatpush1.bf16.msra.mxu0 %v6600
    %6670 = vmatprep.subr.bf16.mxu0 0
    %6671 = vmatpush1.bf16.msra.mxu0 %v6601
    %6672 = vmatprep.subr.bf16.mxu0 0
    %6673 = vmatpush1.bf16.msra.mxu0 %v6602
    %6674 = vmatprep.subr.bf16.mxu0 0
    %6675 = vmatpush1.bf16.msra.mxu0 %v6603
    %6676 = vmatprep.mubr.bf16.mxu0 %v6459
    %6677 = vmatmul.mubr.bf16.gmra.mrb[0].mxu0 %v6458
    %v6678 = vpop.f32.mrb[0].mxu0
    %v6679 = vadd.f32 %v6639, %v6678
    %v6680 = vpop.f32.mrb[0].mxu0
    %v6681 = vpop.f32.mrb[0].mxu0
    %v6682 = vpop.f32.mrb[0].mxu0
    %6683 = vdwg.mxu0
    %v6684 = vld [vmem:[#allocation2 + $0x3a00] sm:$0xff]
    %v6685 = vld [vmem:[#allocation2 + $0x3a08] sm:$0xff]
    %v6686 = vld [vmem:[#allocation2 + $0x3a10] sm:$0xff]
    %v6687 = vld [vmem:[#allocation2 + $0x3a18] sm:$0xff]
    %v6688 = vld [vmem:[#allocation2 + $0x3a20] sm:$0xff]
    %v6689 = vld [vmem:[#allocation2 + $0x3a28] sm:$0xff]
    %v6690 = vld [vmem:[#allocation2 + $0x3a30] sm:$0xff]
    %v6691 = vld [vmem:[#allocation2 + $0x3a38] sm:$0xff]
    %v6692 = vld [vmem:[#allocation2 + $0x3a40] sm:$0xff]
    %v6693 = vld [vmem:[#allocation2 + $0x3a48] sm:$0xff]
    %v6694 = vld [vmem:[#allocation2 + $0x3a50] sm:$0xff]
    %v6695 = vld [vmem:[#allocation2 + $0x3a58] sm:$0xff]
    %v6696 = vld [vmem:[#allocation2 + $0x3a60] sm:$0xff]
    %v6697 = vld [vmem:[#allocation2 + $0x3a68] sm:$0xff]
    %v6698 = vld [vmem:[#allocation2 + $0x3a70] sm:$0xff]
    %v6699 = vld [vmem:[#allocation2 + $0x3a78] sm:$0xff]
    %v6700 = vld [vmem:[#allocation2 + $0x3a80] sm:$0xff]
    %v6701 = vld [vmem:[#allocation2 + $0x3a88] sm:$0xff]
    %v6702 = vld [vmem:[#allocation2 + $0x3a90] sm:$0xff]
    %v6703 = vld [vmem:[#allocation2 + $0x3a98] sm:$0xff]
    %v6704 = vld [vmem:[#allocation2 + $0x3aa0] sm:$0xff]
    %v6705 = vld [vmem:[#allocation2 + $0x3aa8] sm:$0xff]
    %v6706 = vld [vmem:[#allocation2 + $0x3ab0] sm:$0xff]
    %v6707 = vld [vmem:[#allocation2 + $0x3ab8] sm:$0xff]
    %v6708 = vld [vmem:[#allocation2 + $0x3ac0] sm:$0xff]
    %v6709 = vld [vmem:[#allocation2 + $0x3ac8] sm:$0xff]
    %v6710 = vld [vmem:[#allocation2 + $0x3ad0] sm:$0xff]
    %v6711 = vld [vmem:[#allocation2 + $0x3ad8] sm:$0xff]
    %v6712 = vld [vmem:[#allocation2 + $0x3ae0] sm:$0xff]
    %v6713 = vld [vmem:[#allocation2 + $0x3ae8] sm:$0xff]
    %v6714 = vld [vmem:[#allocation2 + $0x3af0] sm:$0xff]
    %v6715 = vld [vmem:[#allocation2 + $0x3af8] sm:$0xff]
    %6716 = vmatprep.subr.bf16.mxu0 0
    %6717 = vmatpush1.bf16.msra.mxu0 %v6684
    %6718 = vmatprep.subr.bf16.mxu0 0
    %6719 = vmatpush1.bf16.msra.mxu0 %v6685
    %6720 = vmatprep.subr.bf16.mxu0 0
    %6721 = vmatpush1.bf16.msra.mxu0 %v6686
    %6722 = vmatprep.subr.bf16.mxu0 0
    %6723 = vmatpush1.bf16.msra.mxu0 %v6687
    %6724 = vmatprep.subr.bf16.mxu0 0
    %6725 = vmatpush1.bf16.msra.mxu0 %v6688
    %6726 = vmatprep.subr.bf16.mxu0 0
    %6727 = vmatpush1.bf16.msra.mxu0 %v6689
    %6728 = vmatprep.subr.bf16.mxu0 0
    %6729 = vmatpush1.bf16.msra.mxu0 %v6690
    %6730 = vmatprep.subr.bf16.mxu0 0
    %6731 = vmatpush1.bf16.msra.mxu0 %v6691
    %6732 = vmatprep.subr.bf16.mxu0 0
    %6733 = vmatpush1.bf16.msra.mxu0 %v6692
    %6734 = vmatprep.subr.bf16.mxu0 0
    %6735 = vmatpush1.bf16.msra.mxu0 %v6693
    %6736 = vmatprep.subr.bf16.mxu0 0
    %6737 = vmatpush1.bf16.msra.mxu0 %v6694
    %6738 = vmatprep.subr.bf16.mxu0 0
    %6739 = vmatpush1.bf16.msra.mxu0 %v6695
    %6740 = vmatprep.subr.bf16.mxu0 0
    %6741 = vmatpush1.bf16.msra.mxu0 %v6696
    %6742 = vmatprep.subr.bf16.mxu0 0
    %6743 = vmatpush1.bf16.msra.mxu0 %v6697
    %6744 = vmatprep.subr.bf16.mxu0 0
    %6745 = vmatpush1.bf16.msra.mxu0 %v6698
    %6746 = vmatprep.subr.bf16.mxu0 0
    %6747 = vmatpush1.bf16.msra.mxu0 %v6699
    %6748 = vmatprep.mubr.bf16.mxu0 %v6457
    %6749 = vmatmul.mubr.bf16.gmra.mrb[0].mxu0 %v6456
    %v6750 = vpop.f32.mrb[0].mxu0
    %v6751 = vadd.f32 0.0, %v6750
    %v6752 = vpop.f32.mrb[0].mxu0
    %v6753 = vpop.f32.mrb[0].mxu0
    %v6754 = vpop.f32.mrb[0].mxu0
    %6755 = vdwg.mxu0
    %6756 = vmatprep.subr.bf16.mxu0 0
    %6757 = vmatpush1.bf16.msra.mxu0 %v6700
    %6758 = vmatprep.subr.bf16.mxu0 0
    %6759 = vmatpush1.bf16.msra.mxu0 %v6701
    %6760 = vmatprep.subr.bf16.mxu0 0
    %6761 = vmatpush1.bf16.msra.mxu0 %v6702
    %6762 = vmatprep.subr.bf16.mxu0 0
    %6763 = vmatpush1.bf16.msra.mxu0 %v6703
    %6764 = vmatprep.subr.bf16.mxu0 0
    %6765 = vmatpush1.bf16.msra.mxu0 %v6704
    %6766 = vmatprep.subr.bf16.mxu0 0
    %6767 = vmatpush1.bf16.msra.mxu0 %v6705
    %6768 = vmatprep.subr.bf16.mxu0 0
    %6769 = vmatpush1.bf16.msra.mxu0 %v6706
    %6770 = vmatprep.subr.bf16.mxu0 0
    %6771 = vmatpush1.bf16.msra.mxu0 %v6707
    %6772 = vmatprep.subr.bf16.mxu0 0
    %6773 = vmatpush1.bf16.msra.mxu0 %v6708
    %6774 = vmatprep.subr.bf16.mxu0 0
    %6775 = vmatpush1.bf16.msra.mxu0 %v6709
    %6776 = vmatprep.subr.bf16.mxu0 0
    %6777 = vmatpush1.bf16.msra.mxu0 %v6710
    %6778 = vmatprep.subr.bf16.mxu0 0
    %6779 = vmatpush1.bf16.msra.mxu0 %v6711
    %6780 = vmatprep.subr.bf16.mxu0 0
    %6781 = vmatpush1.bf16.msra.mxu0 %v6712
    %6782 = vmatprep.subr.bf16.mxu0 0
    %6783 = vmatpush1.bf16.msra.mxu0 %v6713
    %6784 = vmatprep.subr.bf16.mxu0 0
    %6785 = vmatpush1.bf16.msra.mxu0 %v6714
    %6786 = vmatprep.subr.bf16.mxu0 0
    %6787 = vmatpush1.bf16.msra.mxu0 %v6715
    %6788 = vmatprep.mubr.bf16.mxu0 %v6459
    %6789 = vmatmul.mubr.bf16.gmra.mrb[0].mxu0 %v6458
    %v6790 = vpop.f32.mrb[0].mxu0
    %v6791 = vadd.f32 %v6751, %v6790
    %v6792 = vpop.f32.mrb[0].mxu0
    %v6793 = vpop.f32.mrb[0].mxu0
    %v6794 = vpop.f32.mrb[0].mxu0
    %6795 = vdwg.mxu0
    %v6796 = vld [vmem:[#allocation2 + $0x3b00] sm:$0xff]
    %v6797 = vld [vmem:[#allocation2 + $0x3b08] sm:$0xff]
    %v6798 = vld [vmem:[#allocation2 + $0x3b10] sm:$0xff]
    %v6799 = vld [vmem:[#allocation2 + $0x3b18] sm:$0xff]
    %v6800 = vld [vmem:[#allocation2 + $0x3b20] sm:$0xff]
    %v6801 = vld [vmem:[#allocation2 + $0x3b28] sm:$0xff]
    %v6802 = vld [vmem:[#allocation2 + $0x3b30] sm:$0xff]
    %v6803 = vld [vmem:[#allocation2 + $0x3b38] sm:$0xff]
    %v6804 = vld [vmem:[#allocation2 + $0x3b40] sm:$0xff]
    %v6805 = vld [vmem:[#allocation2 + $0x3b48] sm:$0xff]
    %v6806 = vld [vmem:[#allocation2 + $0x3b50] sm:$0xff]
    %v6807 = vld [vmem:[#allocation2 + $0x3b58] sm:$0xff]
    %v6808 = vld [vmem:[#allocation2 + $0x3b60] sm:$0xff]
    %v6809 = vld [vmem:[#allocation2 + $0x3b68] sm:$0xff]
    %v6810 = vld [vmem:[#allocation2 + $0x3b70] sm:$0xff]
    %v6811 = vld [vmem:[#allocation2 + $0x3b78] sm:$0xff]
    %v6812 = vld [vmem:[#allocation2 + $0x3b80] sm:$0xff]
    %v6813 = vld [vmem:[#allocation2 + $0x3b88] sm:$0xff]
    %v6814 = vld [vmem:[#allocation2 + $0x3b90] sm:$0xff]
    %v6815 = vld [vmem:[#allocation2 + $0x3b98] sm:$0xff]
    %v6816 = vld [vmem:[#allocation2 + $0x3ba0] sm:$0xff]
    %v6817 = vld [vmem:[#allocation2 + $0x3ba8] sm:$0xff]
    %v6818 = vld [vmem:[#allocation2 + $0x3bb0] sm:$0xff]
    %v6819 = vld [vmem:[#allocation2 + $0x3bb8] sm:$0xff]
    %v6820 = vld [vmem:[#allocation2 + $0x3bc0] sm:$0xff]
    %v6821 = vld [vmem:[#allocation2 + $0x3bc8] sm:$0xff]
    %v6822 = vld [vmem:[#allocation2 + $0x3bd0] sm:$0xff]
    %v6823 = vld [vmem:[#allocation2 + $0x3bd8] sm:$0xff]
    %v6824 = vld [vmem:[#allocation2 + $0x3be0] sm:$0xff]
    %v6825 = vld [vmem:[#allocation2 + $0x3be8] sm:$0xff]
    %v6826 = vld [vmem:[#allocation2 + $0x3bf0] sm:$0xff]
    %v6827 = vld [vmem:[#allocation2 + $0x3bf8] sm:$0xff]
    %6828 = vmatprep.subr.bf16.mxu0 0
    %6829 = vmatpush1.bf16.msra.mxu0 %v6796
    %6830 = vmatprep.subr.bf16.mxu0 0
    %6831 = vmatpush1.bf16.msra.mxu0 %v6797
    %6832 = vmatprep.subr.bf16.mxu0 0
    %6833 = vmatpush1.bf16.msra.mxu0 %v6798
    %6834 = vmatprep.subr.bf16.mxu0 0
    %6835 = vmatpush1.bf16.msra.mxu0 %v6799
    %6836 = vmatprep.subr.bf16.mxu0 0
    %6837 = vmatpush1.bf16.msra.mxu0 %v6800
    %6838 = vmatprep.subr.bf16.mxu0 0
    %6839 = vmatpush1.bf16.msra.mxu0 %v6801
    %6840 = vmatprep.subr.bf16.mxu0 0
    %6841 = vmatpush1.bf16.msra.mxu0 %v6802
    %6842 = vmatprep.subr.bf16.mxu0 0
    %6843 = vmatpush1.bf16.msra.mxu0 %v6803
    %6844 = vmatprep.subr.bf16.mxu0 0
    %6845 = vmatpush1.bf16.msra.mxu0 %v6804
    %6846 = vmatprep.subr.bf16.mxu0 0
    %6847 = vmatpush1.bf16.msra.mxu0 %v6805
    %6848 = vmatprep.subr.bf16.mxu0 0
    %6849 = vmatpush1.bf16.msra.mxu0 %v6806
    %6850 = vmatprep.subr.bf16.mxu0 0
    %6851 = vmatpush1.bf16.msra.mxu0 %v6807
    %6852 = vmatprep.subr.bf16.mxu0 0
    %6853 = vmatpush1.bf16.msra.mxu0 %v6808
    %6854 = vmatprep.subr.bf16.mxu0 0
    %6855 = vmatpush1.bf16.msra.mxu0 %v6809
    %6856 = vmatprep.subr.bf16.mxu0 0
    %6857 = vmatpush1.bf16.msra.mxu0 %v6810
    %6858 = vmatprep.subr.bf16.mxu0 0
    %6859 = vmatpush1.bf16.msra.mxu0 %v6811
    %6860 = vmatprep.mubr.bf16.mxu0 %v6457
    %6861 = vmatmul.mubr.bf16.gmra.mrb[0].mxu0 %v6456
    %v6862 = vpop.f32.mrb[0].mxu0
    %v6863 = vadd.f32 0.0, %v6862
    %v6864 = vpop.f32.mrb[0].mxu0
    %v6865 = vpop.f32.mrb[0].mxu0
    %v6866 = vpop.f32.mrb[0].mxu0
    %6867 = vdwg.mxu0
    %6868 = vmatprep.subr.bf16.mxu0 0
    %6869 = vmatpush1.bf16.msra.mxu0 %v6812
    %6870 = vmatprep.subr.bf16.mxu0 0
    %6871 = vmatpush1.bf16.msra.mxu0 %v6813
    %6872 = vmatprep.subr.bf16.mxu0 0
    %6873 = vmatpush1.bf16.msra.mxu0 %v6814
    %6874 = vmatprep.subr.bf16.mxu0 0
    %6875 = vmatpush1.bf16.msra.mxu0 %v6815
    %6876 = vmatprep.subr.bf16.mxu0 0
    %6877 = vmatpush1.bf16.msra.mxu0 %v6816
    %6878 = vmatprep.subr.bf16.mxu0 0
    %6879 = vmatpush1.bf16.msra.mxu0 %v6817
    %6880 = vmatprep.subr.bf16.mxu0 0
    %6881 = vmatpush1.bf16.msra.mxu0 %v6818
    %6882 = vmatprep.subr.bf16.mxu0 0
    %6883 = vmatpush1.bf16.msra.mxu0 %v6819
    %6884 = vmatprep.subr.bf16.mxu0 0
    %6885 = vmatpush1.bf16.msra.mxu0 %v6820
    %6886 = vmatprep.subr.bf16.mxu0 0
    %6887 = vmatpush1.bf16.msra.mxu0 %v6821
    %6888 = vmatprep.subr.bf16.mxu0 0
    %6889 = vmatpush1.bf16.msra.mxu0 %v6822
    %6890 = vmatprep.subr.bf16.mxu0 0
    %6891 = vmatpush1.bf16.msra.mxu0 %v6823
    %6892 = vmatprep.subr.bf16.mxu0 0
    %6893 = vmatpush1.bf16.msra.mxu0 %v6824
    %6894 = vmatprep.subr.bf16.mxu0 0
    %6895 = vmatpush1.bf16.msra.mxu0 %v6825
    %6896 = vmatprep.subr.bf16.mxu0 0
    %6897 = vmatpush1.bf16.msra.mxu0 %v6826
    %6898 = vmatprep.subr.bf16.mxu0 0
    %6899 = vmatpush1.bf16.msra.mxu0 %v6827
    %6900 = vmatprep.mubr.bf16.mxu0 %v6459
    %6901 = vmatmul.mubr.bf16.gmra.mrb[0].mxu0 %v6458
    %v6902 = vpop.f32.mrb[0].mxu0
    %v6903 = vadd.f32 %v6863, %v6902
    %v6904 = vpop.f32.mrb[0].mxu0
    %v6905 = vpop.f32.mrb[0].mxu0
    %v6906 = vpop.f32.mrb[0].mxu0
    %6907 = vdwg.mxu0
    %v6908 = vld [vmem:[#allocation4 + $0xc] sm:$0xf]
    %v6910 = vlaneseq
    %v6911 = vshrl.u32 %v6910, 7
    %v6912 = vsub.s32 0, %v6911
    %v6913 = vrot.slane %v6908, %v6912
    %v6914 = vlaneseq
    %v6915 = vshrl.u32 %v6914, 7
    %v6916 = vsub.s32 1, %v6915
    %v6917 = vrot.slane %v6908, %v6916
    %v6918 = vlaneseq
    %v6919 = vshrl.u32 %v6918, 7
    %v6920 = vsub.s32 2, %v6919
    %v6921 = vrot.slane %v6908, %v6920
    %v6922 = vlaneseq
    %v6923 = vshrl.u32 %v6922, 7
    %v6924 = vsub.s32 3, %v6923
    %v6925 = vrot.slane %v6908, %v6924
    %v6930 = vadd.f32 %v6567, %v6913
    %v6931 = vadd.f32 %v6679, %v6917
    %v6932 = vadd.f32 %v6791, %v6921
    %v6933 = vadd.f32 %v6903, %v6925
    %v6934 = vmax.f32 %v6930, 0.0
    %v6935 = vmax.f32 %v6931, 0.0
    %v6936 = vmax.f32 %v6932, 0.0
    %v6937 = vmax.f32 %v6933, 0.0
    %v6938 = vpack.c.bf16 %v6934, %v6934
    %v6939 = vpack.c.bf16 %v6935, %v6935
    %v6940 = vpack.c.bf16 %v6936, %v6936
    %v6941 = vpack.c.bf16 %v6937, %v6937
    %v6942 = vld [vmem:[#allocation2 + $0x3c00] sm:$0xff]
    %v6943 = vld [vmem:[#allocation2 + $0x3c08] sm:$0xff]
    %v6944 = vld [vmem:[#allocation2 + $0x3c10] sm:$0xff]
    %v6945 = vld [vmem:[#allocation2 + $0x3c18] sm:$0xff]
    %v6946 = vld [vmem:[#allocation2 + $0x3c20] sm:$0xff]
    %v6947 = vld [vmem:[#allocation2 + $0x3c28] sm:$0xff]
    %v6948 = vld [vmem:[#allocation2 + $0x3c30] sm:$0xff]
    %v6949 = vld [vmem:[#allocation2 + $0x3c38] sm:$0xff]
    %v6950 = vld [vmem:[#allocation2 + $0x3c40] sm:$0xff]
    %v6951 = vld [vmem:[#allocation2 + $0x3c48] sm:$0xff]
    %v6952 = vld [vmem:[#allocation2 + $0x3c50] sm:$0xff]
    %v6953 = vld [vmem:[#allocation2 + $0x3c58] sm:$0xff]
    %v6954 = vld [vmem:[#allocation2 + $0x3c60] sm:$0xff]
    %v6955 = vld [vmem:[#allocation2 + $0x3c68] sm:$0xff]
    %v6956 = vld [vmem:[#allocation2 + $0x3c70] sm:$0xff]
    %v6957 = vld [vmem:[#allocation2 + $0x3c78] sm:$0xff]
    %v6958 = vld [vmem:[#allocation2 + $0x3c80] sm:$0xff]
    %v6959 = vld [vmem:[#allocation2 + $0x3c88] sm:$0xff]
    %v6960 = vld [vmem:[#allocation2 + $0x3c90] sm:$0xff]
    %v6961 = vld [vmem:[#allocation2 + $0x3c98] sm:$0xff]
    %v6962 = vld [vmem:[#allocation2 + $0x3ca0] sm:$0xff]
    %v6963 = vld [vmem:[#allocation2 + $0x3ca8] sm:$0xff]
    %v6964 = vld [vmem:[#allocation2 + $0x3cb0] sm:$0xff]
    %v6965 = vld [vmem:[#allocation2 + $0x3cb8] sm:$0xff]
    %v6966 = vld [vmem:[#allocation2 + $0x3cc0] sm:$0xff]
    %v6967 = vld [vmem:[#allocation2 + $0x3cc8] sm:$0xff]
    %v6968 = vld [vmem:[#allocation2 + $0x3cd0] sm:$0xff]
    %v6969 = vld [vmem:[#allocation2 + $0x3cd8] sm:$0xff]
    %v6970 = vld [vmem:[#allocation2 + $0x3ce0] sm:$0xff]
    %v6971 = vld [vmem:[#allocation2 + $0x3ce8] sm:$0xff]
    %v6972 = vld [vmem:[#allocation2 + $0x3cf0] sm:$0xff]
    %v6973 = vld [vmem:[#allocation2 + $0x3cf8] sm:$0xff]
    %6974 = vmatprep.subr.bf16.mxu0 0
    %6975 = vmatpush1.bf16.msra.mxu0 %v6942
    %6976 = vmatprep.subr.bf16.mxu0 0
    %6977 = vmatpush1.bf16.msra.mxu0 %v6943
    %6978 = vmatprep.subr.bf16.mxu0 0
    %6979 = vmatpush1.bf16.msra.mxu0 %v6944
    %6980 = vmatprep.subr.bf16.mxu0 0
    %6981 = vmatpush1.bf16.msra.mxu0 %v6945
    %6982 = vmatprep.subr.bf16.mxu0 0
    %6983 = vmatpush1.bf16.msra.mxu0 %v6946
    %6984 = vmatprep.subr.bf16.mxu0 0
    %6985 = vmatpush1.bf16.msra.mxu0 %v6947
    %6986 = vmatprep.subr.bf16.mxu0 0
    %6987 = vmatpush1.bf16.msra.mxu0 %v6948
    %6988 = vmatprep.subr.bf16.mxu0 0
    %6989 = vmatpush1.bf16.msra.mxu0 %v6949
    %6990 = vmatprep.subr.bf16.mxu0 0
    %6991 = vmatpush1.bf16.msra.mxu0 %v6950
    %6992 = vmatprep.subr.bf16.mxu0 0
    %6993 = vmatpush1.bf16.msra.mxu0 %v6951
    %6994 = vmatprep.subr.bf16.mxu0 0
    %6995 = vmatpush1.bf16.msra.mxu0 %v6952
    %6996 = vmatprep.subr.bf16.mxu0 0
    %6997 = vmatpush1.bf16.msra.mxu0 %v6953
    %6998 = vmatprep.subr.bf16.mxu0 0
    %6999 = vmatpush1.bf16.msra.mxu0 %v6954
    %7000 = vmatprep.subr.bf16.mxu0 0
    %7001 = vmatpush1.bf16.msra.mxu0 %v6955
    %7002 = vmatprep.subr.bf16.mxu0 0
    %7003 = vmatpush1.bf16.msra.mxu0 %v6956
    %7004 = vmatprep.subr.bf16.mxu0 0
    %7005 = vmatpush1.bf16.msra.mxu0 %v6957
    %7006 = vmatprep.mubr.bf16.mxu0 %v6939
    %7007 = vmatmul.mubr.bf16.gmra.mrb[0].mxu0 %v6938
    %v7008 = vpop.f32.mrb[0].mxu0
    %v7009 = vadd.f32 0.0, %v7008
    %v7010 = vpop.f32.mrb[0].mxu0
    %v7011 = vpop.f32.mrb[0].mxu0
    %v7012 = vpop.f32.mrb[0].mxu0
    %7013 = vdwg.mxu0
    %7014 = vmatprep.subr.bf16.mxu0 0
    %7015 = vmatpush1.bf16.msra.mxu0 %v6958
    %7016 = vmatprep.subr.bf16.mxu0 0
    %7017 = vmatpush1.bf16.msra.mxu0 %v6959
    %7018 = vmatprep.subr.bf16.mxu0 0
    %7019 = vmatpush1.bf16.msra.mxu0 %v6960
    %7020 = vmatprep.subr.bf16.mxu0 0
    %7021 = vmatpush1.bf16.msra.mxu0 %v6961
    %7022 = vmatprep.subr.bf16.mxu0 0
    %7023 = vmatpush1.bf16.msra.mxu0 %v6962
    %7024 = vmatprep.subr.bf16.mxu0 0
    %7025 = vmatpush1.bf16.msra.mxu0 %v6963
    %7026 = vmatprep.subr.bf16.mxu0 0
    %7027 = vmatpush1.bf16.msra.mxu0 %v6964
    %7028 = vmatprep.subr.bf16.mxu0 0
    %7029 = vmatpush1.bf16.msra.mxu0 %v6965
    %7030 = vmatprep.subr.bf16.mxu0 0
    %7031 = vmatpush1.bf16.msra.mxu0 %v6966
    %7032 = vmatprep.subr.bf16.mxu0 0
    %7033 = vmatpush1.bf16.msra.mxu0 %v6967
    %7034 = vmatprep.subr.bf16.mxu0 0
    %7035 = vmatpush1.bf16.msra.mxu0 %v6968
    %7036 = vmatprep.subr.bf16.mxu0 0
    %7037 = vmatpush1.bf16.msra.mxu0 %v6969
    %7038 = vmatprep.subr.bf16.mxu0 0
    %7039 = vmatpush1.bf16.msra.mxu0 %v6970
    %7040 = vmatprep.subr.bf16.mxu0 0
    %7041 = vmatpush1.bf16.msra.mxu0 %v6971
    %7042 = vmatprep.subr.bf16.mxu0 0
    %7043 = vmatpush1.bf16.msra.mxu0 %v6972
    %7044 = vmatprep.subr.bf16.mxu0 0
    %7045 = vmatpush1.bf16.msra.mxu0 %v6973
    %7046 = vmatprep.mubr.bf16.mxu0 %v6941
    %7047 = vmatmul.mubr.bf16.gmra.mrb[0].mxu0 %v6940
    %v7048 = vpop.f32.mrb[0].mxu0
    %v7049 = vadd.f32 %v7009, %v7048
    %v7050 = vpop.f32.mrb[0].mxu0
    %v7051 = vpop.f32.mrb[0].mxu0
    %v7052 = vpop.f32.mrb[0].mxu0
    %7053 = vdwg.mxu0
    %v7054 = vld [vmem:[#allocation2 + $0x3d00] sm:$0xff]
    %v7055 = vld [vmem:[#allocation2 + $0x3d08] sm:$0xff]
    %v7056 = vld [vmem:[#allocation2 + $0x3d10] sm:$0xff]
    %v7057 = vld [vmem:[#allocation2 + $0x3d18] sm:$0xff]
    %v7058 = vld [vmem:[#allocation2 + $0x3d20] sm:$0xff]
    %v7059 = vld [vmem:[#allocation2 + $0x3d28] sm:$0xff]
    %v7060 = vld [vmem:[#allocation2 + $0x3d30] sm:$0xff]
    %v7061 = vld [vmem:[#allocation2 + $0x3d38] sm:$0xff]
    %v7062 = vld [vmem:[#allocation2 + $0x3d40] sm:$0xff]
    %v7063 = vld [vmem:[#allocation2 + $0x3d48] sm:$0xff]
    %v7064 = vld [vmem:[#allocation2 + $0x3d50] sm:$0xff]
    %v7065 = vld [vmem:[#allocation2 + $0x3d58] sm:$0xff]
    %v7066 = vld [vmem:[#allocation2 + $0x3d60] sm:$0xff]
    %v7067 = vld [vmem:[#allocation2 + $0x3d68] sm:$0xff]
    %v7068 = vld [vmem:[#allocation2 + $0x3d70] sm:$0xff]
    %v7069 = vld [vmem:[#allocation2 + $0x3d78] sm:$0xff]
    %v7070 = vld [vmem:[#allocation2 + $0x3d80] sm:$0xff]
    %v7071 = vld [vmem:[#allocation2 + $0x3d88] sm:$0xff]
    %v7072 = vld [vmem:[#allocation2 + $0x3d90] sm:$0xff]
    %v7073 = vld [vmem:[#allocation2 + $0x3d98] sm:$0xff]
    %v7074 = vld [vmem:[#allocation2 + $0x3da0] sm:$0xff]
    %v7075 = vld [vmem:[#allocation2 + $0x3da8] sm:$0xff]
    %v7076 = vld [vmem:[#allocation2 + $0x3db0] sm:$0xff]
    %v7077 = vld [vmem:[#allocation2 + $0x3db8] sm:$0xff]
    %v7078 = vld [vmem:[#allocation2 + $0x3dc0] sm:$0xff]
    %v7079 = vld [vmem:[#allocation2 + $0x3dc8] sm:$0xff]
    %v7080 = vld [vmem:[#allocation2 + $0x3dd0] sm:$0xff]
    %v7081 = vld [vmem:[#allocation2 + $0x3dd8] sm:$0xff]
    %v7082 = vld [vmem:[#allocation2 + $0x3de0] sm:$0xff]
    %v7083 = vld [vmem:[#allocation2 + $0x3de8] sm:$0xff]
    %v7084 = vld [vmem:[#allocation2 + $0x3df0] sm:$0xff]
    %v7085 = vld [vmem:[#allocation2 + $0x3df8] sm:$0xff]
    %7086 = vmatprep.subr.bf16.mxu0 0
    %7087 = vmatpush1.bf16.msra.mxu0 %v7054
    %7088 = vmatprep.subr.bf16.mxu0 0
    %7089 = vmatpush1.bf16.msra.mxu0 %v7055
    %7090 = vmatprep.subr.bf16.mxu0 0
    %7091 = vmatpush1.bf16.msra.mxu0 %v7056
    %7092 = vmatprep.subr.bf16.mxu0 0
    %7093 = vmatpush1.bf16.msra.mxu0 %v7057
    %7094 = vmatprep.subr.bf16.mxu0 0
    %7095 = vmatpush1.bf16.msra.mxu0 %v7058
    %7096 = vmatprep.subr.bf16.mxu0 0
    %7097 = vmatpush1.bf16.msra.mxu0 %v7059
    %7098 = vmatprep.subr.bf16.mxu0 0
    %7099 = vmatpush1.bf16.msra.mxu0 %v7060
    %7100 = vmatprep.subr.bf16.mxu0 0
    %7101 = vmatpush1.bf16.msra.mxu0 %v7061
    %7102 = vmatprep.subr.bf16.mxu0 0
    %7103 = vmatpush1.bf16.msra.mxu0 %v7062
    %7104 = vmatprep.subr.bf16.mxu0 0
    %7105 = vmatpush1.bf16.msra.mxu0 %v7063
    %7106 = vmatprep.subr.bf16.mxu0 0
    %7107 = vmatpush1.bf16.msra.mxu0 %v7064
    %7108 = vmatprep.subr.bf16.mxu0 0
    %7109 = vmatpush1.bf16.msra.mxu0 %v7065
    %7110 = vmatprep.subr.bf16.mxu0 0
    %7111 = vmatpush1.bf16.msra.mxu0 %v7066
    %7112 = vmatprep.subr.bf16.mxu0 0
    %7113 = vmatpush1.bf16.msra.mxu0 %v7067
    %7114 = vmatprep.subr.bf16.mxu0 0
    %7115 = vmatpush1.bf16.msra.mxu0 %v7068
    %7116 = vmatprep.subr.bf16.mxu0 0
    %7117 = vmatpush1.bf16.msra.mxu0 %v7069
    %7118 = vmatprep.mubr.bf16.mxu0 %v6939
    %7119 = vmatmul.mubr.bf16.gmra.mrb[0].mxu0 %v6938
    %v7120 = vpop.f32.mrb[0].mxu0
    %v7121 = vadd.f32 0.0, %v7120
    %v7122 = vpop.f32.mrb[0].mxu0
    %v7123 = vpop.f32.mrb[0].mxu0
    %v7124 = vpop.f32.mrb[0].mxu0
    %7125 = vdwg.mxu0
    %7126 = vmatprep.subr.bf16.mxu0 0
    %7127 = vmatpush1.bf16.msra.mxu0 %v7070
    %7128 = vmatprep.subr.bf16.mxu0 0
    %7129 = vmatpush1.bf16.msra.mxu0 %v7071
    %7130 = vmatprep.subr.bf16.mxu0 0
    %7131 = vmatpush1.bf16.msra.mxu0 %v7072
    %7132 = vmatprep.subr.bf16.mxu0 0
    %7133 = vmatpush1.bf16.msra.mxu0 %v7073
    %7134 = vmatprep.subr.bf16.mxu0 0
    %7135 = vmatpush1.bf16.msra.mxu0 %v7074
    %7136 = vmatprep.subr.bf16.mxu0 0
    %7137 = vmatpush1.bf16.msra.mxu0 %v7075
    %7138 = vmatprep.subr.bf16.mxu0 0
    %7139 = vmatpush1.bf16.msra.mxu0 %v7076
    %7140 = vmatprep.subr.bf16.mxu0 0
    %7141 = vmatpush1.bf16.msra.mxu0 %v7077
    %7142 = vmatprep.subr.bf16.mxu0 0
    %7143 = vmatpush1.bf16.msra.mxu0 %v7078
    %7144 = vmatprep.subr.bf16.mxu0 0
    %7145 = vmatpush1.bf16.msra.mxu0 %v7079
    %7146 = vmatprep.subr.bf16.mxu0 0
    %7147 = vmatpush1.bf16.msra.mxu0 %v7080
    %7148 = vmatprep.subr.bf16.mxu0 0
    %7149 = vmatpush1.bf16.msra.mxu0 %v7081
    %7150 = vmatprep.subr.bf16.mxu0 0
    %7151 = vmatpush1.bf16.msra.mxu0 %v7082
    %7152 = vmatprep.subr.bf16.mxu0 0
    %7153 = vmatpush1.bf16.msra.mxu0 %v7083
    %7154 = vmatprep.subr.bf16.mxu0 0
    %7155 = vmatpush1.bf16.msra.mxu0 %v7084
    %7156 = vmatprep.subr.bf16.mxu0 0
    %7157 = vmatpush1.bf16.msra.mxu0 %v7085
    %7158 = vmatprep.mubr.bf16.mxu0 %v6941
    %7159 = vmatmul.mubr.bf16.gmra.mrb[0].mxu0 %v6940
    %v7160 = vpop.f32.mrb[0].mxu0
    %v7161 = vadd.f32 %v7121, %v7160
    %v7162 = vpop.f32.mrb[0].mxu0
    %v7163 = vpop.f32.mrb[0].mxu0
    %v7164 = vpop.f32.mrb[0].mxu0
    %7165 = vdwg.mxu0
    %v7166 = vld [vmem:[#allocation2 + $0x3e00] sm:$0xff]
    %v7167 = vld [vmem:[#allocation2 + $0x3e08] sm:$0xff]
    %v7168 = vld [vmem:[#allocation2 + $0x3e10] sm:$0xff]
    %v7169 = vld [vmem:[#allocation2 + $0x3e18] sm:$0xff]
    %v7170 = vld [vmem:[#allocation2 + $0x3e20] sm:$0xff]
    %v7171 = vld [vmem:[#allocation2 + $0x3e28] sm:$0xff]
    %v7172 = vld [vmem:[#allocation2 + $0x3e30] sm:$0xff]
    %v7173 = vld [vmem:[#allocation2 + $0x3e38] sm:$0xff]
    %v7174 = vld [vmem:[#allocation2 + $0x3e40] sm:$0xff]
    %v7175 = vld [vmem:[#allocation2 + $0x3e48] sm:$0xff]
    %v7176 = vld [vmem:[#allocation2 + $0x3e50] sm:$0xff]
    %v7177 = vld [vmem:[#allocation2 + $0x3e58] sm:$0xff]
    %v7178 = vld [vmem:[#allocation2 + $0x3e60] sm:$0xff]
    %v7179 = vld [vmem:[#allocation2 + $0x3e68] sm:$0xff]
    %v7180 = vld [vmem:[#allocation2 + $0x3e70] sm:$0xff]
    %v7181 = vld [vmem:[#allocation2 + $0x3e78] sm:$0xff]
    %v7182 = vld [vmem:[#allocation2 + $0x3e80] sm:$0xff]
    %v7183 = vld [vmem:[#allocation2 + $0x3e88] sm:$0xff]
    %v7184 = vld [vmem:[#allocation2 + $0x3e90] sm:$0xff]
    %v7185 = vld [vmem:[#allocation2 + $0x3e98] sm:$0xff]
    %v7186 = vld [vmem:[#allocation2 + $0x3ea0] sm:$0xff]
    %v7187 = vld [vmem:[#allocation2 + $0x3ea8] sm:$0xff]
    %v7188 = vld [vmem:[#allocation2 + $0x3eb0] sm:$0xff]
    %v7189 = vld [vmem:[#allocation2 + $0x3eb8] sm:$0xff]
    %v7190 = vld [vmem:[#allocation2 + $0x3ec0] sm:$0xff]
    %v7191 = vld [vmem:[#allocation2 + $0x3ec8] sm:$0xff]
    %v7192 = vld [vmem:[#allocation2 + $0x3ed0] sm:$0xff]
    %v7193 = vld [vmem:[#allocation2 + $0x3ed8] sm:$0xff]
    %v7194 = vld [vmem:[#allocation2 + $0x3ee0] sm:$0xff]
    %v7195 = vld [vmem:[#allocation2 + $0x3ee8] sm:$0xff]
    %v7196 = vld [vmem:[#allocation2 + $0x3ef0] sm:$0xff]
    %v7197 = vld [vmem:[#allocation2 + $0x3ef8] sm:$0xff]
    %7198 = vmatprep.subr.bf16.mxu0 0
    %7199 = vmatpush1.bf16.msra.mxu0 %v7166
    %7200 = vmatprep.subr.bf16.mxu0 0
    %7201 = vmatpush1.bf16.msra.mxu0 %v7167
    %7202 = vmatprep.subr.bf16.mxu0 0
    %7203 = vmatpush1.bf16.msra.mxu0 %v7168
    %7204 = vmatprep.subr.bf16.mxu0 0
    %7205 = vmatpush1.bf16.msra.mxu0 %v7169
    %7206 = vmatprep.subr.bf16.mxu0 0
    %7207 = vmatpush1.bf16.msra.mxu0 %v7170
    %7208 = vmatprep.subr.bf16.mxu0 0
    %7209 = vmatpush1.bf16.msra.mxu0 %v7171
    %7210 = vmatprep.subr.bf16.mxu0 0
    %7211 = vmatpush1.bf16.msra.mxu0 %v7172
    %7212 = vmatprep.subr.bf16.mxu0 0
    %7213 = vmatpush1.bf16.msra.mxu0 %v7173
    %7214 = vmatprep.subr.bf16.mxu0 0
    %7215 = vmatpush1.bf16.msra.mxu0 %v7174
    %7216 = vmatprep.subr.bf16.mxu0 0
    %7217 = vmatpush1.bf16.msra.mxu0 %v7175
    %7218 = vmatprep.subr.bf16.mxu0 0
    %7219 = vmatpush1.bf16.msra.mxu0 %v7176
    %7220 = vmatprep.subr.bf16.mxu0 0
    %7221 = vmatpush1.bf16.msra.mxu0 %v7177
    %7222 = vmatprep.subr.bf16.mxu0 0
    %7223 = vmatpush1.bf16.msra.mxu0 %v7178
    %7224 = vmatprep.subr.bf16.mxu0 0
    %7225 = vmatpush1.bf16.msra.mxu0 %v7179
    %7226 = vmatprep.subr.bf16.mxu0 0
    %7227 = vmatpush1.bf16.msra.mxu0 %v7180
    %7228 = vmatprep.subr.bf16.mxu0 0
    %7229 = vmatpush1.bf16.msra.mxu0 %v7181
    %7230 = vmatprep.mubr.bf16.mxu0 %v6939
    %7231 = vmatmul.mubr.bf16.gmra.mrb[0].mxu0 %v6938
    %v7232 = vpop.f32.mrb[0].mxu0
    %v7233 = vadd.f32 0.0, %v7232
    %v7234 = vpop.f32.mrb[0].mxu0
    %v7235 = vpop.f32.mrb[0].mxu0
    %v7236 = vpop.f32.mrb[0].mxu0
    %7237 = vdwg.mxu0
    %7238 = vmatprep.subr.bf16.mxu0 0
    %7239 = vmatpush1.bf16.msra.mxu0 %v7182
    %7240 = vmatprep.subr.bf16.mxu0 0
    %7241 = vmatpush1.bf16.msra.mxu0 %v7183
    %7242 = vmatprep.subr.bf16.mxu0 0
    %7243 = vmatpush1.bf16.msra.mxu0 %v7184
    %7244 = vmatprep.subr.bf16.mxu0 0
    %7245 = vmatpush1.bf16.msra.mxu0 %v7185
    %7246 = vmatprep.subr.bf16.mxu0 0
    %7247 = vmatpush1.bf16.msra.mxu0 %v7186
    %7248 = vmatprep.subr.bf16.mxu0 0
    %7249 = vmatpush1.bf16.msra.mxu0 %v7187
    %7250 = vmatprep.subr.bf16.mxu0 0
    %7251 = vmatpush1.bf16.msra.mxu0 %v7188
    %7252 = vmatprep.subr.bf16.mxu0 0
    %7253 = vmatpush1.bf16.msra.mxu0 %v7189
    %7254 = vmatprep.subr.bf16.mxu0 0
    %7255 = vmatpush1.bf16.msra.mxu0 %v7190
    %7256 = vmatprep.subr.bf16.mxu0 0
    %7257 = vmatpush1.bf16.msra.mxu0 %v7191
    %7258 = vmatprep.subr.bf16.mxu0 0
    %7259 = vmatpush1.bf16.msra.mxu0 %v7192
    %7260 = vmatprep.subr.bf16.mxu0 0
    %7261 = vmatpush1.bf16.msra.mxu0 %v7193
    %7262 = vmatprep.subr.bf16.mxu0 0
    %7263 = vmatpush1.bf16.msra.mxu0 %v7194
    %7264 = vmatprep.subr.bf16.mxu0 0
    %7265 = vmatpush1.bf16.msra.mxu0 %v7195
    %7266 = vmatprep.subr.bf16.mxu0 0
    %7267 = vmatpush1.bf16.msra.mxu0 %v7196
    %7268 = vmatprep.subr.bf16.mxu0 0
    %7269 = vmatpush1.bf16.msra.mxu0 %v7197
    %7270 = vmatprep.mubr.bf16.mxu0 %v6941
    %7271 = vmatmul.mubr.bf16.gmra.mrb[0].mxu0 %v6940
    %v7272 = vpop.f32.mrb[0].mxu0
    %v7273 = vadd.f32 %v7233, %v7272
    %v7274 = vpop.f32.mrb[0].mxu0
    %v7275 = vpop.f32.mrb[0].mxu0
    %v7276 = vpop.f32.mrb[0].mxu0
    %7277 = vdwg.mxu0
    %v7278 = vld [vmem:[#allocation2 + $0x3f00] sm:$0xff]
    %v7279 = vld [vmem:[#allocation2 + $0x3f08] sm:$0xff]
    %v7280 = vld [vmem:[#allocation2 + $0x3f10] sm:$0xff]
    %v7281 = vld [vmem:[#allocation2 + $0x3f18] sm:$0xff]
    %v7282 = vld [vmem:[#allocation2 + $0x3f20] sm:$0xff]
    %v7283 = vld [vmem:[#allocation2 + $0x3f28] sm:$0xff]
    %v7284 = vld [vmem:[#allocation2 + $0x3f30] sm:$0xff]
    %v7285 = vld [vmem:[#allocation2 + $0x3f38] sm:$0xff]
    %v7286 = vld [vmem:[#allocation2 + $0x3f40] sm:$0xff]
    %v7287 = vld [vmem:[#allocation2 + $0x3f48] sm:$0xff]
    %v7288 = vld [vmem:[#allocation2 + $0x3f50] sm:$0xff]
    %v7289 = vld [vmem:[#allocation2 + $0x3f58] sm:$0xff]
    %v7290 = vld [vmem:[#allocation2 + $0x3f60] sm:$0xff]
    %v7291 = vld [vmem:[#allocation2 + $0x3f68] sm:$0xff]
    %v7292 = vld [vmem:[#allocation2 + $0x3f70] sm:$0xff]
    %v7293 = vld [vmem:[#allocation2 + $0x3f78] sm:$0xff]
    %v7294 = vld [vmem:[#allocation2 + $0x3f80] sm:$0xff]
    %v7295 = vld [vmem:[#allocation2 + $0x3f88] sm:$0xff]
    %v7296 = vld [vmem:[#allocation2 + $0x3f90] sm:$0xff]
    %v7297 = vld [vmem:[#allocation2 + $0x3f98] sm:$0xff]
    %v7298 = vld [vmem:[#allocation2 + $0x3fa0] sm:$0xff]
    %v7299 = vld [vmem:[#allocation2 + $0x3fa8] sm:$0xff]
    %v7300 = vld [vmem:[#allocation2 + $0x3fb0] sm:$0xff]
    %v7301 = vld [vmem:[#allocation2 + $0x3fb8] sm:$0xff]
    %v7302 = vld [vmem:[#allocation2 + $0x3fc0] sm:$0xff]
    %v7303 = vld [vmem:[#allocation2 + $0x3fc8] sm:$0xff]
    %v7304 = vld [vmem:[#allocation2 + $0x3fd0] sm:$0xff]
    %v7305 = vld [vmem:[#allocation2 + $0x3fd8] sm:$0xff]
    %v7306 = vld [vmem:[#allocation2 + $0x3fe0] sm:$0xff]
    %v7307 = vld [vmem:[#allocation2 + $0x3fe8] sm:$0xff]
    %v7308 = vld [vmem:[#allocation2 + $0x3ff0] sm:$0xff]
    %v7309 = vld [vmem:[#allocation2 + $0x3ff8] sm:$0xff]
    %7310 = vmatprep.subr.bf16.mxu0 0
    %7311 = vmatpush1.bf16.msra.mxu0 %v7278
    %7312 = vmatprep.subr.bf16.mxu0 0
    %7313 = vmatpush1.bf16.msra.mxu0 %v7279
    %7314 = vmatprep.subr.bf16.mxu0 0
    %7315 = vmatpush1.bf16.msra.mxu0 %v7280
    %7316 = vmatprep.subr.bf16.mxu0 0
    %7317 = vmatpush1.bf16.msra.mxu0 %v7281
    %7318 = vmatprep.subr.bf16.mxu0 0
    %7319 = vmatpush1.bf16.msra.mxu0 %v7282
    %7320 = vmatprep.subr.bf16.mxu0 0
    %7321 = vmatpush1.bf16.msra.mxu0 %v7283
    %7322 = vmatprep.subr.bf16.mxu0 0
    %7323 = vmatpush1.bf16.msra.mxu0 %v7284
    %7324 = vmatprep.subr.bf16.mxu0 0
    %7325 = vmatpush1.bf16.msra.mxu0 %v7285
    %7326 = vmatprep.subr.bf16.mxu0 0
    %7327 = vmatpush1.bf16.msra.mxu0 %v7286
    %7328 = vmatprep.subr.bf16.mxu0 0
    %7329 = vmatpush1.bf16.msra.mxu0 %v7287
    %7330 = vmatprep.subr.bf16.mxu0 0
    %7331 = vmatpush1.bf16.msra.mxu0 %v7288
    %7332 = vmatprep.subr.bf16.mxu0 0
    %7333 = vmatpush1.bf16.msra.mxu0 %v7289
    %7334 = vmatprep.subr.bf16.mxu0 0
    %7335 = vmatpush1.bf16.msra.mxu0 %v7290
    %7336 = vmatprep.subr.bf16.mxu0 0
    %7337 = vmatpush1.bf16.msra.mxu0 %v7291
    %7338 = vmatprep.subr.bf16.mxu0 0
    %7339 = vmatpush1.bf16.msra.mxu0 %v7292
    %7340 = vmatprep.subr.bf16.mxu0 0
    %7341 = vmatpush1.bf16.msra.mxu0 %v7293
    %7342 = vmatprep.mubr.bf16.mxu0 %v6939
    %7343 = vmatmul.mubr.bf16.gmra.mrb[0].mxu0 %v6938
    %v7344 = vpop.f32.mrb[0].mxu0
    %v7345 = vadd.f32 0.0, %v7344
    %v7346 = vpop.f32.mrb[0].mxu0
    %v7347 = vpop.f32.mrb[0].mxu0
    %v7348 = vpop.f32.mrb[0].mxu0
    %7349 = vdwg.mxu0
    %7350 = vmatprep.subr.bf16.mxu0 0
    %7351 = vmatpush1.bf16.msra.mxu0 %v7294
    %7352 = vmatprep.subr.bf16.mxu0 0
    %7353 = vmatpush1.bf16.msra.mxu0 %v7295
    %7354 = vmatprep.subr.bf16.mxu0 0
    %7355 = vmatpush1.bf16.msra.mxu0 %v7296
    %7356 = vmatprep.subr.bf16.mxu0 0
    %7357 = vmatpush1.bf16.msra.mxu0 %v7297
    %7358 = vmatprep.subr.bf16.mxu0 0
    %7359 = vmatpush1.bf16.msra.mxu0 %v7298
    %7360 = vmatprep.subr.bf16.mxu0 0
    %7361 = vmatpush1.bf16.msra.mxu0 %v7299
    %7362 = vmatprep.subr.bf16.mxu0 0
    %7363 = vmatpush1.bf16.msra.mxu0 %v7300
    %7364 = vmatprep.subr.bf16.mxu0 0
    %7365 = vmatpush1.bf16.msra.mxu0 %v7301
    %7366 = vmatprep.subr.bf16.mxu0 0
    %7367 = vmatpush1.bf16.msra.mxu0 %v7302
    %7368 = vmatprep.subr.bf16.mxu0 0
    %7369 = vmatpush1.bf16.msra.mxu0 %v7303
    %7370 = vmatprep.subr.bf16.mxu0 0
    %7371 = vmatpush1.bf16.msra.mxu0 %v7304
    %7372 = vmatprep.subr.bf16.mxu0 0
    %7373 = vmatpush1.bf16.msra.mxu0 %v7305
    %7374 = vmatprep.subr.bf16.mxu0 0
    %7375 = vmatpush1.bf16.msra.mxu0 %v7306
    %7376 = vmatprep.subr.bf16.mxu0 0
    %7377 = vmatpush1.bf16.msra.mxu0 %v7307
    %7378 = vmatprep.subr.bf16.mxu0 0
    %7379 = vmatpush1.bf16.msra.mxu0 %v7308
    %7380 = vmatprep.subr.bf16.mxu0 0
    %7381 = vmatpush1.bf16.msra.mxu0 %v7309
    %7382 = vmatprep.mubr.bf16.mxu0 %v6941
    %7383 = vmatmul.mubr.bf16.gmra.mrb[0].mxu0 %v6940
    %v7384 = vpop.f32.mrb[0].mxu0
    %v7385 = vadd.f32 %v7345, %v7384
    %v7386 = vpop.f32.mrb[0].mxu0
    %v7387 = vpop.f32.mrb[0].mxu0
    %v7388 = vpop.f32.mrb[0].mxu0
    %7389 = vdwg.mxu0
    %v7390 = vld [vmem:[#allocation4 + $0x10] sm:$0xf]
    %v7392 = vlaneseq
    %v7393 = vshrl.u32 %v7392, 7
    %v7394 = vsub.s32 0, %v7393
    %v7395 = vrot.slane %v7390, %v7394
    %v7396 = vlaneseq
    %v7397 = vshrl.u32 %v7396, 7
    %v7398 = vsub.s32 1, %v7397
    %v7399 = vrot.slane %v7390, %v7398
    %v7400 = vlaneseq
    %v7401 = vshrl.u32 %v7400, 7
    %v7402 = vsub.s32 2, %v7401
    %v7403 = vrot.slane %v7390, %v7402
    %v7404 = vlaneseq
    %v7405 = vshrl.u32 %v7404, 7
    %v7406 = vsub.s32 3, %v7405
    %v7407 = vrot.slane %v7390, %v7406
    %v7412 = vadd.f32 %v7049, %v7395
    %v7413 = vadd.f32 %v7161, %v7399
    %v7414 = vadd.f32 %v7273, %v7403
    %v7415 = vadd.f32 %v7385, %v7407
    %v7416 = vmax.f32 %v7412, 0.0
    %v7417 = vmax.f32 %v7413, 0.0
    %v7418 = vmax.f32 %v7414, 0.0
    %v7419 = vmax.f32 %v7415, 0.0
    %v7420 = vpack.c.bf16 %v7416, %v7416
    %v7421 = vpack.c.bf16 %v7417, %v7417
    %v7422 = vpack.c.bf16 %v7418, %v7418
    %v7423 = vpack.c.bf16 %v7419, %v7419
    %v7424 = vld [vmem:[#allocation2 + $0x4000] sm:$0xff]
    %v7425 = vld [vmem:[#allocation2 + $0x4008] sm:$0xff]
    %v7426 = vld [vmem:[#allocation2 + $0x4010] sm:$0xff]
    %v7427 = vld [vmem:[#allocation2 + $0x4018] sm:$0xff]
    %v7428 = vld [vmem:[#allocation2 + $0x4020] sm:$0xff]
    %v7429 = vld [vmem:[#allocation2 + $0x4028] sm:$0xff]
    %v7430 = vld [vmem:[#allocation2 + $0x4030] sm:$0xff]
    %v7431 = vld [vmem:[#allocation2 + $0x4038] sm:$0xff]
    %v7432 = vld [vmem:[#allocation2 + $0x4040] sm:$0xff]
    %v7433 = vld [vmem:[#allocation2 + $0x4048] sm:$0xff]
    %v7434 = vld [vmem:[#allocation2 + $0x4050] sm:$0xff]
    %v7435 = vld [vmem:[#allocation2 + $0x4058] sm:$0xff]
    %v7436 = vld [vmem:[#allocation2 + $0x4060] sm:$0xff]
    %v7437 = vld [vmem:[#allocation2 + $0x4068] sm:$0xff]
    %v7438 = vld [vmem:[#allocation2 + $0x4070] sm:$0xff]
    %v7439 = vld [vmem:[#allocation2 + $0x4078] sm:$0xff]
    %v7440 = vld [vmem:[#allocation2 + $0x4080] sm:$0xff]
    %v7441 = vld [vmem:[#allocation2 + $0x4088] sm:$0xff]
    %v7442 = vld [vmem:[#allocation2 + $0x4090] sm:$0xff]
    %v7443 = vld [vmem:[#allocation2 + $0x4098] sm:$0xff]
    %v7444 = vld [vmem:[#allocation2 + $0x40a0] sm:$0xff]
    %v7445 = vld [vmem:[#allocation2 + $0x40a8] sm:$0xff]
    %v7446 = vld [vmem:[#allocation2 + $0x40b0] sm:$0xff]
    %v7447 = vld [vmem:[#allocation2 + $0x40b8] sm:$0xff]
    %v7448 = vld [vmem:[#allocation2 + $0x40c0] sm:$0xff]
    %v7449 = vld [vmem:[#allocation2 + $0x40c8] sm:$0xff]
    %v7450 = vld [vmem:[#allocation2 + $0x40d0] sm:$0xff]
    %v7451 = vld [vmem:[#allocation2 + $0x40d8] sm:$0xff]
    %v7452 = vld [vmem:[#allocation2 + $0x40e0] sm:$0xff]
    %v7453 = vld [vmem:[#allocation2 + $0x40e8] sm:$0xff]
    %v7454 = vld [vmem:[#allocation2 + $0x40f0] sm:$0xff]
    %v7455 = vld [vmem:[#allocation2 + $0x40f8] sm:$0xff]
    %7456 = vmatprep.subr.bf16.mxu0 0
    %7457 = vmatpush1.bf16.msra.mxu0 %v7424
    %7458 = vmatprep.subr.bf16.mxu0 0
    %7459 = vmatpush1.bf16.msra.mxu0 %v7425
    %7460 = vmatprep.subr.bf16.mxu0 0
    %7461 = vmatpush1.bf16.msra.mxu0 %v7426
    %7462 = vmatprep.subr.bf16.mxu0 0
    %7463 = vmatpush1.bf16.msra.mxu0 %v7427
    %7464 = vmatprep.subr.bf16.mxu0 0
    %7465 = vmatpush1.bf16.msra.mxu0 %v7428
    %7466 = vmatprep.subr.bf16.mxu0 0
    %7467 = vmatpush1.bf16.msra.mxu0 %v7429
    %7468 = vmatprep.subr.bf16.mxu0 0
    %7469 = vmatpush1.bf16.msra.mxu0 %v7430
    %7470 = vmatprep.subr.bf16.mxu0 0
    %7471 = vmatpush1.bf16.msra.mxu0 %v7431
    %7472 = vmatprep.subr.bf16.mxu0 0
    %7473 = vmatpush1.bf16.msra.mxu0 %v7432
    %7474 = vmatprep.subr.bf16.mxu0 0
    %7475 = vmatpush1.bf16.msra.mxu0 %v7433
    %7476 = vmatprep.subr.bf16.mxu0 0
    %7477 = vmatpush1.bf16.msra.mxu0 %v7434
    %7478 = vmatprep.subr.bf16.mxu0 0
    %7479 = vmatpush1.bf16.msra.mxu0 %v7435
    %7480 = vmatprep.subr.bf16.mxu0 0
    %7481 = vmatpush1.bf16.msra.mxu0 %v7436
    %7482 = vmatprep.subr.bf16.mxu0 0
    %7483 = vmatpush1.bf16.msra.mxu0 %v7437
    %7484 = vmatprep.subr.bf16.mxu0 0
    %7485 = vmatpush1.bf16.msra.mxu0 %v7438
    %7486 = vmatprep.subr.bf16.mxu0 0
    %7487 = vmatpush1.bf16.msra.mxu0 %v7439
    %7488 = vmatprep.mubr.bf16.mxu0 %v7421
    %7489 = vmatmul.mubr.bf16.gmra.mrb[0].mxu0 %v7420
    %v7490 = vpop.f32.mrb[0].mxu0
    %v7491 = vadd.f32 0.0, %v7490
    %v7492 = vpop.f32.mrb[0].mxu0
    %v7493 = vpop.f32.mrb[0].mxu0
    %v7494 = vpop.f32.mrb[0].mxu0
    %7495 = vdwg.mxu0
    %7496 = vmatprep.subr.bf16.mxu0 0
    %7497 = vmatpush1.bf16.msra.mxu0 %v7440
    %7498 = vmatprep.subr.bf16.mxu0 0
    %7499 = vmatpush1.bf16.msra.mxu0 %v7441
    %7500 = vmatprep.subr.bf16.mxu0 0
    %7501 = vmatpush1.bf16.msra.mxu0 %v7442
    %7502 = vmatprep.subr.bf16.mxu0 0
    %7503 = vmatpush1.bf16.msra.mxu0 %v7443
    %7504 = vmatprep.subr.bf16.mxu0 0
    %7505 = vmatpush1.bf16.msra.mxu0 %v7444
    %7506 = vmatprep.subr.bf16.mxu0 0
    %7507 = vmatpush1.bf16.msra.mxu0 %v7445
    %7508 = vmatprep.subr.bf16.mxu0 0
    %7509 = vmatpush1.bf16.msra.mxu0 %v7446
    %7510 = vmatprep.subr.bf16.mxu0 0
    %7511 = vmatpush1.bf16.msra.mxu0 %v7447
    %7512 = vmatprep.subr.bf16.mxu0 0
    %7513 = vmatpush1.bf16.msra.mxu0 %v7448
    %7514 = vmatprep.subr.bf16.mxu0 0
    %7515 = vmatpush1.bf16.msra.mxu0 %v7449
    %7516 = vmatprep.subr.bf16.mxu0 0
    %7517 = vmatpush1.bf16.msra.mxu0 %v7450
    %7518 = vmatprep.subr.bf16.mxu0 0
    %7519 = vmatpush1.bf16.msra.mxu0 %v7451
    %7520 = vmatprep.subr.bf16.mxu0 0
    %7521 = vmatpush1.bf16.msra.mxu0 %v7452
    %7522 = vmatprep.subr.bf16.mxu0 0
    %7523 = vmatpush1.bf16.msra.mxu0 %v7453
    %7524 = vmatprep.subr.bf16.mxu0 0
    %7525 = vmatpush1.bf16.msra.mxu0 %v7454
    %7526 = vmatprep.subr.bf16.mxu0 0
    %7527 = vmatpush1.bf16.msra.mxu0 %v7455
    %7528 = vmatprep.mubr.bf16.mxu0 %v7423
    %7529 = vmatmul.mubr.bf16.gmra.mrb[0].mxu0 %v7422
    %v7530 = vpop.f32.mrb[0].mxu0
    %v7531 = vadd.f32 %v7491, %v7530
    %v7532 = vpop.f32.mrb[0].mxu0
    %v7533 = vpop.f32.mrb[0].mxu0
    %v7534 = vpop.f32.mrb[0].mxu0
    %7535 = vdwg.mxu0
    %v7536 = vld [vmem:[#allocation2 + $0x4100] sm:$0xff]
    %v7537 = vld [vmem:[#allocation2 + $0x4108] sm:$0xff]
    %v7538 = vld [vmem:[#allocation2 + $0x4110] sm:$0xff]
    %v7539 = vld [vmem:[#allocation2 + $0x4118] sm:$0xff]
    %v7540 = vld [vmem:[#allocation2 + $0x4120] sm:$0xff]
    %v7541 = vld [vmem:[#allocation2 + $0x4128] sm:$0xff]
    %v7542 = vld [vmem:[#allocation2 + $0x4130] sm:$0xff]
    %v7543 = vld [vmem:[#allocation2 + $0x4138] sm:$0xff]
    %v7544 = vld [vmem:[#allocation2 + $0x4140] sm:$0xff]
    %v7545 = vld [vmem:[#allocation2 + $0x4148] sm:$0xff]
    %v7546 = vld [vmem:[#allocation2 + $0x4150] sm:$0xff]
    %v7547 = vld [vmem:[#allocation2 + $0x4158] sm:$0xff]
    %v7548 = vld [vmem:[#allocation2 + $0x4160] sm:$0xff]
    %v7549 = vld [vmem:[#allocation2 + $0x4168] sm:$0xff]
    %v7550 = vld [vmem:[#allocation2 + $0x4170] sm:$0xff]
    %v7551 = vld [vmem:[#allocation2 + $0x4178] sm:$0xff]
    %v7552 = vld [vmem:[#allocation2 + $0x4180] sm:$0xff]
    %v7553 = vld [vmem:[#allocation2 + $0x4188] sm:$0xff]
    %v7554 = vld [vmem:[#allocation2 + $0x4190] sm:$0xff]
    %v7555 = vld [vmem:[#allocation2 + $0x4198] sm:$0xff]
    %v7556 = vld [vmem:[#allocation2 + $0x41a0] sm:$0xff]
    %v7557 = vld [vmem:[#allocation2 + $0x41a8] sm:$0xff]
    %v7558 = vld [vmem:[#allocation2 + $0x41b0] sm:$0xff]
    %v7559 = vld [vmem:[#allocation2 + $0x41b8] sm:$0xff]
    %v7560 = vld [vmem:[#allocation2 + $0x41c0] sm:$0xff]
    %v7561 = vld [vmem:[#allocation2 + $0x41c8] sm:$0xff]
    %v7562 = vld [vmem:[#allocation2 + $0x41d0] sm:$0xff]
    %v7563 = vld [vmem:[#allocation2 + $0x41d8] sm:$0xff]
    %v7564 = vld [vmem:[#allocation2 + $0x41e0] sm:$0xff]
    %v7565 = vld [vmem:[#allocation2 + $0x41e8] sm:$0xff]
    %v7566 = vld [vmem:[#allocation2 + $0x41f0] sm:$0xff]
    %v7567 = vld [vmem:[#allocation2 + $0x41f8] sm:$0xff]
    %7568 = vmatprep.subr.bf16.mxu0 0
    %7569 = vmatpush1.bf16.msra.mxu0 %v7536
    %7570 = vmatprep.subr.bf16.mxu0 0
    %7571 = vmatpush1.bf16.msra.mxu0 %v7537
    %7572 = vmatprep.subr.bf16.mxu0 0
    %7573 = vmatpush1.bf16.msra.mxu0 %v7538
    %7574 = vmatprep.subr.bf16.mxu0 0
    %7575 = vmatpush1.bf16.msra.mxu0 %v7539
    %7576 = vmatprep.subr.bf16.mxu0 0
    %7577 = vmatpush1.bf16.msra.mxu0 %v7540
    %7578 = vmatprep.subr.bf16.mxu0 0
    %7579 = vmatpush1.bf16.msra.mxu0 %v7541
    %7580 = vmatprep.subr.bf16.mxu0 0
    %7581 = vmatpush1.bf16.msra.mxu0 %v7542
    %7582 = vmatprep.subr.bf16.mxu0 0
    %7583 = vmatpush1.bf16.msra.mxu0 %v7543
    %7584 = vmatprep.subr.bf16.mxu0 0
    %7585 = vmatpush1.bf16.msra.mxu0 %v7544
    %7586 = vmatprep.subr.bf16.mxu0 0
    %7587 = vmatpush1.bf16.msra.mxu0 %v7545
    %7588 = vmatprep.subr.bf16.mxu0 0
    %7589 = vmatpush1.bf16.msra.mxu0 %v7546
    %7590 = vmatprep.subr.bf16.mxu0 0
    %7591 = vmatpush1.bf16.msra.mxu0 %v7547
    %7592 = vmatprep.subr.bf16.mxu0 0
    %7593 = vmatpush1.bf16.msra.mxu0 %v7548
    %7594 = vmatprep.subr.bf16.mxu0 0
    %7595 = vmatpush1.bf16.msra.mxu0 %v7549
    %7596 = vmatprep.subr.bf16.mxu0 0
    %7597 = vmatpush1.bf16.msra.mxu0 %v7550
    %7598 = vmatprep.subr.bf16.mxu0 0
    %7599 = vmatpush1.bf16.msra.mxu0 %v7551
    %7600 = vmatprep.mubr.bf16.mxu0 %v7421
    %7601 = vmatmul.mubr.bf16.gmra.mrb[0].mxu0 %v7420
    %v7602 = vpop.f32.mrb[0].mxu0
    %v7603 = vadd.f32 0.0, %v7602
    %v7604 = vpop.f32.mrb[0].mxu0
    %v7605 = vpop.f32.mrb[0].mxu0
    %v7606 = vpop.f32.mrb[0].mxu0
    %7607 = vdwg.mxu0
    %7608 = vmatprep.subr.bf16.mxu0 0
    %7609 = vmatpush1.bf16.msra.mxu0 %v7552
    %7610 = vmatprep.subr.bf16.mxu0 0
    %7611 = vmatpush1.bf16.msra.mxu0 %v7553
    %7612 = vmatprep.subr.bf16.mxu0 0
    %7613 = vmatpush1.bf16.msra.mxu0 %v7554
    %7614 = vmatprep.subr.bf16.mxu0 0
    %7615 = vmatpush1.bf16.msra.mxu0 %v7555
    %7616 = vmatprep.subr.bf16.mxu0 0
    %7617 = vmatpush1.bf16.msra.mxu0 %v7556
    %7618 = vmatprep.subr.bf16.mxu0 0
    %7619 = vmatpush1.bf16.msra.mxu0 %v7557
    %7620 = vmatprep.subr.bf16.mxu0 0
    %7621 = vmatpush1.bf16.msra.mxu0 %v7558
    %7622 = vmatprep.subr.bf16.mxu0 0
    %7623 = vmatpush1.bf16.msra.mxu0 %v7559
    %7624 = vmatprep.subr.bf16.mxu0 0
    %7625 = vmatpush1.bf16.msra.mxu0 %v7560
    %7626 = vmatprep.subr.bf16.mxu0 0
    %7627 = vmatpush1.bf16.msra.mxu0 %v7561
    %7628 = vmatprep.subr.bf16.mxu0 0
    %7629 = vmatpush1.bf16.msra.mxu0 %v7562
    %7630 = vmatprep.subr.bf16.mxu0 0
    %7631 = vmatpush1.bf16.msra.mxu0 %v7563
    %7632 = vmatprep.subr.bf16.mxu0 0
    %7633 = vmatpush1.bf16.msra.mxu0 %v7564
    %7634 = vmatprep.subr.bf16.mxu0 0
    %7635 = vmatpush1.bf16.msra.mxu0 %v7565
    %7636 = vmatprep.subr.bf16.mxu0 0
    %7637 = vmatpush1.bf16.msra.mxu0 %v7566
    %7638 = vmatprep.subr.bf16.mxu0 0
    %7639 = vmatpush1.bf16.msra.mxu0 %v7567
    %7640 = vmatprep.mubr.bf16.mxu0 %v7423
    %7641 = vmatmul.mubr.bf16.gmra.mrb[0].mxu0 %v7422
    %v7642 = vpop.f32.mrb[0].mxu0
    %v7643 = vadd.f32 %v7603, %v7642
    %v7644 = vpop.f32.mrb[0].mxu0
    %v7645 = vpop.f32.mrb[0].mxu0
    %v7646 = vpop.f32.mrb[0].mxu0
    %7647 = vdwg.mxu0
    %v7648 = vld [vmem:[#allocation4 + $0x14] sm:$0x3]
    %v7650 = vlaneseq
    %v7651 = vshrl.u32 %v7650, 7
    %v7652 = vsub.s32 0, %v7651
    %v7653 = vrot.slane %v7648, %v7652
    %v7654 = vlaneseq
    %v7655 = vshrl.u32 %v7654, 7
    %v7656 = vsub.s32 1, %v7655
    %v7657 = vrot.slane %v7648, %v7656
    %v7660 = vadd.f32 %v7531, %v7653
    %v7661 = vadd.f32 %v7643, %v7657
    %v7662 = vmax.f32 %v7660, 0.0
    %v7663 = vmax.f32 %v7661, 0.0
    %v7664 = vpack.c.bf16 %v7662, %v7662
    %v7665 = vpack.c.bf16 %v7663, %v7663
    %v7666 = vld [vmem:[#allocation2 + $0x4200] sm:$0xff]
    %v7667 = vld [vmem:[#allocation2 + $0x4208] sm:$0xff]
    %v7668 = vld [vmem:[#allocation2 + $0x4210] sm:$0xff]
    %v7669 = vld [vmem:[#allocation2 + $0x4218] sm:$0xff]
    %v7670 = vld [vmem:[#allocation2 + $0x4220] sm:$0xff]
    %v7671 = vld [vmem:[#allocation2 + $0x4228] sm:$0xff]
    %v7672 = vld [vmem:[#allocation2 + $0x4230] sm:$0xff]
    %v7673 = vld [vmem:[#allocation2 + $0x4238] sm:$0xff]
    %v7674 = vld [vmem:[#allocation2 + $0x4240] sm:$0xff]
    %v7675 = vld [vmem:[#allocation2 + $0x4248] sm:$0xff]
    %v7676 = vld [vmem:[#allocation2 + $0x4250] sm:$0xff]
    %v7677 = vld [vmem:[#allocation2 + $0x4258] sm:$0xff]
    %v7678 = vld [vmem:[#allocation2 + $0x4260] sm:$0xff]
    %v7679 = vld [vmem:[#allocation2 + $0x4268] sm:$0xff]
    %v7680 = vld [vmem:[#allocation2 + $0x4270] sm:$0xff]
    %v7681 = vld [vmem:[#allocation2 + $0x4278] sm:$0xff]
    %7682 = vmatprep.subr.bf16.mxu0 0
    %7683 = vmatpush1.bf16.msra.mxu0 %v7666
    %7684 = vmatprep.subr.bf16.mxu0 0
    %7685 = vmatpush1.bf16.msra.mxu0 %v7667
    %7686 = vmatprep.subr.bf16.mxu0 0
    %7687 = vmatpush1.bf16.msra.mxu0 %v7668
    %7688 = vmatprep.subr.bf16.mxu0 0
    %7689 = vmatpush1.bf16.msra.mxu0 %v7669
    %7690 = vmatprep.subr.bf16.mxu0 0
    %7691 = vmatpush1.bf16.msra.mxu0 %v7670
    %7692 = vmatprep.subr.bf16.mxu0 0
    %7693 = vmatpush1.bf16.msra.mxu0 %v7671
    %7694 = vmatprep.subr.bf16.mxu0 0
    %7695 = vmatpush1.bf16.msra.mxu0 %v7672
    %7696 = vmatprep.subr.bf16.mxu0 0
    %7697 = vmatpush1.bf16.msra.mxu0 %v7673
    %7698 = vmatprep.subr.bf16.mxu0 0
    %7699 = vmatpush1.bf16.msra.mxu0 %v7674
    %7700 = vmatprep.subr.bf16.mxu0 0
    %7701 = vmatpush1.bf16.msra.mxu0 %v7675
    %7702 = vmatprep.subr.bf16.mxu0 0
    %7703 = vmatpush1.bf16.msra.mxu0 %v7676
    %7704 = vmatprep.subr.bf16.mxu0 0
    %7705 = vmatpush1.bf16.msra.mxu0 %v7677
    %7706 = vmatprep.subr.bf16.mxu0 0
    %7707 = vmatpush1.bf16.msra.mxu0 %v7678
    %7708 = vmatprep.subr.bf16.mxu0 0
    %7709 = vmatpush1.bf16.msra.mxu0 %v7679
    %7710 = vmatprep.subr.bf16.mxu0 0
    %7711 = vmatpush1.bf16.msra.mxu0 %v7680
    %7712 = vmatprep.subr.bf16.mxu0 0
    %7713 = vmatpush1.bf16.msra.mxu0 %v7681
    %7714 = vmatprep.mubr.bf16.mxu0 %v7665
    %7715 = vmatmul.mubr.bf16.gmra.mrb[0].mxu0 %v7664
    %v7716 = vpop.f32.mrb[0].mxu0
    %v7717 = vadd.f32 0.0, %v7716
    %v7718 = vpop.f32.mrb[0].mxu0
    %v7719 = vpop.f32.mrb[0].mxu0
    %v7720 = vpop.f32.mrb[0].mxu0
    %7721 = vdwg.mxu0
    %v7722 = vld [vmem:[#allocation2 + $0x4280] sm:$0xff]
    %v7723 = vld [vmem:[#allocation2 + $0x4288] sm:$0xff]
    %v7724 = vld [vmem:[#allocation2 + $0x4290] sm:$0xff]
    %v7725 = vld [vmem:[#allocation2 + $0x4298] sm:$0xff]
    %v7726 = vld [vmem:[#allocation2 + $0x42a0] sm:$0xff]
    %v7727 = vld [vmem:[#allocation2 + $0x42a8] sm:$0xff]
    %v7728 = vld [vmem:[#allocation2 + $0x42b0] sm:$0xff]
    %v7729 = vld [vmem:[#allocation2 + $0x42b8] sm:$0xff]
    %v7730 = vld [vmem:[#allocation2 + $0x42c0] sm:$0xff]
    %v7731 = vld [vmem:[#allocation2 + $0x42c8] sm:$0xff]
    %v7732 = vld [vmem:[#allocation2 + $0x42d0] sm:$0xff]
    %v7733 = vld [vmem:[#allocation2 + $0x42d8] sm:$0xff]
    %v7734 = vld [vmem:[#allocation2 + $0x42e0] sm:$0xff]
    %v7735 = vld [vmem:[#allocation2 + $0x42e8] sm:$0xff]
    %v7736 = vld [vmem:[#allocation2 + $0x42f0] sm:$0xff]
    %v7737 = vld [vmem:[#allocation2 + $0x42f8] sm:$0xff]
    %7738 = vmatprep.subr.bf16.mxu0 0
    %7739 = vmatpush1.bf16.msra.mxu0 %v7722
    %7740 = vmatprep.subr.bf16.mxu0 0
    %7741 = vmatpush1.bf16.msra.mxu0 %v7723
    %7742 = vmatprep.subr.bf16.mxu0 0
    %7743 = vmatpush1.bf16.msra.mxu0 %v7724
    %7744 = vmatprep.subr.bf16.mxu0 0
    %7745 = vmatpush1.bf16.msra.mxu0 %v7725
    %7746 = vmatprep.subr.bf16.mxu0 0
    %7747 = vmatpush1.bf16.msra.mxu0 %v7726
    %7748 = vmatprep.subr.bf16.mxu0 0
    %7749 = vmatpush1.bf16.msra.mxu0 %v7727
    %7750 = vmatprep.subr.bf16.mxu0 0
    %7751 = vmatpush1.bf16.msra.mxu0 %v7728
    %7752 = vmatprep.subr.bf16.mxu0 0
    %7753 = vmatpush1.bf16.msra.mxu0 %v7729
    %7754 = vmatprep.subr.bf16.mxu0 0
    %7755 = vmatpush1.bf16.msra.mxu0 %v7730
    %7756 = vmatprep.subr.bf16.mxu0 0
    %7757 = vmatpush1.bf16.msra.mxu0 %v7731
    %7758 = vmatprep.subr.bf16.mxu0 0
    %7759 = vmatpush1.bf16.msra.mxu0 %v7732
    %7760 = vmatprep.subr.bf16.mxu0 0
    %7761 = vmatpush1.bf16.msra.mxu0 %v7733
    %7762 = vmatprep.subr.bf16.mxu0 0
    %7763 = vmatpush1.bf16.msra.mxu0 %v7734
    %7764 = vmatprep.subr.bf16.mxu0 0
    %7765 = vmatpush1.bf16.msra.mxu0 %v7735
    %7766 = vmatprep.subr.bf16.mxu0 0
    %7767 = vmatpush1.bf16.msra.mxu0 %v7736
    %7768 = vmatprep.subr.bf16.mxu0 0
    %7769 = vmatpush1.bf16.msra.mxu0 %v7737
    %7770 = vmatprep.mubr.bf16.mxu0 %v7665
    %7771 = vmatmul.mubr.bf16.gmra.mrb[0].mxu0 %v7664
    %v7772 = vpop.f32.mrb[0].mxu0
    %v7773 = vadd.f32 0.0, %v7772
    %v7774 = vpop.f32.mrb[0].mxu0
    %v7775 = vpop.f32.mrb[0].mxu0
    %v7776 = vpop.f32.mrb[0].mxu0
    %7777 = vdwg.mxu0
    %v7778 = vld [vmem:[#allocation4 + $0x16] sm:$0x3]
    %v7780 = vlaneseq
    %v7781 = vshrl.u32 %v7780, 7
    %v7782 = vsub.s32 0, %v7781
    %v7783 = vrot.slane %v7778, %v7782
    %v7784 = vlaneseq
    %v7785 = vshrl.u32 %v7784, 7
    %v7786 = vsub.s32 1, %v7785
    %v7787 = vrot.slane %v7778, %v7786
    %v7790 = vadd.f32 %v7717, %v7783
    %v7791 = vadd.f32 %v7773, %v7787
    %v7792 = vmax.f32 %v7790, 0.0
    %v7793 = vmax.f32 %v7791, 0.0
    %v7794 = vpack.c.bf16 %v7792, %v7792
    %v7795 = vpack.c.bf16 %v7793, %v7793
    %v7796 = vld [vmem:[#allocation2 + $0x4300] sm:$0xff]
    %v7797 = vld [vmem:[#allocation2 + $0x4308] sm:$0xff]
    %v7798 = vld [vmem:[#allocation2 + $0x4310] sm:$0xff]
    %v7799 = vld [vmem:[#allocation2 + $0x4318] sm:$0xff]
    %v7800 = vld [vmem:[#allocation2 + $0x4320] sm:$0xff]
    %v7801 = vld [vmem:[#allocation2 + $0x4328] sm:$0xff]
    %v7802 = vld [vmem:[#allocation2 + $0x4330] sm:$0xff]
    %v7803 = vld [vmem:[#allocation2 + $0x4338] sm:$0xff]
    %v7804 = vld [vmem:[#allocation2 + $0x4340] sm:$0xff]
    %v7805 = vld [vmem:[#allocation2 + $0x4348] sm:$0xff]
    %v7806 = vld [vmem:[#allocation2 + $0x4350] sm:$0xff]
    %v7807 = vld [vmem:[#allocation2 + $0x4358] sm:$0xff]
    %v7808 = vld [vmem:[#allocation2 + $0x4360] sm:$0xff]
    %v7809 = vld [vmem:[#allocation2 + $0x4368] sm:$0xff]
    %v7810 = vld [vmem:[#allocation2 + $0x4370] sm:$0xff]
    %v7811 = vld [vmem:[#allocation2 + $0x4378] sm:$0xff]
    %7812 = vmatprep.subr.bf16.mxu0 0
    %7813 = vmatpush1.bf16.msra.mxu0 %v7796
    %7814 = vmatprep.subr.bf16.mxu0 0
    %7815 = vmatpush1.bf16.msra.mxu0 %v7797
    %7816 = vmatprep.subr.bf16.mxu0 0
    %7817 = vmatpush1.bf16.msra.mxu0 %v7798
    %7818 = vmatprep.subr.bf16.mxu0 0
    %7819 = vmatpush1.bf16.msra.mxu0 %v7799
    %7820 = vmatprep.subr.bf16.mxu0 0
    %7821 = vmatpush1.bf16.msra.mxu0 %v7800
    %7822 = vmatprep.subr.bf16.mxu0 0
    %7823 = vmatpush1.bf16.msra.mxu0 %v7801
    %7824 = vmatprep.subr.bf16.mxu0 0
    %7825 = vmatpush1.bf16.msra.mxu0 %v7802
    %7826 = vmatprep.subr.bf16.mxu0 0
    %7827 = vmatpush1.bf16.msra.mxu0 %v7803
    %7828 = vmatprep.subr.bf16.mxu0 0
    %7829 = vmatpush1.bf16.msra.mxu0 %v7804
    %7830 = vmatprep.subr.bf16.mxu0 0
    %7831 = vmatpush1.bf16.msra.mxu0 %v7805
    %7832 = vmatprep.subr.bf16.mxu0 0
    %7833 = vmatpush1.bf16.msra.mxu0 %v7806
    %7834 = vmatprep.subr.bf16.mxu0 0
    %7835 = vmatpush1.bf16.msra.mxu0 %v7807
    %7836 = vmatprep.subr.bf16.mxu0 0
    %7837 = vmatpush1.bf16.msra.mxu0 %v7808
    %7838 = vmatprep.subr.bf16.mxu0 0
    %7839 = vmatpush1.bf16.msra.mxu0 %v7809
    %7840 = vmatprep.subr.bf16.mxu0 0
    %7841 = vmatpush1.bf16.msra.mxu0 %v7810
    %7842 = vmatprep.subr.bf16.mxu0 0
    %7843 = vmatpush1.bf16.msra.mxu0 %v7811
    %7844 = vmatprep.mubr.bf16.mxu0 %v7795
    %7845 = vmatmul.mubr.bf16.gmra.mrb[0].mxu0 %v7794
    %v7846 = vpop.f32.mrb[0].mxu0
    %v7847 = vadd.f32 0.0, %v7846
    %v7848 = vpop.f32.mrb[0].mxu0
    %v7849 = vpop.f32.mrb[0].mxu0
    %v7850 = vpop.f32.mrb[0].mxu0
    %7851 = vdwg.mxu0
    %v7852 = vld [vmem:[#allocation2 + $0x4380] sm:$0xff]
    %v7853 = vld [vmem:[#allocation2 + $0x4388] sm:$0xff]
    %v7854 = vld [vmem:[#allocation2 + $0x4390] sm:$0xff]
    %v7855 = vld [vmem:[#allocation2 + $0x4398] sm:$0xff]
    %v7856 = vld [vmem:[#allocation2 + $0x43a0] sm:$0xff]
    %v7857 = vld [vmem:[#allocation2 + $0x43a8] sm:$0xff]
    %v7858 = vld [vmem:[#allocation2 + $0x43b0] sm:$0xff]
    %v7859 = vld [vmem:[#allocation2 + $0x43b8] sm:$0xff]
    %v7860 = vld [vmem:[#allocation2 + $0x43c0] sm:$0xff]
    %v7861 = vld [vmem:[#allocation2 + $0x43c8] sm:$0xff]
    %v7862 = vld [vmem:[#allocation2 + $0x43d0] sm:$0xff]
    %v7863 = vld [vmem:[#allocation2 + $0x43d8] sm:$0xff]
    %v7864 = vld [vmem:[#allocation2 + $0x43e0] sm:$0xff]
    %v7865 = vld [vmem:[#allocation2 + $0x43e8] sm:$0xff]
    %v7866 = vld [vmem:[#allocation2 + $0x43f0] sm:$0xff]
    %v7867 = vld [vmem:[#allocation2 + $0x43f8] sm:$0xff]
    %7868 = vmatprep.subr.bf16.mxu0 0
    %7869 = vmatpush1.bf16.msra.mxu0 %v7852
    %7870 = vmatprep.subr.bf16.mxu0 0
    %7871 = vmatpush1.bf16.msra.mxu0 %v7853
    %7872 = vmatprep.subr.bf16.mxu0 0
    %7873 = vmatpush1.bf16.msra.mxu0 %v7854
    %7874 = vmatprep.subr.bf16.mxu0 0
    %7875 = vmatpush1.bf16.msra.mxu0 %v7855
    %7876 = vmatprep.subr.bf16.mxu0 0
    %7877 = vmatpush1.bf16.msra.mxu0 %v7856
    %7878 = vmatprep.subr.bf16.mxu0 0
    %7879 = vmatpush1.bf16.msra.mxu0 %v7857
    %7880 = vmatprep.subr.bf16.mxu0 0
    %7881 = vmatpush1.bf16.msra.mxu0 %v7858
    %7882 = vmatprep.subr.bf16.mxu0 0
    %7883 = vmatpush1.bf16.msra.mxu0 %v7859
    %7884 = vmatprep.subr.bf16.mxu0 0
    %7885 = vmatpush1.bf16.msra.mxu0 %v7860
    %7886 = vmatprep.subr.bf16.mxu0 0
    %7887 = vmatpush1.bf16.msra.mxu0 %v7861
    %7888 = vmatprep.subr.bf16.mxu0 0
    %7889 = vmatpush1.bf16.msra.mxu0 %v7862
    %7890 = vmatprep.subr.bf16.mxu0 0
    %7891 = vmatpush1.bf16.msra.mxu0 %v7863
    %7892 = vmatprep.subr.bf16.mxu0 0
    %7893 = vmatpush1.bf16.msra.mxu0 %v7864
    %7894 = vmatprep.subr.bf16.mxu0 0
    %7895 = vmatpush1.bf16.msra.mxu0 %v7865
    %7896 = vmatprep.subr.bf16.mxu0 0
    %7897 = vmatpush1.bf16.msra.mxu0 %v7866
    %7898 = vmatprep.subr.bf16.mxu0 0
    %7899 = vmatpush1.bf16.msra.mxu0 %v7867
    %7900 = vmatprep.mubr.bf16.mxu0 %v7795
    %7901 = vmatmul.mubr.bf16.gmra.mrb[0].mxu0 %v7794
    %v7902 = vpop.f32.mrb[0].mxu0
    %v7903 = vadd.f32 0.0, %v7902
    %v7904 = vpop.f32.mrb[0].mxu0
    %v7905 = vpop.f32.mrb[0].mxu0
    %v7906 = vpop.f32.mrb[0].mxu0
    %7907 = vdwg.mxu0
    %v7908 = vld [vmem:[#allocation4 + $0x18] sm:$0x3]
    %v7910 = vlaneseq
    %v7911 = vshrl.u32 %v7910, 7
    %v7912 = vsub.s32 0, %v7911
    %v7913 = vrot.slane %v7908, %v7912
    %v7914 = vlaneseq
    %v7915 = vshrl.u32 %v7914, 7
    %v7916 = vsub.s32 1, %v7915
    %v7917 = vrot.slane %v7908, %v7916
    %v7920 = vadd.f32 %v7847, %v7913
    %v7921 = vadd.f32 %v7903, %v7917
    %v7922 = vmax.f32 %v7920, 0.0
    %v7923 = vmax.f32 %v7921, 0.0
    %v7924 = vpack.c.bf16 %v7922, %v7922
    %v7925 = vpack.c.bf16 %v7923, %v7923
    %v7926 = vld [vmem:[#allocation2 + $0x4400] sm:$0xff]
    %v7927 = vld [vmem:[#allocation2 + $0x4408] sm:$0xff]
    %v7928 = vld [vmem:[#allocation2 + $0x4410] sm:$0xff]
    %v7929 = vld [vmem:[#allocation2 + $0x4418] sm:$0xff]
    %v7930 = vld [vmem:[#allocation2 + $0x4420] sm:$0xff]
    %v7931 = vld [vmem:[#allocation2 + $0x4428] sm:$0xff]
    %v7932 = vld [vmem:[#allocation2 + $0x4430] sm:$0xff]
    %v7933 = vld [vmem:[#allocation2 + $0x4438] sm:$0xff]
    %v7934 = vld [vmem:[#allocation2 + $0x4440] sm:$0xff]
    %v7935 = vld [vmem:[#allocation2 + $0x4448] sm:$0xff]
    %v7936 = vld [vmem:[#allocation2 + $0x4450] sm:$0xff]
    %v7937 = vld [vmem:[#allocation2 + $0x4458] sm:$0xff]
    %v7938 = vld [vmem:[#allocation2 + $0x4460] sm:$0xff]
    %v7939 = vld [vmem:[#allocation2 + $0x4468] sm:$0xff]
    %v7940 = vld [vmem:[#allocation2 + $0x4470] sm:$0xff]
    %v7941 = vld [vmem:[#allocation2 + $0x4478] sm:$0xff]
    %v7942 = vld [vmem:[#allocation4 + $0x1a] sm:$0x1]
    %v7944 = vlaneseq
    %v7945 = vshrl.u32 %v7944, 7
    %v7946 = vsub.s32 0, %v7945
    %v7947 = vrot.slane %v7942, %v7946
    %7949 = vmatprep.subr.bf16.mxu0 0
    %7950 = vmatpush1.bf16.msra.mxu0 %v7926
    %7951 = vmatprep.subr.bf16.mxu0 0
    %7952 = vmatpush1.bf16.msra.mxu0 %v7927
    %7953 = vmatprep.subr.bf16.mxu0 0
    %7954 = vmatpush1.bf16.msra.mxu0 %v7928
    %7955 = vmatprep.subr.bf16.mxu0 0
    %7956 = vmatpush1.bf16.msra.mxu0 %v7929
    %7957 = vmatprep.subr.bf16.mxu0 0
    %7958 = vmatpush1.bf16.msra.mxu0 %v7930
    %7959 = vmatprep.subr.bf16.mxu0 0
    %7960 = vmatpush1.bf16.msra.mxu0 %v7931
    %7961 = vmatprep.subr.bf16.mxu0 0
    %7962 = vmatpush1.bf16.msra.mxu0 %v7932
    %7963 = vmatprep.subr.bf16.mxu0 0
    %7964 = vmatpush1.bf16.msra.mxu0 %v7933
    %7965 = vmatprep.subr.bf16.mxu0 0
    %7966 = vmatpush1.bf16.msra.mxu0 %v7934
    %7967 = vmatprep.subr.bf16.mxu0 0
    %7968 = vmatpush1.bf16.msra.mxu0 %v7935
    %7969 = vmatprep.subr.bf16.mxu0 0
    %7970 = vmatpush1.bf16.msra.mxu0 %v7936
    %7971 = vmatprep.subr.bf16.mxu0 0
    %7972 = vmatpush1.bf16.msra.mxu0 %v7937
    %7973 = vmatprep.subr.bf16.mxu0 0
    %7974 = vmatpush1.bf16.msra.mxu0 %v7938
    %7975 = vmatprep.subr.bf16.mxu0 0
    %7976 = vmatpush1.bf16.msra.mxu0 %v7939
    %7977 = vmatprep.subr.bf16.mxu0 0
    %7978 = vmatpush1.bf16.msra.mxu0 %v7940
    %7979 = vmatprep.subr.bf16.mxu0 0
    %7980 = vmatpush1.bf16.msra.mxu0 %v7941
    %7981 = vmatprep.mubr.bf16.mxu0 %v7925
    %7982 = vmatmul.mubr.bf16.gmra.mrb[0].mxu0 %v7924
    %v7983 = vpop.f32.mrb[0].mxu0
    %v7984 = vadd.f32 %v7947, %v7983
    %v7985 = vpop.f32.mrb[0].mxu0
    %v7986 = vpop.f32.mrb[0].mxu0
    %v7987 = vpop.f32.mrb[0].mxu0
    %7988 = vdwg.mxu0
    %v7989 = vmax.f32 %v7984, 0.0
    %v7990 = vpack.c.bf16 %v7989, %v7989
    %v7991 = vld [vmem:[#allocation2 + $0x4480] sm:$0xff]
    %v7992 = vld [vmem:[#allocation2 + $0x4488] sm:$0xff]
    %v7993 = vld [vmem:[#allocation2 + $0x4490] sm:$0xff]
    %v7994 = vld [vmem:[#allocation2 + $0x4498] sm:$0xff]
    %v7995 = vld [vmem:[#allocation2 + $0x44a0] sm:$0xff]
    %v7996 = vld [vmem:[#allocation2 + $0x44a8] sm:$0xff]
    %v7997 = vld [vmem:[#allocation2 + $0x44b0] sm:$0xff]
    %v7998 = vld [vmem:[#allocation2 + $0x44b8] sm:$0xff]
    %v7999 = vld [vmem:[#allocation4 + $0x1b] sm:$0x1]
    %v8001 = vlaneseq
    %v8002 = vshrl.u32 %v8001, 7
    %v8003 = vsub.s32 0, %v8002
    %v8004 = vrot.slane %v7999, %v8003
    %8006 = vmatprep.subr.bf16.mxu0 0
    %8007 = vmatpush1.bf16.msra.mxu0 %v7991
    %8008 = vmatprep.subr.bf16.mxu0 0
    %8009 = vmatpush1.bf16.msra.mxu0 %v7992
    %8010 = vmatprep.subr.bf16.mxu0 0
    %8011 = vmatpush1.bf16.msra.mxu0 %v7993
    %8012 = vmatprep.subr.bf16.mxu0 0
    %8013 = vmatpush1.bf16.msra.mxu0 %v7994
    %8014 = vmatprep.subr.bf16.mxu0 0
    %8015 = vmatpush1.bf16.msra.mxu0 %v7995
    %8016 = vmatprep.subr.bf16.mxu0 0
    %8017 = vmatpush1.bf16.msra.mxu0 %v7996
    %8018 = vmatprep.subr.bf16.mxu0 0
    %8019 = vmatpush1.bf16.msra.mxu0 %v7997
    %8020 = vmatprep.subr.bf16.mxu0 0
    %8021 = vmatpush1.bf16.msra.mxu0 %v7998
    %8022 = vmatprep.subr.bf16.mxu0 0
    %8023 = vmatpush1.bf16.msra.mxu0 0
    %8024 = vmatprep.subr.bf16.mxu0 0
    %8025 = vmatpush1.bf16.msra.mxu0 0
    %8026 = vmatprep.subr.bf16.mxu0 0
    %8027 = vmatpush1.bf16.msra.mxu0 0
    %8028 = vmatprep.subr.bf16.mxu0 0
    %8029 = vmatpush1.bf16.msra.mxu0 0
    %8030 = vmatprep.subr.bf16.mxu0 0
    %8031 = vmatpush1.bf16.msra.mxu0 0
    %8032 = vmatprep.subr.bf16.mxu0 0
    %8033 = vmatpush1.bf16.msra.mxu0 0
    %8034 = vmatprep.subr.bf16.mxu0 0
    %8035 = vmatpush1.bf16.msra.mxu0 0
    %8036 = vmatprep.subr.bf16.mxu0 0
    %8037 = vmatpush1.bf16.msra.mxu0 0
    %8038 = vmatprep.mubr.bf16.mxu0 0
    %8039 = vmatmul.mubr.bf16.gmra.mrb[0].mxu0 %v7990
    %v8040 = vpop.f32.mrb[0].mxu0
    %v8041 = vadd.f32 %v8004, %v8040
    %v8042 = vpop.f32.mrb[0].mxu0
    %v8043 = vpop.f32.mrb[0].mxu0
    %v8044 = vpop.f32.mrb[0].mxu0
    %8045 = vdwg.mxu0
    %v8046 = vmax.f32 %v8041, 0.0
    %v8047 = vpack.c.bf16 %v8046, %v8046
    %v8048 = vld [vmem:[#allocation2 + $0x44c0] sm:$0xff]
    %v8049 = vld [vmem:[#allocation2 + $0x44c8] sm:$0xff]
    %v8050 = vld [vmem:[#allocation2 + $0x44d0] sm:$0xff]
    %v8051 = vld [vmem:[#allocation2 + $0x44d8] sm:$0xff]
    %v8052 = vld [vmem:[#allocation2 + $0x44e0] sm:$0xff]
    %v8053 = vld [vmem:[#allocation2 + $0x44e8] sm:$0xff]
    %v8054 = vld [vmem:[#allocation2 + $0x44f0] sm:$0xff]
    %v8055 = vld [vmem:[#allocation2 + $0x44f8] sm:$0xff]
    %v8056 = vld [vmem:[#allocation4 + $0x1c] sm:$0x1]
    %v8058 = vlaneseq
    %v8059 = vshrl.u32 %v8058, 7
    %v8060 = vsub.s32 0, %v8059
    %v8061 = vrot.slane %v8056, %v8060
    %8063 = vmatprep.subr.bf16.mxu0 0
    %8064 = vmatpush1.bf16.msra.mxu0 %v8048
    %8065 = vmatprep.subr.bf16.mxu0 0
    %8066 = vmatpush1.bf16.msra.mxu0 %v8049
    %8067 = vmatprep.subr.bf16.mxu0 0
    %8068 = vmatpush1.bf16.msra.mxu0 %v8050
    %8069 = vmatprep.subr.bf16.mxu0 0
    %8070 = vmatpush1.bf16.msra.mxu0 %v8051
    %8071 = vmatprep.subr.bf16.mxu0 0
    %8072 = vmatpush1.bf16.msra.mxu0 %v8052
    %8073 = vmatprep.subr.bf16.mxu0 0
    %8074 = vmatpush1.bf16.msra.mxu0 %v8053
    %8075 = vmatprep.subr.bf16.mxu0 0
    %8076 = vmatpush1.bf16.msra.mxu0 %v8054
    %8077 = vmatprep.subr.bf16.mxu0 0
    %8078 = vmatpush1.bf16.msra.mxu0 %v8055
    %8079 = vmatprep.subr.bf16.mxu0 0
    %8080 = vmatpush1.bf16.msra.mxu0 0
    %8081 = vmatprep.subr.bf16.mxu0 0
    %8082 = vmatpush1.bf16.msra.mxu0 0
    %8083 = vmatprep.subr.bf16.mxu0 0
    %8084 = vmatpush1.bf16.msra.mxu0 0
    %8085 = vmatprep.subr.bf16.mxu0 0
    %8086 = vmatpush1.bf16.msra.mxu0 0
    %8087 = vmatprep.subr.bf16.mxu0 0
    %8088 = vmatpush1.bf16.msra.mxu0 0
    %8089 = vmatprep.subr.bf16.mxu0 0
    %8090 = vmatpush1.bf16.msra.mxu0 0
    %8091 = vmatprep.subr.bf16.mxu0 0
    %8092 = vmatpush1.bf16.msra.mxu0 0
    %8093 = vmatprep.subr.bf16.mxu0 0
    %8094 = vmatpush1.bf16.msra.mxu0 0
    %8095 = vmatprep.mubr.bf16.mxu0 0
    %8096 = vmatmul.mubr.bf16.gmra.mrb[0].mxu0 %v8047
    %v8097 = vpop.f32.mrb[0].mxu0
    %v8098 = vadd.f32 %v8061, %v8097
    %v8099 = vpop.f32.mrb[0].mxu0
    %v8100 = vpop.f32.mrb[0].mxu0
    %v8101 = vpop.f32.mrb[0].mxu0
    %8102 = vdwg.mxu0
    %v8103 = vmax.f32 %v8098, 0.0
    %v8104 = vpack.c.bf16 %v8103, %v8103
    %v8105 = vld [vmem:[#allocation2 + $0x4500] sm:$0xff]
    %v8106 = vld [vmem:[#allocation2 + $0x4508] sm:$0xff]
    %v8107 = vld [vmem:[#allocation2 + $0x4510] sm:$0xff]
    %v8108 = vld [vmem:[#allocation2 + $0x4518] sm:$0xff]
    %v8109 = vld [vmem:[#allocation2 + $0x4520] sm:$0xff]
    %v8110 = vld [vmem:[#allocation2 + $0x4528] sm:$0xff]
    %v8111 = vld [vmem:[#allocation2 + $0x4530] sm:$0xff]
    %v8112 = vld [vmem:[#allocation2 + $0x4538] sm:$0xff]
    %v8113 = vld [vmem:[#allocation4 + $0x1d] sm:$0x1]
    %v8115 = vlaneseq
    %v8116 = vshrl.u32 %v8115, 7
    %v8117 = vsub.s32 0, %v8116
    %v8118 = vrot.slane %v8113, %v8117
    %8120 = vmatprep.subr.bf16.mxu0 0
    %8121 = vmatpush1.bf16.msra.mxu0 %v8105
    %8122 = vmatprep.subr.bf16.mxu0 0
    %8123 = vmatpush1.bf16.msra.mxu0 %v8106
    %8124 = vmatprep.subr.bf16.mxu0 0
    %8125 = vmatpush1.bf16.msra.mxu0 %v8107
    %8126 = vmatprep.subr.bf16.mxu0 0
    %8127 = vmatpush1.bf16.msra.mxu0 %v8108
    %8128 = vmatprep.subr.bf16.mxu0 0
    %8129 = vmatpush1.bf16.msra.mxu0 %v8109
    %8130 = vmatprep.subr.bf16.mxu0 0
    %8131 = vmatpush1.bf16.msra.mxu0 %v8110
    %8132 = vmatprep.subr.bf16.mxu0 0
    %8133 = vmatpush1.bf16.msra.mxu0 %v8111
    %8134 = vmatprep.subr.bf16.mxu0 0
    %8135 = vmatpush1.bf16.msra.mxu0 %v8112
    %8136 = vmatprep.subr.bf16.mxu0 0
    %8137 = vmatpush1.bf16.msra.mxu0 0
    %8138 = vmatprep.subr.bf16.mxu0 0
    %8139 = vmatpush1.bf16.msra.mxu0 0
    %8140 = vmatprep.subr.bf16.mxu0 0
    %8141 = vmatpush1.bf16.msra.mxu0 0
    %8142 = vmatprep.subr.bf16.mxu0 0
    %8143 = vmatpush1.bf16.msra.mxu0 0
    %8144 = vmatprep.subr.bf16.mxu0 0
    %8145 = vmatpush1.bf16.msra.mxu0 0
    %8146 = vmatprep.subr.bf16.mxu0 0
    %8147 = vmatpush1.bf16.msra.mxu0 0
    %8148 = vmatprep.subr.bf16.mxu0 0
    %8149 = vmatpush1.bf16.msra.mxu0 0
    %8150 = vmatprep.subr.bf16.mxu0 0
    %8151 = vmatpush1.bf16.msra.mxu0 0
    %8152 = vmatprep.mubr.bf16.mxu0 0
    %8153 = vmatmul.mubr.bf16.gmra.mrb[0].mxu0 %v8104
    %v8154 = vpop.f32.mrb[0].mxu0
    %v8155 = vadd.f32 %v8118, %v8154
    %v8156 = vpop.f32.mrb[0].mxu0
    %v8157 = vpop.f32.mrb[0].mxu0
    %v8158 = vpop.f32.mrb[0].mxu0
    %8159 = vdwg.mxu0
    %8160 = vst [vmem:[%s3] sm:$0xff] %v8155
    // Predicated region
    $region18: #{net_forward.1} parent=1 // pred_check
      _
    $region19: #{net_forward.1} parent=1 // pred_check_branch
      %8162 = sbr.rel (0) target = $region21
    $region20: #{net_forward.1} parent=1 // pred_region
      _
    $region21: #{net_forward.1} parent=1 // pred_fallthru
      _
    // Predicated region
    $region22: #{net_forward.1} parent=1 // pred_check
      _
    $region23: #{net_forward.1} parent=1 // pred_check_branch
      %8164 = sbr.rel (0) target = $region25
    $region24: #{net_forward.1} parent=1 // pred_region
      _
    $region25: #{net_forward.1} parent=1 // pred_fallthru
      _
    %8165 = vsyncpa [#allocation5], 1
  %8166 = vsyncmov [#allocation3]
  %s8167 = vpop.sfrf %8166
  %p8168 = scmp.eq.s32.totalorder %s8167, 0
  %p8169 = pneg %p8168
  %8171 = shalt.err (%p8169)

</llo_original>
